<compile_context>
chip_gen: v7x
topology: tpu7x:2x2x1
jax: 0.10.0
libtpu: 0.0.40
codegen_flags: <defaults>
</compile_context>

<pallas_src>
import functools

import numpy as np
import jax
import jax.numpy as jnp
from jax.experimental import pallas as pl
from jax.experimental.pallas import tpu as pltpu


def _round_up(a, m):
    return (a + m - 1) // m * m


# ------------------------------- Pallas kernel --------------------------------

def _fused_forward_kernel(xin_ref, mask_ref, w1_ref, w2_ref, wres_ref, aff_ref,
                          out_ref, s_ref, y1_ref, *, offsets, c_min, nw, cp):
    """Fused EnhancedCNN2D forward on flat padded images.

    xin  : (cp, NL_pad)      zero-padded input, channels-first flat (n, y, x)
    mask : (1, NW)           1.0 at valid (non-pad) centers inside the window
    w1   : (cp, ntap*cp)     merged conv1 weights (all branches, 7x7 footprint)
    w2   : (cp, ntap*cp)     merged block-diagonal conv2 weights
    wres : (cp, cp)          residual 1x1 conv weight (padded)
    aff  : (cp, 8)           cols = [b1, bn1_s, bn1_t, b2, bn2_s, bn2_t, bres, 0]
    out  : (cp, NW)          lane-aligned center-window output
    s    : (ntap*cp, NW)     stacked-shift operand scratch (reused by both convs)
    y1   : (cp, NL_pad)      zero-padded flat intermediate image
    """
    mask = mask_ref[...]                                          # (1, NW)

    # ---- conv1 (all branches), single matmul over the stacked operand ----
    for t, off in enumerate(offsets):                             # static unroll
        s_ref[pl.ds(t * cp, cp), :] = xin_ref[:, pl.ds(c_min + off, nw)]

    h = jnp.dot(w1_ref[...], s_ref[...], preferred_element_type=jnp.float32)
    # bias + ReLU + BN1 (eval-mode affine), zero invalid/garbage columns
    h = (jnp.maximum(h + aff_ref[:, 0:1], 0.0) * aff_ref[:, 1:2]
         + aff_ref[:, 2:3]) * mask                                # (cp, NW)

    # Stage y1 as a zero-padded flat image (halo stays zero; window write is
    # lane- and sublane-aligned).
    y1_ref[...] = jnp.zeros_like(y1_ref)
    y1_ref[:, pl.ds(c_min, nw)] = h

    # ---- conv2 (block-diagonal across branches), single matmul ----
    for t, off in enumerate(offsets):
        s_ref[pl.ds(t * cp, cp), :] = y1_ref[:, pl.ds(c_min + off, nw)]

    h2 = jnp.dot(w2_ref[...], s_ref[...], preferred_element_type=jnp.float32)
    h2 = jnp.maximum(h2 + aff_ref[:, 3:4], 0.0) * aff_ref[:, 4:5] + aff_ref[:, 5:6]

    # ---- residual 1x1 conv + add, single full-width unmasked store ----
    res = jnp.dot(wres_ref[...], xin_ref[:, pl.ds(c_min, nw)],
                  preferred_element_type=jnp.float32) + aff_ref[:, 6:7]
    out_ref[...] = h2 + res


# ----------------------------------- glue ------------------------------------

def _bn_affine(gamma, beta, mean, var, eps=1e-5):
    scale = gamma / jnp.sqrt(var + eps)
    return scale, beta - mean * scale


def enhanced_cnn2d_forward(x_nchw, params):
    N, Cin, H, W = x_nchw.shape
    branches = params["branches"]
    nb = len(branches)
    cb = branches[0]["w1"].shape[0]
    Cout = nb * cb
    ks = [bp["k"] for bp in branches]
    kmax = max(ks)
    pmax = kmax // 2
    ntap = kmax * kmax

    Cpad = 8                                   # one sublane tile of channels
    assert Cin <= Cpad and Cout <= Cpad

    Hp, Wp = H + 2 * pmax, W + 2 * pmax
    L = Hp * Wp
    NL = N * L
    c0 = pmax * Wp + pmax                      # first valid center (flat index)
    NLc = (N - 1) * L + (H - 1) * Wp + W       # contiguous center span, N images

    lead = _round_up(c0, 128) - c0             # extra zero cols -> window start lane-aligned
    c_min = c0 + lead
    NW = _round_up(NLc, 128)                   # lane-rounded window width
    off_max = pmax * Wp + pmax
    NL_pad = _round_up(c_min + off_max + NW, 128)

    # Input: NCHW -> zero-padded -> channels-first flat (Cpad, NL_pad).
    xp = jnp.pad(x_nchw, ((0, 0), (0, 0), (pmax, pmax), (pmax, pmax)))
    xin = jnp.transpose(xp, (1, 0, 2, 3)).reshape(Cin, NL)
    xin = jnp.pad(xin, ((0, Cpad - Cin), (lead, NL_pad - NL - lead)))

    # Valid-center mask over the rounded-up window (built host-side; also
    # covers the lane-rounding tail columns).
    m = np.zeros((N, Hp, Wp), np.float32)
    m[:, pmax:pmax + H, pmax:pmax + W] = 1.0
    m = np.pad(m.reshape(NL), (0, NW))
    mask_w = jnp.asarray(m[c0:c0 + NW].reshape(1, NW))

    # Per-tap lane offsets for the kmax x kmax footprint.
    offsets = [(ky - pmax) * Wp + (kx - pmax)
               for ky in range(kmax) for kx in range(kmax)]

    # Merged conv weights: embed each branch's k x k kernel into the kmax x
    # kmax footprint; layout matches the stacked operand (tap-major, then
    # input channel): W[o, t*Cpad + i].
    def embed_w(w, k, row_off, col_off):
        pk = (kmax - k) // 2
        wt = jnp.transpose(w, (0, 2, 3, 1))            # (co, k, k, ci)
        full = jnp.zeros((Cpad, kmax, kmax, Cpad), jnp.float32)
        full = full.at[row_off:row_off + w.shape[0], pk:pk + k, pk:pk + k,
                       col_off:col_off + w.shape[1]].set(wt)
        return full.reshape(Cpad, ntap * Cpad)

    W1 = jnp.zeros((Cpad, ntap * Cpad), jnp.float32)
    W2 = jnp.zeros((Cpad, ntap * Cpad), jnp.float32)
    b1l, s1l, t1l, b2l, s2l, t2l = [], [], [], [], [], []
    for b, bp in enumerate(branches):
        k = bp["k"]
        W1 = W1 + embed_w(bp["w1"], k, b * cb, 0)       # all branches read x
        W2 = W2 + embed_w(bp["w2"], k, b * cb, b * cb)  # block-diagonal
        s1, t1 = _bn_affine(*bp["bn1"])
        s2, t2 = _bn_affine(*bp["bn2"])
        b1l.append(bp["b1"]); s1l.append(s1); t1l.append(t1)
        b2l.append(bp["b2"]); s2l.append(s2); t2l.append(t2)

    rw, rb = params["residual"]
    Wres = jnp.zeros((Cpad, Cpad), jnp.float32)
    Wres = Wres.at[:Cout, :Cin].set(rw.reshape(Cout, Cin))

    def pad_vec(parts):
        v = jnp.concatenate(parts)
        return jnp.pad(v, (0, Cpad - Cout))

    aff_all = jnp.stack(
        [pad_vec(b1l), pad_vec(s1l), pad_vec(t1l),
         pad_vec(b2l), pad_vec(s2l), pad_vec(t2l),
         jnp.pad(rb, (0, Cpad - Cout)), jnp.zeros((Cpad,), jnp.float32)],
        axis=1)                                          # (Cpad, 8)

    kernel = functools.partial(_fused_forward_kernel, offsets=offsets,
                               c_min=c_min, nw=NW, cp=Cpad)

    out_w = pl.pallas_call(
        kernel,
        out_shape=jax.ShapeDtypeStruct((Cpad, NW), jnp.float32),
        in_specs=[pl.BlockSpec(memory_space=pltpu.MemorySpace.VMEM)] * 6,
        out_specs=pl.BlockSpec(memory_space=pltpu.MemorySpace.VMEM),
        scratch_shapes=[pltpu.VMEM((ntap * Cpad, NW), jnp.float32),
                        pltpu.VMEM((Cpad, NL_pad), jnp.float32)],
        compiler_params=pltpu.CompilerParams(vmem_limit_bytes=32 * 1024 * 1024),
    )(xin, mask_w, W1, W2, Wres, aff_all)

    # Extract valid spatial positions and go back to NCHW (layout plumbing).
    out_flat = jnp.pad(out_w[:Cout, :NLc], ((0, 0), (c0, NL - c0 - NLc)))
    out = out_flat.reshape(Cout, N, Hp, Wp)[:, :, pmax:pmax + H, pmax:pmax + W]
    # Dropout(p=0.1): identity in eval mode.
    return jnp.transpose(out, (1, 0, 2, 3))


# -------------------------- deterministic parameters --------------------------

def init_params(key, in_channels, out_channels, kernel_sizes):
    cb = out_channels // len(kernel_sizes)
    branches = []
    for i, k in enumerate(kernel_sizes):
        ksub = jax.random.split(jax.random.fold_in(key, i), 8)
        branches.append(dict(
            k=k,
            w1=0.1 * jax.random.normal(ksub[0], (cb, in_channels, k, k), jnp.float32),
            b1=0.1 * jax.random.normal(ksub[1], (cb,), jnp.float32),
            w2=0.1 * jax.random.normal(ksub[2], (cb, cb, k, k), jnp.float32),
            b2=0.1 * jax.random.normal(ksub[3], (cb,), jnp.float32),
            # BatchNorm2d (eval): gamma, beta, running_mean, running_var
            bn1=(1.0 + 0.1 * jax.random.normal(ksub[4], (cb,), jnp.float32),
                 0.1 * jax.random.normal(ksub[5], (cb,), jnp.float32),
                 jnp.zeros((cb,), jnp.float32),
                 jnp.ones((cb,), jnp.float32)),
            bn2=(1.0 + 0.1 * jax.random.normal(ksub[6], (cb,), jnp.float32),
                 0.1 * jax.random.normal(ksub[7], (cb,), jnp.float32),
                 jnp.zeros((cb,), jnp.float32),
                 jnp.ones((cb,), jnp.float32)),
        ))
    rw = 0.1 * jax.random.normal(jax.random.fold_in(key, 100),
                                 (out_channels, in_channels, 1, 1), jnp.float32)
    rb = 0.1 * jax.random.normal(jax.random.fold_in(key, 101),
                                 (out_channels,), jnp.float32)
    return dict(branches=branches, residual=(rw, rb))


# ------------------------------ pure-JAX reference -----------------------------

def ref_forward(x_nchw, params):
    def conv(x, w, b, pad):
        y = jax.lax.conv_general_dilated(
            x, w, (1, 1), ((pad, pad), (pad, pad)),
            dimension_numbers=("NCHW", "OIHW", "NCHW"))
        return y + b[None, :, None, None]

    def bn(x, g, be, m, v, eps=1e-5):
        return ((x - m[None, :, None, None]) /
                jnp.sqrt(v[None, :, None, None] + eps) *
                g[None, :, None, None] + be[None, :, None, None])

    rw, rb = params["residual"]
    res = conv(x_nchw, rw, rb, 0)
    outs = []
    for bp in params["branches"]:
        k = bp["k"]
        y = bn(jnp.maximum(conv(x_nchw, bp["w1"], bp["b1"], k // 2), 0.0), *bp["bn1"])
        y = bn(jnp.maximum(conv(y, bp["w2"], bp["b2"], k // 2), 0.0), *bp["bn2"])
        outs.append(y)
    return jnp.concatenate(outs, axis=1) + res


# ----------------------------------- main -------------------------------------

if __name__ == "__main__":
    in_channels, out_channels = 4, 6
    kernel_sizes = [3, 5, 7]
    N, H, W = 2, 16, 16

    x = jax.random.normal(jax.random.PRNGKey(0), (N, in_channels, H, W), jnp.float32)
    params = init_params(jax.random.PRNGKey(1), in_channels, out_channels, kernel_sizes)

    out = enhanced_cnn2d_forward(x, params)
    out = jax.block_until_ready(out)

    ref = ref_forward(x, params)
    assert out.shape == (N, out_channels, H, W), out.shape
    err = float(jnp.max(jnp.abs(out - ref)))
    assert jnp.allclose(out, ref, atol=1e-4, rtol=1e-4), err

    print("KERNEL_OK")
</pallas_src>

<mosaic_0001>
module attributes {stable_mosaic.version = 11 : i64} {
  func.func @_fused_forward_kernel(%arg0: memref<8x1152xf32, #tpu.memory_space<vmem>>, %arg1: memref<1x896xf32, #tpu.memory_space<vmem>>, %arg2: memref<8x392xf32, #tpu.memory_space<vmem>>, %arg3: memref<8x392xf32, #tpu.memory_space<vmem>>, %arg4: memref<8x8xf32, #tpu.memory_space<vmem>>, %arg5: memref<8x8xf32, #tpu.memory_space<vmem>>, %arg6: memref<8x896xf32, #tpu.memory_space<vmem>>, %arg7: memref<392x896xf32, #tpu.memory_space<vmem>>, %arg8: memref<8x1152xf32, #tpu.memory_space<vmem>>) attributes {dimension_semantics = [], scalar_prefetch = 0 : i64, scratch_operands = 2 : i64, tpu.core_type = #tpu.core_type<tc>} {
    %c0 = arith.constant 0 : index
    %c0_0 = arith.constant 0 : index
    %0 = vector.load %arg1[%c0, %c0_0] : memref<1x896xf32, #tpu.memory_space<vmem>>, vector<1x896xf32>
    %c0_1 = arith.constant 0 : index
    %c59 = arith.constant 59 : index
    %1 = vector.load %arg0[%c0_1, %c59] : memref<8x1152xf32, #tpu.memory_space<vmem>>, vector<8x896xf32>
    %c0_2 = arith.constant 0 : index
    %c0_3 = arith.constant 0 : index
    %2 = vector.load %arg7[%c0_2, %c0_3] : memref<392x896xf32, #tpu.memory_space<vmem>>, vector<8x896xf32>
    tpu.vector_store %arg7[%c0_2, %c0_3], %1 {strides = array<i32>} : memref<392x896xf32, #tpu.memory_space<vmem>>, vector<8x896xf32>,
    %c0_4 = arith.constant 0 : index
    %c60 = arith.constant 60 : index
    %3 = vector.load %arg0[%c0_4, %c60] : memref<8x1152xf32, #tpu.memory_space<vmem>>, vector<8x896xf32>
    %c8 = arith.constant 8 : index
    %c0_5 = arith.constant 0 : index
    %4 = vector.load %arg7[%c8, %c0_5] : memref<392x896xf32, #tpu.memory_space<vmem>>, vector<8x896xf32>
    tpu.vector_store %arg7[%c8, %c0_5], %3 {strides = array<i32>} : memref<392x896xf32, #tpu.memory_space<vmem>>, vector<8x896xf32>,
    %c0_6 = arith.constant 0 : index
    %c61 = arith.constant 61 : index
    %5 = vector.load %arg0[%c0_6, %c61] : memref<8x1152xf32, #tpu.memory_space<vmem>>, vector<8x896xf32>
    %c16 = arith.constant 16 : index
    %c0_7 = arith.constant 0 : index
    %6 = vector.load %arg7[%c16, %c0_7] : memref<392x896xf32, #tpu.memory_space<vmem>>, vector<8x896xf32>
    tpu.vector_store %arg7[%c16, %c0_7], %5 {strides = array<i32>} : memref<392x896xf32, #tpu.memory_space<vmem>>, vector<8x896xf32>,
    %c0_8 = arith.constant 0 : index
    %c62 = arith.constant 62 : index
    %7 = vector.load %arg0[%c0_8, %c62] : memref<8x1152xf32, #tpu.memory_space<vmem>>, vector<8x896xf32>
    %c24 = arith.constant 24 : index
    %c0_9 = arith.constant 0 : index
    %8 = vector.load %arg7[%c24, %c0_9] : memref<392x896xf32, #tpu.memory_space<vmem>>, vector<8x896xf32>
    tpu.vector_store %arg7[%c24, %c0_9], %7 {strides = array<i32>} : memref<392x896xf32, #tpu.memory_space<vmem>>, vector<8x896xf32>,
    %c0_10 = arith.constant 0 : index
    %c63 = arith.constant 63 : index
    %9 = vector.load %arg0[%c0_10, %c63] : memref<8x1152xf32, #tpu.memory_space<vmem>>, vector<8x896xf32>
    %c32 = arith.constant 32 : index
    %c0_11 = arith.constant 0 : index
    %10 = vector.load %arg7[%c32, %c0_11] : memref<392x896xf32, #tpu.memory_space<vmem>>, vector<8x896xf32>
    tpu.vector_store %arg7[%c32, %c0_11], %9 {strides = array<i32>} : memref<392x896xf32, #tpu.memory_space<vmem>>, vector<8x896xf32>,
    %c0_12 = arith.constant 0 : index
    %c64 = arith.constant 64 : index
    %11 = vector.load %arg0[%c0_12, %c64] : memref<8x1152xf32, #tpu.memory_space<vmem>>, vector<8x896xf32>
    %c40 = arith.constant 40 : index
    %c0_13 = arith.constant 0 : index
    %12 = vector.load %arg7[%c40, %c0_13] : memref<392x896xf32, #tpu.memory_space<vmem>>, vector<8x896xf32>
    tpu.vector_store %arg7[%c40, %c0_13], %11 {strides = array<i32>} : memref<392x896xf32, #tpu.memory_space<vmem>>, vector<8x896xf32>,
    %c0_14 = arith.constant 0 : index
    %c65 = arith.constant 65 : index
    %13 = vector.load %arg0[%c0_14, %c65] : memref<8x1152xf32, #tpu.memory_space<vmem>>, vector<8x896xf32>
    %c48 = arith.constant 48 : index
    %c0_15 = arith.constant 0 : index
    %14 = vector.load %arg7[%c48, %c0_15] : memref<392x896xf32, #tpu.memory_space<vmem>>, vector<8x896xf32>
    tpu.vector_store %arg7[%c48, %c0_15], %13 {strides = array<i32>} : memref<392x896xf32, #tpu.memory_space<vmem>>, vector<8x896xf32>,
    %c0_16 = arith.constant 0 : index
    %c81 = arith.constant 81 : index
    %15 = vector.load %arg0[%c0_16, %c81] : memref<8x1152xf32, #tpu.memory_space<vmem>>, vector<8x896xf32>
    %c56 = arith.constant 56 : index
    %c0_17 = arith.constant 0 : index
    %16 = vector.load %arg7[%c56, %c0_17] : memref<392x896xf32, #tpu.memory_space<vmem>>, vector<8x896xf32>
    tpu.vector_store %arg7[%c56, %c0_17], %15 {strides = array<i32>} : memref<392x896xf32, #tpu.memory_space<vmem>>, vector<8x896xf32>,
    %c0_18 = arith.constant 0 : index
    %c82 = arith.constant 82 : index
    %17 = vector.load %arg0[%c0_18, %c82] : memref<8x1152xf32, #tpu.memory_space<vmem>>, vector<8x896xf32>
    %c64_19 = arith.constant 64 : index
    %c0_20 = arith.constant 0 : index
    %18 = vector.load %arg7[%c64_19, %c0_20] : memref<392x896xf32, #tpu.memory_space<vmem>>, vector<8x896xf32>
    tpu.vector_store %arg7[%c64_19, %c0_20], %17 {strides = array<i32>} : memref<392x896xf32, #tpu.memory_space<vmem>>, vector<8x896xf32>,
    %c0_21 = arith.constant 0 : index
    %c83 = arith.constant 83 : index
    %19 = vector.load %arg0[%c0_21, %c83] : memref<8x1152xf32, #tpu.memory_space<vmem>>, vector<8x896xf32>
    %c72 = arith.constant 72 : index
    %c0_22 = arith.constant 0 : index
    %20 = vector.load %arg7[%c72, %c0_22] : memref<392x896xf32, #tpu.memory_space<vmem>>, vector<8x896xf32>
    tpu.vector_store %arg7[%c72, %c0_22], %19 {strides = array<i32>} : memref<392x896xf32, #tpu.memory_space<vmem>>, vector<8x896xf32>,
    %c0_23 = arith.constant 0 : index
    %c84 = arith.constant 84 : index
    %21 = vector.load %arg0[%c0_23, %c84] : memref<8x1152xf32, #tpu.memory_space<vmem>>, vector<8x896xf32>
    %c80 = arith.constant 80 : index
    %c0_24 = arith.constant 0 : index
    %22 = vector.load %arg7[%c80, %c0_24] : memref<392x896xf32, #tpu.memory_space<vmem>>, vector<8x896xf32>
    tpu.vector_store %arg7[%c80, %c0_24], %21 {strides = array<i32>} : memref<392x896xf32, #tpu.memory_space<vmem>>, vector<8x896xf32>,
    %c0_25 = arith.constant 0 : index
    %c85 = arith.constant 85 : index
    %23 = vector.load %arg0[%c0_25, %c85] : memref<8x1152xf32, #tpu.memory_space<vmem>>, vector<8x896xf32>
    %c88 = arith.constant 88 : index
    %c0_26 = arith.constant 0 : index
    %24 = vector.load %arg7[%c88, %c0_26] : memref<392x896xf32, #tpu.memory_space<vmem>>, vector<8x896xf32>
    tpu.vector_store %arg7[%c88, %c0_26], %23 {strides = array<i32>} : memref<392x896xf32, #tpu.memory_space<vmem>>, vector<8x896xf32>,
    %c0_27 = arith.constant 0 : index
    %c86 = arith.constant 86 : index
    %25 = vector.load %arg0[%c0_27, %c86] : memref<8x1152xf32, #tpu.memory_space<vmem>>, vector<8x896xf32>
    %c96 = arith.constant 96 : index
    %c0_28 = arith.constant 0 : index
    %26 = vector.load %arg7[%c96, %c0_28] : memref<392x896xf32, #tpu.memory_space<vmem>>, vector<8x896xf32>
    tpu.vector_store %arg7[%c96, %c0_28], %25 {strides = array<i32>} : memref<392x896xf32, #tpu.memory_space<vmem>>, vector<8x896xf32>,
    %c0_29 = arith.constant 0 : index
    %c87 = arith.constant 87 : index
    %27 = vector.load %arg0[%c0_29, %c87] : memref<8x1152xf32, #tpu.memory_space<vmem>>, vector<8x896xf32>
    %c104 = arith.constant 104 : index
    %c0_30 = arith.constant 0 : index
    %28 = vector.load %arg7[%c104, %c0_30] : memref<392x896xf32, #tpu.memory_space<vmem>>, vector<8x896xf32>
    tpu.vector_store %arg7[%c104, %c0_30], %27 {strides = array<i32>} : memref<392x896xf32, #tpu.memory_space<vmem>>, vector<8x896xf32>,
    %c0_31 = arith.constant 0 : index
    %c103 = arith.constant 103 : index
    %29 = vector.load %arg0[%c0_31, %c103] : memref<8x1152xf32, #tpu.memory_space<vmem>>, vector<8x896xf32>
    %c112 = arith.constant 112 : index
    %c0_32 = arith.constant 0 : index
    %30 = vector.load %arg7[%c112, %c0_32] : memref<392x896xf32, #tpu.memory_space<vmem>>, vector<8x896xf32>
    tpu.vector_store %arg7[%c112, %c0_32], %29 {strides = array<i32>} : memref<392x896xf32, #tpu.memory_space<vmem>>, vector<8x896xf32>,
    %c0_33 = arith.constant 0 : index
    %c104_34 = arith.constant 104 : index
    %31 = vector.load %arg0[%c0_33, %c104_34] : memref<8x1152xf32, #tpu.memory_space<vmem>>, vector<8x896xf32>
    %c120 = arith.constant 120 : index
    %c0_35 = arith.constant 0 : index
    %32 = vector.load %arg7[%c120, %c0_35] : memref<392x896xf32, #tpu.memory_space<vmem>>, vector<8x896xf32>
    tpu.vector_store %arg7[%c120, %c0_35], %31 {strides = array<i32>} : memref<392x896xf32, #tpu.memory_space<vmem>>, vector<8x896xf32>,
    %c0_36 = arith.constant 0 : index
    %c105 = arith.constant 105 : index
    %33 = vector.load %arg0[%c0_36, %c105] : memref<8x1152xf32, #tpu.memory_space<vmem>>, vector<8x896xf32>
    %c128 = arith.constant 128 : index
    %c0_37 = arith.constant 0 : index
    %34 = vector.load %arg7[%c128, %c0_37] : memref<392x896xf32, #tpu.memory_space<vmem>>, vector<8x896xf32>
    tpu.vector_store %arg7[%c128, %c0_37], %33 {strides = array<i32>} : memref<392x896xf32, #tpu.memory_space<vmem>>, vector<8x896xf32>,
    %c0_38 = arith.constant 0 : index
    %c106 = arith.constant 106 : index
    %35 = vector.load %arg0[%c0_38, %c106] : memref<8x1152xf32, #tpu.memory_space<vmem>>, vector<8x896xf32>
    %c136 = arith.constant 136 : index
    %c0_39 = arith.constant 0 : index
    %36 = vector.load %arg7[%c136, %c0_39] : memref<392x896xf32, #tpu.memory_space<vmem>>, vector<8x896xf32>
    tpu.vector_store %arg7[%c136, %c0_39], %35 {strides = array<i32>} : memref<392x896xf32, #tpu.memory_space<vmem>>, vector<8x896xf32>,
    %c0_40 = arith.constant 0 : index
    %c107 = arith.constant 107 : index
    %37 = vector.load %arg0[%c0_40, %c107] : memref<8x1152xf32, #tpu.memory_space<vmem>>, vector<8x896xf32>
    %c144 = arith.constant 144 : index
    %c0_41 = arith.constant 0 : index
    %38 = vector.load %arg7[%c144, %c0_41] : memref<392x896xf32, #tpu.memory_space<vmem>>, vector<8x896xf32>
    tpu.vector_store %arg7[%c144, %c0_41], %37 {strides = array<i32>} : memref<392x896xf32, #tpu.memory_space<vmem>>, vector<8x896xf32>,
    %c0_42 = arith.constant 0 : index
    %c108 = arith.constant 108 : index
    %39 = vector.load %arg0[%c0_42, %c108] : memref<8x1152xf32, #tpu.memory_space<vmem>>, vector<8x896xf32>
    %c152 = arith.constant 152 : index
    %c0_43 = arith.constant 0 : index
    %40 = vector.load %arg7[%c152, %c0_43] : memref<392x896xf32, #tpu.memory_space<vmem>>, vector<8x896xf32>
    tpu.vector_store %arg7[%c152, %c0_43], %39 {strides = array<i32>} : memref<392x896xf32, #tpu.memory_space<vmem>>, vector<8x896xf32>,
    %c0_44 = arith.constant 0 : index
    %c109 = arith.constant 109 : index
    %41 = vector.load %arg0[%c0_44, %c109] : memref<8x1152xf32, #tpu.memory_space<vmem>>, vector<8x896xf32>
    %c160 = arith.constant 160 : index
    %c0_45 = arith.constant 0 : index
    %42 = vector.load %arg7[%c160, %c0_45] : memref<392x896xf32, #tpu.memory_space<vmem>>, vector<8x896xf32>
    tpu.vector_store %arg7[%c160, %c0_45], %41 {strides = array<i32>} : memref<392x896xf32, #tpu.memory_space<vmem>>, vector<8x896xf32>,
    %c0_46 = arith.constant 0 : index
    %c125 = arith.constant 125 : index
    %43 = vector.load %arg0[%c0_46, %c125] : memref<8x1152xf32, #tpu.memory_space<vmem>>, vector<8x896xf32>
    %c168 = arith.constant 168 : index
    %c0_47 = arith.constant 0 : index
    %44 = vector.load %arg7[%c168, %c0_47] : memref<392x896xf32, #tpu.memory_space<vmem>>, vector<8x896xf32>
    tpu.vector_store %arg7[%c168, %c0_47], %43 {strides = array<i32>} : memref<392x896xf32, #tpu.memory_space<vmem>>, vector<8x896xf32>,
    %c0_48 = arith.constant 0 : index
    %c126 = arith.constant 126 : index
    %45 = vector.load %arg0[%c0_48, %c126] : memref<8x1152xf32, #tpu.memory_space<vmem>>, vector<8x896xf32>
    %c176 = arith.constant 176 : index
    %c0_49 = arith.constant 0 : index
    %46 = vector.load %arg7[%c176, %c0_49] : memref<392x896xf32, #tpu.memory_space<vmem>>, vector<8x896xf32>
    tpu.vector_store %arg7[%c176, %c0_49], %45 {strides = array<i32>} : memref<392x896xf32, #tpu.memory_space<vmem>>, vector<8x896xf32>,
    %c0_50 = arith.constant 0 : index
    %c127 = arith.constant 127 : index
    %47 = vector.load %arg0[%c0_50, %c127] : memref<8x1152xf32, #tpu.memory_space<vmem>>, vector<8x896xf32>
    %c184 = arith.constant 184 : index
    %c0_51 = arith.constant 0 : index
    %48 = vector.load %arg7[%c184, %c0_51] : memref<392x896xf32, #tpu.memory_space<vmem>>, vector<8x896xf32>
    tpu.vector_store %arg7[%c184, %c0_51], %47 {strides = array<i32>} : memref<392x896xf32, #tpu.memory_space<vmem>>, vector<8x896xf32>,
    %c0_52 = arith.constant 0 : index
    %c128_53 = arith.constant 128 : index
    %49 = vector.load %arg0[%c0_52, %c128_53] : memref<8x1152xf32, #tpu.memory_space<vmem>>, vector<8x896xf32>
    %c192 = arith.constant 192 : index
    %c0_54 = arith.constant 0 : index
    %50 = vector.load %arg7[%c192, %c0_54] : memref<392x896xf32, #tpu.memory_space<vmem>>, vector<8x896xf32>
    tpu.vector_store %arg7[%c192, %c0_54], %49 {strides = array<i32>} : memref<392x896xf32, #tpu.memory_space<vmem>>, vector<8x896xf32>,
    %c0_55 = arith.constant 0 : index
    %c129 = arith.constant 129 : index
    %51 = vector.load %arg0[%c0_55, %c129] : memref<8x1152xf32, #tpu.memory_space<vmem>>, vector<8x896xf32>
    %c200 = arith.constant 200 : index
    %c0_56 = arith.constant 0 : index
    %52 = vector.load %arg7[%c200, %c0_56] : memref<392x896xf32, #tpu.memory_space<vmem>>, vector<8x896xf32>
    tpu.vector_store %arg7[%c200, %c0_56], %51 {strides = array<i32>} : memref<392x896xf32, #tpu.memory_space<vmem>>, vector<8x896xf32>,
    %c0_57 = arith.constant 0 : index
    %c130 = arith.constant 130 : index
    %53 = vector.load %arg0[%c0_57, %c130] : memref<8x1152xf32, #tpu.memory_space<vmem>>, vector<8x896xf32>
    %c208 = arith.constant 208 : index
    %c0_58 = arith.constant 0 : index
    %54 = vector.load %arg7[%c208, %c0_58] : memref<392x896xf32, #tpu.memory_space<vmem>>, vector<8x896xf32>
    tpu.vector_store %arg7[%c208, %c0_58], %53 {strides = array<i32>} : memref<392x896xf32, #tpu.memory_space<vmem>>, vector<8x896xf32>,
    %c0_59 = arith.constant 0 : index
    %c131 = arith.constant 131 : index
    %55 = vector.load %arg0[%c0_59, %c131] : memref<8x1152xf32, #tpu.memory_space<vmem>>, vector<8x896xf32>
    %c216 = arith.constant 216 : index
    %c0_60 = arith.constant 0 : index
    %56 = vector.load %arg7[%c216, %c0_60] : memref<392x896xf32, #tpu.memory_space<vmem>>, vector<8x896xf32>
    tpu.vector_store %arg7[%c216, %c0_60], %55 {strides = array<i32>} : memref<392x896xf32, #tpu.memory_space<vmem>>, vector<8x896xf32>,
    %c0_61 = arith.constant 0 : index
    %c147 = arith.constant 147 : index
    %57 = vector.load %arg0[%c0_61, %c147] : memref<8x1152xf32, #tpu.memory_space<vmem>>, vector<8x896xf32>
    %c224 = arith.constant 224 : index
    %c0_62 = arith.constant 0 : index
    %58 = vector.load %arg7[%c224, %c0_62] : memref<392x896xf32, #tpu.memory_space<vmem>>, vector<8x896xf32>
    tpu.vector_store %arg7[%c224, %c0_62], %57 {strides = array<i32>} : memref<392x896xf32, #tpu.memory_space<vmem>>, vector<8x896xf32>,
    %c0_63 = arith.constant 0 : index
    %c148 = arith.constant 148 : index
    %59 = vector.load %arg0[%c0_63, %c148] : memref<8x1152xf32, #tpu.memory_space<vmem>>, vector<8x896xf32>
    %c232 = arith.constant 232 : index
    %c0_64 = arith.constant 0 : index
    %60 = vector.load %arg7[%c232, %c0_64] : memref<392x896xf32, #tpu.memory_space<vmem>>, vector<8x896xf32>
    tpu.vector_store %arg7[%c232, %c0_64], %59 {strides = array<i32>} : memref<392x896xf32, #tpu.memory_space<vmem>>, vector<8x896xf32>,
    %c0_65 = arith.constant 0 : index
    %c149 = arith.constant 149 : index
    %61 = vector.load %arg0[%c0_65, %c149] : memref<8x1152xf32, #tpu.memory_space<vmem>>, vector<8x896xf32>
    %c240 = arith.constant 240 : index
    %c0_66 = arith.constant 0 : index
    %62 = vector.load %arg7[%c240, %c0_66] : memref<392x896xf32, #tpu.memory_space<vmem>>, vector<8x896xf32>
    tpu.vector_store %arg7[%c240, %c0_66], %61 {strides = array<i32>} : memref<392x896xf32, #tpu.memory_space<vmem>>, vector<8x896xf32>,
    %c0_67 = arith.constant 0 : index
    %c150 = arith.constant 150 : index
    %63 = vector.load %arg0[%c0_67, %c150] : memref<8x1152xf32, #tpu.memory_space<vmem>>, vector<8x896xf32>
    %c248 = arith.constant 248 : index
    %c0_68 = arith.constant 0 : index
    %64 = vector.load %arg7[%c248, %c0_68] : memref<392x896xf32, #tpu.memory_space<vmem>>, vector<8x896xf32>
    tpu.vector_store %arg7[%c248, %c0_68], %63 {strides = array<i32>} : memref<392x896xf32, #tpu.memory_space<vmem>>, vector<8x896xf32>,
    %c0_69 = arith.constant 0 : index
    %c151 = arith.constant 151 : index
    %65 = vector.load %arg0[%c0_69, %c151] : memref<8x1152xf32, #tpu.memory_space<vmem>>, vector<8x896xf32>
    %c256 = arith.constant 256 : index
    %c0_70 = arith.constant 0 : index
    %66 = vector.load %arg7[%c256, %c0_70] : memref<392x896xf32, #tpu.memory_space<vmem>>, vector<8x896xf32>
    tpu.vector_store %arg7[%c256, %c0_70], %65 {strides = array<i32>} : memref<392x896xf32, #tpu.memory_space<vmem>>, vector<8x896xf32>,
    %c0_71 = arith.constant 0 : index
    %c152_72 = arith.constant 152 : index
    %67 = vector.load %arg0[%c0_71, %c152_72] : memref<8x1152xf32, #tpu.memory_space<vmem>>, vector<8x896xf32>
    %c264 = arith.constant 264 : index
    %c0_73 = arith.constant 0 : index
    %68 = vector.load %arg7[%c264, %c0_73] : memref<392x896xf32, #tpu.memory_space<vmem>>, vector<8x896xf32>
    tpu.vector_store %arg7[%c264, %c0_73], %67 {strides = array<i32>} : memref<392x896xf32, #tpu.memory_space<vmem>>, vector<8x896xf32>,
    %c0_74 = arith.constant 0 : index
    %c153 = arith.constant 153 : index
    %69 = vector.load %arg0[%c0_74, %c153] : memref<8x1152xf32, #tpu.memory_space<vmem>>, vector<8x896xf32>
    %c272 = arith.constant 272 : index
    %c0_75 = arith.constant 0 : index
    %70 = vector.load %arg7[%c272, %c0_75] : memref<392x896xf32, #tpu.memory_space<vmem>>, vector<8x896xf32>
    tpu.vector_store %arg7[%c272, %c0_75], %69 {strides = array<i32>} : memref<392x896xf32, #tpu.memory_space<vmem>>, vector<8x896xf32>,
    %c0_76 = arith.constant 0 : index
    %c169 = arith.constant 169 : index
    %71 = vector.load %arg0[%c0_76, %c169] : memref<8x1152xf32, #tpu.memory_space<vmem>>, vector<8x896xf32>
    %c280 = arith.constant 280 : index
    %c0_77 = arith.constant 0 : index
    %72 = vector.load %arg7[%c280, %c0_77] : memref<392x896xf32, #tpu.memory_space<vmem>>, vector<8x896xf32>
    tpu.vector_store %arg7[%c280, %c0_77], %71 {strides = array<i32>} : memref<392x896xf32, #tpu.memory_space<vmem>>, vector<8x896xf32>,
    %c0_78 = arith.constant 0 : index
    %c170 = arith.constant 170 : index
    %73 = vector.load %arg0[%c0_78, %c170] : memref<8x1152xf32, #tpu.memory_space<vmem>>, vector<8x896xf32>
    %c288 = arith.constant 288 : index
    %c0_79 = arith.constant 0 : index
    %74 = vector.load %arg7[%c288, %c0_79] : memref<392x896xf32, #tpu.memory_space<vmem>>, vector<8x896xf32>
    tpu.vector_store %arg7[%c288, %c0_79], %73 {strides = array<i32>} : memref<392x896xf32, #tpu.memory_space<vmem>>, vector<8x896xf32>,
    %c0_80 = arith.constant 0 : index
    %c171 = arith.constant 171 : index
    %75 = vector.load %arg0[%c0_80, %c171] : memref<8x1152xf32, #tpu.memory_space<vmem>>, vector<8x896xf32>
    %c296 = arith.constant 296 : index
    %c0_81 = arith.constant 0 : index
    %76 = vector.load %arg7[%c296, %c0_81] : memref<392x896xf32, #tpu.memory_space<vmem>>, vector<8x896xf32>
    tpu.vector_store %arg7[%c296, %c0_81], %75 {strides = array<i32>} : memref<392x896xf32, #tpu.memory_space<vmem>>, vector<8x896xf32>,
    %c0_82 = arith.constant 0 : index
    %c172 = arith.constant 172 : index
    %77 = vector.load %arg0[%c0_82, %c172] : memref<8x1152xf32, #tpu.memory_space<vmem>>, vector<8x896xf32>
    %c304 = arith.constant 304 : index
    %c0_83 = arith.constant 0 : index
    %78 = vector.load %arg7[%c304, %c0_83] : memref<392x896xf32, #tpu.memory_space<vmem>>, vector<8x896xf32>
    tpu.vector_store %arg7[%c304, %c0_83], %77 {strides = array<i32>} : memref<392x896xf32, #tpu.memory_space<vmem>>, vector<8x896xf32>,
    %c0_84 = arith.constant 0 : index
    %c173 = arith.constant 173 : index
    %79 = vector.load %arg0[%c0_84, %c173] : memref<8x1152xf32, #tpu.memory_space<vmem>>, vector<8x896xf32>
    %c312 = arith.constant 312 : index
    %c0_85 = arith.constant 0 : index
    %80 = vector.load %arg7[%c312, %c0_85] : memref<392x896xf32, #tpu.memory_space<vmem>>, vector<8x896xf32>
    tpu.vector_store %arg7[%c312, %c0_85], %79 {strides = array<i32>} : memref<392x896xf32, #tpu.memory_space<vmem>>, vector<8x896xf32>,
    %c0_86 = arith.constant 0 : index
    %c174 = arith.constant 174 : index
    %81 = vector.load %arg0[%c0_86, %c174] : memref<8x1152xf32, #tpu.memory_space<vmem>>, vector<8x896xf32>
    %c320 = arith.constant 320 : index
    %c0_87 = arith.constant 0 : index
    %82 = vector.load %arg7[%c320, %c0_87] : memref<392x896xf32, #tpu.memory_space<vmem>>, vector<8x896xf32>
    tpu.vector_store %arg7[%c320, %c0_87], %81 {strides = array<i32>} : memref<392x896xf32, #tpu.memory_space<vmem>>, vector<8x896xf32>,
    %c0_88 = arith.constant 0 : index
    %c175 = arith.constant 175 : index
    %83 = vector.load %arg0[%c0_88, %c175] : memref<8x1152xf32, #tpu.memory_space<vmem>>, vector<8x896xf32>
    %c328 = arith.constant 328 : index
    %c0_89 = arith.constant 0 : index
    %84 = vector.load %arg7[%c328, %c0_89] : memref<392x896xf32, #tpu.memory_space<vmem>>, vector<8x896xf32>
    tpu.vector_store %arg7[%c328, %c0_89], %83 {strides = array<i32>} : memref<392x896xf32, #tpu.memory_space<vmem>>, vector<8x896xf32>,
    %c0_90 = arith.constant 0 : index
    %c191 = arith.constant 191 : index
    %85 = vector.load %arg0[%c0_90, %c191] : memref<8x1152xf32, #tpu.memory_space<vmem>>, vector<8x896xf32>
    %c336 = arith.constant 336 : index
    %c0_91 = arith.constant 0 : index
    %86 = vector.load %arg7[%c336, %c0_91] : memref<392x896xf32, #tpu.memory_space<vmem>>, vector<8x896xf32>
    tpu.vector_store %arg7[%c336, %c0_91], %85 {strides = array<i32>} : memref<392x896xf32, #tpu.memory_space<vmem>>, vector<8x896xf32>,
    %c0_92 = arith.constant 0 : index
    %c192_93 = arith.constant 192 : index
    %87 = vector.load %arg0[%c0_92, %c192_93] : memref<8x1152xf32, #tpu.memory_space<vmem>>, vector<8x896xf32>
    %c344 = arith.constant 344 : index
    %c0_94 = arith.constant 0 : index
    %88 = vector.load %arg7[%c344, %c0_94] : memref<392x896xf32, #tpu.memory_space<vmem>>, vector<8x896xf32>
    tpu.vector_store %arg7[%c344, %c0_94], %87 {strides = array<i32>} : memref<392x896xf32, #tpu.memory_space<vmem>>, vector<8x896xf32>,
    %c0_95 = arith.constant 0 : index
    %c193 = arith.constant 193 : index
    %89 = vector.load %arg0[%c0_95, %c193] : memref<8x1152xf32, #tpu.memory_space<vmem>>, vector<8x896xf32>
    %c352 = arith.constant 352 : index
    %c0_96 = arith.constant 0 : index
    %90 = vector.load %arg7[%c352, %c0_96] : memref<392x896xf32, #tpu.memory_space<vmem>>, vector<8x896xf32>
    tpu.vector_store %arg7[%c352, %c0_96], %89 {strides = array<i32>} : memref<392x896xf32, #tpu.memory_space<vmem>>, vector<8x896xf32>,
    %c0_97 = arith.constant 0 : index
    %c194 = arith.constant 194 : index
    %91 = vector.load %arg0[%c0_97, %c194] : memref<8x1152xf32, #tpu.memory_space<vmem>>, vector<8x896xf32>
    %c360 = arith.constant 360 : index
    %c0_98 = arith.constant 0 : index
    %92 = vector.load %arg7[%c360, %c0_98] : memref<392x896xf32, #tpu.memory_space<vmem>>, vector<8x896xf32>
    tpu.vector_store %arg7[%c360, %c0_98], %91 {strides = array<i32>} : memref<392x896xf32, #tpu.memory_space<vmem>>, vector<8x896xf32>,
    %c0_99 = arith.constant 0 : index
    %c195 = arith.constant 195 : index
    %93 = vector.load %arg0[%c0_99, %c195] : memref<8x1152xf32, #tpu.memory_space<vmem>>, vector<8x896xf32>
    %c368 = arith.constant 368 : index
    %c0_100 = arith.constant 0 : index
    %94 = vector.load %arg7[%c368, %c0_100] : memref<392x896xf32, #tpu.memory_space<vmem>>, vector<8x896xf32>
    tpu.vector_store %arg7[%c368, %c0_100], %93 {strides = array<i32>} : memref<392x896xf32, #tpu.memory_space<vmem>>, vector<8x896xf32>,
    %c0_101 = arith.constant 0 : index
    %c196 = arith.constant 196 : index
    %95 = vector.load %arg0[%c0_101, %c196] : memref<8x1152xf32, #tpu.memory_space<vmem>>, vector<8x896xf32>
    %c376 = arith.constant 376 : index
    %c0_102 = arith.constant 0 : index
    %96 = vector.load %arg7[%c376, %c0_102] : memref<392x896xf32, #tpu.memory_space<vmem>>, vector<8x896xf32>
    tpu.vector_store %arg7[%c376, %c0_102], %95 {strides = array<i32>} : memref<392x896xf32, #tpu.memory_space<vmem>>, vector<8x896xf32>,
    %c0_103 = arith.constant 0 : index
    %c197 = arith.constant 197 : index
    %97 = vector.load %arg0[%c0_103, %c197] : memref<8x1152xf32, #tpu.memory_space<vmem>>, vector<8x896xf32>
    %c384 = arith.constant 384 : index
    %c0_104 = arith.constant 0 : index
    %98 = vector.load %arg7[%c384, %c0_104] : memref<392x896xf32, #tpu.memory_space<vmem>>, vector<8x896xf32>
    tpu.vector_store %arg7[%c384, %c0_104], %97 {strides = array<i32>} : memref<392x896xf32, #tpu.memory_space<vmem>>, vector<8x896xf32>,
    %c0_105 = arith.constant 0 : index
    %c0_106 = arith.constant 0 : index
    %99 = vector.load %arg2[%c0_105, %c0_106] : memref<8x392xf32, #tpu.memory_space<vmem>>, vector<8x392xf32>
    %c0_107 = arith.constant 0 : index
    %c0_108 = arith.constant 0 : index
    %100 = vector.load %arg7[%c0_107, %c0_108] : memref<392x896xf32, #tpu.memory_space<vmem>>, vector<392x896xf32>
    %cst = arith.constant dense<0.000000e+00> : vector<8x896xf32>
    %101 = tpu.matmul %99, %100, %cst {dimension_numbers = #tpu.dot_dimension_numbers<[1], [0], [0], [1], [0, 0, 1, 1], [], []>} : vector<8x392xf32>, vector<392x896xf32>, vector<8x896xf32> -> vector<8x896xf32>
    %c0_109 = arith.constant 0 : index
    %c0_110 = arith.constant 0 : index
    %102 = vector.load %arg5[%c0_109, %c0_110] : memref<8x8xf32, #tpu.memory_space<vmem>>, vector<8x1xf32>
    %103 = vector.broadcast %102 : vector<8x1xf32> to vector<8x896xf32>
    %104 = arith.addf %101, %103 : vector<8x896xf32>
    %cst_111 = arith.constant 0.000000e+00 : f32
    %105 = vector.broadcast %cst_111 : f32 to vector<8x896xf32>
    %106 = arith.maximumf %104, %105 : vector<8x896xf32>
    %c0_112 = arith.constant 0 : index
    %c1 = arith.constant 1 : index
    %107 = vector.load %arg5[%c0_112, %c1] : memref<8x8xf32, #tpu.memory_space<vmem>>, vector<8x1xf32>
    %108 = vector.broadcast %107 : vector<8x1xf32> to vector<8x896xf32>
    %109 = arith.mulf %106, %108 : vector<8x896xf32>
    %c0_113 = arith.constant 0 : index
    %c2 = arith.constant 2 : index
    %110 = vector.load %arg5[%c0_113, %c2] : memref<8x8xf32, #tpu.memory_space<vmem>>, vector<8x1xf32>
    %111 = vector.broadcast %110 : vector<8x1xf32> to vector<8x896xf32>
    %112 = arith.addf %109, %111 : vector<8x896xf32>
    %113 = vector.broadcast %0 : vector<1x896xf32> to vector<8x896xf32>
    %114 = arith.mulf %112, %113 : vector<8x896xf32>
    %cst_114 = arith.constant 0.000000e+00 : f32
    %115 = vector.broadcast %cst_114 : f32 to vector<8x1152xf32>
    %c0_115 = arith.constant 0 : index
    %c0_116 = arith.constant 0 : index
    %116 = vector.load %arg8[%c0_115, %c0_116] : memref<8x1152xf32, #tpu.memory_space<vmem>>, vector<8x1152xf32>
    tpu.vector_store %arg8[%c0_115, %c0_116], %115 {strides = array<i32>} : memref<8x1152xf32, #tpu.memory_space<vmem>>, vector<8x1152xf32>,
    %c0_117 = arith.constant 0 : index
    %c128_118 = arith.constant 128 : index
    %117 = vector.load %arg8[%c0_117, %c128_118] : memref<8x1152xf32, #tpu.memory_space<vmem>>, vector<8x896xf32>
    tpu.vector_store %arg8[%c0_117, %c128_118], %114 {strides = array<i32>} : memref<8x1152xf32, #tpu.memory_space<vmem>>, vector<8x896xf32>,
    %c0_119 = arith.constant 0 : index
    %c59_120 = arith.constant 59 : index
    %118 = vector.load %arg8[%c0_119, %c59_120] : memref<8x1152xf32, #tpu.memory_space<vmem>>, vector<8x896xf32>
    %c0_121 = arith.constant 0 : index
    %c0_122 = arith.constant 0 : index
    %119 = vector.load %arg7[%c0_121, %c0_122] : memref<392x896xf32, #tpu.memory_space<vmem>>, vector<8x896xf32>
    tpu.vector_store %arg7[%c0_121, %c0_122], %118 {strides = array<i32>} : memref<392x896xf32, #tpu.memory_space<vmem>>, vector<8x896xf32>,
    %c0_123 = arith.constant 0 : index
    %c60_124 = arith.constant 60 : index
    %120 = vector.load %arg8[%c0_123, %c60_124] : memref<8x1152xf32, #tpu.memory_space<vmem>>, vector<8x896xf32>
    %c8_125 = arith.constant 8 : index
    %c0_126 = arith.constant 0 : index
    %121 = vector.load %arg7[%c8_125, %c0_126] : memref<392x896xf32, #tpu.memory_space<vmem>>, vector<8x896xf32>
    tpu.vector_store %arg7[%c8_125, %c0_126], %120 {strides = array<i32>} : memref<392x896xf32, #tpu.memory_space<vmem>>, vector<8x896xf32>,
    %c0_127 = arith.constant 0 : index
    %c61_128 = arith.constant 61 : index
    %122 = vector.load %arg8[%c0_127, %c61_128] : memref<8x1152xf32, #tpu.memory_space<vmem>>, vector<8x896xf32>
    %c16_129 = arith.constant 16 : index
    %c0_130 = arith.constant 0 : index
    %123 = vector.load %arg7[%c16_129, %c0_130] : memref<392x896xf32, #tpu.memory_space<vmem>>, vector<8x896xf32>
    tpu.vector_store %arg7[%c16_129, %c0_130], %122 {strides = array<i32>} : memref<392x896xf32, #tpu.memory_space<vmem>>, vector<8x896xf32>,
    %c0_131 = arith.constant 0 : index
    %c62_132 = arith.constant 62 : index
    %124 = vector.load %arg8[%c0_131, %c62_132] : memref<8x1152xf32, #tpu.memory_space<vmem>>, vector<8x896xf32>
    %c24_133 = arith.constant 24 : index
    %c0_134 = arith.constant 0 : index
    %125 = vector.load %arg7[%c24_133, %c0_134] : memref<392x896xf32, #tpu.memory_space<vmem>>, vector<8x896xf32>
    tpu.vector_store %arg7[%c24_133, %c0_134], %124 {strides = array<i32>} : memref<392x896xf32, #tpu.memory_space<vmem>>, vector<8x896xf32>,
    %c0_135 = arith.constant 0 : index
    %c63_136 = arith.constant 63 : index
    %126 = vector.load %arg8[%c0_135, %c63_136] : memref<8x1152xf32, #tpu.memory_space<vmem>>, vector<8x896xf32>
    %c32_137 = arith.constant 32 : index
    %c0_138 = arith.constant 0 : index
    %127 = vector.load %arg7[%c32_137, %c0_138] : memref<392x896xf32, #tpu.memory_space<vmem>>, vector<8x896xf32>
    tpu.vector_store %arg7[%c32_137, %c0_138], %126 {strides = array<i32>} : memref<392x896xf32, #tpu.memory_space<vmem>>, vector<8x896xf32>,
    %c0_139 = arith.constant 0 : index
    %c64_140 = arith.constant 64 : index
    %128 = vector.load %arg8[%c0_139, %c64_140] : memref<8x1152xf32, #tpu.memory_space<vmem>>, vector<8x896xf32>
    %c40_141 = arith.constant 40 : index
    %c0_142 = arith.constant 0 : index
    %129 = vector.load %arg7[%c40_141, %c0_142] : memref<392x896xf32, #tpu.memory_space<vmem>>, vector<8x896xf32>
    tpu.vector_store %arg7[%c40_141, %c0_142], %128 {strides = array<i32>} : memref<392x896xf32, #tpu.memory_space<vmem>>, vector<8x896xf32>,
    %c0_143 = arith.constant 0 : index
    %c65_144 = arith.constant 65 : index
    %130 = vector.load %arg8[%c0_143, %c65_144] : memref<8x1152xf32, #tpu.memory_space<vmem>>, vector<8x896xf32>
    %c48_145 = arith.constant 48 : index
    %c0_146 = arith.constant 0 : index
    %131 = vector.load %arg7[%c48_145, %c0_146] : memref<392x896xf32, #tpu.memory_space<vmem>>, vector<8x896xf32>
    tpu.vector_store %arg7[%c48_145, %c0_146], %130 {strides = array<i32>} : memref<392x896xf32, #tpu.memory_space<vmem>>, vector<8x896xf32>,
    %c0_147 = arith.constant 0 : index
    %c81_148 = arith.constant 81 : index
    %132 = vector.load %arg8[%c0_147, %c81_148] : memref<8x1152xf32, #tpu.memory_space<vmem>>, vector<8x896xf32>
    %c56_149 = arith.constant 56 : index
    %c0_150 = arith.constant 0 : index
    %133 = vector.load %arg7[%c56_149, %c0_150] : memref<392x896xf32, #tpu.memory_space<vmem>>, vector<8x896xf32>
    tpu.vector_store %arg7[%c56_149, %c0_150], %132 {strides = array<i32>} : memref<392x896xf32, #tpu.memory_space<vmem>>, vector<8x896xf32>,
    %c0_151 = arith.constant 0 : index
    %c82_152 = arith.constant 82 : index
    %134 = vector.load %arg8[%c0_151, %c82_152] : memref<8x1152xf32, #tpu.memory_space<vmem>>, vector<8x896xf32>
    %c64_153 = arith.constant 64 : index
    %c0_154 = arith.constant 0 : index
    %135 = vector.load %arg7[%c64_153, %c0_154] : memref<392x896xf32, #tpu.memory_space<vmem>>, vector<8x896xf32>
    tpu.vector_store %arg7[%c64_153, %c0_154], %134 {strides = array<i32>} : memref<392x896xf32, #tpu.memory_space<vmem>>, vector<8x896xf32>,
    %c0_155 = arith.constant 0 : index
    %c83_156 = arith.constant 83 : index
    %136 = vector.load %arg8[%c0_155, %c83_156] : memref<8x1152xf32, #tpu.memory_space<vmem>>, vector<8x896xf32>
    %c72_157 = arith.constant 72 : index
    %c0_158 = arith.constant 0 : index
    %137 = vector.load %arg7[%c72_157, %c0_158] : memref<392x896xf32, #tpu.memory_space<vmem>>, vector<8x896xf32>
    tpu.vector_store %arg7[%c72_157, %c0_158], %136 {strides = array<i32>} : memref<392x896xf32, #tpu.memory_space<vmem>>, vector<8x896xf32>,
    %c0_159 = arith.constant 0 : index
    %c84_160 = arith.constant 84 : index
    %138 = vector.load %arg8[%c0_159, %c84_160] : memref<8x1152xf32, #tpu.memory_space<vmem>>, vector<8x896xf32>
    %c80_161 = arith.constant 80 : index
    %c0_162 = arith.constant 0 : index
    %139 = vector.load %arg7[%c80_161, %c0_162] : memref<392x896xf32, #tpu.memory_space<vmem>>, vector<8x896xf32>
    tpu.vector_store %arg7[%c80_161, %c0_162], %138 {strides = array<i32>} : memref<392x896xf32, #tpu.memory_space<vmem>>, vector<8x896xf32>,
    %c0_163 = arith.constant 0 : index
    %c85_164 = arith.constant 85 : index
    %140 = vector.load %arg8[%c0_163, %c85_164] : memref<8x1152xf32, #tpu.memory_space<vmem>>, vector<8x896xf32>
    %c88_165 = arith.constant 88 : index
    %c0_166 = arith.constant 0 : index
    %141 = vector.load %arg7[%c88_165, %c0_166] : memref<392x896xf32, #tpu.memory_space<vmem>>, vector<8x896xf32>
    tpu.vector_store %arg7[%c88_165, %c0_166], %140 {strides = array<i32>} : memref<392x896xf32, #tpu.memory_space<vmem>>, vector<8x896xf32>,
    %c0_167 = arith.constant 0 : index
    %c86_168 = arith.constant 86 : index
    %142 = vector.load %arg8[%c0_167, %c86_168] : memref<8x1152xf32, #tpu.memory_space<vmem>>, vector<8x896xf32>
    %c96_169 = arith.constant 96 : index
    %c0_170 = arith.constant 0 : index
    %143 = vector.load %arg7[%c96_169, %c0_170] : memref<392x896xf32, #tpu.memory_space<vmem>>, vector<8x896xf32>
    tpu.vector_store %arg7[%c96_169, %c0_170], %142 {strides = array<i32>} : memref<392x896xf32, #tpu.memory_space<vmem>>, vector<8x896xf32>,
    %c0_171 = arith.constant 0 : index
    %c87_172 = arith.constant 87 : index
    %144 = vector.load %arg8[%c0_171, %c87_172] : memref<8x1152xf32, #tpu.memory_space<vmem>>, vector<8x896xf32>
    %c104_173 = arith.constant 104 : index
    %c0_174 = arith.constant 0 : index
    %145 = vector.load %arg7[%c104_173, %c0_174] : memref<392x896xf32, #tpu.memory_space<vmem>>, vector<8x896xf32>
    tpu.vector_store %arg7[%c104_173, %c0_174], %144 {strides = array<i32>} : memref<392x896xf32, #tpu.memory_space<vmem>>, vector<8x896xf32>,
    %c0_175 = arith.constant 0 : index
    %c103_176 = arith.constant 103 : index
    %146 = vector.load %arg8[%c0_175, %c103_176] : memref<8x1152xf32, #tpu.memory_space<vmem>>, vector<8x896xf32>
    %c112_177 = arith.constant 112 : index
    %c0_178 = arith.constant 0 : index
    %147 = vector.load %arg7[%c112_177, %c0_178] : memref<392x896xf32, #tpu.memory_space<vmem>>, vector<8x896xf32>
    tpu.vector_store %arg7[%c112_177, %c0_178], %146 {strides = array<i32>} : memref<392x896xf32, #tpu.memory_space<vmem>>, vector<8x896xf32>,
    %c0_179 = arith.constant 0 : index
    %c104_180 = arith.constant 104 : index
    %148 = vector.load %arg8[%c0_179, %c104_180] : memref<8x1152xf32, #tpu.memory_space<vmem>>, vector<8x896xf32>
    %c120_181 = arith.constant 120 : index
    %c0_182 = arith.constant 0 : index
    %149 = vector.load %arg7[%c120_181, %c0_182] : memref<392x896xf32, #tpu.memory_space<vmem>>, vector<8x896xf32>
    tpu.vector_store %arg7[%c120_181, %c0_182], %148 {strides = array<i32>} : memref<392x896xf32, #tpu.memory_space<vmem>>, vector<8x896xf32>,
    %c0_183 = arith.constant 0 : index
    %c105_184 = arith.constant 105 : index
    %150 = vector.load %arg8[%c0_183, %c105_184] : memref<8x1152xf32, #tpu.memory_space<vmem>>, vector<8x896xf32>
    %c128_185 = arith.constant 128 : index
    %c0_186 = arith.constant 0 : index
    %151 = vector.load %arg7[%c128_185, %c0_186] : memref<392x896xf32, #tpu.memory_space<vmem>>, vector<8x896xf32>
    tpu.vector_store %arg7[%c128_185, %c0_186], %150 {strides = array<i32>} : memref<392x896xf32, #tpu.memory_space<vmem>>, vector<8x896xf32>,
    %c0_187 = arith.constant 0 : index
    %c106_188 = arith.constant 106 : index
    %152 = vector.load %arg8[%c0_187, %c106_188] : memref<8x1152xf32, #tpu.memory_space<vmem>>, vector<8x896xf32>
    %c136_189 = arith.constant 136 : index
    %c0_190 = arith.constant 0 : index
    %153 = vector.load %arg7[%c136_189, %c0_190] : memref<392x896xf32, #tpu.memory_space<vmem>>, vector<8x896xf32>
    tpu.vector_store %arg7[%c136_189, %c0_190], %152 {strides = array<i32>} : memref<392x896xf32, #tpu.memory_space<vmem>>, vector<8x896xf32>,
    %c0_191 = arith.constant 0 : index
    %c107_192 = arith.constant 107 : index
    %154 = vector.load %arg8[%c0_191, %c107_192] : memref<8x1152xf32, #tpu.memory_space<vmem>>, vector<8x896xf32>
    %c144_193 = arith.constant 144 : index
    %c0_194 = arith.constant 0 : index
    %155 = vector.load %arg7[%c144_193, %c0_194] : memref<392x896xf32, #tpu.memory_space<vmem>>, vector<8x896xf32>
    tpu.vector_store %arg7[%c144_193, %c0_194], %154 {strides = array<i32>} : memref<392x896xf32, #tpu.memory_space<vmem>>, vector<8x896xf32>,
    %c0_195 = arith.constant 0 : index
    %c108_196 = arith.constant 108 : index
    %156 = vector.load %arg8[%c0_195, %c108_196] : memref<8x1152xf32, #tpu.memory_space<vmem>>, vector<8x896xf32>
    %c152_197 = arith.constant 152 : index
    %c0_198 = arith.constant 0 : index
    %157 = vector.load %arg7[%c152_197, %c0_198] : memref<392x896xf32, #tpu.memory_space<vmem>>, vector<8x896xf32>
    tpu.vector_store %arg7[%c152_197, %c0_198], %156 {strides = array<i32>} : memref<392x896xf32, #tpu.memory_space<vmem>>, vector<8x896xf32>,
    %c0_199 = arith.constant 0 : index
    %c109_200 = arith.constant 109 : index
    %158 = vector.load %arg8[%c0_199, %c109_200] : memref<8x1152xf32, #tpu.memory_space<vmem>>, vector<8x896xf32>
    %c160_201 = arith.constant 160 : index
    %c0_202 = arith.constant 0 : index
    %159 = vector.load %arg7[%c160_201, %c0_202] : memref<392x896xf32, #tpu.memory_space<vmem>>, vector<8x896xf32>
    tpu.vector_store %arg7[%c160_201, %c0_202], %158 {strides = array<i32>} : memref<392x896xf32, #tpu.memory_space<vmem>>, vector<8x896xf32>,
    %c0_203 = arith.constant 0 : index
    %c125_204 = arith.constant 125 : index
    %160 = vector.load %arg8[%c0_203, %c125_204] : memref<8x1152xf32, #tpu.memory_space<vmem>>, vector<8x896xf32>
    %c168_205 = arith.constant 168 : index
    %c0_206 = arith.constant 0 : index
    %161 = vector.load %arg7[%c168_205, %c0_206] : memref<392x896xf32, #tpu.memory_space<vmem>>, vector<8x896xf32>
    tpu.vector_store %arg7[%c168_205, %c0_206], %160 {strides = array<i32>} : memref<392x896xf32, #tpu.memory_space<vmem>>, vector<8x896xf32>,
    %c0_207 = arith.constant 0 : index
    %c126_208 = arith.constant 126 : index
    %162 = vector.load %arg8[%c0_207, %c126_208] : memref<8x1152xf32, #tpu.memory_space<vmem>>, vector<8x896xf32>
    %c176_209 = arith.constant 176 : index
    %c0_210 = arith.constant 0 : index
    %163 = vector.load %arg7[%c176_209, %c0_210] : memref<392x896xf32, #tpu.memory_space<vmem>>, vector<8x896xf32>
    tpu.vector_store %arg7[%c176_209, %c0_210], %162 {strides = array<i32>} : memref<392x896xf32, #tpu.memory_space<vmem>>, vector<8x896xf32>,
    %c0_211 = arith.constant 0 : index
    %c127_212 = arith.constant 127 : index
    %164 = vector.load %arg8[%c0_211, %c127_212] : memref<8x1152xf32, #tpu.memory_space<vmem>>, vector<8x896xf32>
    %c184_213 = arith.constant 184 : index
    %c0_214 = arith.constant 0 : index
    %165 = vector.load %arg7[%c184_213, %c0_214] : memref<392x896xf32, #tpu.memory_space<vmem>>, vector<8x896xf32>
    tpu.vector_store %arg7[%c184_213, %c0_214], %164 {strides = array<i32>} : memref<392x896xf32, #tpu.memory_space<vmem>>, vector<8x896xf32>,
    %c0_215 = arith.constant 0 : index
    %c128_216 = arith.constant 128 : index
    %166 = vector.load %arg8[%c0_215, %c128_216] : memref<8x1152xf32, #tpu.memory_space<vmem>>, vector<8x896xf32>
    %c192_217 = arith.constant 192 : index
    %c0_218 = arith.constant 0 : index
    %167 = vector.load %arg7[%c192_217, %c0_218] : memref<392x896xf32, #tpu.memory_space<vmem>>, vector<8x896xf32>
    tpu.vector_store %arg7[%c192_217, %c0_218], %166 {strides = array<i32>} : memref<392x896xf32, #tpu.memory_space<vmem>>, vector<8x896xf32>,
    %c0_219 = arith.constant 0 : index
    %c129_220 = arith.constant 129 : index
    %168 = vector.load %arg8[%c0_219, %c129_220] : memref<8x1152xf32, #tpu.memory_space<vmem>>, vector<8x896xf32>
    %c200_221 = arith.constant 200 : index
    %c0_222 = arith.constant 0 : index
    %169 = vector.load %arg7[%c200_221, %c0_222] : memref<392x896xf32, #tpu.memory_space<vmem>>, vector<8x896xf32>
    tpu.vector_store %arg7[%c200_221, %c0_222], %168 {strides = array<i32>} : memref<392x896xf32, #tpu.memory_space<vmem>>, vector<8x896xf32>,
    %c0_223 = arith.constant 0 : index
    %c130_224 = arith.constant 130 : index
    %170 = vector.load %arg8[%c0_223, %c130_224] : memref<8x1152xf32, #tpu.memory_space<vmem>>, vector<8x896xf32>
    %c208_225 = arith.constant 208 : index
    %c0_226 = arith.constant 0 : index
    %171 = vector.load %arg7[%c208_225, %c0_226] : memref<392x896xf32, #tpu.memory_space<vmem>>, vector<8x896xf32>
    tpu.vector_store %arg7[%c208_225, %c0_226], %170 {strides = array<i32>} : memref<392x896xf32, #tpu.memory_space<vmem>>, vector<8x896xf32>,
    %c0_227 = arith.constant 0 : index
    %c131_228 = arith.constant 131 : index
    %172 = vector.load %arg8[%c0_227, %c131_228] : memref<8x1152xf32, #tpu.memory_space<vmem>>, vector<8x896xf32>
    %c216_229 = arith.constant 216 : index
    %c0_230 = arith.constant 0 : index
    %173 = vector.load %arg7[%c216_229, %c0_230] : memref<392x896xf32, #tpu.memory_space<vmem>>, vector<8x896xf32>
    tpu.vector_store %arg7[%c216_229, %c0_230], %172 {strides = array<i32>} : memref<392x896xf32, #tpu.memory_space<vmem>>, vector<8x896xf32>,
    %c0_231 = arith.constant 0 : index
    %c147_232 = arith.constant 147 : index
    %174 = vector.load %arg8[%c0_231, %c147_232] : memref<8x1152xf32, #tpu.memory_space<vmem>>, vector<8x896xf32>
    %c224_233 = arith.constant 224 : index
    %c0_234 = arith.constant 0 : index
    %175 = vector.load %arg7[%c224_233, %c0_234] : memref<392x896xf32, #tpu.memory_space<vmem>>, vector<8x896xf32>
    tpu.vector_store %arg7[%c224_233, %c0_234], %174 {strides = array<i32>} : memref<392x896xf32, #tpu.memory_space<vmem>>, vector<8x896xf32>,
    %c0_235 = arith.constant 0 : index
    %c148_236 = arith.constant 148 : index
    %176 = vector.load %arg8[%c0_235, %c148_236] : memref<8x1152xf32, #tpu.memory_space<vmem>>, vector<8x896xf32>
    %c232_237 = arith.constant 232 : index
    %c0_238 = arith.constant 0 : index
    %177 = vector.load %arg7[%c232_237, %c0_238] : memref<392x896xf32, #tpu.memory_space<vmem>>, vector<8x896xf32>
    tpu.vector_store %arg7[%c232_237, %c0_238], %176 {strides = array<i32>} : memref<392x896xf32, #tpu.memory_space<vmem>>, vector<8x896xf32>,
    %c0_239 = arith.constant 0 : index
    %c149_240 = arith.constant 149 : index
    %178 = vector.load %arg8[%c0_239, %c149_240] : memref<8x1152xf32, #tpu.memory_space<vmem>>, vector<8x896xf32>
    %c240_241 = arith.constant 240 : index
    %c0_242 = arith.constant 0 : index
    %179 = vector.load %arg7[%c240_241, %c0_242] : memref<392x896xf32, #tpu.memory_space<vmem>>, vector<8x896xf32>
    tpu.vector_store %arg7[%c240_241, %c0_242], %178 {strides = array<i32>} : memref<392x896xf32, #tpu.memory_space<vmem>>, vector<8x896xf32>,
    %c0_243 = arith.constant 0 : index
    %c150_244 = arith.constant 150 : index
    %180 = vector.load %arg8[%c0_243, %c150_244] : memref<8x1152xf32, #tpu.memory_space<vmem>>, vector<8x896xf32>
    %c248_245 = arith.constant 248 : index
    %c0_246 = arith.constant 0 : index
    %181 = vector.load %arg7[%c248_245, %c0_246] : memref<392x896xf32, #tpu.memory_space<vmem>>, vector<8x896xf32>
    tpu.vector_store %arg7[%c248_245, %c0_246], %180 {strides = array<i32>} : memref<392x896xf32, #tpu.memory_space<vmem>>, vector<8x896xf32>,
    %c0_247 = arith.constant 0 : index
    %c151_248 = arith.constant 151 : index
    %182 = vector.load %arg8[%c0_247, %c151_248] : memref<8x1152xf32, #tpu.memory_space<vmem>>, vector<8x896xf32>
    %c256_249 = arith.constant 256 : index
    %c0_250 = arith.constant 0 : index
    %183 = vector.load %arg7[%c256_249, %c0_250] : memref<392x896xf32, #tpu.memory_space<vmem>>, vector<8x896xf32>
    tpu.vector_store %arg7[%c256_249, %c0_250], %182 {strides = array<i32>} : memref<392x896xf32, #tpu.memory_space<vmem>>, vector<8x896xf32>,
    %c0_251 = arith.constant 0 : index
    %c152_252 = arith.constant 152 : index
    %184 = vector.load %arg8[%c0_251, %c152_252] : memref<8x1152xf32, #tpu.memory_space<vmem>>, vector<8x896xf32>
    %c264_253 = arith.constant 264 : index
    %c0_254 = arith.constant 0 : index
    %185 = vector.load %arg7[%c264_253, %c0_254] : memref<392x896xf32, #tpu.memory_space<vmem>>, vector<8x896xf32>
    tpu.vector_store %arg7[%c264_253, %c0_254], %184 {strides = array<i32>} : memref<392x896xf32, #tpu.memory_space<vmem>>, vector<8x896xf32>,
    %c0_255 = arith.constant 0 : index
    %c153_256 = arith.constant 153 : index
    %186 = vector.load %arg8[%c0_255, %c153_256] : memref<8x1152xf32, #tpu.memory_space<vmem>>, vector<8x896xf32>
    %c272_257 = arith.constant 272 : index
    %c0_258 = arith.constant 0 : index
    %187 = vector.load %arg7[%c272_257, %c0_258] : memref<392x896xf32, #tpu.memory_space<vmem>>, vector<8x896xf32>
    tpu.vector_store %arg7[%c272_257, %c0_258], %186 {strides = array<i32>} : memref<392x896xf32, #tpu.memory_space<vmem>>, vector<8x896xf32>,
    %c0_259 = arith.constant 0 : index
    %c169_260 = arith.constant 169 : index
    %188 = vector.load %arg8[%c0_259, %c169_260] : memref<8x1152xf32, #tpu.memory_space<vmem>>, vector<8x896xf32>
    %c280_261 = arith.constant 280 : index
    %c0_262 = arith.constant 0 : index
    %189 = vector.load %arg7[%c280_261, %c0_262] : memref<392x896xf32, #tpu.memory_space<vmem>>, vector<8x896xf32>
    tpu.vector_store %arg7[%c280_261, %c0_262], %188 {strides = array<i32>} : memref<392x896xf32, #tpu.memory_space<vmem>>, vector<8x896xf32>,
    %c0_263 = arith.constant 0 : index
    %c170_264 = arith.constant 170 : index
    %190 = vector.load %arg8[%c0_263, %c170_264] : memref<8x1152xf32, #tpu.memory_space<vmem>>, vector<8x896xf32>
    %c288_265 = arith.constant 288 : index
    %c0_266 = arith.constant 0 : index
    %191 = vector.load %arg7[%c288_265, %c0_266] : memref<392x896xf32, #tpu.memory_space<vmem>>, vector<8x896xf32>
    tpu.vector_store %arg7[%c288_265, %c0_266], %190 {strides = array<i32>} : memref<392x896xf32, #tpu.memory_space<vmem>>, vector<8x896xf32>,
    %c0_267 = arith.constant 0 : index
    %c171_268 = arith.constant 171 : index
    %192 = vector.load %arg8[%c0_267, %c171_268] : memref<8x1152xf32, #tpu.memory_space<vmem>>, vector<8x896xf32>
    %c296_269 = arith.constant 296 : index
    %c0_270 = arith.constant 0 : index
    %193 = vector.load %arg7[%c296_269, %c0_270] : memref<392x896xf32, #tpu.memory_space<vmem>>, vector<8x896xf32>
    tpu.vector_store %arg7[%c296_269, %c0_270], %192 {strides = array<i32>} : memref<392x896xf32, #tpu.memory_space<vmem>>, vector<8x896xf32>,
    %c0_271 = arith.constant 0 : index
    %c172_272 = arith.constant 172 : index
    %194 = vector.load %arg8[%c0_271, %c172_272] : memref<8x1152xf32, #tpu.memory_space<vmem>>, vector<8x896xf32>
    %c304_273 = arith.constant 304 : index
    %c0_274 = arith.constant 0 : index
    %195 = vector.load %arg7[%c304_273, %c0_274] : memref<392x896xf32, #tpu.memory_space<vmem>>, vector<8x896xf32>
    tpu.vector_store %arg7[%c304_273, %c0_274], %194 {strides = array<i32>} : memref<392x896xf32, #tpu.memory_space<vmem>>, vector<8x896xf32>,
    %c0_275 = arith.constant 0 : index
    %c173_276 = arith.constant 173 : index
    %196 = vector.load %arg8[%c0_275, %c173_276] : memref<8x1152xf32, #tpu.memory_space<vmem>>, vector<8x896xf32>
    %c312_277 = arith.constant 312 : index
    %c0_278 = arith.constant 0 : index
    %197 = vector.load %arg7[%c312_277, %c0_278] : memref<392x896xf32, #tpu.memory_space<vmem>>, vector<8x896xf32>
    tpu.vector_store %arg7[%c312_277, %c0_278], %196 {strides = array<i32>} : memref<392x896xf32, #tpu.memory_space<vmem>>, vector<8x896xf32>,
    %c0_279 = arith.constant 0 : index
    %c174_280 = arith.constant 174 : index
    %198 = vector.load %arg8[%c0_279, %c174_280] : memref<8x1152xf32, #tpu.memory_space<vmem>>, vector<8x896xf32>
    %c320_281 = arith.constant 320 : index
    %c0_282 = arith.constant 0 : index
    %199 = vector.load %arg7[%c320_281, %c0_282] : memref<392x896xf32, #tpu.memory_space<vmem>>, vector<8x896xf32>
    tpu.vector_store %arg7[%c320_281, %c0_282], %198 {strides = array<i32>} : memref<392x896xf32, #tpu.memory_space<vmem>>, vector<8x896xf32>,
    %c0_283 = arith.constant 0 : index
    %c175_284 = arith.constant 175 : index
    %200 = vector.load %arg8[%c0_283, %c175_284] : memref<8x1152xf32, #tpu.memory_space<vmem>>, vector<8x896xf32>
    %c328_285 = arith.constant 328 : index
    %c0_286 = arith.constant 0 : index
    %201 = vector.load %arg7[%c328_285, %c0_286] : memref<392x896xf32, #tpu.memory_space<vmem>>, vector<8x896xf32>
    tpu.vector_store %arg7[%c328_285, %c0_286], %200 {strides = array<i32>} : memref<392x896xf32, #tpu.memory_space<vmem>>, vector<8x896xf32>,
    %c0_287 = arith.constant 0 : index
    %c191_288 = arith.constant 191 : index
    %202 = vector.load %arg8[%c0_287, %c191_288] : memref<8x1152xf32, #tpu.memory_space<vmem>>, vector<8x896xf32>
    %c336_289 = arith.constant 336 : index
    %c0_290 = arith.constant 0 : index
    %203 = vector.load %arg7[%c336_289, %c0_290] : memref<392x896xf32, #tpu.memory_space<vmem>>, vector<8x896xf32>
    tpu.vector_store %arg7[%c336_289, %c0_290], %202 {strides = array<i32>} : memref<392x896xf32, #tpu.memory_space<vmem>>, vector<8x896xf32>,
    %c0_291 = arith.constant 0 : index
    %c192_292 = arith.constant 192 : index
    %204 = vector.load %arg8[%c0_291, %c192_292] : memref<8x1152xf32, #tpu.memory_space<vmem>>, vector<8x896xf32>
    %c344_293 = arith.constant 344 : index
    %c0_294 = arith.constant 0 : index
    %205 = vector.load %arg7[%c344_293, %c0_294] : memref<392x896xf32, #tpu.memory_space<vmem>>, vector<8x896xf32>
    tpu.vector_store %arg7[%c344_293, %c0_294], %204 {strides = array<i32>} : memref<392x896xf32, #tpu.memory_space<vmem>>, vector<8x896xf32>,
    %c0_295 = arith.constant 0 : index
    %c193_296 = arith.constant 193 : index
    %206 = vector.load %arg8[%c0_295, %c193_296] : memref<8x1152xf32, #tpu.memory_space<vmem>>, vector<8x896xf32>
    %c352_297 = arith.constant 352 : index
    %c0_298 = arith.constant 0 : index
    %207 = vector.load %arg7[%c352_297, %c0_298] : memref<392x896xf32, #tpu.memory_space<vmem>>, vector<8x896xf32>
    tpu.vector_store %arg7[%c352_297, %c0_298], %206 {strides = array<i32>} : memref<392x896xf32, #tpu.memory_space<vmem>>, vector<8x896xf32>,
    %c0_299 = arith.constant 0 : index
    %c194_300 = arith.constant 194 : index
    %208 = vector.load %arg8[%c0_299, %c194_300] : memref<8x1152xf32, #tpu.memory_space<vmem>>, vector<8x896xf32>
    %c360_301 = arith.constant 360 : index
    %c0_302 = arith.constant 0 : index
    %209 = vector.load %arg7[%c360_301, %c0_302] : memref<392x896xf32, #tpu.memory_space<vmem>>, vector<8x896xf32>
    tpu.vector_store %arg7[%c360_301, %c0_302], %208 {strides = array<i32>} : memref<392x896xf32, #tpu.memory_space<vmem>>, vector<8x896xf32>,
    %c0_303 = arith.constant 0 : index
    %c195_304 = arith.constant 195 : index
    %210 = vector.load %arg8[%c0_303, %c195_304] : memref<8x1152xf32, #tpu.memory_space<vmem>>, vector<8x896xf32>
    %c368_305 = arith.constant 368 : index
    %c0_306 = arith.constant 0 : index
    %211 = vector.load %arg7[%c368_305, %c0_306] : memref<392x896xf32, #tpu.memory_space<vmem>>, vector<8x896xf32>
    tpu.vector_store %arg7[%c368_305, %c0_306], %210 {strides = array<i32>} : memref<392x896xf32, #tpu.memory_space<vmem>>, vector<8x896xf32>,
    %c0_307 = arith.constant 0 : index
    %c196_308 = arith.constant 196 : index
    %212 = vector.load %arg8[%c0_307, %c196_308] : memref<8x1152xf32, #tpu.memory_space<vmem>>, vector<8x896xf32>
    %c376_309 = arith.constant 376 : index
    %c0_310 = arith.constant 0 : index
    %213 = vector.load %arg7[%c376_309, %c0_310] : memref<392x896xf32, #tpu.memory_space<vmem>>, vector<8x896xf32>
    tpu.vector_store %arg7[%c376_309, %c0_310], %212 {strides = array<i32>} : memref<392x896xf32, #tpu.memory_space<vmem>>, vector<8x896xf32>,
    %c0_311 = arith.constant 0 : index
    %c197_312 = arith.constant 197 : index
    %214 = vector.load %arg8[%c0_311, %c197_312] : memref<8x1152xf32, #tpu.memory_space<vmem>>, vector<8x896xf32>
    %c384_313 = arith.constant 384 : index
    %c0_314 = arith.constant 0 : index
    %215 = vector.load %arg7[%c384_313, %c0_314] : memref<392x896xf32, #tpu.memory_space<vmem>>, vector<8x896xf32>
    tpu.vector_store %arg7[%c384_313, %c0_314], %214 {strides = array<i32>} : memref<392x896xf32, #tpu.memory_space<vmem>>, vector<8x896xf32>,
    %c0_315 = arith.constant 0 : index
    %c0_316 = arith.constant 0 : index
    %216 = vector.load %arg3[%c0_315, %c0_316] : memref<8x392xf32, #tpu.memory_space<vmem>>, vector<8x392xf32>
    %c0_317 = arith.constant 0 : index
    %c0_318 = arith.constant 0 : index
    %217 = vector.load %arg7[%c0_317, %c0_318] : memref<392x896xf32, #tpu.memory_space<vmem>>, vector<392x896xf32>
    %cst_319 = arith.constant dense<0.000000e+00> : vector<8x896xf32>
    %218 = tpu.matmul %216, %217, %cst_319 {dimension_numbers = #tpu.dot_dimension_numbers<[1], [0], [0], [1], [0, 0, 1, 1], [], []>} : vector<8x392xf32>, vector<392x896xf32>, vector<8x896xf32> -> vector<8x896xf32>
    %c0_320 = arith.constant 0 : index
    %c3 = arith.constant 3 : index
    %219 = vector.load %arg5[%c0_320, %c3] : memref<8x8xf32, #tpu.memory_space<vmem>>, vector<8x1xf32>
    %220 = vector.broadcast %219 : vector<8x1xf32> to vector<8x896xf32>
    %221 = arith.addf %218, %220 : vector<8x896xf32>
    %cst_321 = arith.constant 0.000000e+00 : f32
    %222 = vector.broadcast %cst_321 : f32 to vector<8x896xf32>
    %223 = arith.maximumf %221, %222 : vector<8x896xf32>
    %c0_322 = arith.constant 0 : index
    %c4 = arith.constant 4 : index
    %224 = vector.load %arg5[%c0_322, %c4] : memref<8x8xf32, #tpu.memory_space<vmem>>, vector<8x1xf32>
    %225 = vector.broadcast %224 : vector<8x1xf32> to vector<8x896xf32>
    %226 = arith.mulf %223, %225 : vector<8x896xf32>
    %c0_323 = arith.constant 0 : index
    %c5 = arith.constant 5 : index
    %227 = vector.load %arg5[%c0_323, %c5] : memref<8x8xf32, #tpu.memory_space<vmem>>, vector<8x1xf32>
    %228 = vector.broadcast %227 : vector<8x1xf32> to vector<8x896xf32>
    %229 = arith.addf %226, %228 : vector<8x896xf32>
    %c0_324 = arith.constant 0 : index
    %c0_325 = arith.constant 0 : index
    %230 = vector.load %arg4[%c0_324, %c0_325] : memref<8x8xf32, #tpu.memory_space<vmem>>, vector<8x8xf32>
    %c0_326 = arith.constant 0 : index
    %c128_327 = arith.constant 128 : index
    %231 = vector.load %arg0[%c0_326, %c128_327] : memref<8x1152xf32, #tpu.memory_space<vmem>>, vector<8x896xf32>
    %cst_328 = arith.constant dense<0.000000e+00> : vector<8x896xf32>
    %232 = tpu.matmul %230, %231, %cst_328 {dimension_numbers = #tpu.dot_dimension_numbers<[1], [0], [0], [1], [0, 0, 1, 1], [], []>} : vector<8x8xf32>, vector<8x896xf32>, vector<8x896xf32> -> vector<8x896xf32>
    %c0_329 = arith.constant 0 : index
    %c6 = arith.constant 6 : index
    %233 = vector.load %arg5[%c0_329, %c6] : memref<8x8xf32, #tpu.memory_space<vmem>>, vector<8x1xf32>
    %234 = vector.broadcast %233 : vector<8x1xf32> to vector<8x896xf32>
    %235 = arith.addf %232, %234 : vector<8x896xf32>
    %236 = arith.addf %229, %235 : vector<8x896xf32>
    %c0_330 = arith.constant 0 : index
    %c0_331 = arith.constant 0 : index
    %237 = vector.load %arg6[%c0_330, %c0_331] : memref<8x896xf32, #tpu.memory_space<vmem>>, vector<8x896xf32>
    tpu.vector_store %arg6[%c0_330, %c0_331], %236 {strides = array<i32>} : memref<8x896xf32, #tpu.memory_space<vmem>>, vector<8x896xf32>,
    return
  }
}

</mosaic_0001>

<llo_original>
// kernel: tpu_custom_call.1
$region0: #{tpu_custom_call.1}
  #allocation0 [shape = 'u32[]', space=smem, size = 0x4, offset = 0x4, fixed_abs, tag = 'smem constant byte address 0x4 - core index']
  #allocation1 [shape = 'u32[144,128]{1,0:T(1,128)}', space=vmem, size = 0x12000, scoped, tag = 'internal scratch']
  #allocation2 [shape = 'f32[392,896]{1,0:T(8,128)}', space=vmem, size = 0x157000, scoped, tag = 'scratch operand']
  #allocation3 [shape = 'f32[8,1152]{1,0:T(8,128)}', space=vmem, size = 0x9000, scoped, tag = 'scratch operand']
  %s0 = inlined_call_operand.hbm [shape: f32[8,1152], index: 0, kind: input, shape index: {}]
  %s1 = inlined_call_operand.hbm [shape: f32[1,896], index: 1, kind: input, shape index: {}]
  %s2 = inlined_call_operand.hbm [shape: f32[8,392], index: 2, kind: input, shape index: {}]
  %s3 = inlined_call_operand.hbm [shape: f32[8,392], index: 3, kind: input, shape index: {}]
  %s4 = inlined_call_operand.vmem [shape: f32[8,8], index: 4, kind: input, shape index: {}]
  %s5 = inlined_call_operand.vmem [shape: f32[8,8], index: 5, kind: input, shape index: {}]
  %s6 = inlined_call_operand.hbm [shape: f32[8,896], index: 6, kind: output, shape index: {}]
  %s7 = sld [smem:[#allocation0]]
  $region50: #{tpu_custom_call.1} parent=0
    _
  %s9 = ssub.s32 1, %s7
  %s10 = scalar_select 0, %s9, %s7
  $region1: #{tpu_custom_call.1} parent=0
    #allocation4 [shape = 'u8[36864]{0}', space=vmem, size = 0x9000, scoped, tag = 'input window, operand 0, single buffered']
    #allocation5 [shape = 's32[1]{0}', space=sflag, size = 0x4, scoped, tag = 'scoped memory for tpu_custom_call.1']
    #allocation6 [shape = 's32[1]{0}', space=sflag, size = 0x4, scoped, tag = 'scoped memory for tpu_custom_call.1']
    #allocation7 [shape = 'u8[3584]{0}', space=vmem, size = 0x1000, scoped, tag = 'input window, operand 1, single buffered']
    #allocation8 [shape = 's32[1]{0}', space=sflag, size = 0x4, scoped, tag = 'scoped memory for tpu_custom_call.1']
    #allocation9 [shape = 'u8[16384]{0}', space=vmem, size = 0x4000, scoped, tag = 'input window, operand 2, single buffered']
    #allocation10 [shape = 'u8[16384]{0}', space=vmem, size = 0x4000, scoped, tag = 'input window, operand 3, single buffered']
    #allocation11 [shape = 's32[1]{0}', space=sflag, size = 0x4, scoped, tag = 'scoped memory for tpu_custom_call.1']
    #allocation12 [shape = 'u8[28672]{0}', space=vmem, size = 0x7000, scoped, tag = 'output window, operand 0, single buffered']
    %11 = vsyncpa [#allocation5], 0
    %12 = vsyncpa [#allocation8], 0
    %13 = vsyncpa [#allocation11], 0
    %14 = vsyncpa [#allocation6], 0
    // Predicated region
    $region2: #{tpu_custom_call.1} parent=1 // pred_check
      _
    $region3: #{tpu_custom_call.1} parent=1 // pred_check_branch
      %16 = sbr.rel (0) target = $region5
    $region4: #{tpu_custom_call.1} parent=1 // pred_region
      %s18 = ssub.s32 1152, 1152
      %19 = vsyncadd [#allocation5], %s18
      %s21 = sshll.u32 [#allocation4], 4
      %s22 = int_to_ptr.vmem [resolvable:$true] %s21
      %24 = dma.hbm_to_vmem [thread:$0]  %s0, 1152, %s22, [#allocation5]
    $region5: #{tpu_custom_call.1} parent=1 // pred_fallthru
      _
    // Predicated region
    $region6: #{tpu_custom_call.1} parent=1 // pred_check
      _
    $region7: #{tpu_custom_call.1} parent=1 // pred_check_branch
      %26 = sbr.rel (0) target = $region9
    $region8: #{tpu_custom_call.1} parent=1 // pred_region
      %s28 = ssub.s32 112, 112
      %29 = vsyncadd [#allocation8], %s28
      %s31 = sshll.u32 [#allocation7], 4
      %s32 = int_to_ptr.vmem [resolvable:$true] %s31
      %34 = dma.hbm_to_vmem [thread:$0]  %s1, 112, %s32, [#allocation8]
    $region9: #{tpu_custom_call.1} parent=1 // pred_fallthru
      _
    // Predicated region
    $region10: #{tpu_custom_call.1} parent=1 // pred_check
      _
    $region11: #{tpu_custom_call.1} parent=1 // pred_check_branch
      %36 = sbr.rel (0) target = $region13
    $region12: #{tpu_custom_call.1} parent=1 // pred_region
      %s38 = ssub.s32 512, 512
      %39 = vsyncadd [#allocation8], %s38
      %s41 = sshll.u32 [#allocation9], 4
      %s42 = int_to_ptr.vmem [resolvable:$true] %s41
      %44 = dma.hbm_to_vmem [thread:$0]  %s2, 512, %s42, [#allocation8]
    $region13: #{tpu_custom_call.1} parent=1 // pred_fallthru
      _
    // Predicated region
    $region14: #{tpu_custom_call.1} parent=1 // pred_check
      _
    $region15: #{tpu_custom_call.1} parent=1 // pred_check_branch
      %46 = sbr.rel (0) target = $region17
    $region16: #{tpu_custom_call.1} parent=1 // pred_region
      %s48 = ssub.s32 512, 512
      %49 = vsyncadd [#allocation11], %s48
      %s51 = sshll.u32 [#allocation10], 4
      %s52 = int_to_ptr.vmem [resolvable:$true] %s51
      %54 = dma.hbm_to_vmem [thread:$0]  %s3, 512, %s52, [#allocation11]
    $region17: #{tpu_custom_call.1} parent=1 // pred_fallthru
      _
    // Predicated region
    $region18: #{tpu_custom_call.1} parent=1 // pred_check
      _
    $region19: #{tpu_custom_call.1} parent=1 // pred_check_branch
      %56 = sbr.rel (0) target = $region21
    $region20: #{tpu_custom_call.1} parent=1 // pred_region
      _
    $region21: #{tpu_custom_call.1} parent=1 // pred_fallthru
      _
    // Predicated region
    $region22: #{tpu_custom_call.1} parent=1 // pred_check
      _
    $region23: #{tpu_custom_call.1} parent=1 // pred_check_branch
      %58 = sbr.rel (0) target = $region25
    $region24: #{tpu_custom_call.1} parent=1 // pred_region
      _
    $region25: #{tpu_custom_call.1} parent=1 // pred_fallthru
      _
    // Predicated region
    $region26: #{tpu_custom_call.1} parent=1 // pred_check
      _
    $region27: #{tpu_custom_call.1} parent=1 // pred_check_branch
      %60 = sbr.rel (0) target = $region29
    $region28: #{tpu_custom_call.1} parent=1 // pred_region
      %61 = dma.done [#allocation5], 1152
    $region29: #{tpu_custom_call.1} parent=1 // pred_fallthru
      _
    // Predicated region
    $region30: #{tpu_custom_call.1} parent=1 // pred_check
      _
    $region31: #{tpu_custom_call.1} parent=1 // pred_check_branch
      %63 = sbr.rel (0) target = $region33
    $region32: #{tpu_custom_call.1} parent=1 // pred_region
      %64 = dma.done [#allocation8], 112
    $region33: #{tpu_custom_call.1} parent=1 // pred_fallthru
      _
    // Predicated region
    $region34: #{tpu_custom_call.1} parent=1 // pred_check
      _
    $region35: #{tpu_custom_call.1} parent=1 // pred_check_branch
      %66 = sbr.rel (0) target = $region37
    $region36: #{tpu_custom_call.1} parent=1 // pred_region
      %67 = dma.done [#allocation8], 512
    $region37: #{tpu_custom_call.1} parent=1 // pred_fallthru
      _
    // Predicated region
    $region38: #{tpu_custom_call.1} parent=1 // pred_check
      _
    $region39: #{tpu_custom_call.1} parent=1 // pred_check_branch
      %69 = sbr.rel (0) target = $region41
    $region40: #{tpu_custom_call.1} parent=1 // pred_region
      %70 = dma.done [#allocation11], 512
    $region41: #{tpu_custom_call.1} parent=1 // pred_fallthru
      _
    %v71 = vld [vmem:[#allocation7] sm:$0xff]
    %v72 = vld [vmem:[#allocation4] sm:$0xff]
    %v73 = vld [vmem:[#allocation4 + $0x8] sm:$0xff]
    %v74 = vld [vmem:[#allocation4 + $0x10] sm:$0xff]
    %v75 = vld [vmem:[#allocation4 + $0x18] sm:$0xff]
    %v76 = vld [vmem:[#allocation4 + $0x20] sm:$0xff]
    %v77 = vld [vmem:[#allocation4 + $0x28] sm:$0xff]
    %v78 = vld [vmem:[#allocation4 + $0x30] sm:$0xff]
    %v79 = vld [vmem:[#allocation4 + $0x38] sm:$0xff]
    %88 = vrot.lane.b32.xlu0 %v72, 69
    %v89 = vpop.permute.xlu0 %88
    %90 = vrot.lane.b32.xlu0 %v73, 69
    %v91 = vpop.permute.xlu0 %90
    %92 = vrot.lane.b32.xlu0 %v74, 69
    %v93 = vpop.permute.xlu0 %92
    %94 = vrot.lane.b32.xlu0 %v75, 69
    %v95 = vpop.permute.xlu0 %94
    %96 = vrot.lane.b32.xlu0 %v76, 69
    %v97 = vpop.permute.xlu0 %96
    %98 = vrot.lane.b32.xlu0 %v77, 69
    %v99 = vpop.permute.xlu0 %98
    %100 = vrot.lane.b32.xlu0 %v78, 69
    %v101 = vpop.permute.xlu0 %100
    %102 = vrot.lane.b32.xlu0 %v79, 69
    %v103 = vpop.permute.xlu0 %102
    %vm104 = vcmask 564224
    %v105 = vsel %vm104, %v89, %v91
    %v106 = vsel %vm104, %v91, %v93
    %v107 = vsel %vm104, %v93, %v95
    %v108 = vsel %vm104, %v95, %v97
    %v109 = vsel %vm104, %v97, %v99
    %v110 = vsel %vm104, %v99, %v101
    %v111 = vsel %vm104, %v101, %v103
    %119 = vst [vmem:[#allocation2] sm:$0xff] %v105
    %120 = vst [vmem:[#allocation2 + $0x8] sm:$0xff] %v106
    %121 = vst [vmem:[#allocation2 + $0x10] sm:$0xff] %v107
    %122 = vst [vmem:[#allocation2 + $0x18] sm:$0xff] %v108
    %123 = vst [vmem:[#allocation2 + $0x20] sm:$0xff] %v109
    %124 = vst [vmem:[#allocation2 + $0x28] sm:$0xff] %v110
    %125 = vst [vmem:[#allocation2 + $0x30] sm:$0xff] %v111
    %v126 = vld [vmem:[#allocation4] sm:$0xff]
    %v127 = vld [vmem:[#allocation4 + $0x8] sm:$0xff]
    %v128 = vld [vmem:[#allocation4 + $0x10] sm:$0xff]
    %v129 = vld [vmem:[#allocation4 + $0x18] sm:$0xff]
    %v130 = vld [vmem:[#allocation4 + $0x20] sm:$0xff]
    %v131 = vld [vmem:[#allocation4 + $0x28] sm:$0xff]
    %v132 = vld [vmem:[#allocation4 + $0x30] sm:$0xff]
    %v133 = vld [vmem:[#allocation4 + $0x38] sm:$0xff]
    %142 = vrot.lane.b32.xlu0 %v126, 68
    %v143 = vpop.permute.xlu0 %142
    %144 = vrot.lane.b32.xlu0 %v127, 68
    %v145 = vpop.permute.xlu0 %144
    %146 = vrot.lane.b32.xlu0 %v128, 68
    %v147 = vpop.permute.xlu0 %146
    %148 = vrot.lane.b32.xlu0 %v129, 68
    %v149 = vpop.permute.xlu0 %148
    %150 = vrot.lane.b32.xlu0 %v130, 68
    %v151 = vpop.permute.xlu0 %150
    %152 = vrot.lane.b32.xlu0 %v131, 68
    %v153 = vpop.permute.xlu0 %152
    %154 = vrot.lane.b32.xlu0 %v132, 68
    %v155 = vpop.permute.xlu0 %154
    %156 = vrot.lane.b32.xlu0 %v133, 68
    %v157 = vpop.permute.xlu0 %156
    %vm158 = vcmask 556032
    %v159 = vsel %vm158, %v143, %v145
    %v160 = vsel %vm158, %v145, %v147
    %v161 = vsel %vm158, %v147, %v149
    %v162 = vsel %vm158, %v149, %v151
    %v163 = vsel %vm158, %v151, %v153
    %v164 = vsel %vm158, %v153, %v155
    %v165 = vsel %vm158, %v155, %v157
    %173 = vst [vmem:[#allocation2 + $0x38] sm:$0xff] %v159
    %174 = vst [vmem:[#allocation2 + $0x40] sm:$0xff] %v160
    %175 = vst [vmem:[#allocation2 + $0x48] sm:$0xff] %v161
    %176 = vst [vmem:[#allocation2 + $0x50] sm:$0xff] %v162
    %177 = vst [vmem:[#allocation2 + $0x58] sm:$0xff] %v163
    %178 = vst [vmem:[#allocation2 + $0x60] sm:$0xff] %v164
    %179 = vst [vmem:[#allocation2 + $0x68] sm:$0xff] %v165
    %v180 = vld [vmem:[#allocation4] sm:$0xff]
    %v181 = vld [vmem:[#allocation4 + $0x8] sm:$0xff]
    %v182 = vld [vmem:[#allocation4 + $0x10] sm:$0xff]
    %v183 = vld [vmem:[#allocation4 + $0x18] sm:$0xff]
    %v184 = vld [vmem:[#allocation4 + $0x20] sm:$0xff]
    %v185 = vld [vmem:[#allocation4 + $0x28] sm:$0xff]
    %v186 = vld [vmem:[#allocation4 + $0x30] sm:$0xff]
    %v187 = vld [vmem:[#allocation4 + $0x38] sm:$0xff]
    %196 = vrot.lane.b32.xlu0 %v180, 67
    %v197 = vpop.permute.xlu0 %196
    %198 = vrot.lane.b32.xlu0 %v181, 67
    %v199 = vpop.permute.xlu0 %198
    %200 = vrot.lane.b32.xlu0 %v182, 67
    %v201 = vpop.permute.xlu0 %200
    %202 = vrot.lane.b32.xlu0 %v183, 67
    %v203 = vpop.permute.xlu0 %202
    %204 = vrot.lane.b32.xlu0 %v184, 67
    %v205 = vpop.permute.xlu0 %204
    %206 = vrot.lane.b32.xlu0 %v185, 67
    %v207 = vpop.permute.xlu0 %206
    %208 = vrot.lane.b32.xlu0 %v186, 67
    %v209 = vpop.permute.xlu0 %208
    %210 = vrot.lane.b32.xlu0 %v187, 67
    %v211 = vpop.permute.xlu0 %210
    %vm212 = vcmask 547840
    %v213 = vsel %vm212, %v197, %v199
    %v214 = vsel %vm212, %v199, %v201
    %v215 = vsel %vm212, %v201, %v203
    %v216 = vsel %vm212, %v203, %v205
    %v217 = vsel %vm212, %v205, %v207
    %v218 = vsel %vm212, %v207, %v209
    %v219 = vsel %vm212, %v209, %v211
    %227 = vst [vmem:[#allocation2 + $0x70] sm:$0xff] %v213
    %228 = vst [vmem:[#allocation2 + $0x78] sm:$0xff] %v214
    %229 = vst [vmem:[#allocation2 + $0x80] sm:$0xff] %v215
    %230 = vst [vmem:[#allocation2 + $0x88] sm:$0xff] %v216
    %231 = vst [vmem:[#allocation2 + $0x90] sm:$0xff] %v217
    %232 = vst [vmem:[#allocation2 + $0x98] sm:$0xff] %v218
    %233 = vst [vmem:[#allocation2 + $0xa0] sm:$0xff] %v219
    %v234 = vld [vmem:[#allocation4] sm:$0xff]
    %v235 = vld [vmem:[#allocation4 + $0x8] sm:$0xff]
    %v236 = vld [vmem:[#allocation4 + $0x10] sm:$0xff]
    %v237 = vld [vmem:[#allocation4 + $0x18] sm:$0xff]
    %v238 = vld [vmem:[#allocation4 + $0x20] sm:$0xff]
    %v239 = vld [vmem:[#allocation4 + $0x28] sm:$0xff]
    %v240 = vld [vmem:[#allocation4 + $0x30] sm:$0xff]
    %v241 = vld [vmem:[#allocation4 + $0x38] sm:$0xff]
    %250 = vrot.lane.b32.xlu0 %v234, 66
    %v251 = vpop.permute.xlu0 %250
    %252 = vrot.lane.b32.xlu0 %v235, 66
    %v253 = vpop.permute.xlu0 %252
    %254 = vrot.lane.b32.xlu0 %v236, 66
    %v255 = vpop.permute.xlu0 %254
    %256 = vrot.lane.b32.xlu0 %v237, 66
    %v257 = vpop.permute.xlu0 %256
    %258 = vrot.lane.b32.xlu0 %v238, 66
    %v259 = vpop.permute.xlu0 %258
    %260 = vrot.lane.b32.xlu0 %v239, 66
    %v261 = vpop.permute.xlu0 %260
    %262 = vrot.lane.b32.xlu0 %v240, 66
    %v263 = vpop.permute.xlu0 %262
    %264 = vrot.lane.b32.xlu0 %v241, 66
    %v265 = vpop.permute.xlu0 %264
    %vm266 = vcmask 539648
    %v267 = vsel %vm266, %v251, %v253
    %v268 = vsel %vm266, %v253, %v255
    %v269 = vsel %vm266, %v255, %v257
    %v270 = vsel %vm266, %v257, %v259
    %v271 = vsel %vm266, %v259, %v261
    %v272 = vsel %vm266, %v261, %v263
    %v273 = vsel %vm266, %v263, %v265
    %281 = vst [vmem:[#allocation2 + $0xa8] sm:$0xff] %v267
    %282 = vst [vmem:[#allocation2 + $0xb0] sm:$0xff] %v268
    %283 = vst [vmem:[#allocation2 + $0xb8] sm:$0xff] %v269
    %284 = vst [vmem:[#allocation2 + $0xc0] sm:$0xff] %v270
    %285 = vst [vmem:[#allocation2 + $0xc8] sm:$0xff] %v271
    %286 = vst [vmem:[#allocation2 + $0xd0] sm:$0xff] %v272
    %287 = vst [vmem:[#allocation2 + $0xd8] sm:$0xff] %v273
    %v288 = vld [vmem:[#allocation4] sm:$0xff]
    %v289 = vld [vmem:[#allocation4 + $0x8] sm:$0xff]
    %v290 = vld [vmem:[#allocation4 + $0x10] sm:$0xff]
    %v291 = vld [vmem:[#allocation4 + $0x18] sm:$0xff]
    %v292 = vld [vmem:[#allocation4 + $0x20] sm:$0xff]
    %v293 = vld [vmem:[#allocation4 + $0x28] sm:$0xff]
    %v294 = vld [vmem:[#allocation4 + $0x30] sm:$0xff]
    %v295 = vld [vmem:[#allocation4 + $0x38] sm:$0xff]
    %304 = vrot.lane.b32.xlu0 %v288, 65
    %v305 = vpop.permute.xlu0 %304
    %306 = vrot.lane.b32.xlu0 %v289, 65
    %v307 = vpop.permute.xlu0 %306
    %308 = vrot.lane.b32.xlu0 %v290, 65
    %v309 = vpop.permute.xlu0 %308
    %310 = vrot.lane.b32.xlu0 %v291, 65
    %v311 = vpop.permute.xlu0 %310
    %312 = vrot.lane.b32.xlu0 %v292, 65
    %v313 = vpop.permute.xlu0 %312
    %314 = vrot.lane.b32.xlu0 %v293, 65
    %v315 = vpop.permute.xlu0 %314
    %316 = vrot.lane.b32.xlu0 %v294, 65
    %v317 = vpop.permute.xlu0 %316
    %318 = vrot.lane.b32.xlu0 %v295, 65
    %v319 = vpop.permute.xlu0 %318
    %vm320 = vcmask 531456
    %v321 = vsel %vm320, %v305, %v307
    %v322 = vsel %vm320, %v307, %v309
    %v323 = vsel %vm320, %v309, %v311
    %v324 = vsel %vm320, %v311, %v313
    %v325 = vsel %vm320, %v313, %v315
    %v326 = vsel %vm320, %v315, %v317
    %v327 = vsel %vm320, %v317, %v319
    %335 = vst [vmem:[#allocation2 + $0xe0] sm:$0xff] %v321
    %336 = vst [vmem:[#allocation2 + $0xe8] sm:$0xff] %v322
    %337 = vst [vmem:[#allocation2 + $0xf0] sm:$0xff] %v323
    %338 = vst [vmem:[#allocation2 + $0xf8] sm:$0xff] %v324
    %339 = vst [vmem:[#allocation2 + $0x100] sm:$0xff] %v325
    %340 = vst [vmem:[#allocation2 + $0x108] sm:$0xff] %v326
    %341 = vst [vmem:[#allocation2 + $0x110] sm:$0xff] %v327
    %v342 = vld [vmem:[#allocation4] sm:$0xff]
    %v343 = vld [vmem:[#allocation4 + $0x8] sm:$0xff]
    %v344 = vld [vmem:[#allocation4 + $0x10] sm:$0xff]
    %v345 = vld [vmem:[#allocation4 + $0x18] sm:$0xff]
    %v346 = vld [vmem:[#allocation4 + $0x20] sm:$0xff]
    %v347 = vld [vmem:[#allocation4 + $0x28] sm:$0xff]
    %v348 = vld [vmem:[#allocation4 + $0x30] sm:$0xff]
    %v349 = vld [vmem:[#allocation4 + $0x38] sm:$0xff]
    %358 = vrot.lane.b32.xlu0 %v342, 64
    %v359 = vpop.permute.xlu0 %358
    %360 = vrot.lane.b32.xlu0 %v343, 64
    %v361 = vpop.permute.xlu0 %360
    %362 = vrot.lane.b32.xlu0 %v344, 64
    %v363 = vpop.permute.xlu0 %362
    %364 = vrot.lane.b32.xlu0 %v345, 64
    %v365 = vpop.permute.xlu0 %364
    %366 = vrot.lane.b32.xlu0 %v346, 64
    %v367 = vpop.permute.xlu0 %366
    %368 = vrot.lane.b32.xlu0 %v347, 64
    %v369 = vpop.permute.xlu0 %368
    %370 = vrot.lane.b32.xlu0 %v348, 64
    %v371 = vpop.permute.xlu0 %370
    %372 = vrot.lane.b32.xlu0 %v349, 64
    %v373 = vpop.permute.xlu0 %372
    %vm374 = vcmask 523264
    %v375 = vsel %vm374, %v359, %v361
    %v376 = vsel %vm374, %v361, %v363
    %v377 = vsel %vm374, %v363, %v365
    %v378 = vsel %vm374, %v365, %v367
    %v379 = vsel %vm374, %v367, %v369
    %v380 = vsel %vm374, %v369, %v371
    %v381 = vsel %vm374, %v371, %v373
    %389 = vst [vmem:[#allocation2 + $0x118] sm:$0xff] %v375
    %390 = vst [vmem:[#allocation2 + $0x120] sm:$0xff] %v376
    %391 = vst [vmem:[#allocation2 + $0x128] sm:$0xff] %v377
    %392 = vst [vmem:[#allocation2 + $0x130] sm:$0xff] %v378
    %393 = vst [vmem:[#allocation2 + $0x138] sm:$0xff] %v379
    %394 = vst [vmem:[#allocation2 + $0x140] sm:$0xff] %v380
    %395 = vst [vmem:[#allocation2 + $0x148] sm:$0xff] %v381
    %v396 = vld [vmem:[#allocation4] sm:$0xff]
    %v397 = vld [vmem:[#allocation4 + $0x8] sm:$0xff]
    %v398 = vld [vmem:[#allocation4 + $0x10] sm:$0xff]
    %v399 = vld [vmem:[#allocation4 + $0x18] sm:$0xff]
    %v400 = vld [vmem:[#allocation4 + $0x20] sm:$0xff]
    %v401 = vld [vmem:[#allocation4 + $0x28] sm:$0xff]
    %v402 = vld [vmem:[#allocation4 + $0x30] sm:$0xff]
    %v403 = vld [vmem:[#allocation4 + $0x38] sm:$0xff]
    %412 = vrot.lane.b32.xlu0 %v396, 63
    %v413 = vpop.permute.xlu0 %412
    %414 = vrot.lane.b32.xlu0 %v397, 63
    %v415 = vpop.permute.xlu0 %414
    %416 = vrot.lane.b32.xlu0 %v398, 63
    %v417 = vpop.permute.xlu0 %416
    %418 = vrot.lane.b32.xlu0 %v399, 63
    %v419 = vpop.permute.xlu0 %418
    %420 = vrot.lane.b32.xlu0 %v400, 63
    %v421 = vpop.permute.xlu0 %420
    %422 = vrot.lane.b32.xlu0 %v401, 63
    %v423 = vpop.permute.xlu0 %422
    %424 = vrot.lane.b32.xlu0 %v402, 63
    %v425 = vpop.permute.xlu0 %424
    %426 = vrot.lane.b32.xlu0 %v403, 63
    %v427 = vpop.permute.xlu0 %426
    %vm428 = vcmask 515072
    %v429 = vsel %vm428, %v413, %v415
    %v430 = vsel %vm428, %v415, %v417
    %v431 = vsel %vm428, %v417, %v419
    %v432 = vsel %vm428, %v419, %v421
    %v433 = vsel %vm428, %v421, %v423
    %v434 = vsel %vm428, %v423, %v425
    %v435 = vsel %vm428, %v425, %v427
    %443 = vst [vmem:[#allocation2 + $0x150] sm:$0xff] %v429
    %444 = vst [vmem:[#allocation2 + $0x158] sm:$0xff] %v430
    %445 = vst [vmem:[#allocation2 + $0x160] sm:$0xff] %v431
    %446 = vst [vmem:[#allocation2 + $0x168] sm:$0xff] %v432
    %447 = vst [vmem:[#allocation2 + $0x170] sm:$0xff] %v433
    %448 = vst [vmem:[#allocation2 + $0x178] sm:$0xff] %v434
    %449 = vst [vmem:[#allocation2 + $0x180] sm:$0xff] %v435
    %v450 = vld [vmem:[#allocation4] sm:$0xff]
    %v451 = vld [vmem:[#allocation4 + $0x8] sm:$0xff]
    %v452 = vld [vmem:[#allocation4 + $0x10] sm:$0xff]
    %v453 = vld [vmem:[#allocation4 + $0x18] sm:$0xff]
    %v454 = vld [vmem:[#allocation4 + $0x20] sm:$0xff]
    %v455 = vld [vmem:[#allocation4 + $0x28] sm:$0xff]
    %v456 = vld [vmem:[#allocation4 + $0x30] sm:$0xff]
    %v457 = vld [vmem:[#allocation4 + $0x38] sm:$0xff]
    %466 = vrot.lane.b32.xlu0 %v450, 47
    %v467 = vpop.permute.xlu0 %466
    %468 = vrot.lane.b32.xlu0 %v451, 47
    %v469 = vpop.permute.xlu0 %468
    %470 = vrot.lane.b32.xlu0 %v452, 47
    %v471 = vpop.permute.xlu0 %470
    %472 = vrot.lane.b32.xlu0 %v453, 47
    %v473 = vpop.permute.xlu0 %472
    %474 = vrot.lane.b32.xlu0 %v454, 47
    %v475 = vpop.permute.xlu0 %474
    %476 = vrot.lane.b32.xlu0 %v455, 47
    %v477 = vpop.permute.xlu0 %476
    %478 = vrot.lane.b32.xlu0 %v456, 47
    %v479 = vpop.permute.xlu0 %478
    %480 = vrot.lane.b32.xlu0 %v457, 47
    %v481 = vpop.permute.xlu0 %480
    %vm482 = vcmask 384000
    %v483 = vsel %vm482, %v467, %v469
    %v484 = vsel %vm482, %v469, %v471
    %v485 = vsel %vm482, %v471, %v473
    %v486 = vsel %vm482, %v473, %v475
    %v487 = vsel %vm482, %v475, %v477
    %v488 = vsel %vm482, %v477, %v479
    %v489 = vsel %vm482, %v479, %v481
    %497 = vst [vmem:[#allocation2 + $0x188] sm:$0xff] %v483
    %498 = vst [vmem:[#allocation2 + $0x190] sm:$0xff] %v484
    %499 = vst [vmem:[#allocation2 + $0x198] sm:$0xff] %v485
    %500 = vst [vmem:[#allocation2 + $0x1a0] sm:$0xff] %v486
    %501 = vst [vmem:[#allocation2 + $0x1a8] sm:$0xff] %v487
    %502 = vst [vmem:[#allocation2 + $0x1b0] sm:$0xff] %v488
    %503 = vst [vmem:[#allocation2 + $0x1b8] sm:$0xff] %v489
    %v504 = vld [vmem:[#allocation4] sm:$0xff]
    %v505 = vld [vmem:[#allocation4 + $0x8] sm:$0xff]
    %v506 = vld [vmem:[#allocation4 + $0x10] sm:$0xff]
    %v507 = vld [vmem:[#allocation4 + $0x18] sm:$0xff]
    %v508 = vld [vmem:[#allocation4 + $0x20] sm:$0xff]
    %v509 = vld [vmem:[#allocation4 + $0x28] sm:$0xff]
    %v510 = vld [vmem:[#allocation4 + $0x30] sm:$0xff]
    %v511 = vld [vmem:[#allocation4 + $0x38] sm:$0xff]
    %520 = vrot.lane.b32.xlu0 %v504, 46
    %v521 = vpop.permute.xlu0 %520
    %522 = vrot.lane.b32.xlu0 %v505, 46
    %v523 = vpop.permute.xlu0 %522
    %524 = vrot.lane.b32.xlu0 %v506, 46
    %v525 = vpop.permute.xlu0 %524
    %526 = vrot.lane.b32.xlu0 %v507, 46
    %v527 = vpop.permute.xlu0 %526
    %528 = vrot.lane.b32.xlu0 %v508, 46
    %v529 = vpop.permute.xlu0 %528
    %530 = vrot.lane.b32.xlu0 %v509, 46
    %v531 = vpop.permute.xlu0 %530
    %532 = vrot.lane.b32.xlu0 %v510, 46
    %v533 = vpop.permute.xlu0 %532
    %534 = vrot.lane.b32.xlu0 %v511, 46
    %v535 = vpop.permute.xlu0 %534
    %vm536 = vcmask 375808
    %v537 = vsel %vm536, %v521, %v523
    %v538 = vsel %vm536, %v523, %v525
    %v539 = vsel %vm536, %v525, %v527
    %v540 = vsel %vm536, %v527, %v529
    %v541 = vsel %vm536, %v529, %v531
    %v542 = vsel %vm536, %v531, %v533
    %v543 = vsel %vm536, %v533, %v535
    %551 = vst [vmem:[#allocation2 + $0x1c0] sm:$0xff] %v537
    %552 = vst [vmem:[#allocation2 + $0x1c8] sm:$0xff] %v538
    %553 = vst [vmem:[#allocation2 + $0x1d0] sm:$0xff] %v539
    %554 = vst [vmem:[#allocation2 + $0x1d8] sm:$0xff] %v540
    %555 = vst [vmem:[#allocation2 + $0x1e0] sm:$0xff] %v541
    %556 = vst [vmem:[#allocation2 + $0x1e8] sm:$0xff] %v542
    %557 = vst [vmem:[#allocation2 + $0x1f0] sm:$0xff] %v543
    %v558 = vld [vmem:[#allocation4] sm:$0xff]
    %v559 = vld [vmem:[#allocation4 + $0x8] sm:$0xff]
    %v560 = vld [vmem:[#allocation4 + $0x10] sm:$0xff]
    %v561 = vld [vmem:[#allocation4 + $0x18] sm:$0xff]
    %v562 = vld [vmem:[#allocation4 + $0x20] sm:$0xff]
    %v563 = vld [vmem:[#allocation4 + $0x28] sm:$0xff]
    %v564 = vld [vmem:[#allocation4 + $0x30] sm:$0xff]
    %v565 = vld [vmem:[#allocation4 + $0x38] sm:$0xff]
    %574 = vrot.lane.b32.xlu0 %v558, 45
    %v575 = vpop.permute.xlu0 %574
    %576 = vrot.lane.b32.xlu0 %v559, 45
    %v577 = vpop.permute.xlu0 %576
    %578 = vrot.lane.b32.xlu0 %v560, 45
    %v579 = vpop.permute.xlu0 %578
    %580 = vrot.lane.b32.xlu0 %v561, 45
    %v581 = vpop.permute.xlu0 %580
    %582 = vrot.lane.b32.xlu0 %v562, 45
    %v583 = vpop.permute.xlu0 %582
    %584 = vrot.lane.b32.xlu0 %v563, 45
    %v585 = vpop.permute.xlu0 %584
    %586 = vrot.lane.b32.xlu0 %v564, 45
    %v587 = vpop.permute.xlu0 %586
    %588 = vrot.lane.b32.xlu0 %v565, 45
    %v589 = vpop.permute.xlu0 %588
    %vm590 = vcmask 367616
    %v591 = vsel %vm590, %v575, %v577
    %v592 = vsel %vm590, %v577, %v579
    %v593 = vsel %vm590, %v579, %v581
    %v594 = vsel %vm590, %v581, %v583
    %v595 = vsel %vm590, %v583, %v585
    %v596 = vsel %vm590, %v585, %v587
    %v597 = vsel %vm590, %v587, %v589
    %605 = vst [vmem:[#allocation2 + $0x1f8] sm:$0xff] %v591
    %606 = vst [vmem:[#allocation2 + $0x200] sm:$0xff] %v592
    %607 = vst [vmem:[#allocation2 + $0x208] sm:$0xff] %v593
    %608 = vst [vmem:[#allocation2 + $0x210] sm:$0xff] %v594
    %609 = vst [vmem:[#allocation2 + $0x218] sm:$0xff] %v595
    %610 = vst [vmem:[#allocation2 + $0x220] sm:$0xff] %v596
    %611 = vst [vmem:[#allocation2 + $0x228] sm:$0xff] %v597
    %v612 = vld [vmem:[#allocation4] sm:$0xff]
    %v613 = vld [vmem:[#allocation4 + $0x8] sm:$0xff]
    %v614 = vld [vmem:[#allocation4 + $0x10] sm:$0xff]
    %v615 = vld [vmem:[#allocation4 + $0x18] sm:$0xff]
    %v616 = vld [vmem:[#allocation4 + $0x20] sm:$0xff]
    %v617 = vld [vmem:[#allocation4 + $0x28] sm:$0xff]
    %v618 = vld [vmem:[#allocation4 + $0x30] sm:$0xff]
    %v619 = vld [vmem:[#allocation4 + $0x38] sm:$0xff]
    %628 = vrot.lane.b32.xlu0 %v612, 44
    %v629 = vpop.permute.xlu0 %628
    %630 = vrot.lane.b32.xlu0 %v613, 44
    %v631 = vpop.permute.xlu0 %630
    %632 = vrot.lane.b32.xlu0 %v614, 44
    %v633 = vpop.permute.xlu0 %632
    %634 = vrot.lane.b32.xlu0 %v615, 44
    %v635 = vpop.permute.xlu0 %634
    %636 = vrot.lane.b32.xlu0 %v616, 44
    %v637 = vpop.permute.xlu0 %636
    %638 = vrot.lane.b32.xlu0 %v617, 44
    %v639 = vpop.permute.xlu0 %638
    %640 = vrot.lane.b32.xlu0 %v618, 44
    %v641 = vpop.permute.xlu0 %640
    %642 = vrot.lane.b32.xlu0 %v619, 44
    %v643 = vpop.permute.xlu0 %642
    %vm644 = vcmask 359424
    %v645 = vsel %vm644, %v629, %v631
    %v646 = vsel %vm644, %v631, %v633
    %v647 = vsel %vm644, %v633, %v635
    %v648 = vsel %vm644, %v635, %v637
    %v649 = vsel %vm644, %v637, %v639
    %v650 = vsel %vm644, %v639, %v641
    %v651 = vsel %vm644, %v641, %v643
    %659 = vst [vmem:[#allocation2 + $0x230] sm:$0xff] %v645
    %660 = vst [vmem:[#allocation2 + $0x238] sm:$0xff] %v646
    %661 = vst [vmem:[#allocation2 + $0x240] sm:$0xff] %v647
    %662 = vst [vmem:[#allocation2 + $0x248] sm:$0xff] %v648
    %663 = vst [vmem:[#allocation2 + $0x250] sm:$0xff] %v649
    %664 = vst [vmem:[#allocation2 + $0x258] sm:$0xff] %v650
    %665 = vst [vmem:[#allocation2 + $0x260] sm:$0xff] %v651
    %v666 = vld [vmem:[#allocation4] sm:$0xff]
    %v667 = vld [vmem:[#allocation4 + $0x8] sm:$0xff]
    %v668 = vld [vmem:[#allocation4 + $0x10] sm:$0xff]
    %v669 = vld [vmem:[#allocation4 + $0x18] sm:$0xff]
    %v670 = vld [vmem:[#allocation4 + $0x20] sm:$0xff]
    %v671 = vld [vmem:[#allocation4 + $0x28] sm:$0xff]
    %v672 = vld [vmem:[#allocation4 + $0x30] sm:$0xff]
    %v673 = vld [vmem:[#allocation4 + $0x38] sm:$0xff]
    %682 = vrot.lane.b32.xlu0 %v666, 43
    %v683 = vpop.permute.xlu0 %682
    %684 = vrot.lane.b32.xlu0 %v667, 43
    %v685 = vpop.permute.xlu0 %684
    %686 = vrot.lane.b32.xlu0 %v668, 43
    %v687 = vpop.permute.xlu0 %686
    %688 = vrot.lane.b32.xlu0 %v669, 43
    %v689 = vpop.permute.xlu0 %688
    %690 = vrot.lane.b32.xlu0 %v670, 43
    %v691 = vpop.permute.xlu0 %690
    %692 = vrot.lane.b32.xlu0 %v671, 43
    %v693 = vpop.permute.xlu0 %692
    %694 = vrot.lane.b32.xlu0 %v672, 43
    %v695 = vpop.permute.xlu0 %694
    %696 = vrot.lane.b32.xlu0 %v673, 43
    %v697 = vpop.permute.xlu0 %696
    %vm698 = vcmask 351232
    %v699 = vsel %vm698, %v683, %v685
    %v700 = vsel %vm698, %v685, %v687
    %v701 = vsel %vm698, %v687, %v689
    %v702 = vsel %vm698, %v689, %v691
    %v703 = vsel %vm698, %v691, %v693
    %v704 = vsel %vm698, %v693, %v695
    %v705 = vsel %vm698, %v695, %v697
    %713 = vst [vmem:[#allocation2 + $0x268] sm:$0xff] %v699
    %714 = vst [vmem:[#allocation2 + $0x270] sm:$0xff] %v700
    %715 = vst [vmem:[#allocation2 + $0x278] sm:$0xff] %v701
    %716 = vst [vmem:[#allocation2 + $0x280] sm:$0xff] %v702
    %717 = vst [vmem:[#allocation2 + $0x288] sm:$0xff] %v703
    %718 = vst [vmem:[#allocation2 + $0x290] sm:$0xff] %v704
    %719 = vst [vmem:[#allocation2 + $0x298] sm:$0xff] %v705
    %v720 = vld [vmem:[#allocation4] sm:$0xff]
    %v721 = vld [vmem:[#allocation4 + $0x8] sm:$0xff]
    %v722 = vld [vmem:[#allocation4 + $0x10] sm:$0xff]
    %v723 = vld [vmem:[#allocation4 + $0x18] sm:$0xff]
    %v724 = vld [vmem:[#allocation4 + $0x20] sm:$0xff]
    %v725 = vld [vmem:[#allocation4 + $0x28] sm:$0xff]
    %v726 = vld [vmem:[#allocation4 + $0x30] sm:$0xff]
    %v727 = vld [vmem:[#allocation4 + $0x38] sm:$0xff]
    %736 = vrot.lane.b32.xlu0 %v720, 42
    %v737 = vpop.permute.xlu0 %736
    %738 = vrot.lane.b32.xlu0 %v721, 42
    %v739 = vpop.permute.xlu0 %738
    %740 = vrot.lane.b32.xlu0 %v722, 42
    %v741 = vpop.permute.xlu0 %740
    %742 = vrot.lane.b32.xlu0 %v723, 42
    %v743 = vpop.permute.xlu0 %742
    %744 = vrot.lane.b32.xlu0 %v724, 42
    %v745 = vpop.permute.xlu0 %744
    %746 = vrot.lane.b32.xlu0 %v725, 42
    %v747 = vpop.permute.xlu0 %746
    %748 = vrot.lane.b32.xlu0 %v726, 42
    %v749 = vpop.permute.xlu0 %748
    %750 = vrot.lane.b32.xlu0 %v727, 42
    %v751 = vpop.permute.xlu0 %750
    %vm752 = vcmask 343040
    %v753 = vsel %vm752, %v737, %v739
    %v754 = vsel %vm752, %v739, %v741
    %v755 = vsel %vm752, %v741, %v743
    %v756 = vsel %vm752, %v743, %v745
    %v757 = vsel %vm752, %v745, %v747
    %v758 = vsel %vm752, %v747, %v749
    %v759 = vsel %vm752, %v749, %v751
    %767 = vst [vmem:[#allocation2 + $0x2a0] sm:$0xff] %v753
    %768 = vst [vmem:[#allocation2 + $0x2a8] sm:$0xff] %v754
    %769 = vst [vmem:[#allocation2 + $0x2b0] sm:$0xff] %v755
    %770 = vst [vmem:[#allocation2 + $0x2b8] sm:$0xff] %v756
    %771 = vst [vmem:[#allocation2 + $0x2c0] sm:$0xff] %v757
    %772 = vst [vmem:[#allocation2 + $0x2c8] sm:$0xff] %v758
    %773 = vst [vmem:[#allocation2 + $0x2d0] sm:$0xff] %v759
    %v774 = vld [vmem:[#allocation4] sm:$0xff]
    %v775 = vld [vmem:[#allocation4 + $0x8] sm:$0xff]
    %v776 = vld [vmem:[#allocation4 + $0x10] sm:$0xff]
    %v777 = vld [vmem:[#allocation4 + $0x18] sm:$0xff]
    %v778 = vld [vmem:[#allocation4 + $0x20] sm:$0xff]
    %v779 = vld [vmem:[#allocation4 + $0x28] sm:$0xff]
    %v780 = vld [vmem:[#allocation4 + $0x30] sm:$0xff]
    %v781 = vld [vmem:[#allocation4 + $0x38] sm:$0xff]
    %790 = vrot.lane.b32.xlu0 %v774, 41
    %v791 = vpop.permute.xlu0 %790
    %792 = vrot.lane.b32.xlu0 %v775, 41
    %v793 = vpop.permute.xlu0 %792
    %794 = vrot.lane.b32.xlu0 %v776, 41
    %v795 = vpop.permute.xlu0 %794
    %796 = vrot.lane.b32.xlu0 %v777, 41
    %v797 = vpop.permute.xlu0 %796
    %798 = vrot.lane.b32.xlu0 %v778, 41
    %v799 = vpop.permute.xlu0 %798
    %800 = vrot.lane.b32.xlu0 %v779, 41
    %v801 = vpop.permute.xlu0 %800
    %802 = vrot.lane.b32.xlu0 %v780, 41
    %v803 = vpop.permute.xlu0 %802
    %804 = vrot.lane.b32.xlu0 %v781, 41
    %v805 = vpop.permute.xlu0 %804
    %vm806 = vcmask 334848
    %v807 = vsel %vm806, %v791, %v793
    %v808 = vsel %vm806, %v793, %v795
    %v809 = vsel %vm806, %v795, %v797
    %v810 = vsel %vm806, %v797, %v799
    %v811 = vsel %vm806, %v799, %v801
    %v812 = vsel %vm806, %v801, %v803
    %v813 = vsel %vm806, %v803, %v805
    %821 = vst [vmem:[#allocation2 + $0x2d8] sm:$0xff] %v807
    %822 = vst [vmem:[#allocation2 + $0x2e0] sm:$0xff] %v808
    %823 = vst [vmem:[#allocation2 + $0x2e8] sm:$0xff] %v809
    %824 = vst [vmem:[#allocation2 + $0x2f0] sm:$0xff] %v810
    %825 = vst [vmem:[#allocation2 + $0x2f8] sm:$0xff] %v811
    %826 = vst [vmem:[#allocation2 + $0x300] sm:$0xff] %v812
    %827 = vst [vmem:[#allocation2 + $0x308] sm:$0xff] %v813
    %v828 = vld [vmem:[#allocation4] sm:$0xff]
    %v829 = vld [vmem:[#allocation4 + $0x8] sm:$0xff]
    %v830 = vld [vmem:[#allocation4 + $0x10] sm:$0xff]
    %v831 = vld [vmem:[#allocation4 + $0x18] sm:$0xff]
    %v832 = vld [vmem:[#allocation4 + $0x20] sm:$0xff]
    %v833 = vld [vmem:[#allocation4 + $0x28] sm:$0xff]
    %v834 = vld [vmem:[#allocation4 + $0x30] sm:$0xff]
    %v835 = vld [vmem:[#allocation4 + $0x38] sm:$0xff]
    %844 = vrot.lane.b32.xlu0 %v828, 25
    %v845 = vpop.permute.xlu0 %844
    %846 = vrot.lane.b32.xlu0 %v829, 25
    %v847 = vpop.permute.xlu0 %846
    %848 = vrot.lane.b32.xlu0 %v830, 25
    %v849 = vpop.permute.xlu0 %848
    %850 = vrot.lane.b32.xlu0 %v831, 25
    %v851 = vpop.permute.xlu0 %850
    %852 = vrot.lane.b32.xlu0 %v832, 25
    %v853 = vpop.permute.xlu0 %852
    %854 = vrot.lane.b32.xlu0 %v833, 25
    %v855 = vpop.permute.xlu0 %854
    %856 = vrot.lane.b32.xlu0 %v834, 25
    %v857 = vpop.permute.xlu0 %856
    %858 = vrot.lane.b32.xlu0 %v835, 25
    %v859 = vpop.permute.xlu0 %858
    %vm860 = vcmask 203776
    %v861 = vsel %vm860, %v845, %v847
    %v862 = vsel %vm860, %v847, %v849
    %v863 = vsel %vm860, %v849, %v851
    %v864 = vsel %vm860, %v851, %v853
    %v865 = vsel %vm860, %v853, %v855
    %v866 = vsel %vm860, %v855, %v857
    %v867 = vsel %vm860, %v857, %v859
    %875 = vst [vmem:[#allocation2 + $0x310] sm:$0xff] %v861
    %876 = vst [vmem:[#allocation2 + $0x318] sm:$0xff] %v862
    %877 = vst [vmem:[#allocation2 + $0x320] sm:$0xff] %v863
    %878 = vst [vmem:[#allocation2 + $0x328] sm:$0xff] %v864
    %879 = vst [vmem:[#allocation2 + $0x330] sm:$0xff] %v865
    %880 = vst [vmem:[#allocation2 + $0x338] sm:$0xff] %v866
    %881 = vst [vmem:[#allocation2 + $0x340] sm:$0xff] %v867
    %v882 = vld [vmem:[#allocation4] sm:$0xff]
    %v883 = vld [vmem:[#allocation4 + $0x8] sm:$0xff]
    %v884 = vld [vmem:[#allocation4 + $0x10] sm:$0xff]
    %v885 = vld [vmem:[#allocation4 + $0x18] sm:$0xff]
    %v886 = vld [vmem:[#allocation4 + $0x20] sm:$0xff]
    %v887 = vld [vmem:[#allocation4 + $0x28] sm:$0xff]
    %v888 = vld [vmem:[#allocation4 + $0x30] sm:$0xff]
    %v889 = vld [vmem:[#allocation4 + $0x38] sm:$0xff]
    %898 = vrot.lane.b32.xlu0 %v882, 24
    %v899 = vpop.permute.xlu0 %898
    %900 = vrot.lane.b32.xlu0 %v883, 24
    %v901 = vpop.permute.xlu0 %900
    %902 = vrot.lane.b32.xlu0 %v884, 24
    %v903 = vpop.permute.xlu0 %902
    %904 = vrot.lane.b32.xlu0 %v885, 24
    %v905 = vpop.permute.xlu0 %904
    %906 = vrot.lane.b32.xlu0 %v886, 24
    %v907 = vpop.permute.xlu0 %906
    %908 = vrot.lane.b32.xlu0 %v887, 24
    %v909 = vpop.permute.xlu0 %908
    %910 = vrot.lane.b32.xlu0 %v888, 24
    %v911 = vpop.permute.xlu0 %910
    %912 = vrot.lane.b32.xlu0 %v889, 24
    %v913 = vpop.permute.xlu0 %912
    %vm914 = vcmask 195584
    %v915 = vsel %vm914, %v899, %v901
    %v916 = vsel %vm914, %v901, %v903
    %v917 = vsel %vm914, %v903, %v905
    %v918 = vsel %vm914, %v905, %v907
    %v919 = vsel %vm914, %v907, %v909
    %v920 = vsel %vm914, %v909, %v911
    %v921 = vsel %vm914, %v911, %v913
    %929 = vst [vmem:[#allocation2 + $0x348] sm:$0xff] %v915
    %930 = vst [vmem:[#allocation2 + $0x350] sm:$0xff] %v916
    %931 = vst [vmem:[#allocation2 + $0x358] sm:$0xff] %v917
    %932 = vst [vmem:[#allocation2 + $0x360] sm:$0xff] %v918
    %933 = vst [vmem:[#allocation2 + $0x368] sm:$0xff] %v919
    %934 = vst [vmem:[#allocation2 + $0x370] sm:$0xff] %v920
    %935 = vst [vmem:[#allocation2 + $0x378] sm:$0xff] %v921
    %v936 = vld [vmem:[#allocation4] sm:$0xff]
    %v937 = vld [vmem:[#allocation4 + $0x8] sm:$0xff]
    %v938 = vld [vmem:[#allocation4 + $0x10] sm:$0xff]
    %v939 = vld [vmem:[#allocation4 + $0x18] sm:$0xff]
    %v940 = vld [vmem:[#allocation4 + $0x20] sm:$0xff]
    %v941 = vld [vmem:[#allocation4 + $0x28] sm:$0xff]
    %v942 = vld [vmem:[#allocation4 + $0x30] sm:$0xff]
    %v943 = vld [vmem:[#allocation4 + $0x38] sm:$0xff]
    %952 = vrot.lane.b32.xlu0 %v936, 23
    %v953 = vpop.permute.xlu0 %952
    %954 = vrot.lane.b32.xlu0 %v937, 23
    %v955 = vpop.permute.xlu0 %954
    %956 = vrot.lane.b32.xlu0 %v938, 23
    %v957 = vpop.permute.xlu0 %956
    %958 = vrot.lane.b32.xlu0 %v939, 23
    %v959 = vpop.permute.xlu0 %958
    %960 = vrot.lane.b32.xlu0 %v940, 23
    %v961 = vpop.permute.xlu0 %960
    %962 = vrot.lane.b32.xlu0 %v941, 23
    %v963 = vpop.permute.xlu0 %962
    %964 = vrot.lane.b32.xlu0 %v942, 23
    %v965 = vpop.permute.xlu0 %964
    %966 = vrot.lane.b32.xlu0 %v943, 23
    %v967 = vpop.permute.xlu0 %966
    %vm968 = vcmask 187392
    %v969 = vsel %vm968, %v953, %v955
    %v970 = vsel %vm968, %v955, %v957
    %v971 = vsel %vm968, %v957, %v959
    %v972 = vsel %vm968, %v959, %v961
    %v973 = vsel %vm968, %v961, %v963
    %v974 = vsel %vm968, %v963, %v965
    %v975 = vsel %vm968, %v965, %v967
    %983 = vst [vmem:[#allocation2 + $0x380] sm:$0xff] %v969
    %984 = vst [vmem:[#allocation2 + $0x388] sm:$0xff] %v970
    %985 = vst [vmem:[#allocation2 + $0x390] sm:$0xff] %v971
    %986 = vst [vmem:[#allocation2 + $0x398] sm:$0xff] %v972
    %987 = vst [vmem:[#allocation2 + $0x3a0] sm:$0xff] %v973
    %988 = vst [vmem:[#allocation2 + $0x3a8] sm:$0xff] %v974
    %989 = vst [vmem:[#allocation2 + $0x3b0] sm:$0xff] %v975
    %v990 = vld [vmem:[#allocation4] sm:$0xff]
    %v991 = vld [vmem:[#allocation4 + $0x8] sm:$0xff]
    %v992 = vld [vmem:[#allocation4 + $0x10] sm:$0xff]
    %v993 = vld [vmem:[#allocation4 + $0x18] sm:$0xff]
    %v994 = vld [vmem:[#allocation4 + $0x20] sm:$0xff]
    %v995 = vld [vmem:[#allocation4 + $0x28] sm:$0xff]
    %v996 = vld [vmem:[#allocation4 + $0x30] sm:$0xff]
    %v997 = vld [vmem:[#allocation4 + $0x38] sm:$0xff]
    %1006 = vrot.lane.b32.xlu0 %v990, 22
    %v1007 = vpop.permute.xlu0 %1006
    %1008 = vrot.lane.b32.xlu0 %v991, 22
    %v1009 = vpop.permute.xlu0 %1008
    %1010 = vrot.lane.b32.xlu0 %v992, 22
    %v1011 = vpop.permute.xlu0 %1010
    %1012 = vrot.lane.b32.xlu0 %v993, 22
    %v1013 = vpop.permute.xlu0 %1012
    %1014 = vrot.lane.b32.xlu0 %v994, 22
    %v1015 = vpop.permute.xlu0 %1014
    %1016 = vrot.lane.b32.xlu0 %v995, 22
    %v1017 = vpop.permute.xlu0 %1016
    %1018 = vrot.lane.b32.xlu0 %v996, 22
    %v1019 = vpop.permute.xlu0 %1018
    %1020 = vrot.lane.b32.xlu0 %v997, 22
    %v1021 = vpop.permute.xlu0 %1020
    %vm1022 = vcmask 179200
    %v1023 = vsel %vm1022, %v1007, %v1009
    %v1024 = vsel %vm1022, %v1009, %v1011
    %v1025 = vsel %vm1022, %v1011, %v1013
    %v1026 = vsel %vm1022, %v1013, %v1015
    %v1027 = vsel %vm1022, %v1015, %v1017
    %v1028 = vsel %vm1022, %v1017, %v1019
    %v1029 = vsel %vm1022, %v1019, %v1021
    %1037 = vst [vmem:[#allocation2 + $0x3b8] sm:$0xff] %v1023
    %1038 = vst [vmem:[#allocation2 + $0x3c0] sm:$0xff] %v1024
    %1039 = vst [vmem:[#allocation2 + $0x3c8] sm:$0xff] %v1025
    %1040 = vst [vmem:[#allocation2 + $0x3d0] sm:$0xff] %v1026
    %1041 = vst [vmem:[#allocation2 + $0x3d8] sm:$0xff] %v1027
    %1042 = vst [vmem:[#allocation2 + $0x3e0] sm:$0xff] %v1028
    %1043 = vst [vmem:[#allocation2 + $0x3e8] sm:$0xff] %v1029
    %v1044 = vld [vmem:[#allocation4] sm:$0xff]
    %v1045 = vld [vmem:[#allocation4 + $0x8] sm:$0xff]
    %v1046 = vld [vmem:[#allocation4 + $0x10] sm:$0xff]
    %v1047 = vld [vmem:[#allocation4 + $0x18] sm:$0xff]
    %v1048 = vld [vmem:[#allocation4 + $0x20] sm:$0xff]
    %v1049 = vld [vmem:[#allocation4 + $0x28] sm:$0xff]
    %v1050 = vld [vmem:[#allocation4 + $0x30] sm:$0xff]
    %v1051 = vld [vmem:[#allocation4 + $0x38] sm:$0xff]
    %1060 = vrot.lane.b32.xlu0 %v1044, 21
    %v1061 = vpop.permute.xlu0 %1060
    %1062 = vrot.lane.b32.xlu0 %v1045, 21
    %v1063 = vpop.permute.xlu0 %1062
    %1064 = vrot.lane.b32.xlu0 %v1046, 21
    %v1065 = vpop.permute.xlu0 %1064
    %1066 = vrot.lane.b32.xlu0 %v1047, 21
    %v1067 = vpop.permute.xlu0 %1066
    %1068 = vrot.lane.b32.xlu0 %v1048, 21
    %v1069 = vpop.permute.xlu0 %1068
    %1070 = vrot.lane.b32.xlu0 %v1049, 21
    %v1071 = vpop.permute.xlu0 %1070
    %1072 = vrot.lane.b32.xlu0 %v1050, 21
    %v1073 = vpop.permute.xlu0 %1072
    %1074 = vrot.lane.b32.xlu0 %v1051, 21
    %v1075 = vpop.permute.xlu0 %1074
    %vm1076 = vcmask 171008
    %v1077 = vsel %vm1076, %v1061, %v1063
    %v1078 = vsel %vm1076, %v1063, %v1065
    %v1079 = vsel %vm1076, %v1065, %v1067
    %v1080 = vsel %vm1076, %v1067, %v1069
    %v1081 = vsel %vm1076, %v1069, %v1071
    %v1082 = vsel %vm1076, %v1071, %v1073
    %v1083 = vsel %vm1076, %v1073, %v1075
    %1091 = vst [vmem:[#allocation2 + $0x3f0] sm:$0xff] %v1077
    %1092 = vst [vmem:[#allocation2 + $0x3f8] sm:$0xff] %v1078
    %1093 = vst [vmem:[#allocation2 + $0x400] sm:$0xff] %v1079
    %1094 = vst [vmem:[#allocation2 + $0x408] sm:$0xff] %v1080
    %1095 = vst [vmem:[#allocation2 + $0x410] sm:$0xff] %v1081
    %1096 = vst [vmem:[#allocation2 + $0x418] sm:$0xff] %v1082
    %1097 = vst [vmem:[#allocation2 + $0x420] sm:$0xff] %v1083
    %v1098 = vld [vmem:[#allocation4] sm:$0xff]
    %v1099 = vld [vmem:[#allocation4 + $0x8] sm:$0xff]
    %v1100 = vld [vmem:[#allocation4 + $0x10] sm:$0xff]
    %v1101 = vld [vmem:[#allocation4 + $0x18] sm:$0xff]
    %v1102 = vld [vmem:[#allocation4 + $0x20] sm:$0xff]
    %v1103 = vld [vmem:[#allocation4 + $0x28] sm:$0xff]
    %v1104 = vld [vmem:[#allocation4 + $0x30] sm:$0xff]
    %v1105 = vld [vmem:[#allocation4 + $0x38] sm:$0xff]
    %1114 = vrot.lane.b32.xlu0 %v1098, 20
    %v1115 = vpop.permute.xlu0 %1114
    %1116 = vrot.lane.b32.xlu0 %v1099, 20
    %v1117 = vpop.permute.xlu0 %1116
    %1118 = vrot.lane.b32.xlu0 %v1100, 20
    %v1119 = vpop.permute.xlu0 %1118
    %1120 = vrot.lane.b32.xlu0 %v1101, 20
    %v1121 = vpop.permute.xlu0 %1120
    %1122 = vrot.lane.b32.xlu0 %v1102, 20
    %v1123 = vpop.permute.xlu0 %1122
    %1124 = vrot.lane.b32.xlu0 %v1103, 20
    %v1125 = vpop.permute.xlu0 %1124
    %1126 = vrot.lane.b32.xlu0 %v1104, 20
    %v1127 = vpop.permute.xlu0 %1126
    %1128 = vrot.lane.b32.xlu0 %v1105, 20
    %v1129 = vpop.permute.xlu0 %1128
    %vm1130 = vcmask 162816
    %v1131 = vsel %vm1130, %v1115, %v1117
    %v1132 = vsel %vm1130, %v1117, %v1119
    %v1133 = vsel %vm1130, %v1119, %v1121
    %v1134 = vsel %vm1130, %v1121, %v1123
    %v1135 = vsel %vm1130, %v1123, %v1125
    %v1136 = vsel %vm1130, %v1125, %v1127
    %v1137 = vsel %vm1130, %v1127, %v1129
    %1145 = vst [vmem:[#allocation2 + $0x428] sm:$0xff] %v1131
    %1146 = vst [vmem:[#allocation2 + $0x430] sm:$0xff] %v1132
    %1147 = vst [vmem:[#allocation2 + $0x438] sm:$0xff] %v1133
    %1148 = vst [vmem:[#allocation2 + $0x440] sm:$0xff] %v1134
    %1149 = vst [vmem:[#allocation2 + $0x448] sm:$0xff] %v1135
    %1150 = vst [vmem:[#allocation2 + $0x450] sm:$0xff] %v1136
    %1151 = vst [vmem:[#allocation2 + $0x458] sm:$0xff] %v1137
    %v1152 = vld [vmem:[#allocation4] sm:$0xff]
    %v1153 = vld [vmem:[#allocation4 + $0x8] sm:$0xff]
    %v1154 = vld [vmem:[#allocation4 + $0x10] sm:$0xff]
    %v1155 = vld [vmem:[#allocation4 + $0x18] sm:$0xff]
    %v1156 = vld [vmem:[#allocation4 + $0x20] sm:$0xff]
    %v1157 = vld [vmem:[#allocation4 + $0x28] sm:$0xff]
    %v1158 = vld [vmem:[#allocation4 + $0x30] sm:$0xff]
    %v1159 = vld [vmem:[#allocation4 + $0x38] sm:$0xff]
    %1168 = vrot.lane.b32.xlu0 %v1152, 19
    %v1169 = vpop.permute.xlu0 %1168
    %1170 = vrot.lane.b32.xlu0 %v1153, 19
    %v1171 = vpop.permute.xlu0 %1170
    %1172 = vrot.lane.b32.xlu0 %v1154, 19
    %v1173 = vpop.permute.xlu0 %1172
    %1174 = vrot.lane.b32.xlu0 %v1155, 19
    %v1175 = vpop.permute.xlu0 %1174
    %1176 = vrot.lane.b32.xlu0 %v1156, 19
    %v1177 = vpop.permute.xlu0 %1176
    %1178 = vrot.lane.b32.xlu0 %v1157, 19
    %v1179 = vpop.permute.xlu0 %1178
    %1180 = vrot.lane.b32.xlu0 %v1158, 19
    %v1181 = vpop.permute.xlu0 %1180
    %1182 = vrot.lane.b32.xlu0 %v1159, 19
    %v1183 = vpop.permute.xlu0 %1182
    %vm1184 = vcmask 154624
    %v1185 = vsel %vm1184, %v1169, %v1171
    %v1186 = vsel %vm1184, %v1171, %v1173
    %v1187 = vsel %vm1184, %v1173, %v1175
    %v1188 = vsel %vm1184, %v1175, %v1177
    %v1189 = vsel %vm1184, %v1177, %v1179
    %v1190 = vsel %vm1184, %v1179, %v1181
    %v1191 = vsel %vm1184, %v1181, %v1183
    %1199 = vst [vmem:[#allocation2 + $0x460] sm:$0xff] %v1185
    %1200 = vst [vmem:[#allocation2 + $0x468] sm:$0xff] %v1186
    %1201 = vst [vmem:[#allocation2 + $0x470] sm:$0xff] %v1187
    %1202 = vst [vmem:[#allocation2 + $0x478] sm:$0xff] %v1188
    %1203 = vst [vmem:[#allocation2 + $0x480] sm:$0xff] %v1189
    %1204 = vst [vmem:[#allocation2 + $0x488] sm:$0xff] %v1190
    %1205 = vst [vmem:[#allocation2 + $0x490] sm:$0xff] %v1191
    %v1206 = vld [vmem:[#allocation4] sm:$0xff]
    %v1207 = vld [vmem:[#allocation4 + $0x8] sm:$0xff]
    %v1208 = vld [vmem:[#allocation4 + $0x10] sm:$0xff]
    %v1209 = vld [vmem:[#allocation4 + $0x18] sm:$0xff]
    %v1210 = vld [vmem:[#allocation4 + $0x20] sm:$0xff]
    %v1211 = vld [vmem:[#allocation4 + $0x28] sm:$0xff]
    %v1212 = vld [vmem:[#allocation4 + $0x30] sm:$0xff]
    %v1213 = vld [vmem:[#allocation4 + $0x38] sm:$0xff]
    %1222 = vrot.lane.b32.xlu0 %v1206, 3
    %v1223 = vpop.permute.xlu0 %1222
    %1224 = vrot.lane.b32.xlu0 %v1207, 3
    %v1225 = vpop.permute.xlu0 %1224
    %1226 = vrot.lane.b32.xlu0 %v1208, 3
    %v1227 = vpop.permute.xlu0 %1226
    %1228 = vrot.lane.b32.xlu0 %v1209, 3
    %v1229 = vpop.permute.xlu0 %1228
    %1230 = vrot.lane.b32.xlu0 %v1210, 3
    %v1231 = vpop.permute.xlu0 %1230
    %1232 = vrot.lane.b32.xlu0 %v1211, 3
    %v1233 = vpop.permute.xlu0 %1232
    %1234 = vrot.lane.b32.xlu0 %v1212, 3
    %v1235 = vpop.permute.xlu0 %1234
    %1236 = vrot.lane.b32.xlu0 %v1213, 3
    %v1237 = vpop.permute.xlu0 %1236
    %vm1238 = vcmask 23552
    %v1239 = vsel %vm1238, %v1223, %v1225
    %v1240 = vsel %vm1238, %v1225, %v1227
    %v1241 = vsel %vm1238, %v1227, %v1229
    %v1242 = vsel %vm1238, %v1229, %v1231
    %v1243 = vsel %vm1238, %v1231, %v1233
    %v1244 = vsel %vm1238, %v1233, %v1235
    %v1245 = vsel %vm1238, %v1235, %v1237
    %1253 = vst [vmem:[#allocation2 + $0x498] sm:$0xff] %v1239
    %1254 = vst [vmem:[#allocation2 + $0x4a0] sm:$0xff] %v1240
    %1255 = vst [vmem:[#allocation2 + $0x4a8] sm:$0xff] %v1241
    %1256 = vst [vmem:[#allocation2 + $0x4b0] sm:$0xff] %v1242
    %1257 = vst [vmem:[#allocation2 + $0x4b8] sm:$0xff] %v1243
    %1258 = vst [vmem:[#allocation2 + $0x4c0] sm:$0xff] %v1244
    %1259 = vst [vmem:[#allocation2 + $0x4c8] sm:$0xff] %v1245
    %v1260 = vld [vmem:[#allocation4] sm:$0xff]
    %v1261 = vld [vmem:[#allocation4 + $0x8] sm:$0xff]
    %v1262 = vld [vmem:[#allocation4 + $0x10] sm:$0xff]
    %v1263 = vld [vmem:[#allocation4 + $0x18] sm:$0xff]
    %v1264 = vld [vmem:[#allocation4 + $0x20] sm:$0xff]
    %v1265 = vld [vmem:[#allocation4 + $0x28] sm:$0xff]
    %v1266 = vld [vmem:[#allocation4 + $0x30] sm:$0xff]
    %v1267 = vld [vmem:[#allocation4 + $0x38] sm:$0xff]
    %1276 = vrot.lane.b32.xlu0 %v1260, 2
    %v1277 = vpop.permute.xlu0 %1276
    %1278 = vrot.lane.b32.xlu0 %v1261, 2
    %v1279 = vpop.permute.xlu0 %1278
    %1280 = vrot.lane.b32.xlu0 %v1262, 2
    %v1281 = vpop.permute.xlu0 %1280
    %1282 = vrot.lane.b32.xlu0 %v1263, 2
    %v1283 = vpop.permute.xlu0 %1282
    %1284 = vrot.lane.b32.xlu0 %v1264, 2
    %v1285 = vpop.permute.xlu0 %1284
    %1286 = vrot.lane.b32.xlu0 %v1265, 2
    %v1287 = vpop.permute.xlu0 %1286
    %1288 = vrot.lane.b32.xlu0 %v1266, 2
    %v1289 = vpop.permute.xlu0 %1288
    %1290 = vrot.lane.b32.xlu0 %v1267, 2
    %v1291 = vpop.permute.xlu0 %1290
    %vm1292 = vcmask 15360
    %v1293 = vsel %vm1292, %v1277, %v1279
    %v1294 = vsel %vm1292, %v1279, %v1281
    %v1295 = vsel %vm1292, %v1281, %v1283
    %v1296 = vsel %vm1292, %v1283, %v1285
    %v1297 = vsel %vm1292, %v1285, %v1287
    %v1298 = vsel %vm1292, %v1287, %v1289
    %v1299 = vsel %vm1292, %v1289, %v1291
    %1307 = vst [vmem:[#allocation2 + $0x4d0] sm:$0xff] %v1293
    %1308 = vst [vmem:[#allocation2 + $0x4d8] sm:$0xff] %v1294
    %1309 = vst [vmem:[#allocation2 + $0x4e0] sm:$0xff] %v1295
    %1310 = vst [vmem:[#allocation2 + $0x4e8] sm:$0xff] %v1296
    %1311 = vst [vmem:[#allocation2 + $0x4f0] sm:$0xff] %v1297
    %1312 = vst [vmem:[#allocation2 + $0x4f8] sm:$0xff] %v1298
    %1313 = vst [vmem:[#allocation2 + $0x500] sm:$0xff] %v1299
    %v1314 = vld [vmem:[#allocation4] sm:$0xff]
    %v1315 = vld [vmem:[#allocation4 + $0x8] sm:$0xff]
    %v1316 = vld [vmem:[#allocation4 + $0x10] sm:$0xff]
    %v1317 = vld [vmem:[#allocation4 + $0x18] sm:$0xff]
    %v1318 = vld [vmem:[#allocation4 + $0x20] sm:$0xff]
    %v1319 = vld [vmem:[#allocation4 + $0x28] sm:$0xff]
    %v1320 = vld [vmem:[#allocation4 + $0x30] sm:$0xff]
    %v1321 = vld [vmem:[#allocation4 + $0x38] sm:$0xff]
    %1330 = vrot.lane.b32.xlu0 %v1314, 1
    %v1331 = vpop.permute.xlu0 %1330
    %1332 = vrot.lane.b32.xlu0 %v1315, 1
    %v1333 = vpop.permute.xlu0 %1332
    %1334 = vrot.lane.b32.xlu0 %v1316, 1
    %v1335 = vpop.permute.xlu0 %1334
    %1336 = vrot.lane.b32.xlu0 %v1317, 1
    %v1337 = vpop.permute.xlu0 %1336
    %1338 = vrot.lane.b32.xlu0 %v1318, 1
    %v1339 = vpop.permute.xlu0 %1338
    %1340 = vrot.lane.b32.xlu0 %v1319, 1
    %v1341 = vpop.permute.xlu0 %1340
    %1342 = vrot.lane.b32.xlu0 %v1320, 1
    %v1343 = vpop.permute.xlu0 %1342
    %1344 = vrot.lane.b32.xlu0 %v1321, 1
    %v1345 = vpop.permute.xlu0 %1344
    %vm1346 = vcmask 7168
    %v1347 = vsel %vm1346, %v1331, %v1333
    %v1348 = vsel %vm1346, %v1333, %v1335
    %v1349 = vsel %vm1346, %v1335, %v1337
    %v1350 = vsel %vm1346, %v1337, %v1339
    %v1351 = vsel %vm1346, %v1339, %v1341
    %v1352 = vsel %vm1346, %v1341, %v1343
    %v1353 = vsel %vm1346, %v1343, %v1345
    %1361 = vst [vmem:[#allocation2 + $0x508] sm:$0xff] %v1347
    %1362 = vst [vmem:[#allocation2 + $0x510] sm:$0xff] %v1348
    %1363 = vst [vmem:[#allocation2 + $0x518] sm:$0xff] %v1349
    %1364 = vst [vmem:[#allocation2 + $0x520] sm:$0xff] %v1350
    %1365 = vst [vmem:[#allocation2 + $0x528] sm:$0xff] %v1351
    %1366 = vst [vmem:[#allocation2 + $0x530] sm:$0xff] %v1352
    %1367 = vst [vmem:[#allocation2 + $0x538] sm:$0xff] %v1353
    %v1368 = vld [vmem:[#allocation4 + $0x8] sm:$0xff]
    %v1369 = vld [vmem:[#allocation4 + $0x10] sm:$0xff]
    %v1370 = vld [vmem:[#allocation4 + $0x18] sm:$0xff]
    %v1371 = vld [vmem:[#allocation4 + $0x20] sm:$0xff]
    %v1372 = vld [vmem:[#allocation4 + $0x28] sm:$0xff]
    %v1373 = vld [vmem:[#allocation4 + $0x30] sm:$0xff]
    %v1374 = vld [vmem:[#allocation4 + $0x38] sm:$0xff]
    %1375 = vst [vmem:[#allocation2 + $0x540] sm:$0xff] %v1368
    %1376 = vst [vmem:[#allocation2 + $0x548] sm:$0xff] %v1369
    %1377 = vst [vmem:[#allocation2 + $0x550] sm:$0xff] %v1370
    %1378 = vst [vmem:[#allocation2 + $0x558] sm:$0xff] %v1371
    %1379 = vst [vmem:[#allocation2 + $0x560] sm:$0xff] %v1372
    %1380 = vst [vmem:[#allocation2 + $0x568] sm:$0xff] %v1373
    %1381 = vst [vmem:[#allocation2 + $0x570] sm:$0xff] %v1374
    %v1382 = vld [vmem:[#allocation4 + $0x8] sm:$0xff]
    %v1383 = vld [vmem:[#allocation4 + $0x10] sm:$0xff]
    %v1384 = vld [vmem:[#allocation4 + $0x18] sm:$0xff]
    %v1385 = vld [vmem:[#allocation4 + $0x20] sm:$0xff]
    %v1386 = vld [vmem:[#allocation4 + $0x28] sm:$0xff]
    %v1387 = vld [vmem:[#allocation4 + $0x30] sm:$0xff]
    %v1388 = vld [vmem:[#allocation4 + $0x38] sm:$0xff]
    %v1389 = vld [vmem:[#allocation4 + $0x40] sm:$0xff]
    %1398 = vrot.lane.b32.xlu0 %v1382, 127
    %v1399 = vpop.permute.xlu0 %1398
    %1400 = vrot.lane.b32.xlu0 %v1383, 127
    %v1401 = vpop.permute.xlu0 %1400
    %1402 = vrot.lane.b32.xlu0 %v1384, 127
    %v1403 = vpop.permute.xlu0 %1402
    %1404 = vrot.lane.b32.xlu0 %v1385, 127
    %v1405 = vpop.permute.xlu0 %1404
    %1406 = vrot.lane.b32.xlu0 %v1386, 127
    %v1407 = vpop.permute.xlu0 %1406
    %1408 = vrot.lane.b32.xlu0 %v1387, 127
    %v1409 = vpop.permute.xlu0 %1408
    %1410 = vrot.lane.b32.xlu0 %v1388, 127
    %v1411 = vpop.permute.xlu0 %1410
    %1412 = vrot.lane.b32.xlu0 %v1389, 127
    %v1413 = vpop.permute.xlu0 %1412
    %vm1414 = vcmask 1039360
    %v1415 = vsel %vm1414, %v1399, %v1401
    %v1416 = vsel %vm1414, %v1401, %v1403
    %v1417 = vsel %vm1414, %v1403, %v1405
    %v1418 = vsel %vm1414, %v1405, %v1407
    %v1419 = vsel %vm1414, %v1407, %v1409
    %v1420 = vsel %vm1414, %v1409, %v1411
    %v1421 = vsel %vm1414, %v1411, %v1413
    %1429 = vst [vmem:[#allocation2 + $0x578] sm:$0xff] %v1415
    %1430 = vst [vmem:[#allocation2 + $0x580] sm:$0xff] %v1416
    %1431 = vst [vmem:[#allocation2 + $0x588] sm:$0xff] %v1417
    %1432 = vst [vmem:[#allocation2 + $0x590] sm:$0xff] %v1418
    %1433 = vst [vmem:[#allocation2 + $0x598] sm:$0xff] %v1419
    %1434 = vst [vmem:[#allocation2 + $0x5a0] sm:$0xff] %v1420
    %1435 = vst [vmem:[#allocation2 + $0x5a8] sm:$0xff] %v1421
    %v1436 = vld [vmem:[#allocation4 + $0x8] sm:$0xff]
    %v1437 = vld [vmem:[#allocation4 + $0x10] sm:$0xff]
    %v1438 = vld [vmem:[#allocation4 + $0x18] sm:$0xff]
    %v1439 = vld [vmem:[#allocation4 + $0x20] sm:$0xff]
    %v1440 = vld [vmem:[#allocation4 + $0x28] sm:$0xff]
    %v1441 = vld [vmem:[#allocation4 + $0x30] sm:$0xff]
    %v1442 = vld [vmem:[#allocation4 + $0x38] sm:$0xff]
    %v1443 = vld [vmem:[#allocation4 + $0x40] sm:$0xff]
    %1452 = vrot.lane.b32.xlu0 %v1436, 126
    %v1453 = vpop.permute.xlu0 %1452
    %1454 = vrot.lane.b32.xlu0 %v1437, 126
    %v1455 = vpop.permute.xlu0 %1454
    %1456 = vrot.lane.b32.xlu0 %v1438, 126
    %v1457 = vpop.permute.xlu0 %1456
    %1458 = vrot.lane.b32.xlu0 %v1439, 126
    %v1459 = vpop.permute.xlu0 %1458
    %1460 = vrot.lane.b32.xlu0 %v1440, 126
    %v1461 = vpop.permute.xlu0 %1460
    %1462 = vrot.lane.b32.xlu0 %v1441, 126
    %v1463 = vpop.permute.xlu0 %1462
    %1464 = vrot.lane.b32.xlu0 %v1442, 126
    %v1465 = vpop.permute.xlu0 %1464
    %1466 = vrot.lane.b32.xlu0 %v1443, 126
    %v1467 = vpop.permute.xlu0 %1466
    %vm1468 = vcmask 1031168
    %v1469 = vsel %vm1468, %v1453, %v1455
    %v1470 = vsel %vm1468, %v1455, %v1457
    %v1471 = vsel %vm1468, %v1457, %v1459
    %v1472 = vsel %vm1468, %v1459, %v1461
    %v1473 = vsel %vm1468, %v1461, %v1463
    %v1474 = vsel %vm1468, %v1463, %v1465
    %v1475 = vsel %vm1468, %v1465, %v1467
    %1483 = vst [vmem:[#allocation2 + $0x5b0] sm:$0xff] %v1469
    %1484 = vst [vmem:[#allocation2 + $0x5b8] sm:$0xff] %v1470
    %1485 = vst [vmem:[#allocation2 + $0x5c0] sm:$0xff] %v1471
    %1486 = vst [vmem:[#allocation2 + $0x5c8] sm:$0xff] %v1472
    %1487 = vst [vmem:[#allocation2 + $0x5d0] sm:$0xff] %v1473
    %1488 = vst [vmem:[#allocation2 + $0x5d8] sm:$0xff] %v1474
    %1489 = vst [vmem:[#allocation2 + $0x5e0] sm:$0xff] %v1475
    %v1490 = vld [vmem:[#allocation4 + $0x8] sm:$0xff]
    %v1491 = vld [vmem:[#allocation4 + $0x10] sm:$0xff]
    %v1492 = vld [vmem:[#allocation4 + $0x18] sm:$0xff]
    %v1493 = vld [vmem:[#allocation4 + $0x20] sm:$0xff]
    %v1494 = vld [vmem:[#allocation4 + $0x28] sm:$0xff]
    %v1495 = vld [vmem:[#allocation4 + $0x30] sm:$0xff]
    %v1496 = vld [vmem:[#allocation4 + $0x38] sm:$0xff]
    %v1497 = vld [vmem:[#allocation4 + $0x40] sm:$0xff]
    %1506 = vrot.lane.b32.xlu0 %v1490, 125
    %v1507 = vpop.permute.xlu0 %1506
    %1508 = vrot.lane.b32.xlu0 %v1491, 125
    %v1509 = vpop.permute.xlu0 %1508
    %1510 = vrot.lane.b32.xlu0 %v1492, 125
    %v1511 = vpop.permute.xlu0 %1510
    %1512 = vrot.lane.b32.xlu0 %v1493, 125
    %v1513 = vpop.permute.xlu0 %1512
    %1514 = vrot.lane.b32.xlu0 %v1494, 125
    %v1515 = vpop.permute.xlu0 %1514
    %1516 = vrot.lane.b32.xlu0 %v1495, 125
    %v1517 = vpop.permute.xlu0 %1516
    %1518 = vrot.lane.b32.xlu0 %v1496, 125
    %v1519 = vpop.permute.xlu0 %1518
    %1520 = vrot.lane.b32.xlu0 %v1497, 125
    %v1521 = vpop.permute.xlu0 %1520
    %vm1522 = vcmask 1022976
    %v1523 = vsel %vm1522, %v1507, %v1509
    %v1524 = vsel %vm1522, %v1509, %v1511
    %v1525 = vsel %vm1522, %v1511, %v1513
    %v1526 = vsel %vm1522, %v1513, %v1515
    %v1527 = vsel %vm1522, %v1515, %v1517
    %v1528 = vsel %vm1522, %v1517, %v1519
    %v1529 = vsel %vm1522, %v1519, %v1521
    %1537 = vst [vmem:[#allocation2 + $0x5e8] sm:$0xff] %v1523
    %1538 = vst [vmem:[#allocation2 + $0x5f0] sm:$0xff] %v1524
    %1539 = vst [vmem:[#allocation2 + $0x5f8] sm:$0xff] %v1525
    %1540 = vst [vmem:[#allocation2 + $0x600] sm:$0xff] %v1526
    %1541 = vst [vmem:[#allocation2 + $0x608] sm:$0xff] %v1527
    %1542 = vst [vmem:[#allocation2 + $0x610] sm:$0xff] %v1528
    %1543 = vst [vmem:[#allocation2 + $0x618] sm:$0xff] %v1529
    %v1544 = vld [vmem:[#allocation4 + $0x8] sm:$0xff]
    %v1545 = vld [vmem:[#allocation4 + $0x10] sm:$0xff]
    %v1546 = vld [vmem:[#allocation4 + $0x18] sm:$0xff]
    %v1547 = vld [vmem:[#allocation4 + $0x20] sm:$0xff]
    %v1548 = vld [vmem:[#allocation4 + $0x28] sm:$0xff]
    %v1549 = vld [vmem:[#allocation4 + $0x30] sm:$0xff]
    %v1550 = vld [vmem:[#allocation4 + $0x38] sm:$0xff]
    %v1551 = vld [vmem:[#allocation4 + $0x40] sm:$0xff]
    %1560 = vrot.lane.b32.xlu0 %v1544, 109
    %v1561 = vpop.permute.xlu0 %1560
    %1562 = vrot.lane.b32.xlu0 %v1545, 109
    %v1563 = vpop.permute.xlu0 %1562
    %1564 = vrot.lane.b32.xlu0 %v1546, 109
    %v1565 = vpop.permute.xlu0 %1564
    %1566 = vrot.lane.b32.xlu0 %v1547, 109
    %v1567 = vpop.permute.xlu0 %1566
    %1568 = vrot.lane.b32.xlu0 %v1548, 109
    %v1569 = vpop.permute.xlu0 %1568
    %1570 = vrot.lane.b32.xlu0 %v1549, 109
    %v1571 = vpop.permute.xlu0 %1570
    %1572 = vrot.lane.b32.xlu0 %v1550, 109
    %v1573 = vpop.permute.xlu0 %1572
    %1574 = vrot.lane.b32.xlu0 %v1551, 109
    %v1575 = vpop.permute.xlu0 %1574
    %vm1576 = vcmask 891904
    %v1577 = vsel %vm1576, %v1561, %v1563
    %v1578 = vsel %vm1576, %v1563, %v1565
    %v1579 = vsel %vm1576, %v1565, %v1567
    %v1580 = vsel %vm1576, %v1567, %v1569
    %v1581 = vsel %vm1576, %v1569, %v1571
    %v1582 = vsel %vm1576, %v1571, %v1573
    %v1583 = vsel %vm1576, %v1573, %v1575
    %1591 = vst [vmem:[#allocation2 + $0x620] sm:$0xff] %v1577
    %1592 = vst [vmem:[#allocation2 + $0x628] sm:$0xff] %v1578
    %1593 = vst [vmem:[#allocation2 + $0x630] sm:$0xff] %v1579
    %1594 = vst [vmem:[#allocation2 + $0x638] sm:$0xff] %v1580
    %1595 = vst [vmem:[#allocation2 + $0x640] sm:$0xff] %v1581
    %1596 = vst [vmem:[#allocation2 + $0x648] sm:$0xff] %v1582
    %1597 = vst [vmem:[#allocation2 + $0x650] sm:$0xff] %v1583
    %v1598 = vld [vmem:[#allocation4 + $0x8] sm:$0xff]
    %v1599 = vld [vmem:[#allocation4 + $0x10] sm:$0xff]
    %v1600 = vld [vmem:[#allocation4 + $0x18] sm:$0xff]
    %v1601 = vld [vmem:[#allocation4 + $0x20] sm:$0xff]
    %v1602 = vld [vmem:[#allocation4 + $0x28] sm:$0xff]
    %v1603 = vld [vmem:[#allocation4 + $0x30] sm:$0xff]
    %v1604 = vld [vmem:[#allocation4 + $0x38] sm:$0xff]
    %v1605 = vld [vmem:[#allocation4 + $0x40] sm:$0xff]
    %1614 = vrot.lane.b32.xlu0 %v1598, 108
    %v1615 = vpop.permute.xlu0 %1614
    %1616 = vrot.lane.b32.xlu0 %v1599, 108
    %v1617 = vpop.permute.xlu0 %1616
    %1618 = vrot.lane.b32.xlu0 %v1600, 108
    %v1619 = vpop.permute.xlu0 %1618
    %1620 = vrot.lane.b32.xlu0 %v1601, 108
    %v1621 = vpop.permute.xlu0 %1620
    %1622 = vrot.lane.b32.xlu0 %v1602, 108
    %v1623 = vpop.permute.xlu0 %1622
    %1624 = vrot.lane.b32.xlu0 %v1603, 108
    %v1625 = vpop.permute.xlu0 %1624
    %1626 = vrot.lane.b32.xlu0 %v1604, 108
    %v1627 = vpop.permute.xlu0 %1626
    %1628 = vrot.lane.b32.xlu0 %v1605, 108
    %v1629 = vpop.permute.xlu0 %1628
    %vm1630 = vcmask 883712
    %v1631 = vsel %vm1630, %v1615, %v1617
    %v1632 = vsel %vm1630, %v1617, %v1619
    %v1633 = vsel %vm1630, %v1619, %v1621
    %v1634 = vsel %vm1630, %v1621, %v1623
    %v1635 = vsel %vm1630, %v1623, %v1625
    %v1636 = vsel %vm1630, %v1625, %v1627
    %v1637 = vsel %vm1630, %v1627, %v1629
    %1645 = vst [vmem:[#allocation2 + $0x658] sm:$0xff] %v1631
    %1646 = vst [vmem:[#allocation2 + $0x660] sm:$0xff] %v1632
    %1647 = vst [vmem:[#allocation2 + $0x668] sm:$0xff] %v1633
    %1648 = vst [vmem:[#allocation2 + $0x670] sm:$0xff] %v1634
    %1649 = vst [vmem:[#allocation2 + $0x678] sm:$0xff] %v1635
    %1650 = vst [vmem:[#allocation2 + $0x680] sm:$0xff] %v1636
    %1651 = vst [vmem:[#allocation2 + $0x688] sm:$0xff] %v1637
    %v1652 = vld [vmem:[#allocation4 + $0x8] sm:$0xff]
    %v1653 = vld [vmem:[#allocation4 + $0x10] sm:$0xff]
    %v1654 = vld [vmem:[#allocation4 + $0x18] sm:$0xff]
    %v1655 = vld [vmem:[#allocation4 + $0x20] sm:$0xff]
    %v1656 = vld [vmem:[#allocation4 + $0x28] sm:$0xff]
    %v1657 = vld [vmem:[#allocation4 + $0x30] sm:$0xff]
    %v1658 = vld [vmem:[#allocation4 + $0x38] sm:$0xff]
    %v1659 = vld [vmem:[#allocation4 + $0x40] sm:$0xff]
    %1668 = vrot.lane.b32.xlu0 %v1652, 107
    %v1669 = vpop.permute.xlu0 %1668
    %1670 = vrot.lane.b32.xlu0 %v1653, 107
    %v1671 = vpop.permute.xlu0 %1670
    %1672 = vrot.lane.b32.xlu0 %v1654, 107
    %v1673 = vpop.permute.xlu0 %1672
    %1674 = vrot.lane.b32.xlu0 %v1655, 107
    %v1675 = vpop.permute.xlu0 %1674
    %1676 = vrot.lane.b32.xlu0 %v1656, 107
    %v1677 = vpop.permute.xlu0 %1676
    %1678 = vrot.lane.b32.xlu0 %v1657, 107
    %v1679 = vpop.permute.xlu0 %1678
    %1680 = vrot.lane.b32.xlu0 %v1658, 107
    %v1681 = vpop.permute.xlu0 %1680
    %1682 = vrot.lane.b32.xlu0 %v1659, 107
    %v1683 = vpop.permute.xlu0 %1682
    %vm1684 = vcmask 875520
    %v1685 = vsel %vm1684, %v1669, %v1671
    %v1686 = vsel %vm1684, %v1671, %v1673
    %v1687 = vsel %vm1684, %v1673, %v1675
    %v1688 = vsel %vm1684, %v1675, %v1677
    %v1689 = vsel %vm1684, %v1677, %v1679
    %v1690 = vsel %vm1684, %v1679, %v1681
    %v1691 = vsel %vm1684, %v1681, %v1683
    %1699 = vst [vmem:[#allocation2 + $0x690] sm:$0xff] %v1685
    %1700 = vst [vmem:[#allocation2 + $0x698] sm:$0xff] %v1686
    %1701 = vst [vmem:[#allocation2 + $0x6a0] sm:$0xff] %v1687
    %1702 = vst [vmem:[#allocation2 + $0x6a8] sm:$0xff] %v1688
    %1703 = vst [vmem:[#allocation2 + $0x6b0] sm:$0xff] %v1689
    %1704 = vst [vmem:[#allocation2 + $0x6b8] sm:$0xff] %v1690
    %1705 = vst [vmem:[#allocation2 + $0x6c0] sm:$0xff] %v1691
    %v1706 = vld [vmem:[#allocation4 + $0x8] sm:$0xff]
    %v1707 = vld [vmem:[#allocation4 + $0x10] sm:$0xff]
    %v1708 = vld [vmem:[#allocation4 + $0x18] sm:$0xff]
    %v1709 = vld [vmem:[#allocation4 + $0x20] sm:$0xff]
    %v1710 = vld [vmem:[#allocation4 + $0x28] sm:$0xff]
    %v1711 = vld [vmem:[#allocation4 + $0x30] sm:$0xff]
    %v1712 = vld [vmem:[#allocation4 + $0x38] sm:$0xff]
    %v1713 = vld [vmem:[#allocation4 + $0x40] sm:$0xff]
    %1722 = vrot.lane.b32.xlu0 %v1706, 106
    %v1723 = vpop.permute.xlu0 %1722
    %1724 = vrot.lane.b32.xlu0 %v1707, 106
    %v1725 = vpop.permute.xlu0 %1724
    %1726 = vrot.lane.b32.xlu0 %v1708, 106
    %v1727 = vpop.permute.xlu0 %1726
    %1728 = vrot.lane.b32.xlu0 %v1709, 106
    %v1729 = vpop.permute.xlu0 %1728
    %1730 = vrot.lane.b32.xlu0 %v1710, 106
    %v1731 = vpop.permute.xlu0 %1730
    %1732 = vrot.lane.b32.xlu0 %v1711, 106
    %v1733 = vpop.permute.xlu0 %1732
    %1734 = vrot.lane.b32.xlu0 %v1712, 106
    %v1735 = vpop.permute.xlu0 %1734
    %1736 = vrot.lane.b32.xlu0 %v1713, 106
    %v1737 = vpop.permute.xlu0 %1736
    %vm1738 = vcmask 867328
    %v1739 = vsel %vm1738, %v1723, %v1725
    %v1740 = vsel %vm1738, %v1725, %v1727
    %v1741 = vsel %vm1738, %v1727, %v1729
    %v1742 = vsel %vm1738, %v1729, %v1731
    %v1743 = vsel %vm1738, %v1731, %v1733
    %v1744 = vsel %vm1738, %v1733, %v1735
    %v1745 = vsel %vm1738, %v1735, %v1737
    %1753 = vst [vmem:[#allocation2 + $0x6c8] sm:$0xff] %v1739
    %1754 = vst [vmem:[#allocation2 + $0x6d0] sm:$0xff] %v1740
    %1755 = vst [vmem:[#allocation2 + $0x6d8] sm:$0xff] %v1741
    %1756 = vst [vmem:[#allocation2 + $0x6e0] sm:$0xff] %v1742
    %1757 = vst [vmem:[#allocation2 + $0x6e8] sm:$0xff] %v1743
    %1758 = vst [vmem:[#allocation2 + $0x6f0] sm:$0xff] %v1744
    %1759 = vst [vmem:[#allocation2 + $0x6f8] sm:$0xff] %v1745
    %v1760 = vld [vmem:[#allocation4 + $0x8] sm:$0xff]
    %v1761 = vld [vmem:[#allocation4 + $0x10] sm:$0xff]
    %v1762 = vld [vmem:[#allocation4 + $0x18] sm:$0xff]
    %v1763 = vld [vmem:[#allocation4 + $0x20] sm:$0xff]
    %v1764 = vld [vmem:[#allocation4 + $0x28] sm:$0xff]
    %v1765 = vld [vmem:[#allocation4 + $0x30] sm:$0xff]
    %v1766 = vld [vmem:[#allocation4 + $0x38] sm:$0xff]
    %v1767 = vld [vmem:[#allocation4 + $0x40] sm:$0xff]
    %1776 = vrot.lane.b32.xlu0 %v1760, 105
    %v1777 = vpop.permute.xlu0 %1776
    %1778 = vrot.lane.b32.xlu0 %v1761, 105
    %v1779 = vpop.permute.xlu0 %1778
    %1780 = vrot.lane.b32.xlu0 %v1762, 105
    %v1781 = vpop.permute.xlu0 %1780
    %1782 = vrot.lane.b32.xlu0 %v1763, 105
    %v1783 = vpop.permute.xlu0 %1782
    %1784 = vrot.lane.b32.xlu0 %v1764, 105
    %v1785 = vpop.permute.xlu0 %1784
    %1786 = vrot.lane.b32.xlu0 %v1765, 105
    %v1787 = vpop.permute.xlu0 %1786
    %1788 = vrot.lane.b32.xlu0 %v1766, 105
    %v1789 = vpop.permute.xlu0 %1788
    %1790 = vrot.lane.b32.xlu0 %v1767, 105
    %v1791 = vpop.permute.xlu0 %1790
    %vm1792 = vcmask 859136
    %v1793 = vsel %vm1792, %v1777, %v1779
    %v1794 = vsel %vm1792, %v1779, %v1781
    %v1795 = vsel %vm1792, %v1781, %v1783
    %v1796 = vsel %vm1792, %v1783, %v1785
    %v1797 = vsel %vm1792, %v1785, %v1787
    %v1798 = vsel %vm1792, %v1787, %v1789
    %v1799 = vsel %vm1792, %v1789, %v1791
    %1807 = vst [vmem:[#allocation2 + $0x700] sm:$0xff] %v1793
    %1808 = vst [vmem:[#allocation2 + $0x708] sm:$0xff] %v1794
    %1809 = vst [vmem:[#allocation2 + $0x710] sm:$0xff] %v1795
    %1810 = vst [vmem:[#allocation2 + $0x718] sm:$0xff] %v1796
    %1811 = vst [vmem:[#allocation2 + $0x720] sm:$0xff] %v1797
    %1812 = vst [vmem:[#allocation2 + $0x728] sm:$0xff] %v1798
    %1813 = vst [vmem:[#allocation2 + $0x730] sm:$0xff] %v1799
    %v1814 = vld [vmem:[#allocation4 + $0x8] sm:$0xff]
    %v1815 = vld [vmem:[#allocation4 + $0x10] sm:$0xff]
    %v1816 = vld [vmem:[#allocation4 + $0x18] sm:$0xff]
    %v1817 = vld [vmem:[#allocation4 + $0x20] sm:$0xff]
    %v1818 = vld [vmem:[#allocation4 + $0x28] sm:$0xff]
    %v1819 = vld [vmem:[#allocation4 + $0x30] sm:$0xff]
    %v1820 = vld [vmem:[#allocation4 + $0x38] sm:$0xff]
    %v1821 = vld [vmem:[#allocation4 + $0x40] sm:$0xff]
    %1830 = vrot.lane.b32.xlu0 %v1814, 104
    %v1831 = vpop.permute.xlu0 %1830
    %1832 = vrot.lane.b32.xlu0 %v1815, 104
    %v1833 = vpop.permute.xlu0 %1832
    %1834 = vrot.lane.b32.xlu0 %v1816, 104
    %v1835 = vpop.permute.xlu0 %1834
    %1836 = vrot.lane.b32.xlu0 %v1817, 104
    %v1837 = vpop.permute.xlu0 %1836
    %1838 = vrot.lane.b32.xlu0 %v1818, 104
    %v1839 = vpop.permute.xlu0 %1838
    %1840 = vrot.lane.b32.xlu0 %v1819, 104
    %v1841 = vpop.permute.xlu0 %1840
    %1842 = vrot.lane.b32.xlu0 %v1820, 104
    %v1843 = vpop.permute.xlu0 %1842
    %1844 = vrot.lane.b32.xlu0 %v1821, 104
    %v1845 = vpop.permute.xlu0 %1844
    %vm1846 = vcmask 850944
    %v1847 = vsel %vm1846, %v1831, %v1833
    %v1848 = vsel %vm1846, %v1833, %v1835
    %v1849 = vsel %vm1846, %v1835, %v1837
    %v1850 = vsel %vm1846, %v1837, %v1839
    %v1851 = vsel %vm1846, %v1839, %v1841
    %v1852 = vsel %vm1846, %v1841, %v1843
    %v1853 = vsel %vm1846, %v1843, %v1845
    %1861 = vst [vmem:[#allocation2 + $0x738] sm:$0xff] %v1847
    %1862 = vst [vmem:[#allocation2 + $0x740] sm:$0xff] %v1848
    %1863 = vst [vmem:[#allocation2 + $0x748] sm:$0xff] %v1849
    %1864 = vst [vmem:[#allocation2 + $0x750] sm:$0xff] %v1850
    %1865 = vst [vmem:[#allocation2 + $0x758] sm:$0xff] %v1851
    %1866 = vst [vmem:[#allocation2 + $0x760] sm:$0xff] %v1852
    %1867 = vst [vmem:[#allocation2 + $0x768] sm:$0xff] %v1853
    %v1868 = vld [vmem:[#allocation4 + $0x8] sm:$0xff]
    %v1869 = vld [vmem:[#allocation4 + $0x10] sm:$0xff]
    %v1870 = vld [vmem:[#allocation4 + $0x18] sm:$0xff]
    %v1871 = vld [vmem:[#allocation4 + $0x20] sm:$0xff]
    %v1872 = vld [vmem:[#allocation4 + $0x28] sm:$0xff]
    %v1873 = vld [vmem:[#allocation4 + $0x30] sm:$0xff]
    %v1874 = vld [vmem:[#allocation4 + $0x38] sm:$0xff]
    %v1875 = vld [vmem:[#allocation4 + $0x40] sm:$0xff]
    %1884 = vrot.lane.b32.xlu0 %v1868, 103
    %v1885 = vpop.permute.xlu0 %1884
    %1886 = vrot.lane.b32.xlu0 %v1869, 103
    %v1887 = vpop.permute.xlu0 %1886
    %1888 = vrot.lane.b32.xlu0 %v1870, 103
    %v1889 = vpop.permute.xlu0 %1888
    %1890 = vrot.lane.b32.xlu0 %v1871, 103
    %v1891 = vpop.permute.xlu0 %1890
    %1892 = vrot.lane.b32.xlu0 %v1872, 103
    %v1893 = vpop.permute.xlu0 %1892
    %1894 = vrot.lane.b32.xlu0 %v1873, 103
    %v1895 = vpop.permute.xlu0 %1894
    %1896 = vrot.lane.b32.xlu0 %v1874, 103
    %v1897 = vpop.permute.xlu0 %1896
    %1898 = vrot.lane.b32.xlu0 %v1875, 103
    %v1899 = vpop.permute.xlu0 %1898
    %vm1900 = vcmask 842752
    %v1901 = vsel %vm1900, %v1885, %v1887
    %v1902 = vsel %vm1900, %v1887, %v1889
    %v1903 = vsel %vm1900, %v1889, %v1891
    %v1904 = vsel %vm1900, %v1891, %v1893
    %v1905 = vsel %vm1900, %v1893, %v1895
    %v1906 = vsel %vm1900, %v1895, %v1897
    %v1907 = vsel %vm1900, %v1897, %v1899
    %1915 = vst [vmem:[#allocation2 + $0x770] sm:$0xff] %v1901
    %1916 = vst [vmem:[#allocation2 + $0x778] sm:$0xff] %v1902
    %1917 = vst [vmem:[#allocation2 + $0x780] sm:$0xff] %v1903
    %1918 = vst [vmem:[#allocation2 + $0x788] sm:$0xff] %v1904
    %1919 = vst [vmem:[#allocation2 + $0x790] sm:$0xff] %v1905
    %1920 = vst [vmem:[#allocation2 + $0x798] sm:$0xff] %v1906
    %1921 = vst [vmem:[#allocation2 + $0x7a0] sm:$0xff] %v1907
    %v1922 = vld [vmem:[#allocation4 + $0x8] sm:$0xff]
    %v1923 = vld [vmem:[#allocation4 + $0x10] sm:$0xff]
    %v1924 = vld [vmem:[#allocation4 + $0x18] sm:$0xff]
    %v1925 = vld [vmem:[#allocation4 + $0x20] sm:$0xff]
    %v1926 = vld [vmem:[#allocation4 + $0x28] sm:$0xff]
    %v1927 = vld [vmem:[#allocation4 + $0x30] sm:$0xff]
    %v1928 = vld [vmem:[#allocation4 + $0x38] sm:$0xff]
    %v1929 = vld [vmem:[#allocation4 + $0x40] sm:$0xff]
    %1938 = vrot.lane.b32.xlu0 %v1922, 87
    %v1939 = vpop.permute.xlu0 %1938
    %1940 = vrot.lane.b32.xlu0 %v1923, 87
    %v1941 = vpop.permute.xlu0 %1940
    %1942 = vrot.lane.b32.xlu0 %v1924, 87
    %v1943 = vpop.permute.xlu0 %1942
    %1944 = vrot.lane.b32.xlu0 %v1925, 87
    %v1945 = vpop.permute.xlu0 %1944
    %1946 = vrot.lane.b32.xlu0 %v1926, 87
    %v1947 = vpop.permute.xlu0 %1946
    %1948 = vrot.lane.b32.xlu0 %v1927, 87
    %v1949 = vpop.permute.xlu0 %1948
    %1950 = vrot.lane.b32.xlu0 %v1928, 87
    %v1951 = vpop.permute.xlu0 %1950
    %1952 = vrot.lane.b32.xlu0 %v1929, 87
    %v1953 = vpop.permute.xlu0 %1952
    %vm1954 = vcmask 711680
    %v1955 = vsel %vm1954, %v1939, %v1941
    %v1956 = vsel %vm1954, %v1941, %v1943
    %v1957 = vsel %vm1954, %v1943, %v1945
    %v1958 = vsel %vm1954, %v1945, %v1947
    %v1959 = vsel %vm1954, %v1947, %v1949
    %v1960 = vsel %vm1954, %v1949, %v1951
    %v1961 = vsel %vm1954, %v1951, %v1953
    %1969 = vst [vmem:[#allocation2 + $0x7a8] sm:$0xff] %v1955
    %1970 = vst [vmem:[#allocation2 + $0x7b0] sm:$0xff] %v1956
    %1971 = vst [vmem:[#allocation2 + $0x7b8] sm:$0xff] %v1957
    %1972 = vst [vmem:[#allocation2 + $0x7c0] sm:$0xff] %v1958
    %1973 = vst [vmem:[#allocation2 + $0x7c8] sm:$0xff] %v1959
    %1974 = vst [vmem:[#allocation2 + $0x7d0] sm:$0xff] %v1960
    %1975 = vst [vmem:[#allocation2 + $0x7d8] sm:$0xff] %v1961
    %v1976 = vld [vmem:[#allocation4 + $0x8] sm:$0xff]
    %v1977 = vld [vmem:[#allocation4 + $0x10] sm:$0xff]
    %v1978 = vld [vmem:[#allocation4 + $0x18] sm:$0xff]
    %v1979 = vld [vmem:[#allocation4 + $0x20] sm:$0xff]
    %v1980 = vld [vmem:[#allocation4 + $0x28] sm:$0xff]
    %v1981 = vld [vmem:[#allocation4 + $0x30] sm:$0xff]
    %v1982 = vld [vmem:[#allocation4 + $0x38] sm:$0xff]
    %v1983 = vld [vmem:[#allocation4 + $0x40] sm:$0xff]
    %1992 = vrot.lane.b32.xlu0 %v1976, 86
    %v1993 = vpop.permute.xlu0 %1992
    %1994 = vrot.lane.b32.xlu0 %v1977, 86
    %v1995 = vpop.permute.xlu0 %1994
    %1996 = vrot.lane.b32.xlu0 %v1978, 86
    %v1997 = vpop.permute.xlu0 %1996
    %1998 = vrot.lane.b32.xlu0 %v1979, 86
    %v1999 = vpop.permute.xlu0 %1998
    %2000 = vrot.lane.b32.xlu0 %v1980, 86
    %v2001 = vpop.permute.xlu0 %2000
    %2002 = vrot.lane.b32.xlu0 %v1981, 86
    %v2003 = vpop.permute.xlu0 %2002
    %2004 = vrot.lane.b32.xlu0 %v1982, 86
    %v2005 = vpop.permute.xlu0 %2004
    %2006 = vrot.lane.b32.xlu0 %v1983, 86
    %v2007 = vpop.permute.xlu0 %2006
    %vm2008 = vcmask 703488
    %v2009 = vsel %vm2008, %v1993, %v1995
    %v2010 = vsel %vm2008, %v1995, %v1997
    %v2011 = vsel %vm2008, %v1997, %v1999
    %v2012 = vsel %vm2008, %v1999, %v2001
    %v2013 = vsel %vm2008, %v2001, %v2003
    %v2014 = vsel %vm2008, %v2003, %v2005
    %v2015 = vsel %vm2008, %v2005, %v2007
    %2023 = vst [vmem:[#allocation2 + $0x7e0] sm:$0xff] %v2009
    %2024 = vst [vmem:[#allocation2 + $0x7e8] sm:$0xff] %v2010
    %2025 = vst [vmem:[#allocation2 + $0x7f0] sm:$0xff] %v2011
    %2026 = vst [vmem:[#allocation2 + $0x7f8] sm:$0xff] %v2012
    %2027 = vst [vmem:[#allocation2 + $0x800] sm:$0xff] %v2013
    %2028 = vst [vmem:[#allocation2 + $0x808] sm:$0xff] %v2014
    %2029 = vst [vmem:[#allocation2 + $0x810] sm:$0xff] %v2015
    %v2030 = vld [vmem:[#allocation4 + $0x8] sm:$0xff]
    %v2031 = vld [vmem:[#allocation4 + $0x10] sm:$0xff]
    %v2032 = vld [vmem:[#allocation4 + $0x18] sm:$0xff]
    %v2033 = vld [vmem:[#allocation4 + $0x20] sm:$0xff]
    %v2034 = vld [vmem:[#allocation4 + $0x28] sm:$0xff]
    %v2035 = vld [vmem:[#allocation4 + $0x30] sm:$0xff]
    %v2036 = vld [vmem:[#allocation4 + $0x38] sm:$0xff]
    %v2037 = vld [vmem:[#allocation4 + $0x40] sm:$0xff]
    %2046 = vrot.lane.b32.xlu0 %v2030, 85
    %v2047 = vpop.permute.xlu0 %2046
    %2048 = vrot.lane.b32.xlu0 %v2031, 85
    %v2049 = vpop.permute.xlu0 %2048
    %2050 = vrot.lane.b32.xlu0 %v2032, 85
    %v2051 = vpop.permute.xlu0 %2050
    %2052 = vrot.lane.b32.xlu0 %v2033, 85
    %v2053 = vpop.permute.xlu0 %2052
    %2054 = vrot.lane.b32.xlu0 %v2034, 85
    %v2055 = vpop.permute.xlu0 %2054
    %2056 = vrot.lane.b32.xlu0 %v2035, 85
    %v2057 = vpop.permute.xlu0 %2056
    %2058 = vrot.lane.b32.xlu0 %v2036, 85
    %v2059 = vpop.permute.xlu0 %2058
    %2060 = vrot.lane.b32.xlu0 %v2037, 85
    %v2061 = vpop.permute.xlu0 %2060
    %vm2062 = vcmask 695296
    %v2063 = vsel %vm2062, %v2047, %v2049
    %v2064 = vsel %vm2062, %v2049, %v2051
    %v2065 = vsel %vm2062, %v2051, %v2053
    %v2066 = vsel %vm2062, %v2053, %v2055
    %v2067 = vsel %vm2062, %v2055, %v2057
    %v2068 = vsel %vm2062, %v2057, %v2059
    %v2069 = vsel %vm2062, %v2059, %v2061
    %2077 = vst [vmem:[#allocation2 + $0x818] sm:$0xff] %v2063
    %2078 = vst [vmem:[#allocation2 + $0x820] sm:$0xff] %v2064
    %2079 = vst [vmem:[#allocation2 + $0x828] sm:$0xff] %v2065
    %2080 = vst [vmem:[#allocation2 + $0x830] sm:$0xff] %v2066
    %2081 = vst [vmem:[#allocation2 + $0x838] sm:$0xff] %v2067
    %2082 = vst [vmem:[#allocation2 + $0x840] sm:$0xff] %v2068
    %2083 = vst [vmem:[#allocation2 + $0x848] sm:$0xff] %v2069
    %v2084 = vld [vmem:[#allocation4 + $0x8] sm:$0xff]
    %v2085 = vld [vmem:[#allocation4 + $0x10] sm:$0xff]
    %v2086 = vld [vmem:[#allocation4 + $0x18] sm:$0xff]
    %v2087 = vld [vmem:[#allocation4 + $0x20] sm:$0xff]
    %v2088 = vld [vmem:[#allocation4 + $0x28] sm:$0xff]
    %v2089 = vld [vmem:[#allocation4 + $0x30] sm:$0xff]
    %v2090 = vld [vmem:[#allocation4 + $0x38] sm:$0xff]
    %v2091 = vld [vmem:[#allocation4 + $0x40] sm:$0xff]
    %2100 = vrot.lane.b32.xlu0 %v2084, 84
    %v2101 = vpop.permute.xlu0 %2100
    %2102 = vrot.lane.b32.xlu0 %v2085, 84
    %v2103 = vpop.permute.xlu0 %2102
    %2104 = vrot.lane.b32.xlu0 %v2086, 84
    %v2105 = vpop.permute.xlu0 %2104
    %2106 = vrot.lane.b32.xlu0 %v2087, 84
    %v2107 = vpop.permute.xlu0 %2106
    %2108 = vrot.lane.b32.xlu0 %v2088, 84
    %v2109 = vpop.permute.xlu0 %2108
    %2110 = vrot.lane.b32.xlu0 %v2089, 84
    %v2111 = vpop.permute.xlu0 %2110
    %2112 = vrot.lane.b32.xlu0 %v2090, 84
    %v2113 = vpop.permute.xlu0 %2112
    %2114 = vrot.lane.b32.xlu0 %v2091, 84
    %v2115 = vpop.permute.xlu0 %2114
    %vm2116 = vcmask 687104
    %v2117 = vsel %vm2116, %v2101, %v2103
    %v2118 = vsel %vm2116, %v2103, %v2105
    %v2119 = vsel %vm2116, %v2105, %v2107
    %v2120 = vsel %vm2116, %v2107, %v2109
    %v2121 = vsel %vm2116, %v2109, %v2111
    %v2122 = vsel %vm2116, %v2111, %v2113
    %v2123 = vsel %vm2116, %v2113, %v2115
    %2131 = vst [vmem:[#allocation2 + $0x850] sm:$0xff] %v2117
    %2132 = vst [vmem:[#allocation2 + $0x858] sm:$0xff] %v2118
    %2133 = vst [vmem:[#allocation2 + $0x860] sm:$0xff] %v2119
    %2134 = vst [vmem:[#allocation2 + $0x868] sm:$0xff] %v2120
    %2135 = vst [vmem:[#allocation2 + $0x870] sm:$0xff] %v2121
    %2136 = vst [vmem:[#allocation2 + $0x878] sm:$0xff] %v2122
    %2137 = vst [vmem:[#allocation2 + $0x880] sm:$0xff] %v2123
    %v2138 = vld [vmem:[#allocation4 + $0x8] sm:$0xff]
    %v2139 = vld [vmem:[#allocation4 + $0x10] sm:$0xff]
    %v2140 = vld [vmem:[#allocation4 + $0x18] sm:$0xff]
    %v2141 = vld [vmem:[#allocation4 + $0x20] sm:$0xff]
    %v2142 = vld [vmem:[#allocation4 + $0x28] sm:$0xff]
    %v2143 = vld [vmem:[#allocation4 + $0x30] sm:$0xff]
    %v2144 = vld [vmem:[#allocation4 + $0x38] sm:$0xff]
    %v2145 = vld [vmem:[#allocation4 + $0x40] sm:$0xff]
    %2154 = vrot.lane.b32.xlu0 %v2138, 83
    %v2155 = vpop.permute.xlu0 %2154
    %2156 = vrot.lane.b32.xlu0 %v2139, 83
    %v2157 = vpop.permute.xlu0 %2156
    %2158 = vrot.lane.b32.xlu0 %v2140, 83
    %v2159 = vpop.permute.xlu0 %2158
    %2160 = vrot.lane.b32.xlu0 %v2141, 83
    %v2161 = vpop.permute.xlu0 %2160
    %2162 = vrot.lane.b32.xlu0 %v2142, 83
    %v2163 = vpop.permute.xlu0 %2162
    %2164 = vrot.lane.b32.xlu0 %v2143, 83
    %v2165 = vpop.permute.xlu0 %2164
    %2166 = vrot.lane.b32.xlu0 %v2144, 83
    %v2167 = vpop.permute.xlu0 %2166
    %2168 = vrot.lane.b32.xlu0 %v2145, 83
    %v2169 = vpop.permute.xlu0 %2168
    %vm2170 = vcmask 678912
    %v2171 = vsel %vm2170, %v2155, %v2157
    %v2172 = vsel %vm2170, %v2157, %v2159
    %v2173 = vsel %vm2170, %v2159, %v2161
    %v2174 = vsel %vm2170, %v2161, %v2163
    %v2175 = vsel %vm2170, %v2163, %v2165
    %v2176 = vsel %vm2170, %v2165, %v2167
    %v2177 = vsel %vm2170, %v2167, %v2169
    %2185 = vst [vmem:[#allocation2 + $0x888] sm:$0xff] %v2171
    %2186 = vst [vmem:[#allocation2 + $0x890] sm:$0xff] %v2172
    %2187 = vst [vmem:[#allocation2 + $0x898] sm:$0xff] %v2173
    %2188 = vst [vmem:[#allocation2 + $0x8a0] sm:$0xff] %v2174
    %2189 = vst [vmem:[#allocation2 + $0x8a8] sm:$0xff] %v2175
    %2190 = vst [vmem:[#allocation2 + $0x8b0] sm:$0xff] %v2176
    %2191 = vst [vmem:[#allocation2 + $0x8b8] sm:$0xff] %v2177
    %v2192 = vld [vmem:[#allocation4 + $0x8] sm:$0xff]
    %v2193 = vld [vmem:[#allocation4 + $0x10] sm:$0xff]
    %v2194 = vld [vmem:[#allocation4 + $0x18] sm:$0xff]
    %v2195 = vld [vmem:[#allocation4 + $0x20] sm:$0xff]
    %v2196 = vld [vmem:[#allocation4 + $0x28] sm:$0xff]
    %v2197 = vld [vmem:[#allocation4 + $0x30] sm:$0xff]
    %v2198 = vld [vmem:[#allocation4 + $0x38] sm:$0xff]
    %v2199 = vld [vmem:[#allocation4 + $0x40] sm:$0xff]
    %2208 = vrot.lane.b32.xlu0 %v2192, 82
    %v2209 = vpop.permute.xlu0 %2208
    %2210 = vrot.lane.b32.xlu0 %v2193, 82
    %v2211 = vpop.permute.xlu0 %2210
    %2212 = vrot.lane.b32.xlu0 %v2194, 82
    %v2213 = vpop.permute.xlu0 %2212
    %2214 = vrot.lane.b32.xlu0 %v2195, 82
    %v2215 = vpop.permute.xlu0 %2214
    %2216 = vrot.lane.b32.xlu0 %v2196, 82
    %v2217 = vpop.permute.xlu0 %2216
    %2218 = vrot.lane.b32.xlu0 %v2197, 82
    %v2219 = vpop.permute.xlu0 %2218
    %2220 = vrot.lane.b32.xlu0 %v2198, 82
    %v2221 = vpop.permute.xlu0 %2220
    %2222 = vrot.lane.b32.xlu0 %v2199, 82
    %v2223 = vpop.permute.xlu0 %2222
    %vm2224 = vcmask 670720
    %v2225 = vsel %vm2224, %v2209, %v2211
    %v2226 = vsel %vm2224, %v2211, %v2213
    %v2227 = vsel %vm2224, %v2213, %v2215
    %v2228 = vsel %vm2224, %v2215, %v2217
    %v2229 = vsel %vm2224, %v2217, %v2219
    %v2230 = vsel %vm2224, %v2219, %v2221
    %v2231 = vsel %vm2224, %v2221, %v2223
    %2239 = vst [vmem:[#allocation2 + $0x8c0] sm:$0xff] %v2225
    %2240 = vst [vmem:[#allocation2 + $0x8c8] sm:$0xff] %v2226
    %2241 = vst [vmem:[#allocation2 + $0x8d0] sm:$0xff] %v2227
    %2242 = vst [vmem:[#allocation2 + $0x8d8] sm:$0xff] %v2228
    %2243 = vst [vmem:[#allocation2 + $0x8e0] sm:$0xff] %v2229
    %2244 = vst [vmem:[#allocation2 + $0x8e8] sm:$0xff] %v2230
    %2245 = vst [vmem:[#allocation2 + $0x8f0] sm:$0xff] %v2231
    %v2246 = vld [vmem:[#allocation4 + $0x8] sm:$0xff]
    %v2247 = vld [vmem:[#allocation4 + $0x10] sm:$0xff]
    %v2248 = vld [vmem:[#allocation4 + $0x18] sm:$0xff]
    %v2249 = vld [vmem:[#allocation4 + $0x20] sm:$0xff]
    %v2250 = vld [vmem:[#allocation4 + $0x28] sm:$0xff]
    %v2251 = vld [vmem:[#allocation4 + $0x30] sm:$0xff]
    %v2252 = vld [vmem:[#allocation4 + $0x38] sm:$0xff]
    %v2253 = vld [vmem:[#allocation4 + $0x40] sm:$0xff]
    %2262 = vrot.lane.b32.xlu0 %v2246, 81
    %v2263 = vpop.permute.xlu0 %2262
    %2264 = vrot.lane.b32.xlu0 %v2247, 81
    %v2265 = vpop.permute.xlu0 %2264
    %2266 = vrot.lane.b32.xlu0 %v2248, 81
    %v2267 = vpop.permute.xlu0 %2266
    %2268 = vrot.lane.b32.xlu0 %v2249, 81
    %v2269 = vpop.permute.xlu0 %2268
    %2270 = vrot.lane.b32.xlu0 %v2250, 81
    %v2271 = vpop.permute.xlu0 %2270
    %2272 = vrot.lane.b32.xlu0 %v2251, 81
    %v2273 = vpop.permute.xlu0 %2272
    %2274 = vrot.lane.b32.xlu0 %v2252, 81
    %v2275 = vpop.permute.xlu0 %2274
    %2276 = vrot.lane.b32.xlu0 %v2253, 81
    %v2277 = vpop.permute.xlu0 %2276
    %vm2278 = vcmask 662528
    %v2279 = vsel %vm2278, %v2263, %v2265
    %v2280 = vsel %vm2278, %v2265, %v2267
    %v2281 = vsel %vm2278, %v2267, %v2269
    %v2282 = vsel %vm2278, %v2269, %v2271
    %v2283 = vsel %vm2278, %v2271, %v2273
    %v2284 = vsel %vm2278, %v2273, %v2275
    %v2285 = vsel %vm2278, %v2275, %v2277
    %2293 = vst [vmem:[#allocation2 + $0x8f8] sm:$0xff] %v2279
    %2294 = vst [vmem:[#allocation2 + $0x900] sm:$0xff] %v2280
    %2295 = vst [vmem:[#allocation2 + $0x908] sm:$0xff] %v2281
    %2296 = vst [vmem:[#allocation2 + $0x910] sm:$0xff] %v2282
    %2297 = vst [vmem:[#allocation2 + $0x918] sm:$0xff] %v2283
    %2298 = vst [vmem:[#allocation2 + $0x920] sm:$0xff] %v2284
    %2299 = vst [vmem:[#allocation2 + $0x928] sm:$0xff] %v2285
    %v2300 = vld [vmem:[#allocation4 + $0x8] sm:$0xff]
    %v2301 = vld [vmem:[#allocation4 + $0x10] sm:$0xff]
    %v2302 = vld [vmem:[#allocation4 + $0x18] sm:$0xff]
    %v2303 = vld [vmem:[#allocation4 + $0x20] sm:$0xff]
    %v2304 = vld [vmem:[#allocation4 + $0x28] sm:$0xff]
    %v2305 = vld [vmem:[#allocation4 + $0x30] sm:$0xff]
    %v2306 = vld [vmem:[#allocation4 + $0x38] sm:$0xff]
    %v2307 = vld [vmem:[#allocation4 + $0x40] sm:$0xff]
    %2316 = vrot.lane.b32.xlu0 %v2300, 65
    %v2317 = vpop.permute.xlu0 %2316
    %2318 = vrot.lane.b32.xlu0 %v2301, 65
    %v2319 = vpop.permute.xlu0 %2318
    %2320 = vrot.lane.b32.xlu0 %v2302, 65
    %v2321 = vpop.permute.xlu0 %2320
    %2322 = vrot.lane.b32.xlu0 %v2303, 65
    %v2323 = vpop.permute.xlu0 %2322
    %2324 = vrot.lane.b32.xlu0 %v2304, 65
    %v2325 = vpop.permute.xlu0 %2324
    %2326 = vrot.lane.b32.xlu0 %v2305, 65
    %v2327 = vpop.permute.xlu0 %2326
    %2328 = vrot.lane.b32.xlu0 %v2306, 65
    %v2329 = vpop.permute.xlu0 %2328
    %2330 = vrot.lane.b32.xlu0 %v2307, 65
    %v2331 = vpop.permute.xlu0 %2330
    %v2332 = vsel %vm320, %v2317, %v2319
    %v2333 = vsel %vm320, %v2319, %v2321
    %v2334 = vsel %vm320, %v2321, %v2323
    %v2335 = vsel %vm320, %v2323, %v2325
    %v2336 = vsel %vm320, %v2325, %v2327
    %v2337 = vsel %vm320, %v2327, %v2329
    %v2338 = vsel %vm320, %v2329, %v2331
    %2346 = vst [vmem:[#allocation2 + $0x930] sm:$0xff] %v2332
    %2347 = vst [vmem:[#allocation2 + $0x938] sm:$0xff] %v2333
    %2348 = vst [vmem:[#allocation2 + $0x940] sm:$0xff] %v2334
    %2349 = vst [vmem:[#allocation2 + $0x948] sm:$0xff] %v2335
    %2350 = vst [vmem:[#allocation2 + $0x950] sm:$0xff] %v2336
    %2351 = vst [vmem:[#allocation2 + $0x958] sm:$0xff] %v2337
    %2352 = vst [vmem:[#allocation2 + $0x960] sm:$0xff] %v2338
    %v2353 = vld [vmem:[#allocation4 + $0x8] sm:$0xff]
    %v2354 = vld [vmem:[#allocation4 + $0x10] sm:$0xff]
    %v2355 = vld [vmem:[#allocation4 + $0x18] sm:$0xff]
    %v2356 = vld [vmem:[#allocation4 + $0x20] sm:$0xff]
    %v2357 = vld [vmem:[#allocation4 + $0x28] sm:$0xff]
    %v2358 = vld [vmem:[#allocation4 + $0x30] sm:$0xff]
    %v2359 = vld [vmem:[#allocation4 + $0x38] sm:$0xff]
    %v2360 = vld [vmem:[#allocation4 + $0x40] sm:$0xff]
    %2369 = vrot.lane.b32.xlu0 %v2353, 64
    %v2370 = vpop.permute.xlu0 %2369
    %2371 = vrot.lane.b32.xlu0 %v2354, 64
    %v2372 = vpop.permute.xlu0 %2371
    %2373 = vrot.lane.b32.xlu0 %v2355, 64
    %v2374 = vpop.permute.xlu0 %2373
    %2375 = vrot.lane.b32.xlu0 %v2356, 64
    %v2376 = vpop.permute.xlu0 %2375
    %2377 = vrot.lane.b32.xlu0 %v2357, 64
    %v2378 = vpop.permute.xlu0 %2377
    %2379 = vrot.lane.b32.xlu0 %v2358, 64
    %v2380 = vpop.permute.xlu0 %2379
    %2381 = vrot.lane.b32.xlu0 %v2359, 64
    %v2382 = vpop.permute.xlu0 %2381
    %2383 = vrot.lane.b32.xlu0 %v2360, 64
    %v2384 = vpop.permute.xlu0 %2383
    %v2385 = vsel %vm374, %v2370, %v2372
    %v2386 = vsel %vm374, %v2372, %v2374
    %v2387 = vsel %vm374, %v2374, %v2376
    %v2388 = vsel %vm374, %v2376, %v2378
    %v2389 = vsel %vm374, %v2378, %v2380
    %v2390 = vsel %vm374, %v2380, %v2382
    %v2391 = vsel %vm374, %v2382, %v2384
    %2399 = vst [vmem:[#allocation2 + $0x968] sm:$0xff] %v2385
    %2400 = vst [vmem:[#allocation2 + $0x970] sm:$0xff] %v2386
    %2401 = vst [vmem:[#allocation2 + $0x978] sm:$0xff] %v2387
    %2402 = vst [vmem:[#allocation2 + $0x980] sm:$0xff] %v2388
    %2403 = vst [vmem:[#allocation2 + $0x988] sm:$0xff] %v2389
    %2404 = vst [vmem:[#allocation2 + $0x990] sm:$0xff] %v2390
    %2405 = vst [vmem:[#allocation2 + $0x998] sm:$0xff] %v2391
    %v2406 = vld [vmem:[#allocation4 + $0x8] sm:$0xff]
    %v2407 = vld [vmem:[#allocation4 + $0x10] sm:$0xff]
    %v2408 = vld [vmem:[#allocation4 + $0x18] sm:$0xff]
    %v2409 = vld [vmem:[#allocation4 + $0x20] sm:$0xff]
    %v2410 = vld [vmem:[#allocation4 + $0x28] sm:$0xff]
    %v2411 = vld [vmem:[#allocation4 + $0x30] sm:$0xff]
    %v2412 = vld [vmem:[#allocation4 + $0x38] sm:$0xff]
    %v2413 = vld [vmem:[#allocation4 + $0x40] sm:$0xff]
    %2422 = vrot.lane.b32.xlu0 %v2406, 63
    %v2423 = vpop.permute.xlu0 %2422
    %2424 = vrot.lane.b32.xlu0 %v2407, 63
    %v2425 = vpop.permute.xlu0 %2424
    %2426 = vrot.lane.b32.xlu0 %v2408, 63
    %v2427 = vpop.permute.xlu0 %2426
    %2428 = vrot.lane.b32.xlu0 %v2409, 63
    %v2429 = vpop.permute.xlu0 %2428
    %2430 = vrot.lane.b32.xlu0 %v2410, 63
    %v2431 = vpop.permute.xlu0 %2430
    %2432 = vrot.lane.b32.xlu0 %v2411, 63
    %v2433 = vpop.permute.xlu0 %2432
    %2434 = vrot.lane.b32.xlu0 %v2412, 63
    %v2435 = vpop.permute.xlu0 %2434
    %2436 = vrot.lane.b32.xlu0 %v2413, 63
    %v2437 = vpop.permute.xlu0 %2436
    %v2438 = vsel %vm428, %v2423, %v2425
    %v2439 = vsel %vm428, %v2425, %v2427
    %v2440 = vsel %vm428, %v2427, %v2429
    %v2441 = vsel %vm428, %v2429, %v2431
    %v2442 = vsel %vm428, %v2431, %v2433
    %v2443 = vsel %vm428, %v2433, %v2435
    %v2444 = vsel %vm428, %v2435, %v2437
    %2452 = vst [vmem:[#allocation2 + $0x9a0] sm:$0xff] %v2438
    %2453 = vst [vmem:[#allocation2 + $0x9a8] sm:$0xff] %v2439
    %2454 = vst [vmem:[#allocation2 + $0x9b0] sm:$0xff] %v2440
    %2455 = vst [vmem:[#allocation2 + $0x9b8] sm:$0xff] %v2441
    %2456 = vst [vmem:[#allocation2 + $0x9c0] sm:$0xff] %v2442
    %2457 = vst [vmem:[#allocation2 + $0x9c8] sm:$0xff] %v2443
    %2458 = vst [vmem:[#allocation2 + $0x9d0] sm:$0xff] %v2444
    %v2459 = vld [vmem:[#allocation4 + $0x8] sm:$0xff]
    %v2460 = vld [vmem:[#allocation4 + $0x10] sm:$0xff]
    %v2461 = vld [vmem:[#allocation4 + $0x18] sm:$0xff]
    %v2462 = vld [vmem:[#allocation4 + $0x20] sm:$0xff]
    %v2463 = vld [vmem:[#allocation4 + $0x28] sm:$0xff]
    %v2464 = vld [vmem:[#allocation4 + $0x30] sm:$0xff]
    %v2465 = vld [vmem:[#allocation4 + $0x38] sm:$0xff]
    %v2466 = vld [vmem:[#allocation4 + $0x40] sm:$0xff]
    %2475 = vrot.lane.b32.xlu0 %v2459, 62
    %v2476 = vpop.permute.xlu0 %2475
    %2477 = vrot.lane.b32.xlu0 %v2460, 62
    %v2478 = vpop.permute.xlu0 %2477
    %2479 = vrot.lane.b32.xlu0 %v2461, 62
    %v2480 = vpop.permute.xlu0 %2479
    %2481 = vrot.lane.b32.xlu0 %v2462, 62
    %v2482 = vpop.permute.xlu0 %2481
    %2483 = vrot.lane.b32.xlu0 %v2463, 62
    %v2484 = vpop.permute.xlu0 %2483
    %2485 = vrot.lane.b32.xlu0 %v2464, 62
    %v2486 = vpop.permute.xlu0 %2485
    %2487 = vrot.lane.b32.xlu0 %v2465, 62
    %v2488 = vpop.permute.xlu0 %2487
    %2489 = vrot.lane.b32.xlu0 %v2466, 62
    %v2490 = vpop.permute.xlu0 %2489
    %vm2491 = vcmask 506880
    %v2492 = vsel %vm2491, %v2476, %v2478
    %v2493 = vsel %vm2491, %v2478, %v2480
    %v2494 = vsel %vm2491, %v2480, %v2482
    %v2495 = vsel %vm2491, %v2482, %v2484
    %v2496 = vsel %vm2491, %v2484, %v2486
    %v2497 = vsel %vm2491, %v2486, %v2488
    %v2498 = vsel %vm2491, %v2488, %v2490
    %2506 = vst [vmem:[#allocation2 + $0x9d8] sm:$0xff] %v2492
    %2507 = vst [vmem:[#allocation2 + $0x9e0] sm:$0xff] %v2493
    %2508 = vst [vmem:[#allocation2 + $0x9e8] sm:$0xff] %v2494
    %2509 = vst [vmem:[#allocation2 + $0x9f0] sm:$0xff] %v2495
    %2510 = vst [vmem:[#allocation2 + $0x9f8] sm:$0xff] %v2496
    %2511 = vst [vmem:[#allocation2 + $0xa00] sm:$0xff] %v2497
    %2512 = vst [vmem:[#allocation2 + $0xa08] sm:$0xff] %v2498
    %v2513 = vld [vmem:[#allocation4 + $0x8] sm:$0xff]
    %v2514 = vld [vmem:[#allocation4 + $0x10] sm:$0xff]
    %v2515 = vld [vmem:[#allocation4 + $0x18] sm:$0xff]
    %v2516 = vld [vmem:[#allocation4 + $0x20] sm:$0xff]
    %v2517 = vld [vmem:[#allocation4 + $0x28] sm:$0xff]
    %v2518 = vld [vmem:[#allocation4 + $0x30] sm:$0xff]
    %v2519 = vld [vmem:[#allocation4 + $0x38] sm:$0xff]
    %v2520 = vld [vmem:[#allocation4 + $0x40] sm:$0xff]
    %2529 = vrot.lane.b32.xlu0 %v2513, 61
    %v2530 = vpop.permute.xlu0 %2529
    %2531 = vrot.lane.b32.xlu0 %v2514, 61
    %v2532 = vpop.permute.xlu0 %2531
    %2533 = vrot.lane.b32.xlu0 %v2515, 61
    %v2534 = vpop.permute.xlu0 %2533
    %2535 = vrot.lane.b32.xlu0 %v2516, 61
    %v2536 = vpop.permute.xlu0 %2535
    %2537 = vrot.lane.b32.xlu0 %v2517, 61
    %v2538 = vpop.permute.xlu0 %2537
    %2539 = vrot.lane.b32.xlu0 %v2518, 61
    %v2540 = vpop.permute.xlu0 %2539
    %2541 = vrot.lane.b32.xlu0 %v2519, 61
    %v2542 = vpop.permute.xlu0 %2541
    %2543 = vrot.lane.b32.xlu0 %v2520, 61
    %v2544 = vpop.permute.xlu0 %2543
    %vm2545 = vcmask 498688
    %v2546 = vsel %vm2545, %v2530, %v2532
    %v2547 = vsel %vm2545, %v2532, %v2534
    %v2548 = vsel %vm2545, %v2534, %v2536
    %v2549 = vsel %vm2545, %v2536, %v2538
    %v2550 = vsel %vm2545, %v2538, %v2540
    %v2551 = vsel %vm2545, %v2540, %v2542
    %v2552 = vsel %vm2545, %v2542, %v2544
    %2560 = vst [vmem:[#allocation2 + $0xa10] sm:$0xff] %v2546
    %2561 = vst [vmem:[#allocation2 + $0xa18] sm:$0xff] %v2547
    %2562 = vst [vmem:[#allocation2 + $0xa20] sm:$0xff] %v2548
    %2563 = vst [vmem:[#allocation2 + $0xa28] sm:$0xff] %v2549
    %2564 = vst [vmem:[#allocation2 + $0xa30] sm:$0xff] %v2550
    %2565 = vst [vmem:[#allocation2 + $0xa38] sm:$0xff] %v2551
    %2566 = vst [vmem:[#allocation2 + $0xa40] sm:$0xff] %v2552
    %v2567 = vld [vmem:[#allocation4 + $0x8] sm:$0xff]
    %v2568 = vld [vmem:[#allocation4 + $0x10] sm:$0xff]
    %v2569 = vld [vmem:[#allocation4 + $0x18] sm:$0xff]
    %v2570 = vld [vmem:[#allocation4 + $0x20] sm:$0xff]
    %v2571 = vld [vmem:[#allocation4 + $0x28] sm:$0xff]
    %v2572 = vld [vmem:[#allocation4 + $0x30] sm:$0xff]
    %v2573 = vld [vmem:[#allocation4 + $0x38] sm:$0xff]
    %v2574 = vld [vmem:[#allocation4 + $0x40] sm:$0xff]
    %2583 = vrot.lane.b32.xlu0 %v2567, 60
    %v2584 = vpop.permute.xlu0 %2583
    %2585 = vrot.lane.b32.xlu0 %v2568, 60
    %v2586 = vpop.permute.xlu0 %2585
    %2587 = vrot.lane.b32.xlu0 %v2569, 60
    %v2588 = vpop.permute.xlu0 %2587
    %2589 = vrot.lane.b32.xlu0 %v2570, 60
    %v2590 = vpop.permute.xlu0 %2589
    %2591 = vrot.lane.b32.xlu0 %v2571, 60
    %v2592 = vpop.permute.xlu0 %2591
    %2593 = vrot.lane.b32.xlu0 %v2572, 60
    %v2594 = vpop.permute.xlu0 %2593
    %2595 = vrot.lane.b32.xlu0 %v2573, 60
    %v2596 = vpop.permute.xlu0 %2595
    %2597 = vrot.lane.b32.xlu0 %v2574, 60
    %v2598 = vpop.permute.xlu0 %2597
    %vm2599 = vcmask 490496
    %v2600 = vsel %vm2599, %v2584, %v2586
    %v2601 = vsel %vm2599, %v2586, %v2588
    %v2602 = vsel %vm2599, %v2588, %v2590
    %v2603 = vsel %vm2599, %v2590, %v2592
    %v2604 = vsel %vm2599, %v2592, %v2594
    %v2605 = vsel %vm2599, %v2594, %v2596
    %v2606 = vsel %vm2599, %v2596, %v2598
    %2614 = vst [vmem:[#allocation2 + $0xa48] sm:$0xff] %v2600
    %2615 = vst [vmem:[#allocation2 + $0xa50] sm:$0xff] %v2601
    %2616 = vst [vmem:[#allocation2 + $0xa58] sm:$0xff] %v2602
    %2617 = vst [vmem:[#allocation2 + $0xa60] sm:$0xff] %v2603
    %2618 = vst [vmem:[#allocation2 + $0xa68] sm:$0xff] %v2604
    %2619 = vst [vmem:[#allocation2 + $0xa70] sm:$0xff] %v2605
    %2620 = vst [vmem:[#allocation2 + $0xa78] sm:$0xff] %v2606
    %v2621 = vld [vmem:[#allocation4 + $0x8] sm:$0xff]
    %v2622 = vld [vmem:[#allocation4 + $0x10] sm:$0xff]
    %v2623 = vld [vmem:[#allocation4 + $0x18] sm:$0xff]
    %v2624 = vld [vmem:[#allocation4 + $0x20] sm:$0xff]
    %v2625 = vld [vmem:[#allocation4 + $0x28] sm:$0xff]
    %v2626 = vld [vmem:[#allocation4 + $0x30] sm:$0xff]
    %v2627 = vld [vmem:[#allocation4 + $0x38] sm:$0xff]
    %v2628 = vld [vmem:[#allocation4 + $0x40] sm:$0xff]
    %2637 = vrot.lane.b32.xlu0 %v2621, 59
    %v2638 = vpop.permute.xlu0 %2637
    %2639 = vrot.lane.b32.xlu0 %v2622, 59
    %v2640 = vpop.permute.xlu0 %2639
    %2641 = vrot.lane.b32.xlu0 %v2623, 59
    %v2642 = vpop.permute.xlu0 %2641
    %2643 = vrot.lane.b32.xlu0 %v2624, 59
    %v2644 = vpop.permute.xlu0 %2643
    %2645 = vrot.lane.b32.xlu0 %v2625, 59
    %v2646 = vpop.permute.xlu0 %2645
    %2647 = vrot.lane.b32.xlu0 %v2626, 59
    %v2648 = vpop.permute.xlu0 %2647
    %2649 = vrot.lane.b32.xlu0 %v2627, 59
    %v2650 = vpop.permute.xlu0 %2649
    %2651 = vrot.lane.b32.xlu0 %v2628, 59
    %v2652 = vpop.permute.xlu0 %2651
    %vm2653 = vcmask 482304
    %v2654 = vsel %vm2653, %v2638, %v2640
    %v2655 = vsel %vm2653, %v2640, %v2642
    %v2656 = vsel %vm2653, %v2642, %v2644
    %v2657 = vsel %vm2653, %v2644, %v2646
    %v2658 = vsel %vm2653, %v2646, %v2648
    %v2659 = vsel %vm2653, %v2648, %v2650
    %v2660 = vsel %vm2653, %v2650, %v2652
    %2668 = vst [vmem:[#allocation2 + $0xa80] sm:$0xff] %v2654
    %2669 = vst [vmem:[#allocation2 + $0xa88] sm:$0xff] %v2655
    %2670 = vst [vmem:[#allocation2 + $0xa90] sm:$0xff] %v2656
    %2671 = vst [vmem:[#allocation2 + $0xa98] sm:$0xff] %v2657
    %2672 = vst [vmem:[#allocation2 + $0xaa0] sm:$0xff] %v2658
    %2673 = vst [vmem:[#allocation2 + $0xaa8] sm:$0xff] %v2659
    %2674 = vst [vmem:[#allocation2 + $0xab0] sm:$0xff] %v2660
    %v2675 = vld [vmem:[#allocation9] sm:$0xff]
    %v2676 = vld [vmem:[#allocation9 + $0x8] sm:$0xff]
    %v2677 = vld [vmem:[#allocation9 + $0x10] sm:$0xff]
    %v2678 = vld [vmem:[#allocation9 + $0x18] sm:$0xff]
    %v2679 = vld [vmem:[#allocation2] sm:$0xff]
    %v2680 = vld [vmem:[#allocation2 + $0x8] sm:$0xff]
    %v2681 = vld [vmem:[#allocation2 + $0x10] sm:$0xff]
    %v2682 = vld [vmem:[#allocation2 + $0x18] sm:$0xff]
    %v2683 = vld [vmem:[#allocation2 + $0x20] sm:$0xff]
    %v2684 = vld [vmem:[#allocation2 + $0x28] sm:$0xff]
    %v2685 = vld [vmem:[#allocation2 + $0x30] sm:$0xff]
    %v2686 = vld [vmem:[#allocation2 + $0x38] sm:$0xff]
    %v2687 = vld [vmem:[#allocation2 + $0x40] sm:$0xff]
    %v2688 = vld [vmem:[#allocation2 + $0x48] sm:$0xff]
    %v2689 = vld [vmem:[#allocation2 + $0x50] sm:$0xff]
    %v2690 = vld [vmem:[#allocation2 + $0x58] sm:$0xff]
    %v2691 = vld [vmem:[#allocation2 + $0x60] sm:$0xff]
    %v2692 = vld [vmem:[#allocation2 + $0x68] sm:$0xff]
    %v2693 = vld [vmem:[#allocation2 + $0x70] sm:$0xff]
    %v2694 = vld [vmem:[#allocation2 + $0x78] sm:$0xff]
    %v2695 = vld [vmem:[#allocation2 + $0x80] sm:$0xff]
    %v2696 = vld [vmem:[#allocation2 + $0x88] sm:$0xff]
    %v2697 = vld [vmem:[#allocation2 + $0x90] sm:$0xff]
    %v2698 = vld [vmem:[#allocation2 + $0x98] sm:$0xff]
    %v2699 = vld [vmem:[#allocation2 + $0xa0] sm:$0xff]
    %v2700 = vld [vmem:[#allocation2 + $0xa8] sm:$0xff]
    %v2701 = vld [vmem:[#allocation2 + $0xb0] sm:$0xff]
    %v2702 = vld [vmem:[#allocation2 + $0xb8] sm:$0xff]
    %v2703 = vld [vmem:[#allocation2 + $0xc0] sm:$0xff]
    %v2704 = vld [vmem:[#allocation2 + $0xc8] sm:$0xff]
    %v2705 = vld [vmem:[#allocation2 + $0xd0] sm:$0xff]
    %v2706 = vld [vmem:[#allocation2 + $0xd8] sm:$0xff]
    %v2707 = vld [vmem:[#allocation2 + $0xe0] sm:$0xff]
    %v2708 = vld [vmem:[#allocation2 + $0xe8] sm:$0xff]
    %v2709 = vld [vmem:[#allocation2 + $0xf0] sm:$0xff]
    %v2710 = vld [vmem:[#allocation2 + $0xf8] sm:$0xff]
    %v2711 = vld [vmem:[#allocation2 + $0x100] sm:$0xff]
    %v2712 = vld [vmem:[#allocation2 + $0x108] sm:$0xff]
    %v2713 = vld [vmem:[#allocation2 + $0x110] sm:$0xff]
    %v2714 = vld [vmem:[#allocation2 + $0x118] sm:$0xff]
    %v2715 = vld [vmem:[#allocation2 + $0x120] sm:$0xff]
    %v2716 = vld [vmem:[#allocation2 + $0x128] sm:$0xff]
    %v2717 = vld [vmem:[#allocation2 + $0x130] sm:$0xff]
    %v2718 = vld [vmem:[#allocation2 + $0x138] sm:$0xff]
    %v2719 = vld [vmem:[#allocation2 + $0x140] sm:$0xff]
    %v2720 = vld [vmem:[#allocation2 + $0x148] sm:$0xff]
    %v2721 = vld [vmem:[#allocation2 + $0x150] sm:$0xff]
    %v2722 = vld [vmem:[#allocation2 + $0x158] sm:$0xff]
    %v2723 = vld [vmem:[#allocation2 + $0x160] sm:$0xff]
    %v2724 = vld [vmem:[#allocation2 + $0x168] sm:$0xff]
    %v2725 = vld [vmem:[#allocation2 + $0x170] sm:$0xff]
    %v2726 = vld [vmem:[#allocation2 + $0x178] sm:$0xff]
    %v2727 = vld [vmem:[#allocation2 + $0x180] sm:$0xff]
    %v2728 = vld [vmem:[#allocation2 + $0x188] sm:$0xff]
    %v2729 = vld [vmem:[#allocation2 + $0x190] sm:$0xff]
    %v2730 = vld [vmem:[#allocation2 + $0x198] sm:$0xff]
    %v2731 = vld [vmem:[#allocation2 + $0x1a0] sm:$0xff]
    %v2732 = vld [vmem:[#allocation2 + $0x1a8] sm:$0xff]
    %v2733 = vld [vmem:[#allocation2 + $0x1b0] sm:$0xff]
    %v2734 = vld [vmem:[#allocation2 + $0x1b8] sm:$0xff]
    %v2735 = vld [vmem:[#allocation2 + $0x1c0] sm:$0xff]
    %v2736 = vld [vmem:[#allocation2 + $0x1c8] sm:$0xff]
    %v2737 = vld [vmem:[#allocation2 + $0x1d0] sm:$0xff]
    %v2738 = vld [vmem:[#allocation2 + $0x1d8] sm:$0xff]
    %v2739 = vld [vmem:[#allocation2 + $0x1e0] sm:$0xff]
    %v2740 = vld [vmem:[#allocation2 + $0x1e8] sm:$0xff]
    %v2741 = vld [vmem:[#allocation2 + $0x1f0] sm:$0xff]
    %v2742 = vld [vmem:[#allocation2 + $0x1f8] sm:$0xff]
    %v2743 = vld [vmem:[#allocation2 + $0x200] sm:$0xff]
    %v2744 = vld [vmem:[#allocation2 + $0x208] sm:$0xff]
    %v2745 = vld [vmem:[#allocation2 + $0x210] sm:$0xff]
    %v2746 = vld [vmem:[#allocation2 + $0x218] sm:$0xff]
    %v2747 = vld [vmem:[#allocation2 + $0x220] sm:$0xff]
    %v2748 = vld [vmem:[#allocation2 + $0x228] sm:$0xff]
    %v2749 = vld [vmem:[#allocation2 + $0x230] sm:$0xff]
    %v2750 = vld [vmem:[#allocation2 + $0x238] sm:$0xff]
    %v2751 = vld [vmem:[#allocation2 + $0x240] sm:$0xff]
    %v2752 = vld [vmem:[#allocation2 + $0x248] sm:$0xff]
    %v2753 = vld [vmem:[#allocation2 + $0x250] sm:$0xff]
    %v2754 = vld [vmem:[#allocation2 + $0x258] sm:$0xff]
    %v2755 = vld [vmem:[#allocation2 + $0x260] sm:$0xff]
    %v2756 = vld [vmem:[#allocation2 + $0x268] sm:$0xff]
    %v2757 = vld [vmem:[#allocation2 + $0x270] sm:$0xff]
    %v2758 = vld [vmem:[#allocation2 + $0x278] sm:$0xff]
    %v2759 = vld [vmem:[#allocation2 + $0x280] sm:$0xff]
    %v2760 = vld [vmem:[#allocation2 + $0x288] sm:$0xff]
    %v2761 = vld [vmem:[#allocation2 + $0x290] sm:$0xff]
    %v2762 = vld [vmem:[#allocation2 + $0x298] sm:$0xff]
    %v2763 = vld [vmem:[#allocation2 + $0x2a0] sm:$0xff]
    %v2764 = vld [vmem:[#allocation2 + $0x2a8] sm:$0xff]
    %v2765 = vld [vmem:[#allocation2 + $0x2b0] sm:$0xff]
    %v2766 = vld [vmem:[#allocation2 + $0x2b8] sm:$0xff]
    %v2767 = vld [vmem:[#allocation2 + $0x2c0] sm:$0xff]
    %v2768 = vld [vmem:[#allocation2 + $0x2c8] sm:$0xff]
    %v2769 = vld [vmem:[#allocation2 + $0x2d0] sm:$0xff]
    %v2770 = vld [vmem:[#allocation2 + $0x2d8] sm:$0xff]
    %v2771 = vld [vmem:[#allocation2 + $0x2e0] sm:$0xff]
    %v2772 = vld [vmem:[#allocation2 + $0x2e8] sm:$0xff]
    %v2773 = vld [vmem:[#allocation2 + $0x2f0] sm:$0xff]
    %v2774 = vld [vmem:[#allocation2 + $0x2f8] sm:$0xff]
    %v2775 = vld [vmem:[#allocation2 + $0x300] sm:$0xff]
    %v2776 = vld [vmem:[#allocation2 + $0x308] sm:$0xff]
    %v2777 = vld [vmem:[#allocation2 + $0x310] sm:$0xff]
    %v2778 = vld [vmem:[#allocation2 + $0x318] sm:$0xff]
    %v2779 = vld [vmem:[#allocation2 + $0x320] sm:$0xff]
    %v2780 = vld [vmem:[#allocation2 + $0x328] sm:$0xff]
    %v2781 = vld [vmem:[#allocation2 + $0x330] sm:$0xff]
    %v2782 = vld [vmem:[#allocation2 + $0x338] sm:$0xff]
    %v2783 = vld [vmem:[#allocation2 + $0x340] sm:$0xff]
    %v2784 = vld [vmem:[#allocation2 + $0x348] sm:$0xff]
    %v2785 = vld [vmem:[#allocation2 + $0x350] sm:$0xff]
    %v2786 = vld [vmem:[#allocation2 + $0x358] sm:$0xff]
    %v2787 = vld [vmem:[#allocation2 + $0x360] sm:$0xff]
    %v2788 = vld [vmem:[#allocation2 + $0x368] sm:$0xff]
    %v2789 = vld [vmem:[#allocation2 + $0x370] sm:$0xff]
    %v2790 = vld [vmem:[#allocation2 + $0x378] sm:$0xff]
    %v2791 = vld [vmem:[#allocation2 + $0x380] sm:$0xff]
    %v2792 = vld [vmem:[#allocation2 + $0x388] sm:$0xff]
    %v2793 = vld [vmem:[#allocation2 + $0x390] sm:$0xff]
    %v2794 = vld [vmem:[#allocation2 + $0x398] sm:$0xff]
    %v2795 = vld [vmem:[#allocation2 + $0x3a0] sm:$0xff]
    %v2796 = vld [vmem:[#allocation2 + $0x3a8] sm:$0xff]
    %v2797 = vld [vmem:[#allocation2 + $0x3b0] sm:$0xff]
    %v2798 = vld [vmem:[#allocation2 + $0x3b8] sm:$0xff]
    %v2799 = vld [vmem:[#allocation2 + $0x3c0] sm:$0xff]
    %v2800 = vld [vmem:[#allocation2 + $0x3c8] sm:$0xff]
    %v2801 = vld [vmem:[#allocation2 + $0x3d0] sm:$0xff]
    %v2802 = vld [vmem:[#allocation2 + $0x3d8] sm:$0xff]
    %v2803 = vld [vmem:[#allocation2 + $0x3e0] sm:$0xff]
    %v2804 = vld [vmem:[#allocation2 + $0x3e8] sm:$0xff]
    %v2805 = vld [vmem:[#allocation2 + $0x3f0] sm:$0xff]
    %v2806 = vld [vmem:[#allocation2 + $0x3f8] sm:$0xff]
    %v2807 = vld [vmem:[#allocation2 + $0x400] sm:$0xff]
    %v2808 = vld [vmem:[#allocation2 + $0x408] sm:$0xff]
    %v2809 = vld [vmem:[#allocation2 + $0x410] sm:$0xff]
    %v2810 = vld [vmem:[#allocation2 + $0x418] sm:$0xff]
    %v2811 = vld [vmem:[#allocation2 + $0x420] sm:$0xff]
    %v2812 = vld [vmem:[#allocation2 + $0x428] sm:$0xff]
    %v2813 = vld [vmem:[#allocation2 + $0x430] sm:$0xff]
    %v2814 = vld [vmem:[#allocation2 + $0x438] sm:$0xff]
    %v2815 = vld [vmem:[#allocation2 + $0x440] sm:$0xff]
    %v2816 = vld [vmem:[#allocation2 + $0x448] sm:$0xff]
    %v2817 = vld [vmem:[#allocation2 + $0x450] sm:$0xff]
    %v2818 = vld [vmem:[#allocation2 + $0x458] sm:$0xff]
    %v2819 = vld [vmem:[#allocation2 + $0x460] sm:$0xff]
    %v2820 = vld [vmem:[#allocation2 + $0x468] sm:$0xff]
    %v2821 = vld [vmem:[#allocation2 + $0x470] sm:$0xff]
    %v2822 = vld [vmem:[#allocation2 + $0x478] sm:$0xff]
    %v2823 = vld [vmem:[#allocation2 + $0x480] sm:$0xff]
    %v2824 = vld [vmem:[#allocation2 + $0x488] sm:$0xff]
    %v2825 = vld [vmem:[#allocation2 + $0x490] sm:$0xff]
    %v2826 = vld [vmem:[#allocation2 + $0x498] sm:$0xff]
    %v2827 = vld [vmem:[#allocation2 + $0x4a0] sm:$0xff]
    %v2828 = vld [vmem:[#allocation2 + $0x4a8] sm:$0xff]
    %v2829 = vld [vmem:[#allocation2 + $0x4b0] sm:$0xff]
    %v2830 = vld [vmem:[#allocation2 + $0x4b8] sm:$0xff]
    %v2831 = vld [vmem:[#allocation2 + $0x4c0] sm:$0xff]
    %v2832 = vld [vmem:[#allocation2 + $0x4c8] sm:$0xff]
    %v2833 = vld [vmem:[#allocation2 + $0x4d0] sm:$0xff]
    %v2834 = vld [vmem:[#allocation2 + $0x4d8] sm:$0xff]
    %v2835 = vld [vmem:[#allocation2 + $0x4e0] sm:$0xff]
    %v2836 = vld [vmem:[#allocation2 + $0x4e8] sm:$0xff]
    %v2837 = vld [vmem:[#allocation2 + $0x4f0] sm:$0xff]
    %v2838 = vld [vmem:[#allocation2 + $0x4f8] sm:$0xff]
    %v2839 = vld [vmem:[#allocation2 + $0x500] sm:$0xff]
    %v2840 = vld [vmem:[#allocation2 + $0x508] sm:$0xff]
    %v2841 = vld [vmem:[#allocation2 + $0x510] sm:$0xff]
    %v2842 = vld [vmem:[#allocation2 + $0x518] sm:$0xff]
    %v2843 = vld [vmem:[#allocation2 + $0x520] sm:$0xff]
    %v2844 = vld [vmem:[#allocation2 + $0x528] sm:$0xff]
    %v2845 = vld [vmem:[#allocation2 + $0x530] sm:$0xff]
    %v2846 = vld [vmem:[#allocation2 + $0x538] sm:$0xff]
    %v2847 = vld [vmem:[#allocation2 + $0x540] sm:$0xff]
    %v2848 = vld [vmem:[#allocation2 + $0x548] sm:$0xff]
    %v2849 = vld [vmem:[#allocation2 + $0x550] sm:$0xff]
    %v2850 = vld [vmem:[#allocation2 + $0x558] sm:$0xff]
    %v2851 = vld [vmem:[#allocation2 + $0x560] sm:$0xff]
    %v2852 = vld [vmem:[#allocation2 + $0x568] sm:$0xff]
    %v2853 = vld [vmem:[#allocation2 + $0x570] sm:$0xff]
    %v2854 = vld [vmem:[#allocation2 + $0x578] sm:$0xff]
    %v2855 = vld [vmem:[#allocation2 + $0x580] sm:$0xff]
    %v2856 = vld [vmem:[#allocation2 + $0x588] sm:$0xff]
    %v2857 = vld [vmem:[#allocation2 + $0x590] sm:$0xff]
    %v2858 = vld [vmem:[#allocation2 + $0x598] sm:$0xff]
    %v2859 = vld [vmem:[#allocation2 + $0x5a0] sm:$0xff]
    %v2860 = vld [vmem:[#allocation2 + $0x5a8] sm:$0xff]
    %v2861 = vld [vmem:[#allocation2 + $0x5b0] sm:$0xff]
    %v2862 = vld [vmem:[#allocation2 + $0x5b8] sm:$0xff]
    %v2863 = vld [vmem:[#allocation2 + $0x5c0] sm:$0xff]
    %v2864 = vld [vmem:[#allocation2 + $0x5c8] sm:$0xff]
    %v2865 = vld [vmem:[#allocation2 + $0x5d0] sm:$0xff]
    %v2866 = vld [vmem:[#allocation2 + $0x5d8] sm:$0xff]
    %v2867 = vld [vmem:[#allocation2 + $0x5e0] sm:$0xff]
    %v2868 = vld [vmem:[#allocation2 + $0x5e8] sm:$0xff]
    %v2869 = vld [vmem:[#allocation2 + $0x5f0] sm:$0xff]
    %v2870 = vld [vmem:[#allocation2 + $0x5f8] sm:$0xff]
    %v2871 = vld [vmem:[#allocation2 + $0x600] sm:$0xff]
    %v2872 = vld [vmem:[#allocation2 + $0x608] sm:$0xff]
    %v2873 = vld [vmem:[#allocation2 + $0x610] sm:$0xff]
    %v2874 = vld [vmem:[#allocation2 + $0x618] sm:$0xff]
    %v2875 = vld [vmem:[#allocation2 + $0x620] sm:$0xff]
    %v2876 = vld [vmem:[#allocation2 + $0x628] sm:$0xff]
    %v2877 = vld [vmem:[#allocation2 + $0x630] sm:$0xff]
    %v2878 = vld [vmem:[#allocation2 + $0x638] sm:$0xff]
    %v2879 = vld [vmem:[#allocation2 + $0x640] sm:$0xff]
    %v2880 = vld [vmem:[#allocation2 + $0x648] sm:$0xff]
    %v2881 = vld [vmem:[#allocation2 + $0x650] sm:$0xff]
    %v2882 = vld [vmem:[#allocation2 + $0x658] sm:$0xff]
    %v2883 = vld [vmem:[#allocation2 + $0x660] sm:$0xff]
    %v2884 = vld [vmem:[#allocation2 + $0x668] sm:$0xff]
    %v2885 = vld [vmem:[#allocation2 + $0x670] sm:$0xff]
    %v2886 = vld [vmem:[#allocation2 + $0x678] sm:$0xff]
    %v2887 = vld [vmem:[#allocation2 + $0x680] sm:$0xff]
    %v2888 = vld [vmem:[#allocation2 + $0x688] sm:$0xff]
    %v2889 = vld [vmem:[#allocation2 + $0x690] sm:$0xff]
    %v2890 = vld [vmem:[#allocation2 + $0x698] sm:$0xff]
    %v2891 = vld [vmem:[#allocation2 + $0x6a0] sm:$0xff]
    %v2892 = vld [vmem:[#allocation2 + $0x6a8] sm:$0xff]
    %v2893 = vld [vmem:[#allocation2 + $0x6b0] sm:$0xff]
    %v2894 = vld [vmem:[#allocation2 + $0x6b8] sm:$0xff]
    %v2895 = vld [vmem:[#allocation2 + $0x6c0] sm:$0xff]
    %v2896 = vld [vmem:[#allocation2 + $0x6c8] sm:$0xff]
    %v2897 = vld [vmem:[#allocation2 + $0x6d0] sm:$0xff]
    %v2898 = vld [vmem:[#allocation2 + $0x6d8] sm:$0xff]
    %v2899 = vld [vmem:[#allocation2 + $0x6e0] sm:$0xff]
    %v2900 = vld [vmem:[#allocation2 + $0x6e8] sm:$0xff]
    %v2901 = vld [vmem:[#allocation2 + $0x6f0] sm:$0xff]
    %v2902 = vld [vmem:[#allocation2 + $0x6f8] sm:$0xff]
    %v2903 = vld [vmem:[#allocation2 + $0x700] sm:$0xff]
    %v2904 = vld [vmem:[#allocation2 + $0x708] sm:$0xff]
    %v2905 = vld [vmem:[#allocation2 + $0x710] sm:$0xff]
    %v2906 = vld [vmem:[#allocation2 + $0x718] sm:$0xff]
    %v2907 = vld [vmem:[#allocation2 + $0x720] sm:$0xff]
    %v2908 = vld [vmem:[#allocation2 + $0x728] sm:$0xff]
    %v2909 = vld [vmem:[#allocation2 + $0x730] sm:$0xff]
    %v2910 = vld [vmem:[#allocation2 + $0x738] sm:$0xff]
    %v2911 = vld [vmem:[#allocation2 + $0x740] sm:$0xff]
    %v2912 = vld [vmem:[#allocation2 + $0x748] sm:$0xff]
    %v2913 = vld [vmem:[#allocation2 + $0x750] sm:$0xff]
    %v2914 = vld [vmem:[#allocation2 + $0x758] sm:$0xff]
    %v2915 = vld [vmem:[#allocation2 + $0x760] sm:$0xff]
    %v2916 = vld [vmem:[#allocation2 + $0x768] sm:$0xff]
    %v2917 = vld [vmem:[#allocation2 + $0x770] sm:$0xff]
    %v2918 = vld [vmem:[#allocation2 + $0x778] sm:$0xff]
    %v2919 = vld [vmem:[#allocation2 + $0x780] sm:$0xff]
    %v2920 = vld [vmem:[#allocation2 + $0x788] sm:$0xff]
    %v2921 = vld [vmem:[#allocation2 + $0x790] sm:$0xff]
    %v2922 = vld [vmem:[#allocation2 + $0x798] sm:$0xff]
    %v2923 = vld [vmem:[#allocation2 + $0x7a0] sm:$0xff]
    %v2924 = vld [vmem:[#allocation2 + $0x7a8] sm:$0xff]
    %v2925 = vld [vmem:[#allocation2 + $0x7b0] sm:$0xff]
    %v2926 = vld [vmem:[#allocation2 + $0x7b8] sm:$0xff]
    %v2927 = vld [vmem:[#allocation2 + $0x7c0] sm:$0xff]
    %v2928 = vld [vmem:[#allocation2 + $0x7c8] sm:$0xff]
    %v2929 = vld [vmem:[#allocation2 + $0x7d0] sm:$0xff]
    %v2930 = vld [vmem:[#allocation2 + $0x7d8] sm:$0xff]
    %v2931 = vld [vmem:[#allocation2 + $0x7e0] sm:$0xff]
    %v2932 = vld [vmem:[#allocation2 + $0x7e8] sm:$0xff]
    %v2933 = vld [vmem:[#allocation2 + $0x7f0] sm:$0xff]
    %v2934 = vld [vmem:[#allocation2 + $0x7f8] sm:$0xff]
    %v2935 = vld [vmem:[#allocation2 + $0x800] sm:$0xff]
    %v2936 = vld [vmem:[#allocation2 + $0x808] sm:$0xff]
    %v2937 = vld [vmem:[#allocation2 + $0x810] sm:$0xff]
    %v2938 = vld [vmem:[#allocation2 + $0x818] sm:$0xff]
    %v2939 = vld [vmem:[#allocation2 + $0x820] sm:$0xff]
    %v2940 = vld [vmem:[#allocation2 + $0x828] sm:$0xff]
    %v2941 = vld [vmem:[#allocation2 + $0x830] sm:$0xff]
    %v2942 = vld [vmem:[#allocation2 + $0x838] sm:$0xff]
    %v2943 = vld [vmem:[#allocation2 + $0x840] sm:$0xff]
    %v2944 = vld [vmem:[#allocation2 + $0x848] sm:$0xff]
    %v2945 = vld [vmem:[#allocation2 + $0x850] sm:$0xff]
    %v2946 = vld [vmem:[#allocation2 + $0x858] sm:$0xff]
    %v2947 = vld [vmem:[#allocation2 + $0x860] sm:$0xff]
    %v2948 = vld [vmem:[#allocation2 + $0x868] sm:$0xff]
    %v2949 = vld [vmem:[#allocation2 + $0x870] sm:$0xff]
    %v2950 = vld [vmem:[#allocation2 + $0x878] sm:$0xff]
    %v2951 = vld [vmem:[#allocation2 + $0x880] sm:$0xff]
    %v2952 = vld [vmem:[#allocation2 + $0x888] sm:$0xff]
    %v2953 = vld [vmem:[#allocation2 + $0x890] sm:$0xff]
    %v2954 = vld [vmem:[#allocation2 + $0x898] sm:$0xff]
    %v2955 = vld [vmem:[#allocation2 + $0x8a0] sm:$0xff]
    %v2956 = vld [vmem:[#allocation2 + $0x8a8] sm:$0xff]
    %v2957 = vld [vmem:[#allocation2 + $0x8b0] sm:$0xff]
    %v2958 = vld [vmem:[#allocation2 + $0x8b8] sm:$0xff]
    %v2959 = vld [vmem:[#allocation2 + $0x8c0] sm:$0xff]
    %v2960 = vld [vmem:[#allocation2 + $0x8c8] sm:$0xff]
    %v2961 = vld [vmem:[#allocation2 + $0x8d0] sm:$0xff]
    %v2962 = vld [vmem:[#allocation2 + $0x8d8] sm:$0xff]
    %v2963 = vld [vmem:[#allocation2 + $0x8e0] sm:$0xff]
    %v2964 = vld [vmem:[#allocation2 + $0x8e8] sm:$0xff]
    %v2965 = vld [vmem:[#allocation2 + $0x8f0] sm:$0xff]
    %v2966 = vld [vmem:[#allocation2 + $0x8f8] sm:$0xff]
    %v2967 = vld [vmem:[#allocation2 + $0x900] sm:$0xff]
    %v2968 = vld [vmem:[#allocation2 + $0x908] sm:$0xff]
    %v2969 = vld [vmem:[#allocation2 + $0x910] sm:$0xff]
    %v2970 = vld [vmem:[#allocation2 + $0x918] sm:$0xff]
    %v2971 = vld [vmem:[#allocation2 + $0x920] sm:$0xff]
    %v2972 = vld [vmem:[#allocation2 + $0x928] sm:$0xff]
    %v2973 = vld [vmem:[#allocation2 + $0x930] sm:$0xff]
    %v2974 = vld [vmem:[#allocation2 + $0x938] sm:$0xff]
    %v2975 = vld [vmem:[#allocation2 + $0x940] sm:$0xff]
    %v2976 = vld [vmem:[#allocation2 + $0x948] sm:$0xff]
    %v2977 = vld [vmem:[#allocation2 + $0x950] sm:$0xff]
    %v2978 = vld [vmem:[#allocation2 + $0x958] sm:$0xff]
    %v2979 = vld [vmem:[#allocation2 + $0x960] sm:$0xff]
    %v2980 = vld [vmem:[#allocation2 + $0x968] sm:$0xff]
    %v2981 = vld [vmem:[#allocation2 + $0x970] sm:$0xff]
    %v2982 = vld [vmem:[#allocation2 + $0x978] sm:$0xff]
    %v2983 = vld [vmem:[#allocation2 + $0x980] sm:$0xff]
    %v2984 = vld [vmem:[#allocation2 + $0x988] sm:$0xff]
    %v2985 = vld [vmem:[#allocation2 + $0x990] sm:$0xff]
    %v2986 = vld [vmem:[#allocation2 + $0x998] sm:$0xff]
    %v2987 = vld [vmem:[#allocation2 + $0x9a0] sm:$0xff]
    %v2988 = vld [vmem:[#allocation2 + $0x9a8] sm:$0xff]
    %v2989 = vld [vmem:[#allocation2 + $0x9b0] sm:$0xff]
    %v2990 = vld [vmem:[#allocation2 + $0x9b8] sm:$0xff]
    %v2991 = vld [vmem:[#allocation2 + $0x9c0] sm:$0xff]
    %v2992 = vld [vmem:[#allocation2 + $0x9c8] sm:$0xff]
    %v2993 = vld [vmem:[#allocation2 + $0x9d0] sm:$0xff]
    %v2994 = vld [vmem:[#allocation2 + $0x9d8] sm:$0xff]
    %v2995 = vld [vmem:[#allocation2 + $0x9e0] sm:$0xff]
    %v2996 = vld [vmem:[#allocation2 + $0x9e8] sm:$0xff]
    %v2997 = vld [vmem:[#allocation2 + $0x9f0] sm:$0xff]
    %v2998 = vld [vmem:[#allocation2 + $0x9f8] sm:$0xff]
    %v2999 = vld [vmem:[#allocation2 + $0xa00] sm:$0xff]
    %v3000 = vld [vmem:[#allocation2 + $0xa08] sm:$0xff]
    %v3001 = vld [vmem:[#allocation2 + $0xa10] sm:$0xff]
    %v3002 = vld [vmem:[#allocation2 + $0xa18] sm:$0xff]
    %v3003 = vld [vmem:[#allocation2 + $0xa20] sm:$0xff]
    %v3004 = vld [vmem:[#allocation2 + $0xa28] sm:$0xff]
    %v3005 = vld [vmem:[#allocation2 + $0xa30] sm:$0xff]
    %v3006 = vld [vmem:[#allocation2 + $0xa38] sm:$0xff]
    %v3007 = vld [vmem:[#allocation2 + $0xa40] sm:$0xff]
    %v3008 = vld [vmem:[#allocation2 + $0xa48] sm:$0xff]
    %v3009 = vld [vmem:[#allocation2 + $0xa50] sm:$0xff]
    %v3010 = vld [vmem:[#allocation2 + $0xa58] sm:$0xff]
    %v3011 = vld [vmem:[#allocation2 + $0xa60] sm:$0xff]
    %v3012 = vld [vmem:[#allocation2 + $0xa68] sm:$0xff]
    %v3013 = vld [vmem:[#allocation2 + $0xa70] sm:$0xff]
    %v3014 = vld [vmem:[#allocation2 + $0xa78] sm:$0xff]
    %v3015 = vld [vmem:[#allocation2 + $0xa80] sm:$0xff]
    %v3016 = vld [vmem:[#allocation2 + $0xa88] sm:$0xff]
    %v3017 = vld [vmem:[#allocation2 + $0xa90] sm:$0xff]
    %v3018 = vld [vmem:[#allocation2 + $0xa98] sm:$0xff]
    %v3019 = vld [vmem:[#allocation2 + $0xaa0] sm:$0xff]
    %v3020 = vld [vmem:[#allocation2 + $0xaa8] sm:$0xff]
    %v3021 = vld [vmem:[#allocation2 + $0xab0] sm:$0xff]
    %v3022 = vld [vmem:[%s5] sm:$0xff]
    %3024 = vset.pattern.permute.xlu0 0
    %3025 = vperm.xlu0 %3024, %v3022
    %v3026 = vpop.permute.xlu0 %3025
    %vm3028 = vcmask 64512
    %v3030 = vsel %vm3028, %v2678, 0
    %3032 = vmatprep.subr.mxu0 %v2680
    %3033 = vmatpush1.msra.mxu0 %v2679
    %3034 = vmatprep.subr.mxu0 %v2687
    %3035 = vmatpush1.msra.mxu0 %v2686
    %3036 = vmatprep.subr.mxu0 %v2694
    %3037 = vmatpush1.msra.mxu0 %v2693
    %3038 = vmatprep.subr.mxu0 %v2701
    %3039 = vmatpush1.msra.mxu0 %v2700
    %3040 = vmatprep.subr.mxu0 %v2708
    %3041 = vmatpush1.msra.mxu0 %v2707
    %3042 = vmatprep.subr.mxu0 %v2715
    %3043 = vmatpush1.msra.mxu0 %v2714
    %3044 = vmatprep.subr.mxu0 %v2722
    %3045 = vmatpush1.msra.mxu0 %v2721
    %3046 = vmatprep.subr.mxu0 %v2729
    %3047 = vmatpush1.msra.mxu0 %v2728
    %3048 = vmatprep.subr.mxu0 %v2736
    %3049 = vmatpush1.msra.mxu0 %v2735
    %3050 = vmatprep.subr.mxu0 %v2743
    %3051 = vmatpush1.msra.mxu0 %v2742
    %3052 = vmatprep.subr.mxu0 %v2750
    %3053 = vmatpush1.msra.mxu0 %v2749
    %3054 = vmatprep.subr.mxu0 %v2757
    %3055 = vmatpush1.msra.mxu0 %v2756
    %3056 = vmatprep.subr.mxu0 %v2764
    %3057 = vmatpush1.msra.mxu0 %v2763
    %3058 = vmatprep.subr.mxu0 %v2771
    %3059 = vmatpush1.msra.mxu0 %v2770
    %3060 = vmatprep.subr.mxu0 %v2778
    %3061 = vmatpush1.msra.mxu0 %v2777
    %3062 = vmatprep.subr.mxu0 %v2785
    %3063 = vmatpush1.msra.mxu0 %v2784
    %3064 = vmatprep.subr.mxu0 %v2792
    %3065 = vmatpush1.msra.mxu0 %v2791
    %3066 = vmatprep.subr.mxu0 %v2799
    %3067 = vmatpush1.msra.mxu0 %v2798
    %3068 = vmatprep.subr.mxu0 %v2806
    %3069 = vmatpush1.msra.mxu0 %v2805
    %3070 = vmatprep.subr.mxu0 %v2813
    %3071 = vmatpush1.msra.mxu0 %v2812
    %3072 = vmatprep.subr.mxu0 %v2820
    %3073 = vmatpush1.msra.mxu0 %v2819
    %3074 = vmatprep.subr.mxu0 %v2827
    %3075 = vmatpush1.msra.mxu0 %v2826
    %3076 = vmatprep.subr.mxu0 %v2834
    %3077 = vmatpush1.msra.mxu0 %v2833
    %3078 = vmatprep.subr.mxu0 %v2841
    %3079 = vmatpush1.msra.mxu0 %v2840
    %3080 = vmatprep.subr.mxu0 %v2848
    %3081 = vmatpush1.msra.mxu0 %v2847
    %3082 = vmatprep.subr.mxu0 %v2855
    %3083 = vmatpush1.msra.mxu0 %v2854
    %3084 = vmatprep.subr.mxu0 %v2862
    %3085 = vmatpush1.msra.mxu0 %v2861
    %3086 = vmatprep.subr.mxu0 %v2869
    %3087 = vmatpush1.msra.mxu0 %v2868
    %3088 = vmatprep.subr.mxu0 %v2876
    %3089 = vmatpush1.msra.mxu0 %v2875
    %3090 = vmatprep.subr.mxu0 %v2883
    %3091 = vmatpush1.msra.mxu0 %v2882
    %3092 = vmatprep.subr.mxu0 %v2890
    %3093 = vmatpush1.msra.mxu0 %v2889
    %3094 = vmatprep.subr.mxu0 %v2897
    %3095 = vmatpush1.msra.mxu0 %v2896
    %3096 = vmatprep.mubr.f32.mxu0 %v2676
    %3097 = vmatmul.mubr.f32.gmra.mrb[0].mxu0 %v2675
    %v3098 = vpop.f32.mrb[0].mxu0
    %v3099 = vadd.f32 %v3026, %v3098
    %v3100 = vpop.f32.mrb[0].mxu0
    %v3101 = vadd.f32 %v3026, %v3100
    %3102 = vdwg.mxu0
    %3103 = vmatprep.subr.mxu0 %v2904
    %3104 = vmatpush1.msra.mxu0 %v2903
    %3105 = vmatprep.subr.mxu0 %v2911
    %3106 = vmatpush1.msra.mxu0 %v2910
    %3107 = vmatprep.subr.mxu0 %v2918
    %3108 = vmatpush1.msra.mxu0 %v2917
    %3109 = vmatprep.subr.mxu0 %v2925
    %3110 = vmatpush1.msra.mxu0 %v2924
    %3111 = vmatprep.subr.mxu0 %v2932
    %3112 = vmatpush1.msra.mxu0 %v2931
    %3113 = vmatprep.subr.mxu0 %v2939
    %3114 = vmatpush1.msra.mxu0 %v2938
    %3115 = vmatprep.subr.mxu0 %v2946
    %3116 = vmatpush1.msra.mxu0 %v2945
    %3117 = vmatprep.subr.mxu0 %v2953
    %3118 = vmatpush1.msra.mxu0 %v2952
    %3119 = vmatprep.subr.mxu0 %v2960
    %3120 = vmatpush1.msra.mxu0 %v2959
    %3121 = vmatprep.subr.mxu0 %v2967
    %3122 = vmatpush1.msra.mxu0 %v2966
    %3123 = vmatprep.subr.mxu0 %v2974
    %3124 = vmatpush1.msra.mxu0 %v2973
    %3125 = vmatprep.subr.mxu0 %v2981
    %3126 = vmatpush1.msra.mxu0 %v2980
    %3127 = vmatprep.subr.mxu0 %v2988
    %3128 = vmatpush1.msra.mxu0 %v2987
    %3129 = vmatprep.subr.mxu0 %v2995
    %3130 = vmatpush1.msra.mxu0 %v2994
    %3131 = vmatprep.subr.mxu0 %v3002
    %3132 = vmatpush1.msra.mxu0 %v3001
    %3133 = vmatprep.subr.mxu0 %v3009
    %3134 = vmatpush1.msra.mxu0 %v3008
    %3135 = vmatprep.subr.mxu0 %v3016
    %3136 = vmatpush1.msra.mxu0 %v3015
    %3137 = vmatprep.subr.mxu0 0.0
    %3138 = vmatpush1.msra.mxu0 0.0
    %3139 = vmatprep.subr.mxu0 0.0
    %3140 = vmatpush1.msra.mxu0 0.0
    %3141 = vmatprep.subr.mxu0 0.0
    %3142 = vmatpush1.msra.mxu0 0.0
    %3143 = vmatprep.subr.mxu0 0.0
    %3144 = vmatpush1.msra.mxu0 0.0
    %3145 = vmatprep.subr.mxu0 0.0
    %3146 = vmatpush1.msra.mxu0 0.0
    %3147 = vmatprep.subr.mxu0 0.0
    %3148 = vmatpush1.msra.mxu0 0.0
    %3149 = vmatprep.subr.mxu0 0.0
    %3150 = vmatpush1.msra.mxu0 0.0
    %3151 = vmatprep.subr.mxu0 0.0
    %3152 = vmatpush1.msra.mxu0 0.0
    %3153 = vmatprep.subr.mxu0 0.0
    %3154 = vmatpush1.msra.mxu0 0.0
    %3155 = vmatprep.subr.mxu0 0.0
    %3156 = vmatpush1.msra.mxu0 0.0
    %3157 = vmatprep.subr.mxu0 0.0
    %3158 = vmatpush1.msra.mxu0 0.0
    %3159 = vmatprep.subr.mxu0 0.0
    %3160 = vmatpush1.msra.mxu0 0.0
    %3161 = vmatprep.subr.mxu0 0.0
    %3162 = vmatpush1.msra.mxu0 0.0
    %3163 = vmatprep.subr.mxu0 0.0
    %3164 = vmatpush1.msra.mxu0 0.0
    %3165 = vmatprep.subr.mxu0 0.0
    %3166 = vmatpush1.msra.mxu0 0.0
    %3167 = vmatprep.mubr.f32.mxu0 %v3030
    %3168 = vmatmul.mubr.f32.gmra.mrb[0].mxu0 %v2677
    %v3169 = vpop.f32.mrb[0].mxu0
    %v3170 = vadd.f32 %v3099, %v3169
    %v3171 = vpop.f32.mrb[0].mxu0
    %v3172 = vadd.f32 %v3101, %v3171
    %3173 = vdwg.mxu0
    %3174 = vmatprep.subr.mxu0 %v2682
    %3175 = vmatpush1.msra.mxu0 %v2681
    %3176 = vmatprep.subr.mxu0 %v2689
    %3177 = vmatpush1.msra.mxu0 %v2688
    %3178 = vmatprep.subr.mxu0 %v2696
    %3179 = vmatpush1.msra.mxu0 %v2695
    %3180 = vmatprep.subr.mxu0 %v2703
    %3181 = vmatpush1.msra.mxu0 %v2702
    %3182 = vmatprep.subr.mxu0 %v2710
    %3183 = vmatpush1.msra.mxu0 %v2709
    %3184 = vmatprep.subr.mxu0 %v2717
    %3185 = vmatpush1.msra.mxu0 %v2716
    %3186 = vmatprep.subr.mxu0 %v2724
    %3187 = vmatpush1.msra.mxu0 %v2723
    %3188 = vmatprep.subr.mxu0 %v2731
    %3189 = vmatpush1.msra.mxu0 %v2730
    %3190 = vmatprep.subr.mxu0 %v2738
    %3191 = vmatpush1.msra.mxu0 %v2737
    %3192 = vmatprep.subr.mxu0 %v2745
    %3193 = vmatpush1.msra.mxu0 %v2744
    %3194 = vmatprep.subr.mxu0 %v2752
    %3195 = vmatpush1.msra.mxu0 %v2751
    %3196 = vmatprep.subr.mxu0 %v2759
    %3197 = vmatpush1.msra.mxu0 %v2758
    %3198 = vmatprep.subr.mxu0 %v2766
    %3199 = vmatpush1.msra.mxu0 %v2765
    %3200 = vmatprep.subr.mxu0 %v2773
    %3201 = vmatpush1.msra.mxu0 %v2772
    %3202 = vmatprep.subr.mxu0 %v2780
    %3203 = vmatpush1.msra.mxu0 %v2779
    %3204 = vmatprep.subr.mxu0 %v2787
    %3205 = vmatpush1.msra.mxu0 %v2786
    %3206 = vmatprep.subr.mxu0 %v2794
    %3207 = vmatpush1.msra.mxu0 %v2793
    %3208 = vmatprep.subr.mxu0 %v2801
    %3209 = vmatpush1.msra.mxu0 %v2800
    %3210 = vmatprep.subr.mxu0 %v2808
    %3211 = vmatpush1.msra.mxu0 %v2807
    %3212 = vmatprep.subr.mxu0 %v2815
    %3213 = vmatpush1.msra.mxu0 %v2814
    %3214 = vmatprep.subr.mxu0 %v2822
    %3215 = vmatpush1.msra.mxu0 %v2821
    %3216 = vmatprep.subr.mxu0 %v2829
    %3217 = vmatpush1.msra.mxu0 %v2828
    %3218 = vmatprep.subr.mxu0 %v2836
    %3219 = vmatpush1.msra.mxu0 %v2835
    %3220 = vmatprep.subr.mxu0 %v2843
    %3221 = vmatpush1.msra.mxu0 %v2842
    %3222 = vmatprep.subr.mxu0 %v2850
    %3223 = vmatpush1.msra.mxu0 %v2849
    %3224 = vmatprep.subr.mxu0 %v2857
    %3225 = vmatpush1.msra.mxu0 %v2856
    %3226 = vmatprep.subr.mxu0 %v2864
    %3227 = vmatpush1.msra.mxu0 %v2863
    %3228 = vmatprep.subr.mxu0 %v2871
    %3229 = vmatpush1.msra.mxu0 %v2870
    %3230 = vmatprep.subr.mxu0 %v2878
    %3231 = vmatpush1.msra.mxu0 %v2877
    %3232 = vmatprep.subr.mxu0 %v2885
    %3233 = vmatpush1.msra.mxu0 %v2884
    %3234 = vmatprep.subr.mxu0 %v2892
    %3235 = vmatpush1.msra.mxu0 %v2891
    %3236 = vmatprep.subr.mxu0 %v2899
    %3237 = vmatpush1.msra.mxu0 %v2898
    %3238 = vmatprep.mubr.f32.mxu0 %v2676
    %3239 = vmatmul.mubr.f32.gmra.mrb[0].mxu0 %v2675
    %v3240 = vpop.f32.mrb[0].mxu0
    %v3241 = vadd.f32 %v3026, %v3240
    %v3242 = vpop.f32.mrb[0].mxu0
    %v3243 = vadd.f32 %v3026, %v3242
    %3244 = vdwg.mxu0
    %3245 = vmatprep.subr.mxu0 %v2906
    %3246 = vmatpush1.msra.mxu0 %v2905
    %3247 = vmatprep.subr.mxu0 %v2913
    %3248 = vmatpush1.msra.mxu0 %v2912
    %3249 = vmatprep.subr.mxu0 %v2920
    %3250 = vmatpush1.msra.mxu0 %v2919
    %3251 = vmatprep.subr.mxu0 %v2927
    %3252 = vmatpush1.msra.mxu0 %v2926
    %3253 = vmatprep.subr.mxu0 %v2934
    %3254 = vmatpush1.msra.mxu0 %v2933
    %3255 = vmatprep.subr.mxu0 %v2941
    %3256 = vmatpush1.msra.mxu0 %v2940
    %3257 = vmatprep.subr.mxu0 %v2948
    %3258 = vmatpush1.msra.mxu0 %v2947
    %3259 = vmatprep.subr.mxu0 %v2955
    %3260 = vmatpush1.msra.mxu0 %v2954
    %3261 = vmatprep.subr.mxu0 %v2962
    %3262 = vmatpush1.msra.mxu0 %v2961
    %3263 = vmatprep.subr.mxu0 %v2969
    %3264 = vmatpush1.msra.mxu0 %v2968
    %3265 = vmatprep.subr.mxu0 %v2976
    %3266 = vmatpush1.msra.mxu0 %v2975
    %3267 = vmatprep.subr.mxu0 %v2983
    %3268 = vmatpush1.msra.mxu0 %v2982
    %3269 = vmatprep.subr.mxu0 %v2990
    %3270 = vmatpush1.msra.mxu0 %v2989
    %3271 = vmatprep.subr.mxu0 %v2997
    %3272 = vmatpush1.msra.mxu0 %v2996
    %3273 = vmatprep.subr.mxu0 %v3004
    %3274 = vmatpush1.msra.mxu0 %v3003
    %3275 = vmatprep.subr.mxu0 %v3011
    %3276 = vmatpush1.msra.mxu0 %v3010
    %3277 = vmatprep.subr.mxu0 %v3018
    %3278 = vmatpush1.msra.mxu0 %v3017
    %3279 = vmatprep.subr.mxu0 0.0
    %3280 = vmatpush1.msra.mxu0 0.0
    %3281 = vmatprep.subr.mxu0 0.0
    %3282 = vmatpush1.msra.mxu0 0.0
    %3283 = vmatprep.subr.mxu0 0.0
    %3284 = vmatpush1.msra.mxu0 0.0
    %3285 = vmatprep.subr.mxu0 0.0
    %3286 = vmatpush1.msra.mxu0 0.0
    %3287 = vmatprep.subr.mxu0 0.0
    %3288 = vmatpush1.msra.mxu0 0.0
    %3289 = vmatprep.subr.mxu0 0.0
    %3290 = vmatpush1.msra.mxu0 0.0
    %3291 = vmatprep.subr.mxu0 0.0
    %3292 = vmatpush1.msra.mxu0 0.0
    %3293 = vmatprep.subr.mxu0 0.0
    %3294 = vmatpush1.msra.mxu0 0.0
    %3295 = vmatprep.subr.mxu0 0.0
    %3296 = vmatpush1.msra.mxu0 0.0
    %3297 = vmatprep.subr.mxu0 0.0
    %3298 = vmatpush1.msra.mxu0 0.0
    %3299 = vmatprep.subr.mxu0 0.0
    %3300 = vmatpush1.msra.mxu0 0.0
    %3301 = vmatprep.subr.mxu0 0.0
    %3302 = vmatpush1.msra.mxu0 0.0
    %3303 = vmatprep.subr.mxu0 0.0
    %3304 = vmatpush1.msra.mxu0 0.0
    %3305 = vmatprep.subr.mxu0 0.0
    %3306 = vmatpush1.msra.mxu0 0.0
    %3307 = vmatprep.subr.mxu0 0.0
    %3308 = vmatpush1.msra.mxu0 0.0
    %3309 = vmatprep.mubr.f32.mxu0 %v3030
    %3310 = vmatmul.mubr.f32.gmra.mrb[0].mxu0 %v2677
    %v3311 = vpop.f32.mrb[0].mxu0
    %v3312 = vadd.f32 %v3241, %v3311
    %v3313 = vpop.f32.mrb[0].mxu0
    %v3314 = vadd.f32 %v3243, %v3313
    %3315 = vdwg.mxu0
    %3316 = vmatprep.subr.mxu0 %v2684
    %3317 = vmatpush1.msra.mxu0 %v2683
    %3318 = vmatprep.subr.mxu0 %v2691
    %3319 = vmatpush1.msra.mxu0 %v2690
    %3320 = vmatprep.subr.mxu0 %v2698
    %3321 = vmatpush1.msra.mxu0 %v2697
    %3322 = vmatprep.subr.mxu0 %v2705
    %3323 = vmatpush1.msra.mxu0 %v2704
    %3324 = vmatprep.subr.mxu0 %v2712
    %3325 = vmatpush1.msra.mxu0 %v2711
    %3326 = vmatprep.subr.mxu0 %v2719
    %3327 = vmatpush1.msra.mxu0 %v2718
    %3328 = vmatprep.subr.mxu0 %v2726
    %3329 = vmatpush1.msra.mxu0 %v2725
    %3330 = vmatprep.subr.mxu0 %v2733
    %3331 = vmatpush1.msra.mxu0 %v2732
    %3332 = vmatprep.subr.mxu0 %v2740
    %3333 = vmatpush1.msra.mxu0 %v2739
    %3334 = vmatprep.subr.mxu0 %v2747
    %3335 = vmatpush1.msra.mxu0 %v2746
    %3336 = vmatprep.subr.mxu0 %v2754
    %3337 = vmatpush1.msra.mxu0 %v2753
    %3338 = vmatprep.subr.mxu0 %v2761
    %3339 = vmatpush1.msra.mxu0 %v2760
    %3340 = vmatprep.subr.mxu0 %v2768
    %3341 = vmatpush1.msra.mxu0 %v2767
    %3342 = vmatprep.subr.mxu0 %v2775
    %3343 = vmatpush1.msra.mxu0 %v2774
    %3344 = vmatprep.subr.mxu0 %v2782
    %3345 = vmatpush1.msra.mxu0 %v2781
    %3346 = vmatprep.subr.mxu0 %v2789
    %3347 = vmatpush1.msra.mxu0 %v2788
    %3348 = vmatprep.subr.mxu0 %v2796
    %3349 = vmatpush1.msra.mxu0 %v2795
    %3350 = vmatprep.subr.mxu0 %v2803
    %3351 = vmatpush1.msra.mxu0 %v2802
    %3352 = vmatprep.subr.mxu0 %v2810
    %3353 = vmatpush1.msra.mxu0 %v2809
    %3354 = vmatprep.subr.mxu0 %v2817
    %3355 = vmatpush1.msra.mxu0 %v2816
    %3356 = vmatprep.subr.mxu0 %v2824
    %3357 = vmatpush1.msra.mxu0 %v2823
    %3358 = vmatprep.subr.mxu0 %v2831
    %3359 = vmatpush1.msra.mxu0 %v2830
    %3360 = vmatprep.subr.mxu0 %v2838
    %3361 = vmatpush1.msra.mxu0 %v2837
    %3362 = vmatprep.subr.mxu0 %v2845
    %3363 = vmatpush1.msra.mxu0 %v2844
    %3364 = vmatprep.subr.mxu0 %v2852
    %3365 = vmatpush1.msra.mxu0 %v2851
    %3366 = vmatprep.subr.mxu0 %v2859
    %3367 = vmatpush1.msra.mxu0 %v2858
    %3368 = vmatprep.subr.mxu0 %v2866
    %3369 = vmatpush1.msra.mxu0 %v2865
    %3370 = vmatprep.subr.mxu0 %v2873
    %3371 = vmatpush1.msra.mxu0 %v2872
    %3372 = vmatprep.subr.mxu0 %v2880
    %3373 = vmatpush1.msra.mxu0 %v2879
    %3374 = vmatprep.subr.mxu0 %v2887
    %3375 = vmatpush1.msra.mxu0 %v2886
    %3376 = vmatprep.subr.mxu0 %v2894
    %3377 = vmatpush1.msra.mxu0 %v2893
    %3378 = vmatprep.subr.mxu0 %v2901
    %3379 = vmatpush1.msra.mxu0 %v2900
    %3380 = vmatprep.mubr.f32.mxu0 %v2676
    %3381 = vmatmul.mubr.f32.gmra.mrb[0].mxu0 %v2675
    %v3382 = vpop.f32.mrb[0].mxu0
    %v3383 = vadd.f32 %v3026, %v3382
    %v3384 = vpop.f32.mrb[0].mxu0
    %v3385 = vadd.f32 %v3026, %v3384
    %3386 = vdwg.mxu0
    %3387 = vmatprep.subr.mxu0 %v2908
    %3388 = vmatpush1.msra.mxu0 %v2907
    %3389 = vmatprep.subr.mxu0 %v2915
    %3390 = vmatpush1.msra.mxu0 %v2914
    %3391 = vmatprep.subr.mxu0 %v2922
    %3392 = vmatpush1.msra.mxu0 %v2921
    %3393 = vmatprep.subr.mxu0 %v2929
    %3394 = vmatpush1.msra.mxu0 %v2928
    %3395 = vmatprep.subr.mxu0 %v2936
    %3396 = vmatpush1.msra.mxu0 %v2935
    %3397 = vmatprep.subr.mxu0 %v2943
    %3398 = vmatpush1.msra.mxu0 %v2942
    %3399 = vmatprep.subr.mxu0 %v2950
    %3400 = vmatpush1.msra.mxu0 %v2949
    %3401 = vmatprep.subr.mxu0 %v2957
    %3402 = vmatpush1.msra.mxu0 %v2956
    %3403 = vmatprep.subr.mxu0 %v2964
    %3404 = vmatpush1.msra.mxu0 %v2963
    %3405 = vmatprep.subr.mxu0 %v2971
    %3406 = vmatpush1.msra.mxu0 %v2970
    %3407 = vmatprep.subr.mxu0 %v2978
    %3408 = vmatpush1.msra.mxu0 %v2977
    %3409 = vmatprep.subr.mxu0 %v2985
    %3410 = vmatpush1.msra.mxu0 %v2984
    %3411 = vmatprep.subr.mxu0 %v2992
    %3412 = vmatpush1.msra.mxu0 %v2991
    %3413 = vmatprep.subr.mxu0 %v2999
    %3414 = vmatpush1.msra.mxu0 %v2998
    %3415 = vmatprep.subr.mxu0 %v3006
    %3416 = vmatpush1.msra.mxu0 %v3005
    %3417 = vmatprep.subr.mxu0 %v3013
    %3418 = vmatpush1.msra.mxu0 %v3012
    %3419 = vmatprep.subr.mxu0 %v3020
    %3420 = vmatpush1.msra.mxu0 %v3019
    %3421 = vmatprep.subr.mxu0 0.0
    %3422 = vmatpush1.msra.mxu0 0.0
    %3423 = vmatprep.subr.mxu0 0.0
    %3424 = vmatpush1.msra.mxu0 0.0
    %3425 = vmatprep.subr.mxu0 0.0
    %3426 = vmatpush1.msra.mxu0 0.0
    %3427 = vmatprep.subr.mxu0 0.0
    %3428 = vmatpush1.msra.mxu0 0.0
    %3429 = vmatprep.subr.mxu0 0.0
    %3430 = vmatpush1.msra.mxu0 0.0
    %3431 = vmatprep.subr.mxu0 0.0
    %3432 = vmatpush1.msra.mxu0 0.0
    %3433 = vmatprep.subr.mxu0 0.0
    %3434 = vmatpush1.msra.mxu0 0.0
    %3435 = vmatprep.subr.mxu0 0.0
    %3436 = vmatpush1.msra.mxu0 0.0
    %3437 = vmatprep.subr.mxu0 0.0
    %3438 = vmatpush1.msra.mxu0 0.0
    %3439 = vmatprep.subr.mxu0 0.0
    %3440 = vmatpush1.msra.mxu0 0.0
    %3441 = vmatprep.subr.mxu0 0.0
    %3442 = vmatpush1.msra.mxu0 0.0
    %3443 = vmatprep.subr.mxu0 0.0
    %3444 = vmatpush1.msra.mxu0 0.0
    %3445 = vmatprep.subr.mxu0 0.0
    %3446 = vmatpush1.msra.mxu0 0.0
    %3447 = vmatprep.subr.mxu0 0.0
    %3448 = vmatpush1.msra.mxu0 0.0
    %3449 = vmatprep.subr.mxu0 0.0
    %3450 = vmatpush1.msra.mxu0 0.0
    %3451 = vmatprep.mubr.f32.mxu0 %v3030
    %3452 = vmatmul.mubr.f32.gmra.mrb[0].mxu0 %v2677
    %v3453 = vpop.f32.mrb[0].mxu0
    %v3454 = vadd.f32 %v3383, %v3453
    %v3455 = vpop.f32.mrb[0].mxu0
    %v3456 = vadd.f32 %v3385, %v3455
    %3457 = vdwg.mxu0
    %3458 = vmatprep.subr.mxu0 0.0
    %3459 = vmatpush1.msra.mxu0 %v2685
    %3460 = vmatprep.subr.mxu0 0.0
    %3461 = vmatpush1.msra.mxu0 %v2692
    %3462 = vmatprep.subr.mxu0 0.0
    %3463 = vmatpush1.msra.mxu0 %v2699
    %3464 = vmatprep.subr.mxu0 0.0
    %3465 = vmatpush1.msra.mxu0 %v2706
    %3466 = vmatprep.subr.mxu0 0.0
    %3467 = vmatpush1.msra.mxu0 %v2713
    %3468 = vmatprep.subr.mxu0 0.0
    %3469 = vmatpush1.msra.mxu0 %v2720
    %3470 = vmatprep.subr.mxu0 0.0
    %3471 = vmatpush1.msra.mxu0 %v2727
    %3472 = vmatprep.subr.mxu0 0.0
    %3473 = vmatpush1.msra.mxu0 %v2734
    %3474 = vmatprep.subr.mxu0 0.0
    %3475 = vmatpush1.msra.mxu0 %v2741
    %3476 = vmatprep.subr.mxu0 0.0
    %3477 = vmatpush1.msra.mxu0 %v2748
    %3478 = vmatprep.subr.mxu0 0.0
    %3479 = vmatpush1.msra.mxu0 %v2755
    %3480 = vmatprep.subr.mxu0 0.0
    %3481 = vmatpush1.msra.mxu0 %v2762
    %3482 = vmatprep.subr.mxu0 0.0
    %3483 = vmatpush1.msra.mxu0 %v2769
    %3484 = vmatprep.subr.mxu0 0.0
    %3485 = vmatpush1.msra.mxu0 %v2776
    %3486 = vmatprep.subr.mxu0 0.0
    %3487 = vmatpush1.msra.mxu0 %v2783
    %3488 = vmatprep.subr.mxu0 0.0
    %3489 = vmatpush1.msra.mxu0 %v2790
    %3490 = vmatprep.subr.mxu0 0.0
    %3491 = vmatpush1.msra.mxu0 %v2797
    %3492 = vmatprep.subr.mxu0 0.0
    %3493 = vmatpush1.msra.mxu0 %v2804
    %3494 = vmatprep.subr.mxu0 0.0
    %3495 = vmatpush1.msra.mxu0 %v2811
    %3496 = vmatprep.subr.mxu0 0.0
    %3497 = vmatpush1.msra.mxu0 %v2818
    %3498 = vmatprep.subr.mxu0 0.0
    %3499 = vmatpush1.msra.mxu0 %v2825
    %3500 = vmatprep.subr.mxu0 0.0
    %3501 = vmatpush1.msra.mxu0 %v2832
    %3502 = vmatprep.subr.mxu0 0.0
    %3503 = vmatpush1.msra.mxu0 %v2839
    %3504 = vmatprep.subr.mxu0 0.0
    %3505 = vmatpush1.msra.mxu0 %v2846
    %3506 = vmatprep.subr.mxu0 0.0
    %3507 = vmatpush1.msra.mxu0 %v2853
    %3508 = vmatprep.subr.mxu0 0.0
    %3509 = vmatpush1.msra.mxu0 %v2860
    %3510 = vmatprep.subr.mxu0 0.0
    %3511 = vmatpush1.msra.mxu0 %v2867
    %3512 = vmatprep.subr.mxu0 0.0
    %3513 = vmatpush1.msra.mxu0 %v2874
    %3514 = vmatprep.subr.mxu0 0.0
    %3515 = vmatpush1.msra.mxu0 %v2881
    %3516 = vmatprep.subr.mxu0 0.0
    %3517 = vmatpush1.msra.mxu0 %v2888
    %3518 = vmatprep.subr.mxu0 0.0
    %3519 = vmatpush1.msra.mxu0 %v2895
    %3520 = vmatprep.subr.mxu0 0.0
    %3521 = vmatpush1.msra.mxu0 %v2902
    %3522 = vmatprep.mubr.f32.mxu0 %v2676
    %3523 = vmatmul.mubr.f32.gmra.mrb[0].mxu0 %v2675
    %v3524 = vpop.f32.mrb[0].mxu0
    %v3525 = vadd.f32 %v3026, %v3524
    %v3526 = vpop.f32.mrb[0].mxu0
    %3527 = vdwg.mxu0
    %3528 = vmatprep.subr.mxu0 0.0
    %3529 = vmatpush1.msra.mxu0 %v2909
    %3530 = vmatprep.subr.mxu0 0.0
    %3531 = vmatpush1.msra.mxu0 %v2916
    %3532 = vmatprep.subr.mxu0 0.0
    %3533 = vmatpush1.msra.mxu0 %v2923
    %3534 = vmatprep.subr.mxu0 0.0
    %3535 = vmatpush1.msra.mxu0 %v2930
    %3536 = vmatprep.subr.mxu0 0.0
    %3537 = vmatpush1.msra.mxu0 %v2937
    %3538 = vmatprep.subr.mxu0 0.0
    %3539 = vmatpush1.msra.mxu0 %v2944
    %3540 = vmatprep.subr.mxu0 0.0
    %3541 = vmatpush1.msra.mxu0 %v2951
    %3542 = vmatprep.subr.mxu0 0.0
    %3543 = vmatpush1.msra.mxu0 %v2958
    %3544 = vmatprep.subr.mxu0 0.0
    %3545 = vmatpush1.msra.mxu0 %v2965
    %3546 = vmatprep.subr.mxu0 0.0
    %3547 = vmatpush1.msra.mxu0 %v2972
    %3548 = vmatprep.subr.mxu0 0.0
    %3549 = vmatpush1.msra.mxu0 %v2979
    %3550 = vmatprep.subr.mxu0 0.0
    %3551 = vmatpush1.msra.mxu0 %v2986
    %3552 = vmatprep.subr.mxu0 0.0
    %3553 = vmatpush1.msra.mxu0 %v2993
    %3554 = vmatprep.subr.mxu0 0.0
    %3555 = vmatpush1.msra.mxu0 %v3000
    %3556 = vmatprep.subr.mxu0 0.0
    %3557 = vmatpush1.msra.mxu0 %v3007
    %3558 = vmatprep.subr.mxu0 0.0
    %3559 = vmatpush1.msra.mxu0 %v3014
    %3560 = vmatprep.subr.mxu0 0.0
    %3561 = vmatpush1.msra.mxu0 %v3021
    %3562 = vmatprep.subr.mxu0 0.0
    %3563 = vmatpush1.msra.mxu0 0.0
    %3564 = vmatprep.subr.mxu0 0.0
    %3565 = vmatpush1.msra.mxu0 0.0
    %3566 = vmatprep.subr.mxu0 0.0
    %3567 = vmatpush1.msra.mxu0 0.0
    %3568 = vmatprep.subr.mxu0 0.0
    %3569 = vmatpush1.msra.mxu0 0.0
    %3570 = vmatprep.subr.mxu0 0.0
    %3571 = vmatpush1.msra.mxu0 0.0
    %3572 = vmatprep.subr.mxu0 0.0
    %3573 = vmatpush1.msra.mxu0 0.0
    %3574 = vmatprep.subr.mxu0 0.0
    %3575 = vmatpush1.msra.mxu0 0.0
    %3576 = vmatprep.subr.mxu0 0.0
    %3577 = vmatpush1.msra.mxu0 0.0
    %3578 = vmatprep.subr.mxu0 0.0
    %3579 = vmatpush1.msra.mxu0 0.0
    %3580 = vmatprep.subr.mxu0 0.0
    %3581 = vmatpush1.msra.mxu0 0.0
    %3582 = vmatprep.subr.mxu0 0.0
    %3583 = vmatpush1.msra.mxu0 0.0
    %3584 = vmatprep.subr.mxu0 0.0
    %3585 = vmatpush1.msra.mxu0 0.0
    %3586 = vmatprep.subr.mxu0 0.0
    %3587 = vmatpush1.msra.mxu0 0.0
    %3588 = vmatprep.subr.mxu0 0.0
    %3589 = vmatpush1.msra.mxu0 0.0
    %3590 = vmatprep.subr.mxu0 0.0
    %3591 = vmatpush1.msra.mxu0 0.0
    %3592 = vmatprep.mubr.f32.mxu0 %v3030
    %3593 = vmatmul.mubr.f32.gmra.mrb[0].mxu0 %v2677
    %v3594 = vpop.f32.mrb[0].mxu0
    %v3595 = vadd.f32 %v3525, %v3594
    %v3596 = vpop.f32.mrb[0].mxu0
    %3597 = vdwg.mxu0
    %v3598 = vmax.f32 %v3170, 0.0
    %v3599 = vmax.f32 %v3172, 0.0
    %v3600 = vmax.f32 %v3312, 0.0
    %v3601 = vmax.f32 %v3314, 0.0
    %v3602 = vmax.f32 %v3454, 0.0
    %v3603 = vmax.f32 %v3456, 0.0
    %v3604 = vmax.f32 %v3595, 0.0
    %3605 = vset.pattern.permute.xlu0 1
    %3606 = vperm.xlu0 %3605, %v3022
    %v3607 = vpop.permute.xlu0 %3606
    %v3609 = vmul.f32 %v3598, %v3607
    %v3610 = vmul.f32 %v3599, %v3607
    %v3611 = vmul.f32 %v3600, %v3607
    %v3612 = vmul.f32 %v3601, %v3607
    %v3613 = vmul.f32 %v3602, %v3607
    %v3614 = vmul.f32 %v3603, %v3607
    %v3615 = vmul.f32 %v3604, %v3607
    %3616 = vset.pattern.permute.xlu0 2
    %3617 = vperm.xlu0 %3616, %v3022
    %v3618 = vpop.permute.xlu0 %3617
    %v3620 = vadd.f32 %v3609, %v3618
    %v3621 = vadd.f32 %v3610, %v3618
    %v3622 = vadd.f32 %v3611, %v3618
    %v3623 = vadd.f32 %v3612, %v3618
    %v3624 = vadd.f32 %v3613, %v3618
    %v3625 = vadd.f32 %v3614, %v3618
    %v3626 = vadd.f32 %v3615, %v3618
    %v3628 = vlaneseq
    %v3629 = vshrl.u32 %v3628, 7
    %v3630 = vsub.s32 0, %v3629
    %v3631 = vrot.slane %v71, %v3630
    %v3632 = vlaneseq
    %v3633 = vshrl.u32 %v3632, 7
    %v3634 = vsub.s32 1, %v3633
    %v3635 = vrot.slane %v71, %v3634
    %v3636 = vlaneseq
    %v3637 = vshrl.u32 %v3636, 7
    %v3638 = vsub.s32 2, %v3637
    %v3639 = vrot.slane %v71, %v3638
    %v3640 = vlaneseq
    %v3641 = vshrl.u32 %v3640, 7
    %v3642 = vsub.s32 3, %v3641
    %v3643 = vrot.slane %v71, %v3642
    %v3644 = vlaneseq
    %v3645 = vshrl.u32 %v3644, 7
    %v3646 = vsub.s32 4, %v3645
    %v3647 = vrot.slane %v71, %v3646
    %v3648 = vlaneseq
    %v3649 = vshrl.u32 %v3648, 7
    %v3650 = vsub.s32 5, %v3649
    %v3651 = vrot.slane %v71, %v3650
    %v3652 = vlaneseq
    %v3653 = vshrl.u32 %v3652, 7
    %v3654 = vsub.s32 6, %v3653
    %v3655 = vrot.slane %v71, %v3654
    %v3663 = vmul.f32 %v3620, %v3631
    %v3664 = vmul.f32 %v3621, %v3635
    %v3665 = vmul.f32 %v3622, %v3639
    %v3666 = vmul.f32 %v3623, %v3643
    %v3667 = vmul.f32 %v3624, %v3647
    %v3668 = vmul.f32 %v3625, %v3651
    %v3669 = vmul.f32 %v3626, %v3655
    %3670 = vst [vmem:[#allocation3] sm:$0xff] 0.0
    %3671 = vst [vmem:[#allocation3 + $0x8] sm:$0xff] 0.0
    %3672 = vst [vmem:[#allocation3 + $0x10] sm:$0xff] 0.0
    %3673 = vst [vmem:[#allocation3 + $0x18] sm:$0xff] 0.0
    %3674 = vst [vmem:[#allocation3 + $0x20] sm:$0xff] 0.0
    %3675 = vst [vmem:[#allocation3 + $0x28] sm:$0xff] 0.0
    %3676 = vst [vmem:[#allocation3 + $0x30] sm:$0xff] 0.0
    %3677 = vst [vmem:[#allocation3 + $0x38] sm:$0xff] 0.0
    %3678 = vst [vmem:[#allocation3 + $0x40] sm:$0xff] 0.0
    %3679 = vst [vmem:[#allocation3 + $0x8] sm:$0xff] %v3663
    %3680 = vst [vmem:[#allocation3 + $0x10] sm:$0xff] %v3664
    %3681 = vst [vmem:[#allocation3 + $0x18] sm:$0xff] %v3665
    %3682 = vst [vmem:[#allocation3 + $0x20] sm:$0xff] %v3666
    %3683 = vst [vmem:[#allocation3 + $0x28] sm:$0xff] %v3667
    %3684 = vst [vmem:[#allocation3 + $0x30] sm:$0xff] %v3668
    %3685 = vst [vmem:[#allocation3 + $0x38] sm:$0xff] %v3669
    %v3686 = vld [vmem:[#allocation3] sm:$0xff]
    %v3687 = vld [vmem:[#allocation3 + $0x8] sm:$0xff]
    %v3688 = vld [vmem:[#allocation3 + $0x10] sm:$0xff]
    %v3689 = vld [vmem:[#allocation3 + $0x18] sm:$0xff]
    %v3690 = vld [vmem:[#allocation3 + $0x20] sm:$0xff]
    %v3691 = vld [vmem:[#allocation3 + $0x28] sm:$0xff]
    %v3692 = vld [vmem:[#allocation3 + $0x30] sm:$0xff]
    %v3693 = vld [vmem:[#allocation3 + $0x38] sm:$0xff]
    %3702 = vrot.lane.b32.xlu0 %v3686, 69
    %v3703 = vpop.permute.xlu0 %3702
    %3704 = vrot.lane.b32.xlu0 %v3687, 69
    %v3705 = vpop.permute.xlu0 %3704
    %3706 = vrot.lane.b32.xlu0 %v3688, 69
    %v3707 = vpop.permute.xlu0 %3706
    %3708 = vrot.lane.b32.xlu0 %v3689, 69
    %v3709 = vpop.permute.xlu0 %3708
    %3710 = vrot.lane.b32.xlu0 %v3690, 69
    %v3711 = vpop.permute.xlu0 %3710
    %3712 = vrot.lane.b32.xlu0 %v3691, 69
    %v3713 = vpop.permute.xlu0 %3712
    %3714 = vrot.lane.b32.xlu0 %v3692, 69
    %v3715 = vpop.permute.xlu0 %3714
    %3716 = vrot.lane.b32.xlu0 %v3693, 69
    %v3717 = vpop.permute.xlu0 %3716
    %v3718 = vsel %vm104, %v3703, %v3705
    %v3719 = vsel %vm104, %v3705, %v3707
    %v3720 = vsel %vm104, %v3707, %v3709
    %v3721 = vsel %vm104, %v3709, %v3711
    %v3722 = vsel %vm104, %v3711, %v3713
    %v3723 = vsel %vm104, %v3713, %v3715
    %v3724 = vsel %vm104, %v3715, %v3717
    %3732 = vst [vmem:[#allocation2] sm:$0xff] %v3718
    %3733 = vst [vmem:[#allocation2 + $0x8] sm:$0xff] %v3719
    %3734 = vst [vmem:[#allocation2 + $0x10] sm:$0xff] %v3720
    %3735 = vst [vmem:[#allocation2 + $0x18] sm:$0xff] %v3721
    %3736 = vst [vmem:[#allocation2 + $0x20] sm:$0xff] %v3722
    %3737 = vst [vmem:[#allocation2 + $0x28] sm:$0xff] %v3723
    %3738 = vst [vmem:[#allocation2 + $0x30] sm:$0xff] %v3724
    %v3739 = vld [vmem:[#allocation3] sm:$0xff]
    %v3740 = vld [vmem:[#allocation3 + $0x8] sm:$0xff]
    %v3741 = vld [vmem:[#allocation3 + $0x10] sm:$0xff]
    %v3742 = vld [vmem:[#allocation3 + $0x18] sm:$0xff]
    %v3743 = vld [vmem:[#allocation3 + $0x20] sm:$0xff]
    %v3744 = vld [vmem:[#allocation3 + $0x28] sm:$0xff]
    %v3745 = vld [vmem:[#allocation3 + $0x30] sm:$0xff]
    %v3746 = vld [vmem:[#allocation3 + $0x38] sm:$0xff]
    %3755 = vrot.lane.b32.xlu0 %v3739, 68
    %v3756 = vpop.permute.xlu0 %3755
    %3757 = vrot.lane.b32.xlu0 %v3740, 68
    %v3758 = vpop.permute.xlu0 %3757
    %3759 = vrot.lane.b32.xlu0 %v3741, 68
    %v3760 = vpop.permute.xlu0 %3759
    %3761 = vrot.lane.b32.xlu0 %v3742, 68
    %v3762 = vpop.permute.xlu0 %3761
    %3763 = vrot.lane.b32.xlu0 %v3743, 68
    %v3764 = vpop.permute.xlu0 %3763
    %3765 = vrot.lane.b32.xlu0 %v3744, 68
    %v3766 = vpop.permute.xlu0 %3765
    %3767 = vrot.lane.b32.xlu0 %v3745, 68
    %v3768 = vpop.permute.xlu0 %3767
    %3769 = vrot.lane.b32.xlu0 %v3746, 68
    %v3770 = vpop.permute.xlu0 %3769
    %v3771 = vsel %vm158, %v3756, %v3758
    %v3772 = vsel %vm158, %v3758, %v3760
    %v3773 = vsel %vm158, %v3760, %v3762
    %v3774 = vsel %vm158, %v3762, %v3764
    %v3775 = vsel %vm158, %v3764, %v3766
    %v3776 = vsel %vm158, %v3766, %v3768
    %v3777 = vsel %vm158, %v3768, %v3770
    %3785 = vst [vmem:[#allocation2 + $0x38] sm:$0xff] %v3771
    %3786 = vst [vmem:[#allocation2 + $0x40] sm:$0xff] %v3772
    %3787 = vst [vmem:[#allocation2 + $0x48] sm:$0xff] %v3773
    %3788 = vst [vmem:[#allocation2 + $0x50] sm:$0xff] %v3774
    %3789 = vst [vmem:[#allocation2 + $0x58] sm:$0xff] %v3775
    %3790 = vst [vmem:[#allocation2 + $0x60] sm:$0xff] %v3776
    %3791 = vst [vmem:[#allocation2 + $0x68] sm:$0xff] %v3777
    %v3792 = vld [vmem:[#allocation3] sm:$0xff]
    %v3793 = vld [vmem:[#allocation3 + $0x8] sm:$0xff]
    %v3794 = vld [vmem:[#allocation3 + $0x10] sm:$0xff]
    %v3795 = vld [vmem:[#allocation3 + $0x18] sm:$0xff]
    %v3796 = vld [vmem:[#allocation3 + $0x20] sm:$0xff]
    %v3797 = vld [vmem:[#allocation3 + $0x28] sm:$0xff]
    %v3798 = vld [vmem:[#allocation3 + $0x30] sm:$0xff]
    %v3799 = vld [vmem:[#allocation3 + $0x38] sm:$0xff]
    %3808 = vrot.lane.b32.xlu0 %v3792, 67
    %v3809 = vpop.permute.xlu0 %3808
    %3810 = vrot.lane.b32.xlu0 %v3793, 67
    %v3811 = vpop.permute.xlu0 %3810
    %3812 = vrot.lane.b32.xlu0 %v3794, 67
    %v3813 = vpop.permute.xlu0 %3812
    %3814 = vrot.lane.b32.xlu0 %v3795, 67
    %v3815 = vpop.permute.xlu0 %3814
    %3816 = vrot.lane.b32.xlu0 %v3796, 67
    %v3817 = vpop.permute.xlu0 %3816
    %3818 = vrot.lane.b32.xlu0 %v3797, 67
    %v3819 = vpop.permute.xlu0 %3818
    %3820 = vrot.lane.b32.xlu0 %v3798, 67
    %v3821 = vpop.permute.xlu0 %3820
    %3822 = vrot.lane.b32.xlu0 %v3799, 67
    %v3823 = vpop.permute.xlu0 %3822
    %v3824 = vsel %vm212, %v3809, %v3811
    %v3825 = vsel %vm212, %v3811, %v3813
    %v3826 = vsel %vm212, %v3813, %v3815
    %v3827 = vsel %vm212, %v3815, %v3817
    %v3828 = vsel %vm212, %v3817, %v3819
    %v3829 = vsel %vm212, %v3819, %v3821
    %v3830 = vsel %vm212, %v3821, %v3823
    %3838 = vst [vmem:[#allocation2 + $0x70] sm:$0xff] %v3824
    %3839 = vst [vmem:[#allocation2 + $0x78] sm:$0xff] %v3825
    %3840 = vst [vmem:[#allocation2 + $0x80] sm:$0xff] %v3826
    %3841 = vst [vmem:[#allocation2 + $0x88] sm:$0xff] %v3827
    %3842 = vst [vmem:[#allocation2 + $0x90] sm:$0xff] %v3828
    %3843 = vst [vmem:[#allocation2 + $0x98] sm:$0xff] %v3829
    %3844 = vst [vmem:[#allocation2 + $0xa0] sm:$0xff] %v3830
    %v3845 = vld [vmem:[#allocation3] sm:$0xff]
    %v3846 = vld [vmem:[#allocation3 + $0x8] sm:$0xff]
    %v3847 = vld [vmem:[#allocation3 + $0x10] sm:$0xff]
    %v3848 = vld [vmem:[#allocation3 + $0x18] sm:$0xff]
    %v3849 = vld [vmem:[#allocation3 + $0x20] sm:$0xff]
    %v3850 = vld [vmem:[#allocation3 + $0x28] sm:$0xff]
    %v3851 = vld [vmem:[#allocation3 + $0x30] sm:$0xff]
    %v3852 = vld [vmem:[#allocation3 + $0x38] sm:$0xff]
    %3861 = vrot.lane.b32.xlu0 %v3845, 66
    %v3862 = vpop.permute.xlu0 %3861
    %3863 = vrot.lane.b32.xlu0 %v3846, 66
    %v3864 = vpop.permute.xlu0 %3863
    %3865 = vrot.lane.b32.xlu0 %v3847, 66
    %v3866 = vpop.permute.xlu0 %3865
    %3867 = vrot.lane.b32.xlu0 %v3848, 66
    %v3868 = vpop.permute.xlu0 %3867
    %3869 = vrot.lane.b32.xlu0 %v3849, 66
    %v3870 = vpop.permute.xlu0 %3869
    %3871 = vrot.lane.b32.xlu0 %v3850, 66
    %v3872 = vpop.permute.xlu0 %3871
    %3873 = vrot.lane.b32.xlu0 %v3851, 66
    %v3874 = vpop.permute.xlu0 %3873
    %3875 = vrot.lane.b32.xlu0 %v3852, 66
    %v3876 = vpop.permute.xlu0 %3875
    %v3877 = vsel %vm266, %v3862, %v3864
    %v3878 = vsel %vm266, %v3864, %v3866
    %v3879 = vsel %vm266, %v3866, %v3868
    %v3880 = vsel %vm266, %v3868, %v3870
    %v3881 = vsel %vm266, %v3870, %v3872
    %v3882 = vsel %vm266, %v3872, %v3874
    %v3883 = vsel %vm266, %v3874, %v3876
    %3891 = vst [vmem:[#allocation2 + $0xa8] sm:$0xff] %v3877
    %3892 = vst [vmem:[#allocation2 + $0xb0] sm:$0xff] %v3878
    %3893 = vst [vmem:[#allocation2 + $0xb8] sm:$0xff] %v3879
    %3894 = vst [vmem:[#allocation2 + $0xc0] sm:$0xff] %v3880
    %3895 = vst [vmem:[#allocation2 + $0xc8] sm:$0xff] %v3881
    %3896 = vst [vmem:[#allocation2 + $0xd0] sm:$0xff] %v3882
    %3897 = vst [vmem:[#allocation2 + $0xd8] sm:$0xff] %v3883
    %v3898 = vld [vmem:[#allocation3] sm:$0xff]
    %v3899 = vld [vmem:[#allocation3 + $0x8] sm:$0xff]
    %v3900 = vld [vmem:[#allocation3 + $0x10] sm:$0xff]
    %v3901 = vld [vmem:[#allocation3 + $0x18] sm:$0xff]
    %v3902 = vld [vmem:[#allocation3 + $0x20] sm:$0xff]
    %v3903 = vld [vmem:[#allocation3 + $0x28] sm:$0xff]
    %v3904 = vld [vmem:[#allocation3 + $0x30] sm:$0xff]
    %v3905 = vld [vmem:[#allocation3 + $0x38] sm:$0xff]
    %3914 = vrot.lane.b32.xlu0 %v3898, 65
    %v3915 = vpop.permute.xlu0 %3914
    %3916 = vrot.lane.b32.xlu0 %v3899, 65
    %v3917 = vpop.permute.xlu0 %3916
    %3918 = vrot.lane.b32.xlu0 %v3900, 65
    %v3919 = vpop.permute.xlu0 %3918
    %3920 = vrot.lane.b32.xlu0 %v3901, 65
    %v3921 = vpop.permute.xlu0 %3920
    %3922 = vrot.lane.b32.xlu0 %v3902, 65
    %v3923 = vpop.permute.xlu0 %3922
    %3924 = vrot.lane.b32.xlu0 %v3903, 65
    %v3925 = vpop.permute.xlu0 %3924
    %3926 = vrot.lane.b32.xlu0 %v3904, 65
    %v3927 = vpop.permute.xlu0 %3926
    %3928 = vrot.lane.b32.xlu0 %v3905, 65
    %v3929 = vpop.permute.xlu0 %3928
    %v3930 = vsel %vm320, %v3915, %v3917
    %v3931 = vsel %vm320, %v3917, %v3919
    %v3932 = vsel %vm320, %v3919, %v3921
    %v3933 = vsel %vm320, %v3921, %v3923
    %v3934 = vsel %vm320, %v3923, %v3925
    %v3935 = vsel %vm320, %v3925, %v3927
    %v3936 = vsel %vm320, %v3927, %v3929
    %3944 = vst [vmem:[#allocation2 + $0xe0] sm:$0xff] %v3930
    %3945 = vst [vmem:[#allocation2 + $0xe8] sm:$0xff] %v3931
    %3946 = vst [vmem:[#allocation2 + $0xf0] sm:$0xff] %v3932
    %3947 = vst [vmem:[#allocation2 + $0xf8] sm:$0xff] %v3933
    %3948 = vst [vmem:[#allocation2 + $0x100] sm:$0xff] %v3934
    %3949 = vst [vmem:[#allocation2 + $0x108] sm:$0xff] %v3935
    %3950 = vst [vmem:[#allocation2 + $0x110] sm:$0xff] %v3936
    %v3951 = vld [vmem:[#allocation3] sm:$0xff]
    %v3952 = vld [vmem:[#allocation3 + $0x8] sm:$0xff]
    %v3953 = vld [vmem:[#allocation3 + $0x10] sm:$0xff]
    %v3954 = vld [vmem:[#allocation3 + $0x18] sm:$0xff]
    %v3955 = vld [vmem:[#allocation3 + $0x20] sm:$0xff]
    %v3956 = vld [vmem:[#allocation3 + $0x28] sm:$0xff]
    %v3957 = vld [vmem:[#allocation3 + $0x30] sm:$0xff]
    %v3958 = vld [vmem:[#allocation3 + $0x38] sm:$0xff]
    %3967 = vrot.lane.b32.xlu0 %v3951, 64
    %v3968 = vpop.permute.xlu0 %3967
    %3969 = vrot.lane.b32.xlu0 %v3952, 64
    %v3970 = vpop.permute.xlu0 %3969
    %3971 = vrot.lane.b32.xlu0 %v3953, 64
    %v3972 = vpop.permute.xlu0 %3971
    %3973 = vrot.lane.b32.xlu0 %v3954, 64
    %v3974 = vpop.permute.xlu0 %3973
    %3975 = vrot.lane.b32.xlu0 %v3955, 64
    %v3976 = vpop.permute.xlu0 %3975
    %3977 = vrot.lane.b32.xlu0 %v3956, 64
    %v3978 = vpop.permute.xlu0 %3977
    %3979 = vrot.lane.b32.xlu0 %v3957, 64
    %v3980 = vpop.permute.xlu0 %3979
    %3981 = vrot.lane.b32.xlu0 %v3958, 64
    %v3982 = vpop.permute.xlu0 %3981
    %v3983 = vsel %vm374, %v3968, %v3970
    %v3984 = vsel %vm374, %v3970, %v3972
    %v3985 = vsel %vm374, %v3972, %v3974
    %v3986 = vsel %vm374, %v3974, %v3976
    %v3987 = vsel %vm374, %v3976, %v3978
    %v3988 = vsel %vm374, %v3978, %v3980
    %v3989 = vsel %vm374, %v3980, %v3982
    %3997 = vst [vmem:[#allocation2 + $0x118] sm:$0xff] %v3983
    %3998 = vst [vmem:[#allocation2 + $0x120] sm:$0xff] %v3984
    %3999 = vst [vmem:[#allocation2 + $0x128] sm:$0xff] %v3985
    %4000 = vst [vmem:[#allocation2 + $0x130] sm:$0xff] %v3986
    %4001 = vst [vmem:[#allocation2 + $0x138] sm:$0xff] %v3987
    %4002 = vst [vmem:[#allocation2 + $0x140] sm:$0xff] %v3988
    %4003 = vst [vmem:[#allocation2 + $0x148] sm:$0xff] %v3989
    %v4004 = vld [vmem:[#allocation3] sm:$0xff]
    %v4005 = vld [vmem:[#allocation3 + $0x8] sm:$0xff]
    %v4006 = vld [vmem:[#allocation3 + $0x10] sm:$0xff]
    %v4007 = vld [vmem:[#allocation3 + $0x18] sm:$0xff]
    %v4008 = vld [vmem:[#allocation3 + $0x20] sm:$0xff]
    %v4009 = vld [vmem:[#allocation3 + $0x28] sm:$0xff]
    %v4010 = vld [vmem:[#allocation3 + $0x30] sm:$0xff]
    %v4011 = vld [vmem:[#allocation3 + $0x38] sm:$0xff]
    %4020 = vrot.lane.b32.xlu0 %v4004, 63
    %v4021 = vpop.permute.xlu0 %4020
    %4022 = vrot.lane.b32.xlu0 %v4005, 63
    %v4023 = vpop.permute.xlu0 %4022
    %4024 = vrot.lane.b32.xlu0 %v4006, 63
    %v4025 = vpop.permute.xlu0 %4024
    %4026 = vrot.lane.b32.xlu0 %v4007, 63
    %v4027 = vpop.permute.xlu0 %4026
    %4028 = vrot.lane.b32.xlu0 %v4008, 63
    %v4029 = vpop.permute.xlu0 %4028
    %4030 = vrot.lane.b32.xlu0 %v4009, 63
    %v4031 = vpop.permute.xlu0 %4030
    %4032 = vrot.lane.b32.xlu0 %v4010, 63
    %v4033 = vpop.permute.xlu0 %4032
    %4034 = vrot.lane.b32.xlu0 %v4011, 63
    %v4035 = vpop.permute.xlu0 %4034
    %v4036 = vsel %vm428, %v4021, %v4023
    %v4037 = vsel %vm428, %v4023, %v4025
    %v4038 = vsel %vm428, %v4025, %v4027
    %v4039 = vsel %vm428, %v4027, %v4029
    %v4040 = vsel %vm428, %v4029, %v4031
    %v4041 = vsel %vm428, %v4031, %v4033
    %v4042 = vsel %vm428, %v4033, %v4035
    %4050 = vst [vmem:[#allocation2 + $0x150] sm:$0xff] %v4036
    %4051 = vst [vmem:[#allocation2 + $0x158] sm:$0xff] %v4037
    %4052 = vst [vmem:[#allocation2 + $0x160] sm:$0xff] %v4038
    %4053 = vst [vmem:[#allocation2 + $0x168] sm:$0xff] %v4039
    %4054 = vst [vmem:[#allocation2 + $0x170] sm:$0xff] %v4040
    %4055 = vst [vmem:[#allocation2 + $0x178] sm:$0xff] %v4041
    %4056 = vst [vmem:[#allocation2 + $0x180] sm:$0xff] %v4042
    %v4057 = vld [vmem:[#allocation3] sm:$0xff]
    %v4058 = vld [vmem:[#allocation3 + $0x8] sm:$0xff]
    %v4059 = vld [vmem:[#allocation3 + $0x10] sm:$0xff]
    %v4060 = vld [vmem:[#allocation3 + $0x18] sm:$0xff]
    %v4061 = vld [vmem:[#allocation3 + $0x20] sm:$0xff]
    %v4062 = vld [vmem:[#allocation3 + $0x28] sm:$0xff]
    %v4063 = vld [vmem:[#allocation3 + $0x30] sm:$0xff]
    %v4064 = vld [vmem:[#allocation3 + $0x38] sm:$0xff]
    %4073 = vrot.lane.b32.xlu0 %v4057, 47
    %v4074 = vpop.permute.xlu0 %4073
    %4075 = vrot.lane.b32.xlu0 %v4058, 47
    %v4076 = vpop.permute.xlu0 %4075
    %4077 = vrot.lane.b32.xlu0 %v4059, 47
    %v4078 = vpop.permute.xlu0 %4077
    %4079 = vrot.lane.b32.xlu0 %v4060, 47
    %v4080 = vpop.permute.xlu0 %4079
    %4081 = vrot.lane.b32.xlu0 %v4061, 47
    %v4082 = vpop.permute.xlu0 %4081
    %4083 = vrot.lane.b32.xlu0 %v4062, 47
    %v4084 = vpop.permute.xlu0 %4083
    %4085 = vrot.lane.b32.xlu0 %v4063, 47
    %v4086 = vpop.permute.xlu0 %4085
    %4087 = vrot.lane.b32.xlu0 %v4064, 47
    %v4088 = vpop.permute.xlu0 %4087
    %v4089 = vsel %vm482, %v4074, %v4076
    %v4090 = vsel %vm482, %v4076, %v4078
    %v4091 = vsel %vm482, %v4078, %v4080
    %v4092 = vsel %vm482, %v4080, %v4082
    %v4093 = vsel %vm482, %v4082, %v4084
    %v4094 = vsel %vm482, %v4084, %v4086
    %v4095 = vsel %vm482, %v4086, %v4088
    %4103 = vst [vmem:[#allocation2 + $0x188] sm:$0xff] %v4089
    %4104 = vst [vmem:[#allocation2 + $0x190] sm:$0xff] %v4090
    %4105 = vst [vmem:[#allocation2 + $0x198] sm:$0xff] %v4091
    %4106 = vst [vmem:[#allocation2 + $0x1a0] sm:$0xff] %v4092
    %4107 = vst [vmem:[#allocation2 + $0x1a8] sm:$0xff] %v4093
    %4108 = vst [vmem:[#allocation2 + $0x1b0] sm:$0xff] %v4094
    %4109 = vst [vmem:[#allocation2 + $0x1b8] sm:$0xff] %v4095
    %v4110 = vld [vmem:[#allocation3] sm:$0xff]
    %v4111 = vld [vmem:[#allocation3 + $0x8] sm:$0xff]
    %v4112 = vld [vmem:[#allocation3 + $0x10] sm:$0xff]
    %v4113 = vld [vmem:[#allocation3 + $0x18] sm:$0xff]
    %v4114 = vld [vmem:[#allocation3 + $0x20] sm:$0xff]
    %v4115 = vld [vmem:[#allocation3 + $0x28] sm:$0xff]
    %v4116 = vld [vmem:[#allocation3 + $0x30] sm:$0xff]
    %v4117 = vld [vmem:[#allocation3 + $0x38] sm:$0xff]
    %4126 = vrot.lane.b32.xlu0 %v4110, 46
    %v4127 = vpop.permute.xlu0 %4126
    %4128 = vrot.lane.b32.xlu0 %v4111, 46
    %v4129 = vpop.permute.xlu0 %4128
    %4130 = vrot.lane.b32.xlu0 %v4112, 46
    %v4131 = vpop.permute.xlu0 %4130
    %4132 = vrot.lane.b32.xlu0 %v4113, 46
    %v4133 = vpop.permute.xlu0 %4132
    %4134 = vrot.lane.b32.xlu0 %v4114, 46
    %v4135 = vpop.permute.xlu0 %4134
    %4136 = vrot.lane.b32.xlu0 %v4115, 46
    %v4137 = vpop.permute.xlu0 %4136
    %4138 = vrot.lane.b32.xlu0 %v4116, 46
    %v4139 = vpop.permute.xlu0 %4138
    %4140 = vrot.lane.b32.xlu0 %v4117, 46
    %v4141 = vpop.permute.xlu0 %4140
    %v4142 = vsel %vm536, %v4127, %v4129
    %v4143 = vsel %vm536, %v4129, %v4131
    %v4144 = vsel %vm536, %v4131, %v4133
    %v4145 = vsel %vm536, %v4133, %v4135
    %v4146 = vsel %vm536, %v4135, %v4137
    %v4147 = vsel %vm536, %v4137, %v4139
    %v4148 = vsel %vm536, %v4139, %v4141
    %4156 = vst [vmem:[#allocation2 + $0x1c0] sm:$0xff] %v4142
    %4157 = vst [vmem:[#allocation2 + $0x1c8] sm:$0xff] %v4143
    %4158 = vst [vmem:[#allocation2 + $0x1d0] sm:$0xff] %v4144
    %4159 = vst [vmem:[#allocation2 + $0x1d8] sm:$0xff] %v4145
    %4160 = vst [vmem:[#allocation2 + $0x1e0] sm:$0xff] %v4146
    %4161 = vst [vmem:[#allocation2 + $0x1e8] sm:$0xff] %v4147
    %4162 = vst [vmem:[#allocation2 + $0x1f0] sm:$0xff] %v4148
    %v4163 = vld [vmem:[#allocation3] sm:$0xff]
    %v4164 = vld [vmem:[#allocation3 + $0x8] sm:$0xff]
    %v4165 = vld [vmem:[#allocation3 + $0x10] sm:$0xff]
    %v4166 = vld [vmem:[#allocation3 + $0x18] sm:$0xff]
    %v4167 = vld [vmem:[#allocation3 + $0x20] sm:$0xff]
    %v4168 = vld [vmem:[#allocation3 + $0x28] sm:$0xff]
    %v4169 = vld [vmem:[#allocation3 + $0x30] sm:$0xff]
    %v4170 = vld [vmem:[#allocation3 + $0x38] sm:$0xff]
    %4179 = vrot.lane.b32.xlu0 %v4163, 45
    %v4180 = vpop.permute.xlu0 %4179
    %4181 = vrot.lane.b32.xlu0 %v4164, 45
    %v4182 = vpop.permute.xlu0 %4181
    %4183 = vrot.lane.b32.xlu0 %v4165, 45
    %v4184 = vpop.permute.xlu0 %4183
    %4185 = vrot.lane.b32.xlu0 %v4166, 45
    %v4186 = vpop.permute.xlu0 %4185
    %4187 = vrot.lane.b32.xlu0 %v4167, 45
    %v4188 = vpop.permute.xlu0 %4187
    %4189 = vrot.lane.b32.xlu0 %v4168, 45
    %v4190 = vpop.permute.xlu0 %4189
    %4191 = vrot.lane.b32.xlu0 %v4169, 45
    %v4192 = vpop.permute.xlu0 %4191
    %4193 = vrot.lane.b32.xlu0 %v4170, 45
    %v4194 = vpop.permute.xlu0 %4193
    %v4195 = vsel %vm590, %v4180, %v4182
    %v4196 = vsel %vm590, %v4182, %v4184
    %v4197 = vsel %vm590, %v4184, %v4186
    %v4198 = vsel %vm590, %v4186, %v4188
    %v4199 = vsel %vm590, %v4188, %v4190
    %v4200 = vsel %vm590, %v4190, %v4192
    %v4201 = vsel %vm590, %v4192, %v4194
    %4209 = vst [vmem:[#allocation2 + $0x1f8] sm:$0xff] %v4195
    %4210 = vst [vmem:[#allocation2 + $0x200] sm:$0xff] %v4196
    %4211 = vst [vmem:[#allocation2 + $0x208] sm:$0xff] %v4197
    %4212 = vst [vmem:[#allocation2 + $0x210] sm:$0xff] %v4198
    %4213 = vst [vmem:[#allocation2 + $0x218] sm:$0xff] %v4199
    %4214 = vst [vmem:[#allocation2 + $0x220] sm:$0xff] %v4200
    %4215 = vst [vmem:[#allocation2 + $0x228] sm:$0xff] %v4201
    %v4216 = vld [vmem:[#allocation3] sm:$0xff]
    %v4217 = vld [vmem:[#allocation3 + $0x8] sm:$0xff]
    %v4218 = vld [vmem:[#allocation3 + $0x10] sm:$0xff]
    %v4219 = vld [vmem:[#allocation3 + $0x18] sm:$0xff]
    %v4220 = vld [vmem:[#allocation3 + $0x20] sm:$0xff]
    %v4221 = vld [vmem:[#allocation3 + $0x28] sm:$0xff]
    %v4222 = vld [vmem:[#allocation3 + $0x30] sm:$0xff]
    %v4223 = vld [vmem:[#allocation3 + $0x38] sm:$0xff]
    %4232 = vrot.lane.b32.xlu0 %v4216, 44
    %v4233 = vpop.permute.xlu0 %4232
    %4234 = vrot.lane.b32.xlu0 %v4217, 44
    %v4235 = vpop.permute.xlu0 %4234
    %4236 = vrot.lane.b32.xlu0 %v4218, 44
    %v4237 = vpop.permute.xlu0 %4236
    %4238 = vrot.lane.b32.xlu0 %v4219, 44
    %v4239 = vpop.permute.xlu0 %4238
    %4240 = vrot.lane.b32.xlu0 %v4220, 44
    %v4241 = vpop.permute.xlu0 %4240
    %4242 = vrot.lane.b32.xlu0 %v4221, 44
    %v4243 = vpop.permute.xlu0 %4242
    %4244 = vrot.lane.b32.xlu0 %v4222, 44
    %v4245 = vpop.permute.xlu0 %4244
    %4246 = vrot.lane.b32.xlu0 %v4223, 44
    %v4247 = vpop.permute.xlu0 %4246
    %v4248 = vsel %vm644, %v4233, %v4235
    %v4249 = vsel %vm644, %v4235, %v4237
    %v4250 = vsel %vm644, %v4237, %v4239
    %v4251 = vsel %vm644, %v4239, %v4241
    %v4252 = vsel %vm644, %v4241, %v4243
    %v4253 = vsel %vm644, %v4243, %v4245
    %v4254 = vsel %vm644, %v4245, %v4247
    %4262 = vst [vmem:[#allocation2 + $0x230] sm:$0xff] %v4248
    %4263 = vst [vmem:[#allocation2 + $0x238] sm:$0xff] %v4249
    %4264 = vst [vmem:[#allocation2 + $0x240] sm:$0xff] %v4250
    %4265 = vst [vmem:[#allocation2 + $0x248] sm:$0xff] %v4251
    %4266 = vst [vmem:[#allocation2 + $0x250] sm:$0xff] %v4252
    %4267 = vst [vmem:[#allocation2 + $0x258] sm:$0xff] %v4253
    %4268 = vst [vmem:[#allocation2 + $0x260] sm:$0xff] %v4254
    %v4269 = vld [vmem:[#allocation3] sm:$0xff]
    %v4270 = vld [vmem:[#allocation3 + $0x8] sm:$0xff]
    %v4271 = vld [vmem:[#allocation3 + $0x10] sm:$0xff]
    %v4272 = vld [vmem:[#allocation3 + $0x18] sm:$0xff]
    %v4273 = vld [vmem:[#allocation3 + $0x20] sm:$0xff]
    %v4274 = vld [vmem:[#allocation3 + $0x28] sm:$0xff]
    %v4275 = vld [vmem:[#allocation3 + $0x30] sm:$0xff]
    %v4276 = vld [vmem:[#allocation3 + $0x38] sm:$0xff]
    %4285 = vrot.lane.b32.xlu0 %v4269, 43
    %v4286 = vpop.permute.xlu0 %4285
    %4287 = vrot.lane.b32.xlu0 %v4270, 43
    %v4288 = vpop.permute.xlu0 %4287
    %4289 = vrot.lane.b32.xlu0 %v4271, 43
    %v4290 = vpop.permute.xlu0 %4289
    %4291 = vrot.lane.b32.xlu0 %v4272, 43
    %v4292 = vpop.permute.xlu0 %4291
    %4293 = vrot.lane.b32.xlu0 %v4273, 43
    %v4294 = vpop.permute.xlu0 %4293
    %4295 = vrot.lane.b32.xlu0 %v4274, 43
    %v4296 = vpop.permute.xlu0 %4295
    %4297 = vrot.lane.b32.xlu0 %v4275, 43
    %v4298 = vpop.permute.xlu0 %4297
    %4299 = vrot.lane.b32.xlu0 %v4276, 43
    %v4300 = vpop.permute.xlu0 %4299
    %v4301 = vsel %vm698, %v4286, %v4288
    %v4302 = vsel %vm698, %v4288, %v4290
    %v4303 = vsel %vm698, %v4290, %v4292
    %v4304 = vsel %vm698, %v4292, %v4294
    %v4305 = vsel %vm698, %v4294, %v4296
    %v4306 = vsel %vm698, %v4296, %v4298
    %v4307 = vsel %vm698, %v4298, %v4300
    %4315 = vst [vmem:[#allocation2 + $0x268] sm:$0xff] %v4301
    %4316 = vst [vmem:[#allocation2 + $0x270] sm:$0xff] %v4302
    %4317 = vst [vmem:[#allocation2 + $0x278] sm:$0xff] %v4303
    %4318 = vst [vmem:[#allocation2 + $0x280] sm:$0xff] %v4304
    %4319 = vst [vmem:[#allocation2 + $0x288] sm:$0xff] %v4305
    %4320 = vst [vmem:[#allocation2 + $0x290] sm:$0xff] %v4306
    %4321 = vst [vmem:[#allocation2 + $0x298] sm:$0xff] %v4307
    %v4322 = vld [vmem:[#allocation3] sm:$0xff]
    %v4323 = vld [vmem:[#allocation3 + $0x8] sm:$0xff]
    %v4324 = vld [vmem:[#allocation3 + $0x10] sm:$0xff]
    %v4325 = vld [vmem:[#allocation3 + $0x18] sm:$0xff]
    %v4326 = vld [vmem:[#allocation3 + $0x20] sm:$0xff]
    %v4327 = vld [vmem:[#allocation3 + $0x28] sm:$0xff]
    %v4328 = vld [vmem:[#allocation3 + $0x30] sm:$0xff]
    %v4329 = vld [vmem:[#allocation3 + $0x38] sm:$0xff]
    %4338 = vrot.lane.b32.xlu0 %v4322, 42
    %v4339 = vpop.permute.xlu0 %4338
    %4340 = vrot.lane.b32.xlu0 %v4323, 42
    %v4341 = vpop.permute.xlu0 %4340
    %4342 = vrot.lane.b32.xlu0 %v4324, 42
    %v4343 = vpop.permute.xlu0 %4342
    %4344 = vrot.lane.b32.xlu0 %v4325, 42
    %v4345 = vpop.permute.xlu0 %4344
    %4346 = vrot.lane.b32.xlu0 %v4326, 42
    %v4347 = vpop.permute.xlu0 %4346
    %4348 = vrot.lane.b32.xlu0 %v4327, 42
    %v4349 = vpop.permute.xlu0 %4348
    %4350 = vrot.lane.b32.xlu0 %v4328, 42
    %v4351 = vpop.permute.xlu0 %4350
    %4352 = vrot.lane.b32.xlu0 %v4329, 42
    %v4353 = vpop.permute.xlu0 %4352
    %v4354 = vsel %vm752, %v4339, %v4341
    %v4355 = vsel %vm752, %v4341, %v4343
    %v4356 = vsel %vm752, %v4343, %v4345
    %v4357 = vsel %vm752, %v4345, %v4347
    %v4358 = vsel %vm752, %v4347, %v4349
    %v4359 = vsel %vm752, %v4349, %v4351
    %v4360 = vsel %vm752, %v4351, %v4353
    %4368 = vst [vmem:[#allocation2 + $0x2a0] sm:$0xff] %v4354
    %4369 = vst [vmem:[#allocation2 + $0x2a8] sm:$0xff] %v4355
    %4370 = vst [vmem:[#allocation2 + $0x2b0] sm:$0xff] %v4356
    %4371 = vst [vmem:[#allocation2 + $0x2b8] sm:$0xff] %v4357
    %4372 = vst [vmem:[#allocation2 + $0x2c0] sm:$0xff] %v4358
    %4373 = vst [vmem:[#allocation2 + $0x2c8] sm:$0xff] %v4359
    %4374 = vst [vmem:[#allocation2 + $0x2d0] sm:$0xff] %v4360
    %v4375 = vld [vmem:[#allocation3] sm:$0xff]
    %v4376 = vld [vmem:[#allocation3 + $0x8] sm:$0xff]
    %v4377 = vld [vmem:[#allocation3 + $0x10] sm:$0xff]
    %v4378 = vld [vmem:[#allocation3 + $0x18] sm:$0xff]
    %v4379 = vld [vmem:[#allocation3 + $0x20] sm:$0xff]
    %v4380 = vld [vmem:[#allocation3 + $0x28] sm:$0xff]
    %v4381 = vld [vmem:[#allocation3 + $0x30] sm:$0xff]
    %v4382 = vld [vmem:[#allocation3 + $0x38] sm:$0xff]
    %4391 = vrot.lane.b32.xlu0 %v4375, 41
    %v4392 = vpop.permute.xlu0 %4391
    %4393 = vrot.lane.b32.xlu0 %v4376, 41
    %v4394 = vpop.permute.xlu0 %4393
    %4395 = vrot.lane.b32.xlu0 %v4377, 41
    %v4396 = vpop.permute.xlu0 %4395
    %4397 = vrot.lane.b32.xlu0 %v4378, 41
    %v4398 = vpop.permute.xlu0 %4397
    %4399 = vrot.lane.b32.xlu0 %v4379, 41
    %v4400 = vpop.permute.xlu0 %4399
    %4401 = vrot.lane.b32.xlu0 %v4380, 41
    %v4402 = vpop.permute.xlu0 %4401
    %4403 = vrot.lane.b32.xlu0 %v4381, 41
    %v4404 = vpop.permute.xlu0 %4403
    %4405 = vrot.lane.b32.xlu0 %v4382, 41
    %v4406 = vpop.permute.xlu0 %4405
    %v4407 = vsel %vm806, %v4392, %v4394
    %v4408 = vsel %vm806, %v4394, %v4396
    %v4409 = vsel %vm806, %v4396, %v4398
    %v4410 = vsel %vm806, %v4398, %v4400
    %v4411 = vsel %vm806, %v4400, %v4402
    %v4412 = vsel %vm806, %v4402, %v4404
    %v4413 = vsel %vm806, %v4404, %v4406
    %4421 = vst [vmem:[#allocation2 + $0x2d8] sm:$0xff] %v4407
    %4422 = vst [vmem:[#allocation2 + $0x2e0] sm:$0xff] %v4408
    %4423 = vst [vmem:[#allocation2 + $0x2e8] sm:$0xff] %v4409
    %4424 = vst [vmem:[#allocation2 + $0x2f0] sm:$0xff] %v4410
    %4425 = vst [vmem:[#allocation2 + $0x2f8] sm:$0xff] %v4411
    %4426 = vst [vmem:[#allocation2 + $0x300] sm:$0xff] %v4412
    %4427 = vst [vmem:[#allocation2 + $0x308] sm:$0xff] %v4413
    %v4428 = vld [vmem:[#allocation3] sm:$0xff]
    %v4429 = vld [vmem:[#allocation3 + $0x8] sm:$0xff]
    %v4430 = vld [vmem:[#allocation3 + $0x10] sm:$0xff]
    %v4431 = vld [vmem:[#allocation3 + $0x18] sm:$0xff]
    %v4432 = vld [vmem:[#allocation3 + $0x20] sm:$0xff]
    %v4433 = vld [vmem:[#allocation3 + $0x28] sm:$0xff]
    %v4434 = vld [vmem:[#allocation3 + $0x30] sm:$0xff]
    %v4435 = vld [vmem:[#allocation3 + $0x38] sm:$0xff]
    %4444 = vrot.lane.b32.xlu0 %v4428, 25
    %v4445 = vpop.permute.xlu0 %4444
    %4446 = vrot.lane.b32.xlu0 %v4429, 25
    %v4447 = vpop.permute.xlu0 %4446
    %4448 = vrot.lane.b32.xlu0 %v4430, 25
    %v4449 = vpop.permute.xlu0 %4448
    %4450 = vrot.lane.b32.xlu0 %v4431, 25
    %v4451 = vpop.permute.xlu0 %4450
    %4452 = vrot.lane.b32.xlu0 %v4432, 25
    %v4453 = vpop.permute.xlu0 %4452
    %4454 = vrot.lane.b32.xlu0 %v4433, 25
    %v4455 = vpop.permute.xlu0 %4454
    %4456 = vrot.lane.b32.xlu0 %v4434, 25
    %v4457 = vpop.permute.xlu0 %4456
    %4458 = vrot.lane.b32.xlu0 %v4435, 25
    %v4459 = vpop.permute.xlu0 %4458
    %v4460 = vsel %vm860, %v4445, %v4447
    %v4461 = vsel %vm860, %v4447, %v4449
    %v4462 = vsel %vm860, %v4449, %v4451
    %v4463 = vsel %vm860, %v4451, %v4453
    %v4464 = vsel %vm860, %v4453, %v4455
    %v4465 = vsel %vm860, %v4455, %v4457
    %v4466 = vsel %vm860, %v4457, %v4459
    %4474 = vst [vmem:[#allocation2 + $0x310] sm:$0xff] %v4460
    %4475 = vst [vmem:[#allocation2 + $0x318] sm:$0xff] %v4461
    %4476 = vst [vmem:[#allocation2 + $0x320] sm:$0xff] %v4462
    %4477 = vst [vmem:[#allocation2 + $0x328] sm:$0xff] %v4463
    %4478 = vst [vmem:[#allocation2 + $0x330] sm:$0xff] %v4464
    %4479 = vst [vmem:[#allocation2 + $0x338] sm:$0xff] %v4465
    %4480 = vst [vmem:[#allocation2 + $0x340] sm:$0xff] %v4466
    %v4481 = vld [vmem:[#allocation3] sm:$0xff]
    %v4482 = vld [vmem:[#allocation3 + $0x8] sm:$0xff]
    %v4483 = vld [vmem:[#allocation3 + $0x10] sm:$0xff]
    %v4484 = vld [vmem:[#allocation3 + $0x18] sm:$0xff]
    %v4485 = vld [vmem:[#allocation3 + $0x20] sm:$0xff]
    %v4486 = vld [vmem:[#allocation3 + $0x28] sm:$0xff]
    %v4487 = vld [vmem:[#allocation3 + $0x30] sm:$0xff]
    %v4488 = vld [vmem:[#allocation3 + $0x38] sm:$0xff]
    %4497 = vrot.lane.b32.xlu0 %v4481, 24
    %v4498 = vpop.permute.xlu0 %4497
    %4499 = vrot.lane.b32.xlu0 %v4482, 24
    %v4500 = vpop.permute.xlu0 %4499
    %4501 = vrot.lane.b32.xlu0 %v4483, 24
    %v4502 = vpop.permute.xlu0 %4501
    %4503 = vrot.lane.b32.xlu0 %v4484, 24
    %v4504 = vpop.permute.xlu0 %4503
    %4505 = vrot.lane.b32.xlu0 %v4485, 24
    %v4506 = vpop.permute.xlu0 %4505
    %4507 = vrot.lane.b32.xlu0 %v4486, 24
    %v4508 = vpop.permute.xlu0 %4507
    %4509 = vrot.lane.b32.xlu0 %v4487, 24
    %v4510 = vpop.permute.xlu0 %4509
    %4511 = vrot.lane.b32.xlu0 %v4488, 24
    %v4512 = vpop.permute.xlu0 %4511
    %v4513 = vsel %vm914, %v4498, %v4500
    %v4514 = vsel %vm914, %v4500, %v4502
    %v4515 = vsel %vm914, %v4502, %v4504
    %v4516 = vsel %vm914, %v4504, %v4506
    %v4517 = vsel %vm914, %v4506, %v4508
    %v4518 = vsel %vm914, %v4508, %v4510
    %v4519 = vsel %vm914, %v4510, %v4512
    %4527 = vst [vmem:[#allocation2 + $0x348] sm:$0xff] %v4513
    %4528 = vst [vmem:[#allocation2 + $0x350] sm:$0xff] %v4514
    %4529 = vst [vmem:[#allocation2 + $0x358] sm:$0xff] %v4515
    %4530 = vst [vmem:[#allocation2 + $0x360] sm:$0xff] %v4516
    %4531 = vst [vmem:[#allocation2 + $0x368] sm:$0xff] %v4517
    %4532 = vst [vmem:[#allocation2 + $0x370] sm:$0xff] %v4518
    %4533 = vst [vmem:[#allocation2 + $0x378] sm:$0xff] %v4519
    %v4534 = vld [vmem:[#allocation3] sm:$0xff]
    %v4535 = vld [vmem:[#allocation3 + $0x8] sm:$0xff]
    %v4536 = vld [vmem:[#allocation3 + $0x10] sm:$0xff]
    %v4537 = vld [vmem:[#allocation3 + $0x18] sm:$0xff]
    %v4538 = vld [vmem:[#allocation3 + $0x20] sm:$0xff]
    %v4539 = vld [vmem:[#allocation3 + $0x28] sm:$0xff]
    %v4540 = vld [vmem:[#allocation3 + $0x30] sm:$0xff]
    %v4541 = vld [vmem:[#allocation3 + $0x38] sm:$0xff]
    %4550 = vrot.lane.b32.xlu0 %v4534, 23
    %v4551 = vpop.permute.xlu0 %4550
    %4552 = vrot.lane.b32.xlu0 %v4535, 23
    %v4553 = vpop.permute.xlu0 %4552
    %4554 = vrot.lane.b32.xlu0 %v4536, 23
    %v4555 = vpop.permute.xlu0 %4554
    %4556 = vrot.lane.b32.xlu0 %v4537, 23
    %v4557 = vpop.permute.xlu0 %4556
    %4558 = vrot.lane.b32.xlu0 %v4538, 23
    %v4559 = vpop.permute.xlu0 %4558
    %4560 = vrot.lane.b32.xlu0 %v4539, 23
    %v4561 = vpop.permute.xlu0 %4560
    %4562 = vrot.lane.b32.xlu0 %v4540, 23
    %v4563 = vpop.permute.xlu0 %4562
    %4564 = vrot.lane.b32.xlu0 %v4541, 23
    %v4565 = vpop.permute.xlu0 %4564
    %v4566 = vsel %vm968, %v4551, %v4553
    %v4567 = vsel %vm968, %v4553, %v4555
    %v4568 = vsel %vm968, %v4555, %v4557
    %v4569 = vsel %vm968, %v4557, %v4559
    %v4570 = vsel %vm968, %v4559, %v4561
    %v4571 = vsel %vm968, %v4561, %v4563
    %v4572 = vsel %vm968, %v4563, %v4565
    %4580 = vst [vmem:[#allocation2 + $0x380] sm:$0xff] %v4566
    %4581 = vst [vmem:[#allocation2 + $0x388] sm:$0xff] %v4567
    %4582 = vst [vmem:[#allocation2 + $0x390] sm:$0xff] %v4568
    %4583 = vst [vmem:[#allocation2 + $0x398] sm:$0xff] %v4569
    %4584 = vst [vmem:[#allocation2 + $0x3a0] sm:$0xff] %v4570
    %4585 = vst [vmem:[#allocation2 + $0x3a8] sm:$0xff] %v4571
    %4586 = vst [vmem:[#allocation2 + $0x3b0] sm:$0xff] %v4572
    %v4587 = vld [vmem:[#allocation3] sm:$0xff]
    %v4588 = vld [vmem:[#allocation3 + $0x8] sm:$0xff]
    %v4589 = vld [vmem:[#allocation3 + $0x10] sm:$0xff]
    %v4590 = vld [vmem:[#allocation3 + $0x18] sm:$0xff]
    %v4591 = vld [vmem:[#allocation3 + $0x20] sm:$0xff]
    %v4592 = vld [vmem:[#allocation3 + $0x28] sm:$0xff]
    %v4593 = vld [vmem:[#allocation3 + $0x30] sm:$0xff]
    %v4594 = vld [vmem:[#allocation3 + $0x38] sm:$0xff]
    %4603 = vrot.lane.b32.xlu0 %v4587, 22
    %v4604 = vpop.permute.xlu0 %4603
    %4605 = vrot.lane.b32.xlu0 %v4588, 22
    %v4606 = vpop.permute.xlu0 %4605
    %4607 = vrot.lane.b32.xlu0 %v4589, 22
    %v4608 = vpop.permute.xlu0 %4607
    %4609 = vrot.lane.b32.xlu0 %v4590, 22
    %v4610 = vpop.permute.xlu0 %4609
    %4611 = vrot.lane.b32.xlu0 %v4591, 22
    %v4612 = vpop.permute.xlu0 %4611
    %4613 = vrot.lane.b32.xlu0 %v4592, 22
    %v4614 = vpop.permute.xlu0 %4613
    %4615 = vrot.lane.b32.xlu0 %v4593, 22
    %v4616 = vpop.permute.xlu0 %4615
    %4617 = vrot.lane.b32.xlu0 %v4594, 22
    %v4618 = vpop.permute.xlu0 %4617
    %v4619 = vsel %vm1022, %v4604, %v4606
    %v4620 = vsel %vm1022, %v4606, %v4608
    %v4621 = vsel %vm1022, %v4608, %v4610
    %v4622 = vsel %vm1022, %v4610, %v4612
    %v4623 = vsel %vm1022, %v4612, %v4614
    %v4624 = vsel %vm1022, %v4614, %v4616
    %v4625 = vsel %vm1022, %v4616, %v4618
    %4633 = vst [vmem:[#allocation2 + $0x3b8] sm:$0xff] %v4619
    %4634 = vst [vmem:[#allocation2 + $0x3c0] sm:$0xff] %v4620
    %4635 = vst [vmem:[#allocation2 + $0x3c8] sm:$0xff] %v4621
    %4636 = vst [vmem:[#allocation2 + $0x3d0] sm:$0xff] %v4622
    %4637 = vst [vmem:[#allocation2 + $0x3d8] sm:$0xff] %v4623
    %4638 = vst [vmem:[#allocation2 + $0x3e0] sm:$0xff] %v4624
    %4639 = vst [vmem:[#allocation2 + $0x3e8] sm:$0xff] %v4625
    %v4640 = vld [vmem:[#allocation3] sm:$0xff]
    %v4641 = vld [vmem:[#allocation3 + $0x8] sm:$0xff]
    %v4642 = vld [vmem:[#allocation3 + $0x10] sm:$0xff]
    %v4643 = vld [vmem:[#allocation3 + $0x18] sm:$0xff]
    %v4644 = vld [vmem:[#allocation3 + $0x20] sm:$0xff]
    %v4645 = vld [vmem:[#allocation3 + $0x28] sm:$0xff]
    %v4646 = vld [vmem:[#allocation3 + $0x30] sm:$0xff]
    %v4647 = vld [vmem:[#allocation3 + $0x38] sm:$0xff]
    %4656 = vrot.lane.b32.xlu0 %v4640, 21
    %v4657 = vpop.permute.xlu0 %4656
    %4658 = vrot.lane.b32.xlu0 %v4641, 21
    %v4659 = vpop.permute.xlu0 %4658
    %4660 = vrot.lane.b32.xlu0 %v4642, 21
    %v4661 = vpop.permute.xlu0 %4660
    %4662 = vrot.lane.b32.xlu0 %v4643, 21
    %v4663 = vpop.permute.xlu0 %4662
    %4664 = vrot.lane.b32.xlu0 %v4644, 21
    %v4665 = vpop.permute.xlu0 %4664
    %4666 = vrot.lane.b32.xlu0 %v4645, 21
    %v4667 = vpop.permute.xlu0 %4666
    %4668 = vrot.lane.b32.xlu0 %v4646, 21
    %v4669 = vpop.permute.xlu0 %4668
    %4670 = vrot.lane.b32.xlu0 %v4647, 21
    %v4671 = vpop.permute.xlu0 %4670
    %v4672 = vsel %vm1076, %v4657, %v4659
    %v4673 = vsel %vm1076, %v4659, %v4661
    %v4674 = vsel %vm1076, %v4661, %v4663
    %v4675 = vsel %vm1076, %v4663, %v4665
    %v4676 = vsel %vm1076, %v4665, %v4667
    %v4677 = vsel %vm1076, %v4667, %v4669
    %v4678 = vsel %vm1076, %v4669, %v4671
    %4686 = vst [vmem:[#allocation2 + $0x3f0] sm:$0xff] %v4672
    %4687 = vst [vmem:[#allocation2 + $0x3f8] sm:$0xff] %v4673
    %4688 = vst [vmem:[#allocation2 + $0x400] sm:$0xff] %v4674
    %4689 = vst [vmem:[#allocation2 + $0x408] sm:$0xff] %v4675
    %4690 = vst [vmem:[#allocation2 + $0x410] sm:$0xff] %v4676
    %4691 = vst [vmem:[#allocation2 + $0x418] sm:$0xff] %v4677
    %4692 = vst [vmem:[#allocation2 + $0x420] sm:$0xff] %v4678
    %v4693 = vld [vmem:[#allocation3] sm:$0xff]
    %v4694 = vld [vmem:[#allocation3 + $0x8] sm:$0xff]
    %v4695 = vld [vmem:[#allocation3 + $0x10] sm:$0xff]
    %v4696 = vld [vmem:[#allocation3 + $0x18] sm:$0xff]
    %v4697 = vld [vmem:[#allocation3 + $0x20] sm:$0xff]
    %v4698 = vld [vmem:[#allocation3 + $0x28] sm:$0xff]
    %v4699 = vld [vmem:[#allocation3 + $0x30] sm:$0xff]
    %v4700 = vld [vmem:[#allocation3 + $0x38] sm:$0xff]
    %4709 = vrot.lane.b32.xlu0 %v4693, 20
    %v4710 = vpop.permute.xlu0 %4709
    %4711 = vrot.lane.b32.xlu0 %v4694, 20
    %v4712 = vpop.permute.xlu0 %4711
    %4713 = vrot.lane.b32.xlu0 %v4695, 20
    %v4714 = vpop.permute.xlu0 %4713
    %4715 = vrot.lane.b32.xlu0 %v4696, 20
    %v4716 = vpop.permute.xlu0 %4715
    %4717 = vrot.lane.b32.xlu0 %v4697, 20
    %v4718 = vpop.permute.xlu0 %4717
    %4719 = vrot.lane.b32.xlu0 %v4698, 20
    %v4720 = vpop.permute.xlu0 %4719
    %4721 = vrot.lane.b32.xlu0 %v4699, 20
    %v4722 = vpop.permute.xlu0 %4721
    %4723 = vrot.lane.b32.xlu0 %v4700, 20
    %v4724 = vpop.permute.xlu0 %4723
    %v4725 = vsel %vm1130, %v4710, %v4712
    %v4726 = vsel %vm1130, %v4712, %v4714
    %v4727 = vsel %vm1130, %v4714, %v4716
    %v4728 = vsel %vm1130, %v4716, %v4718
    %v4729 = vsel %vm1130, %v4718, %v4720
    %v4730 = vsel %vm1130, %v4720, %v4722
    %v4731 = vsel %vm1130, %v4722, %v4724
    %4739 = vst [vmem:[#allocation2 + $0x428] sm:$0xff] %v4725
    %4740 = vst [vmem:[#allocation2 + $0x430] sm:$0xff] %v4726
    %4741 = vst [vmem:[#allocation2 + $0x438] sm:$0xff] %v4727
    %4742 = vst [vmem:[#allocation2 + $0x440] sm:$0xff] %v4728
    %4743 = vst [vmem:[#allocation2 + $0x448] sm:$0xff] %v4729
    %4744 = vst [vmem:[#allocation2 + $0x450] sm:$0xff] %v4730
    %4745 = vst [vmem:[#allocation2 + $0x458] sm:$0xff] %v4731
    %v4746 = vld [vmem:[#allocation3] sm:$0xff]
    %v4747 = vld [vmem:[#allocation3 + $0x8] sm:$0xff]
    %v4748 = vld [vmem:[#allocation3 + $0x10] sm:$0xff]
    %v4749 = vld [vmem:[#allocation3 + $0x18] sm:$0xff]
    %v4750 = vld [vmem:[#allocation3 + $0x20] sm:$0xff]
    %v4751 = vld [vmem:[#allocation3 + $0x28] sm:$0xff]
    %v4752 = vld [vmem:[#allocation3 + $0x30] sm:$0xff]
    %v4753 = vld [vmem:[#allocation3 + $0x38] sm:$0xff]
    %4762 = vrot.lane.b32.xlu0 %v4746, 19
    %v4763 = vpop.permute.xlu0 %4762
    %4764 = vrot.lane.b32.xlu0 %v4747, 19
    %v4765 = vpop.permute.xlu0 %4764
    %4766 = vrot.lane.b32.xlu0 %v4748, 19
    %v4767 = vpop.permute.xlu0 %4766
    %4768 = vrot.lane.b32.xlu0 %v4749, 19
    %v4769 = vpop.permute.xlu0 %4768
    %4770 = vrot.lane.b32.xlu0 %v4750, 19
    %v4771 = vpop.permute.xlu0 %4770
    %4772 = vrot.lane.b32.xlu0 %v4751, 19
    %v4773 = vpop.permute.xlu0 %4772
    %4774 = vrot.lane.b32.xlu0 %v4752, 19
    %v4775 = vpop.permute.xlu0 %4774
    %4776 = vrot.lane.b32.xlu0 %v4753, 19
    %v4777 = vpop.permute.xlu0 %4776
    %v4778 = vsel %vm1184, %v4763, %v4765
    %v4779 = vsel %vm1184, %v4765, %v4767
    %v4780 = vsel %vm1184, %v4767, %v4769
    %v4781 = vsel %vm1184, %v4769, %v4771
    %v4782 = vsel %vm1184, %v4771, %v4773
    %v4783 = vsel %vm1184, %v4773, %v4775
    %v4784 = vsel %vm1184, %v4775, %v4777
    %4792 = vst [vmem:[#allocation2 + $0x460] sm:$0xff] %v4778
    %4793 = vst [vmem:[#allocation2 + $0x468] sm:$0xff] %v4779
    %4794 = vst [vmem:[#allocation2 + $0x470] sm:$0xff] %v4780
    %4795 = vst [vmem:[#allocation2 + $0x478] sm:$0xff] %v4781
    %4796 = vst [vmem:[#allocation2 + $0x480] sm:$0xff] %v4782
    %4797 = vst [vmem:[#allocation2 + $0x488] sm:$0xff] %v4783
    %4798 = vst [vmem:[#allocation2 + $0x490] sm:$0xff] %v4784
    %v4799 = vld [vmem:[#allocation3] sm:$0xff]
    %v4800 = vld [vmem:[#allocation3 + $0x8] sm:$0xff]
    %v4801 = vld [vmem:[#allocation3 + $0x10] sm:$0xff]
    %v4802 = vld [vmem:[#allocation3 + $0x18] sm:$0xff]
    %v4803 = vld [vmem:[#allocation3 + $0x20] sm:$0xff]
    %v4804 = vld [vmem:[#allocation3 + $0x28] sm:$0xff]
    %v4805 = vld [vmem:[#allocation3 + $0x30] sm:$0xff]
    %v4806 = vld [vmem:[#allocation3 + $0x38] sm:$0xff]
    %4815 = vrot.lane.b32.xlu0 %v4799, 3
    %v4816 = vpop.permute.xlu0 %4815
    %4817 = vrot.lane.b32.xlu0 %v4800, 3
    %v4818 = vpop.permute.xlu0 %4817
    %4819 = vrot.lane.b32.xlu0 %v4801, 3
    %v4820 = vpop.permute.xlu0 %4819
    %4821 = vrot.lane.b32.xlu0 %v4802, 3
    %v4822 = vpop.permute.xlu0 %4821
    %4823 = vrot.lane.b32.xlu0 %v4803, 3
    %v4824 = vpop.permute.xlu0 %4823
    %4825 = vrot.lane.b32.xlu0 %v4804, 3
    %v4826 = vpop.permute.xlu0 %4825
    %4827 = vrot.lane.b32.xlu0 %v4805, 3
    %v4828 = vpop.permute.xlu0 %4827
    %4829 = vrot.lane.b32.xlu0 %v4806, 3
    %v4830 = vpop.permute.xlu0 %4829
    %v4831 = vsel %vm1238, %v4816, %v4818
    %v4832 = vsel %vm1238, %v4818, %v4820
    %v4833 = vsel %vm1238, %v4820, %v4822
    %v4834 = vsel %vm1238, %v4822, %v4824
    %v4835 = vsel %vm1238, %v4824, %v4826
    %v4836 = vsel %vm1238, %v4826, %v4828
    %v4837 = vsel %vm1238, %v4828, %v4830
    %4845 = vst [vmem:[#allocation2 + $0x498] sm:$0xff] %v4831
    %4846 = vst [vmem:[#allocation2 + $0x4a0] sm:$0xff] %v4832
    %4847 = vst [vmem:[#allocation2 + $0x4a8] sm:$0xff] %v4833
    %4848 = vst [vmem:[#allocation2 + $0x4b0] sm:$0xff] %v4834
    %4849 = vst [vmem:[#allocation2 + $0x4b8] sm:$0xff] %v4835
    %4850 = vst [vmem:[#allocation2 + $0x4c0] sm:$0xff] %v4836
    %4851 = vst [vmem:[#allocation2 + $0x4c8] sm:$0xff] %v4837
    %v4852 = vld [vmem:[#allocation3] sm:$0xff]
    %v4853 = vld [vmem:[#allocation3 + $0x8] sm:$0xff]
    %v4854 = vld [vmem:[#allocation3 + $0x10] sm:$0xff]
    %v4855 = vld [vmem:[#allocation3 + $0x18] sm:$0xff]
    %v4856 = vld [vmem:[#allocation3 + $0x20] sm:$0xff]
    %v4857 = vld [vmem:[#allocation3 + $0x28] sm:$0xff]
    %v4858 = vld [vmem:[#allocation3 + $0x30] sm:$0xff]
    %v4859 = vld [vmem:[#allocation3 + $0x38] sm:$0xff]
    %4868 = vrot.lane.b32.xlu0 %v4852, 2
    %v4869 = vpop.permute.xlu0 %4868
    %4870 = vrot.lane.b32.xlu0 %v4853, 2
    %v4871 = vpop.permute.xlu0 %4870
    %4872 = vrot.lane.b32.xlu0 %v4854, 2
    %v4873 = vpop.permute.xlu0 %4872
    %4874 = vrot.lane.b32.xlu0 %v4855, 2
    %v4875 = vpop.permute.xlu0 %4874
    %4876 = vrot.lane.b32.xlu0 %v4856, 2
    %v4877 = vpop.permute.xlu0 %4876
    %4878 = vrot.lane.b32.xlu0 %v4857, 2
    %v4879 = vpop.permute.xlu0 %4878
    %4880 = vrot.lane.b32.xlu0 %v4858, 2
    %v4881 = vpop.permute.xlu0 %4880
    %4882 = vrot.lane.b32.xlu0 %v4859, 2
    %v4883 = vpop.permute.xlu0 %4882
    %v4884 = vsel %vm1292, %v4869, %v4871
    %v4885 = vsel %vm1292, %v4871, %v4873
    %v4886 = vsel %vm1292, %v4873, %v4875
    %v4887 = vsel %vm1292, %v4875, %v4877
    %v4888 = vsel %vm1292, %v4877, %v4879
    %v4889 = vsel %vm1292, %v4879, %v4881
    %v4890 = vsel %vm1292, %v4881, %v4883
    %4898 = vst [vmem:[#allocation2 + $0x4d0] sm:$0xff] %v4884
    %4899 = vst [vmem:[#allocation2 + $0x4d8] sm:$0xff] %v4885
    %4900 = vst [vmem:[#allocation2 + $0x4e0] sm:$0xff] %v4886
    %4901 = vst [vmem:[#allocation2 + $0x4e8] sm:$0xff] %v4887
    %4902 = vst [vmem:[#allocation2 + $0x4f0] sm:$0xff] %v4888
    %4903 = vst [vmem:[#allocation2 + $0x4f8] sm:$0xff] %v4889
    %4904 = vst [vmem:[#allocation2 + $0x500] sm:$0xff] %v4890
    %v4905 = vld [vmem:[#allocation3] sm:$0xff]
    %v4906 = vld [vmem:[#allocation3 + $0x8] sm:$0xff]
    %v4907 = vld [vmem:[#allocation3 + $0x10] sm:$0xff]
    %v4908 = vld [vmem:[#allocation3 + $0x18] sm:$0xff]
    %v4909 = vld [vmem:[#allocation3 + $0x20] sm:$0xff]
    %v4910 = vld [vmem:[#allocation3 + $0x28] sm:$0xff]
    %v4911 = vld [vmem:[#allocation3 + $0x30] sm:$0xff]
    %v4912 = vld [vmem:[#allocation3 + $0x38] sm:$0xff]
    %4921 = vrot.lane.b32.xlu0 %v4905, 1
    %v4922 = vpop.permute.xlu0 %4921
    %4923 = vrot.lane.b32.xlu0 %v4906, 1
    %v4924 = vpop.permute.xlu0 %4923
    %4925 = vrot.lane.b32.xlu0 %v4907, 1
    %v4926 = vpop.permute.xlu0 %4925
    %4927 = vrot.lane.b32.xlu0 %v4908, 1
    %v4928 = vpop.permute.xlu0 %4927
    %4929 = vrot.lane.b32.xlu0 %v4909, 1
    %v4930 = vpop.permute.xlu0 %4929
    %4931 = vrot.lane.b32.xlu0 %v4910, 1
    %v4932 = vpop.permute.xlu0 %4931
    %4933 = vrot.lane.b32.xlu0 %v4911, 1
    %v4934 = vpop.permute.xlu0 %4933
    %4935 = vrot.lane.b32.xlu0 %v4912, 1
    %v4936 = vpop.permute.xlu0 %4935
    %v4937 = vsel %vm1346, %v4922, %v4924
    %v4938 = vsel %vm1346, %v4924, %v4926
    %v4939 = vsel %vm1346, %v4926, %v4928
    %v4940 = vsel %vm1346, %v4928, %v4930
    %v4941 = vsel %vm1346, %v4930, %v4932
    %v4942 = vsel %vm1346, %v4932, %v4934
    %v4943 = vsel %vm1346, %v4934, %v4936
    %4951 = vst [vmem:[#allocation2 + $0x508] sm:$0xff] %v4937
    %4952 = vst [vmem:[#allocation2 + $0x510] sm:$0xff] %v4938
    %4953 = vst [vmem:[#allocation2 + $0x518] sm:$0xff] %v4939
    %4954 = vst [vmem:[#allocation2 + $0x520] sm:$0xff] %v4940
    %4955 = vst [vmem:[#allocation2 + $0x528] sm:$0xff] %v4941
    %4956 = vst [vmem:[#allocation2 + $0x530] sm:$0xff] %v4942
    %4957 = vst [vmem:[#allocation2 + $0x538] sm:$0xff] %v4943
    %v4958 = vld [vmem:[#allocation3 + $0x8] sm:$0xff]
    %v4959 = vld [vmem:[#allocation3 + $0x10] sm:$0xff]
    %v4960 = vld [vmem:[#allocation3 + $0x18] sm:$0xff]
    %v4961 = vld [vmem:[#allocation3 + $0x20] sm:$0xff]
    %v4962 = vld [vmem:[#allocation3 + $0x28] sm:$0xff]
    %v4963 = vld [vmem:[#allocation3 + $0x30] sm:$0xff]
    %v4964 = vld [vmem:[#allocation3 + $0x38] sm:$0xff]
    %4965 = vst [vmem:[#allocation2 + $0x540] sm:$0xff] %v4958
    %4966 = vst [vmem:[#allocation2 + $0x548] sm:$0xff] %v4959
    %4967 = vst [vmem:[#allocation2 + $0x550] sm:$0xff] %v4960
    %4968 = vst [vmem:[#allocation2 + $0x558] sm:$0xff] %v4961
    %4969 = vst [vmem:[#allocation2 + $0x560] sm:$0xff] %v4962
    %4970 = vst [vmem:[#allocation2 + $0x568] sm:$0xff] %v4963
    %4971 = vst [vmem:[#allocation2 + $0x570] sm:$0xff] %v4964
    %v4972 = vld [vmem:[#allocation3 + $0x8] sm:$0xff]
    %v4973 = vld [vmem:[#allocation3 + $0x10] sm:$0xff]
    %v4974 = vld [vmem:[#allocation3 + $0x18] sm:$0xff]
    %v4975 = vld [vmem:[#allocation3 + $0x20] sm:$0xff]
    %v4976 = vld [vmem:[#allocation3 + $0x28] sm:$0xff]
    %v4977 = vld [vmem:[#allocation3 + $0x30] sm:$0xff]
    %v4978 = vld [vmem:[#allocation3 + $0x38] sm:$0xff]
    %v4979 = vld [vmem:[#allocation3 + $0x40] sm:$0xff]
    %4988 = vrot.lane.b32.xlu0 %v4972, 127
    %v4989 = vpop.permute.xlu0 %4988
    %4990 = vrot.lane.b32.xlu0 %v4973, 127
    %v4991 = vpop.permute.xlu0 %4990
    %4992 = vrot.lane.b32.xlu0 %v4974, 127
    %v4993 = vpop.permute.xlu0 %4992
    %4994 = vrot.lane.b32.xlu0 %v4975, 127
    %v4995 = vpop.permute.xlu0 %4994
    %4996 = vrot.lane.b32.xlu0 %v4976, 127
    %v4997 = vpop.permute.xlu0 %4996
    %4998 = vrot.lane.b32.xlu0 %v4977, 127
    %v4999 = vpop.permute.xlu0 %4998
    %5000 = vrot.lane.b32.xlu0 %v4978, 127
    %v5001 = vpop.permute.xlu0 %5000
    %5002 = vrot.lane.b32.xlu0 %v4979, 127
    %v5003 = vpop.permute.xlu0 %5002
    %v5004 = vsel %vm1414, %v4989, %v4991
    %v5005 = vsel %vm1414, %v4991, %v4993
    %v5006 = vsel %vm1414, %v4993, %v4995
    %v5007 = vsel %vm1414, %v4995, %v4997
    %v5008 = vsel %vm1414, %v4997, %v4999
    %v5009 = vsel %vm1414, %v4999, %v5001
    %v5010 = vsel %vm1414, %v5001, %v5003
    %5018 = vst [vmem:[#allocation2 + $0x578] sm:$0xff] %v5004
    %5019 = vst [vmem:[#allocation2 + $0x580] sm:$0xff] %v5005
    %5020 = vst [vmem:[#allocation2 + $0x588] sm:$0xff] %v5006
    %5021 = vst [vmem:[#allocation2 + $0x590] sm:$0xff] %v5007
    %5022 = vst [vmem:[#allocation2 + $0x598] sm:$0xff] %v5008
    %5023 = vst [vmem:[#allocation2 + $0x5a0] sm:$0xff] %v5009
    %5024 = vst [vmem:[#allocation2 + $0x5a8] sm:$0xff] %v5010
    %v5025 = vld [vmem:[#allocation3 + $0x8] sm:$0xff]
    %v5026 = vld [vmem:[#allocation3 + $0x10] sm:$0xff]
    %v5027 = vld [vmem:[#allocation3 + $0x18] sm:$0xff]
    %v5028 = vld [vmem:[#allocation3 + $0x20] sm:$0xff]
    %v5029 = vld [vmem:[#allocation3 + $0x28] sm:$0xff]
    %v5030 = vld [vmem:[#allocation3 + $0x30] sm:$0xff]
    %v5031 = vld [vmem:[#allocation3 + $0x38] sm:$0xff]
    %v5032 = vld [vmem:[#allocation3 + $0x40] sm:$0xff]
    %5041 = vrot.lane.b32.xlu0 %v5025, 126
    %v5042 = vpop.permute.xlu0 %5041
    %5043 = vrot.lane.b32.xlu0 %v5026, 126
    %v5044 = vpop.permute.xlu0 %5043
    %5045 = vrot.lane.b32.xlu0 %v5027, 126
    %v5046 = vpop.permute.xlu0 %5045
    %5047 = vrot.lane.b32.xlu0 %v5028, 126
    %v5048 = vpop.permute.xlu0 %5047
    %5049 = vrot.lane.b32.xlu0 %v5029, 126
    %v5050 = vpop.permute.xlu0 %5049
    %5051 = vrot.lane.b32.xlu0 %v5030, 126
    %v5052 = vpop.permute.xlu0 %5051
    %5053 = vrot.lane.b32.xlu0 %v5031, 126
    %v5054 = vpop.permute.xlu0 %5053
    %5055 = vrot.lane.b32.xlu0 %v5032, 126
    %v5056 = vpop.permute.xlu0 %5055
    %v5057 = vsel %vm1468, %v5042, %v5044
    %v5058 = vsel %vm1468, %v5044, %v5046
    %v5059 = vsel %vm1468, %v5046, %v5048
    %v5060 = vsel %vm1468, %v5048, %v5050
    %v5061 = vsel %vm1468, %v5050, %v5052
    %v5062 = vsel %vm1468, %v5052, %v5054
    %v5063 = vsel %vm1468, %v5054, %v5056
    %5071 = vst [vmem:[#allocation2 + $0x5b0] sm:$0xff] %v5057
    %5072 = vst [vmem:[#allocation2 + $0x5b8] sm:$0xff] %v5058
    %5073 = vst [vmem:[#allocation2 + $0x5c0] sm:$0xff] %v5059
    %5074 = vst [vmem:[#allocation2 + $0x5c8] sm:$0xff] %v5060
    %5075 = vst [vmem:[#allocation2 + $0x5d0] sm:$0xff] %v5061
    %5076 = vst [vmem:[#allocation2 + $0x5d8] sm:$0xff] %v5062
    %5077 = vst [vmem:[#allocation2 + $0x5e0] sm:$0xff] %v5063
    %v5078 = vld [vmem:[#allocation3 + $0x8] sm:$0xff]
    %v5079 = vld [vmem:[#allocation3 + $0x10] sm:$0xff]
    %v5080 = vld [vmem:[#allocation3 + $0x18] sm:$0xff]
    %v5081 = vld [vmem:[#allocation3 + $0x20] sm:$0xff]
    %v5082 = vld [vmem:[#allocation3 + $0x28] sm:$0xff]
    %v5083 = vld [vmem:[#allocation3 + $0x30] sm:$0xff]
    %v5084 = vld [vmem:[#allocation3 + $0x38] sm:$0xff]
    %v5085 = vld [vmem:[#allocation3 + $0x40] sm:$0xff]
    %5094 = vrot.lane.b32.xlu0 %v5078, 125
    %v5095 = vpop.permute.xlu0 %5094
    %5096 = vrot.lane.b32.xlu0 %v5079, 125
    %v5097 = vpop.permute.xlu0 %5096
    %5098 = vrot.lane.b32.xlu0 %v5080, 125
    %v5099 = vpop.permute.xlu0 %5098
    %5100 = vrot.lane.b32.xlu0 %v5081, 125
    %v5101 = vpop.permute.xlu0 %5100
    %5102 = vrot.lane.b32.xlu0 %v5082, 125
    %v5103 = vpop.permute.xlu0 %5102
    %5104 = vrot.lane.b32.xlu0 %v5083, 125
    %v5105 = vpop.permute.xlu0 %5104
    %5106 = vrot.lane.b32.xlu0 %v5084, 125
    %v5107 = vpop.permute.xlu0 %5106
    %5108 = vrot.lane.b32.xlu0 %v5085, 125
    %v5109 = vpop.permute.xlu0 %5108
    %v5110 = vsel %vm1522, %v5095, %v5097
    %v5111 = vsel %vm1522, %v5097, %v5099
    %v5112 = vsel %vm1522, %v5099, %v5101
    %v5113 = vsel %vm1522, %v5101, %v5103
    %v5114 = vsel %vm1522, %v5103, %v5105
    %v5115 = vsel %vm1522, %v5105, %v5107
    %v5116 = vsel %vm1522, %v5107, %v5109
    %5124 = vst [vmem:[#allocation2 + $0x5e8] sm:$0xff] %v5110
    %5125 = vst [vmem:[#allocation2 + $0x5f0] sm:$0xff] %v5111
    %5126 = vst [vmem:[#allocation2 + $0x5f8] sm:$0xff] %v5112
    %5127 = vst [vmem:[#allocation2 + $0x600] sm:$0xff] %v5113
    %5128 = vst [vmem:[#allocation2 + $0x608] sm:$0xff] %v5114
    %5129 = vst [vmem:[#allocation2 + $0x610] sm:$0xff] %v5115
    %5130 = vst [vmem:[#allocation2 + $0x618] sm:$0xff] %v5116
    %v5131 = vld [vmem:[#allocation3 + $0x8] sm:$0xff]
    %v5132 = vld [vmem:[#allocation3 + $0x10] sm:$0xff]
    %v5133 = vld [vmem:[#allocation3 + $0x18] sm:$0xff]
    %v5134 = vld [vmem:[#allocation3 + $0x20] sm:$0xff]
    %v5135 = vld [vmem:[#allocation3 + $0x28] sm:$0xff]
    %v5136 = vld [vmem:[#allocation3 + $0x30] sm:$0xff]
    %v5137 = vld [vmem:[#allocation3 + $0x38] sm:$0xff]
    %v5138 = vld [vmem:[#allocation3 + $0x40] sm:$0xff]
    %5147 = vrot.lane.b32.xlu0 %v5131, 109
    %v5148 = vpop.permute.xlu0 %5147
    %5149 = vrot.lane.b32.xlu0 %v5132, 109
    %v5150 = vpop.permute.xlu0 %5149
    %5151 = vrot.lane.b32.xlu0 %v5133, 109
    %v5152 = vpop.permute.xlu0 %5151
    %5153 = vrot.lane.b32.xlu0 %v5134, 109
    %v5154 = vpop.permute.xlu0 %5153
    %5155 = vrot.lane.b32.xlu0 %v5135, 109
    %v5156 = vpop.permute.xlu0 %5155
    %5157 = vrot.lane.b32.xlu0 %v5136, 109
    %v5158 = vpop.permute.xlu0 %5157
    %5159 = vrot.lane.b32.xlu0 %v5137, 109
    %v5160 = vpop.permute.xlu0 %5159
    %5161 = vrot.lane.b32.xlu0 %v5138, 109
    %v5162 = vpop.permute.xlu0 %5161
    %v5163 = vsel %vm1576, %v5148, %v5150
    %v5164 = vsel %vm1576, %v5150, %v5152
    %v5165 = vsel %vm1576, %v5152, %v5154
    %v5166 = vsel %vm1576, %v5154, %v5156
    %v5167 = vsel %vm1576, %v5156, %v5158
    %v5168 = vsel %vm1576, %v5158, %v5160
    %v5169 = vsel %vm1576, %v5160, %v5162
    %5177 = vst [vmem:[#allocation2 + $0x620] sm:$0xff] %v5163
    %5178 = vst [vmem:[#allocation2 + $0x628] sm:$0xff] %v5164
    %5179 = vst [vmem:[#allocation2 + $0x630] sm:$0xff] %v5165
    %5180 = vst [vmem:[#allocation2 + $0x638] sm:$0xff] %v5166
    %5181 = vst [vmem:[#allocation2 + $0x640] sm:$0xff] %v5167
    %5182 = vst [vmem:[#allocation2 + $0x648] sm:$0xff] %v5168
    %5183 = vst [vmem:[#allocation2 + $0x650] sm:$0xff] %v5169
    %v5184 = vld [vmem:[#allocation3 + $0x8] sm:$0xff]
    %v5185 = vld [vmem:[#allocation3 + $0x10] sm:$0xff]
    %v5186 = vld [vmem:[#allocation3 + $0x18] sm:$0xff]
    %v5187 = vld [vmem:[#allocation3 + $0x20] sm:$0xff]
    %v5188 = vld [vmem:[#allocation3 + $0x28] sm:$0xff]
    %v5189 = vld [vmem:[#allocation3 + $0x30] sm:$0xff]
    %v5190 = vld [vmem:[#allocation3 + $0x38] sm:$0xff]
    %v5191 = vld [vmem:[#allocation3 + $0x40] sm:$0xff]
    %5200 = vrot.lane.b32.xlu0 %v5184, 108
    %v5201 = vpop.permute.xlu0 %5200
    %5202 = vrot.lane.b32.xlu0 %v5185, 108
    %v5203 = vpop.permute.xlu0 %5202
    %5204 = vrot.lane.b32.xlu0 %v5186, 108
    %v5205 = vpop.permute.xlu0 %5204
    %5206 = vrot.lane.b32.xlu0 %v5187, 108
    %v5207 = vpop.permute.xlu0 %5206
    %5208 = vrot.lane.b32.xlu0 %v5188, 108
    %v5209 = vpop.permute.xlu0 %5208
    %5210 = vrot.lane.b32.xlu0 %v5189, 108
    %v5211 = vpop.permute.xlu0 %5210
    %5212 = vrot.lane.b32.xlu0 %v5190, 108
    %v5213 = vpop.permute.xlu0 %5212
    %5214 = vrot.lane.b32.xlu0 %v5191, 108
    %v5215 = vpop.permute.xlu0 %5214
    %v5216 = vsel %vm1630, %v5201, %v5203
    %v5217 = vsel %vm1630, %v5203, %v5205
    %v5218 = vsel %vm1630, %v5205, %v5207
    %v5219 = vsel %vm1630, %v5207, %v5209
    %v5220 = vsel %vm1630, %v5209, %v5211
    %v5221 = vsel %vm1630, %v5211, %v5213
    %v5222 = vsel %vm1630, %v5213, %v5215
    %5230 = vst [vmem:[#allocation2 + $0x658] sm:$0xff] %v5216
    %5231 = vst [vmem:[#allocation2 + $0x660] sm:$0xff] %v5217
    %5232 = vst [vmem:[#allocation2 + $0x668] sm:$0xff] %v5218
    %5233 = vst [vmem:[#allocation2 + $0x670] sm:$0xff] %v5219
    %5234 = vst [vmem:[#allocation2 + $0x678] sm:$0xff] %v5220
    %5235 = vst [vmem:[#allocation2 + $0x680] sm:$0xff] %v5221
    %5236 = vst [vmem:[#allocation2 + $0x688] sm:$0xff] %v5222
    %v5237 = vld [vmem:[#allocation3 + $0x8] sm:$0xff]
    %v5238 = vld [vmem:[#allocation3 + $0x10] sm:$0xff]
    %v5239 = vld [vmem:[#allocation3 + $0x18] sm:$0xff]
    %v5240 = vld [vmem:[#allocation3 + $0x20] sm:$0xff]
    %v5241 = vld [vmem:[#allocation3 + $0x28] sm:$0xff]
    %v5242 = vld [vmem:[#allocation3 + $0x30] sm:$0xff]
    %v5243 = vld [vmem:[#allocation3 + $0x38] sm:$0xff]
    %v5244 = vld [vmem:[#allocation3 + $0x40] sm:$0xff]
    %5253 = vrot.lane.b32.xlu0 %v5237, 107
    %v5254 = vpop.permute.xlu0 %5253
    %5255 = vrot.lane.b32.xlu0 %v5238, 107
    %v5256 = vpop.permute.xlu0 %5255
    %5257 = vrot.lane.b32.xlu0 %v5239, 107
    %v5258 = vpop.permute.xlu0 %5257
    %5259 = vrot.lane.b32.xlu0 %v5240, 107
    %v5260 = vpop.permute.xlu0 %5259
    %5261 = vrot.lane.b32.xlu0 %v5241, 107
    %v5262 = vpop.permute.xlu0 %5261
    %5263 = vrot.lane.b32.xlu0 %v5242, 107
    %v5264 = vpop.permute.xlu0 %5263
    %5265 = vrot.lane.b32.xlu0 %v5243, 107
    %v5266 = vpop.permute.xlu0 %5265
    %5267 = vrot.lane.b32.xlu0 %v5244, 107
    %v5268 = vpop.permute.xlu0 %5267
    %v5269 = vsel %vm1684, %v5254, %v5256
    %v5270 = vsel %vm1684, %v5256, %v5258
    %v5271 = vsel %vm1684, %v5258, %v5260
    %v5272 = vsel %vm1684, %v5260, %v5262
    %v5273 = vsel %vm1684, %v5262, %v5264
    %v5274 = vsel %vm1684, %v5264, %v5266
    %v5275 = vsel %vm1684, %v5266, %v5268
    %5283 = vst [vmem:[#allocation2 + $0x690] sm:$0xff] %v5269
    %5284 = vst [vmem:[#allocation2 + $0x698] sm:$0xff] %v5270
    %5285 = vst [vmem:[#allocation2 + $0x6a0] sm:$0xff] %v5271
    %5286 = vst [vmem:[#allocation2 + $0x6a8] sm:$0xff] %v5272
    %5287 = vst [vmem:[#allocation2 + $0x6b0] sm:$0xff] %v5273
    %5288 = vst [vmem:[#allocation2 + $0x6b8] sm:$0xff] %v5274
    %5289 = vst [vmem:[#allocation2 + $0x6c0] sm:$0xff] %v5275
    %v5290 = vld [vmem:[#allocation3 + $0x8] sm:$0xff]
    %v5291 = vld [vmem:[#allocation3 + $0x10] sm:$0xff]
    %v5292 = vld [vmem:[#allocation3 + $0x18] sm:$0xff]
    %v5293 = vld [vmem:[#allocation3 + $0x20] sm:$0xff]
    %v5294 = vld [vmem:[#allocation3 + $0x28] sm:$0xff]
    %v5295 = vld [vmem:[#allocation3 + $0x30] sm:$0xff]
    %v5296 = vld [vmem:[#allocation3 + $0x38] sm:$0xff]
    %v5297 = vld [vmem:[#allocation3 + $0x40] sm:$0xff]
    %5306 = vrot.lane.b32.xlu0 %v5290, 106
    %v5307 = vpop.permute.xlu0 %5306
    %5308 = vrot.lane.b32.xlu0 %v5291, 106
    %v5309 = vpop.permute.xlu0 %5308
    %5310 = vrot.lane.b32.xlu0 %v5292, 106
    %v5311 = vpop.permute.xlu0 %5310
    %5312 = vrot.lane.b32.xlu0 %v5293, 106
    %v5313 = vpop.permute.xlu0 %5312
    %5314 = vrot.lane.b32.xlu0 %v5294, 106
    %v5315 = vpop.permute.xlu0 %5314
    %5316 = vrot.lane.b32.xlu0 %v5295, 106
    %v5317 = vpop.permute.xlu0 %5316
    %5318 = vrot.lane.b32.xlu0 %v5296, 106
    %v5319 = vpop.permute.xlu0 %5318
    %5320 = vrot.lane.b32.xlu0 %v5297, 106
    %v5321 = vpop.permute.xlu0 %5320
    %v5322 = vsel %vm1738, %v5307, %v5309
    %v5323 = vsel %vm1738, %v5309, %v5311
    %v5324 = vsel %vm1738, %v5311, %v5313
    %v5325 = vsel %vm1738, %v5313, %v5315
    %v5326 = vsel %vm1738, %v5315, %v5317
    %v5327 = vsel %vm1738, %v5317, %v5319
    %v5328 = vsel %vm1738, %v5319, %v5321
    %5336 = vst [vmem:[#allocation2 + $0x6c8] sm:$0xff] %v5322
    %5337 = vst [vmem:[#allocation2 + $0x6d0] sm:$0xff] %v5323
    %5338 = vst [vmem:[#allocation2 + $0x6d8] sm:$0xff] %v5324
    %5339 = vst [vmem:[#allocation2 + $0x6e0] sm:$0xff] %v5325
    %5340 = vst [vmem:[#allocation2 + $0x6e8] sm:$0xff] %v5326
    %5341 = vst [vmem:[#allocation2 + $0x6f0] sm:$0xff] %v5327
    %5342 = vst [vmem:[#allocation2 + $0x6f8] sm:$0xff] %v5328
    %v5343 = vld [vmem:[#allocation3 + $0x8] sm:$0xff]
    %v5344 = vld [vmem:[#allocation3 + $0x10] sm:$0xff]
    %v5345 = vld [vmem:[#allocation3 + $0x18] sm:$0xff]
    %v5346 = vld [vmem:[#allocation3 + $0x20] sm:$0xff]
    %v5347 = vld [vmem:[#allocation3 + $0x28] sm:$0xff]
    %v5348 = vld [vmem:[#allocation3 + $0x30] sm:$0xff]
    %v5349 = vld [vmem:[#allocation3 + $0x38] sm:$0xff]
    %v5350 = vld [vmem:[#allocation3 + $0x40] sm:$0xff]
    %5359 = vrot.lane.b32.xlu0 %v5343, 105
    %v5360 = vpop.permute.xlu0 %5359
    %5361 = vrot.lane.b32.xlu0 %v5344, 105
    %v5362 = vpop.permute.xlu0 %5361
    %5363 = vrot.lane.b32.xlu0 %v5345, 105
    %v5364 = vpop.permute.xlu0 %5363
    %5365 = vrot.lane.b32.xlu0 %v5346, 105
    %v5366 = vpop.permute.xlu0 %5365
    %5367 = vrot.lane.b32.xlu0 %v5347, 105
    %v5368 = vpop.permute.xlu0 %5367
    %5369 = vrot.lane.b32.xlu0 %v5348, 105
    %v5370 = vpop.permute.xlu0 %5369
    %5371 = vrot.lane.b32.xlu0 %v5349, 105
    %v5372 = vpop.permute.xlu0 %5371
    %5373 = vrot.lane.b32.xlu0 %v5350, 105
    %v5374 = vpop.permute.xlu0 %5373
    %v5375 = vsel %vm1792, %v5360, %v5362
    %v5376 = vsel %vm1792, %v5362, %v5364
    %v5377 = vsel %vm1792, %v5364, %v5366
    %v5378 = vsel %vm1792, %v5366, %v5368
    %v5379 = vsel %vm1792, %v5368, %v5370
    %v5380 = vsel %vm1792, %v5370, %v5372
    %v5381 = vsel %vm1792, %v5372, %v5374
    %5389 = vst [vmem:[#allocation2 + $0x700] sm:$0xff] %v5375
    %5390 = vst [vmem:[#allocation2 + $0x708] sm:$0xff] %v5376
    %5391 = vst [vmem:[#allocation2 + $0x710] sm:$0xff] %v5377
    %5392 = vst [vmem:[#allocation2 + $0x718] sm:$0xff] %v5378
    %5393 = vst [vmem:[#allocation2 + $0x720] sm:$0xff] %v5379
    %5394 = vst [vmem:[#allocation2 + $0x728] sm:$0xff] %v5380
    %5395 = vst [vmem:[#allocation2 + $0x730] sm:$0xff] %v5381
    %v5396 = vld [vmem:[#allocation3 + $0x8] sm:$0xff]
    %v5397 = vld [vmem:[#allocation3 + $0x10] sm:$0xff]
    %v5398 = vld [vmem:[#allocation3 + $0x18] sm:$0xff]
    %v5399 = vld [vmem:[#allocation3 + $0x20] sm:$0xff]
    %v5400 = vld [vmem:[#allocation3 + $0x28] sm:$0xff]
    %v5401 = vld [vmem:[#allocation3 + $0x30] sm:$0xff]
    %v5402 = vld [vmem:[#allocation3 + $0x38] sm:$0xff]
    %v5403 = vld [vmem:[#allocation3 + $0x40] sm:$0xff]
    %5412 = vrot.lane.b32.xlu0 %v5396, 104
    %v5413 = vpop.permute.xlu0 %5412
    %5414 = vrot.lane.b32.xlu0 %v5397, 104
    %v5415 = vpop.permute.xlu0 %5414
    %5416 = vrot.lane.b32.xlu0 %v5398, 104
    %v5417 = vpop.permute.xlu0 %5416
    %5418 = vrot.lane.b32.xlu0 %v5399, 104
    %v5419 = vpop.permute.xlu0 %5418
    %5420 = vrot.lane.b32.xlu0 %v5400, 104
    %v5421 = vpop.permute.xlu0 %5420
    %5422 = vrot.lane.b32.xlu0 %v5401, 104
    %v5423 = vpop.permute.xlu0 %5422
    %5424 = vrot.lane.b32.xlu0 %v5402, 104
    %v5425 = vpop.permute.xlu0 %5424
    %5426 = vrot.lane.b32.xlu0 %v5403, 104
    %v5427 = vpop.permute.xlu0 %5426
    %v5428 = vsel %vm1846, %v5413, %v5415
    %v5429 = vsel %vm1846, %v5415, %v5417
    %v5430 = vsel %vm1846, %v5417, %v5419
    %v5431 = vsel %vm1846, %v5419, %v5421
    %v5432 = vsel %vm1846, %v5421, %v5423
    %v5433 = vsel %vm1846, %v5423, %v5425
    %v5434 = vsel %vm1846, %v5425, %v5427
    %5442 = vst [vmem:[#allocation2 + $0x738] sm:$0xff] %v5428
    %5443 = vst [vmem:[#allocation2 + $0x740] sm:$0xff] %v5429
    %5444 = vst [vmem:[#allocation2 + $0x748] sm:$0xff] %v5430
    %5445 = vst [vmem:[#allocation2 + $0x750] sm:$0xff] %v5431
    %5446 = vst [vmem:[#allocation2 + $0x758] sm:$0xff] %v5432
    %5447 = vst [vmem:[#allocation2 + $0x760] sm:$0xff] %v5433
    %5448 = vst [vmem:[#allocation2 + $0x768] sm:$0xff] %v5434
    %v5449 = vld [vmem:[#allocation3 + $0x8] sm:$0xff]
    %v5450 = vld [vmem:[#allocation3 + $0x10] sm:$0xff]
    %v5451 = vld [vmem:[#allocation3 + $0x18] sm:$0xff]
    %v5452 = vld [vmem:[#allocation3 + $0x20] sm:$0xff]
    %v5453 = vld [vmem:[#allocation3 + $0x28] sm:$0xff]
    %v5454 = vld [vmem:[#allocation3 + $0x30] sm:$0xff]
    %v5455 = vld [vmem:[#allocation3 + $0x38] sm:$0xff]
    %v5456 = vld [vmem:[#allocation3 + $0x40] sm:$0xff]
    %5465 = vrot.lane.b32.xlu0 %v5449, 103
    %v5466 = vpop.permute.xlu0 %5465
    %5467 = vrot.lane.b32.xlu0 %v5450, 103
    %v5468 = vpop.permute.xlu0 %5467
    %5469 = vrot.lane.b32.xlu0 %v5451, 103
    %v5470 = vpop.permute.xlu0 %5469
    %5471 = vrot.lane.b32.xlu0 %v5452, 103
    %v5472 = vpop.permute.xlu0 %5471
    %5473 = vrot.lane.b32.xlu0 %v5453, 103
    %v5474 = vpop.permute.xlu0 %5473
    %5475 = vrot.lane.b32.xlu0 %v5454, 103
    %v5476 = vpop.permute.xlu0 %5475
    %5477 = vrot.lane.b32.xlu0 %v5455, 103
    %v5478 = vpop.permute.xlu0 %5477
    %5479 = vrot.lane.b32.xlu0 %v5456, 103
    %v5480 = vpop.permute.xlu0 %5479
    %v5481 = vsel %vm1900, %v5466, %v5468
    %v5482 = vsel %vm1900, %v5468, %v5470
    %v5483 = vsel %vm1900, %v5470, %v5472
    %v5484 = vsel %vm1900, %v5472, %v5474
    %v5485 = vsel %vm1900, %v5474, %v5476
    %v5486 = vsel %vm1900, %v5476, %v5478
    %v5487 = vsel %vm1900, %v5478, %v5480
    %5495 = vst [vmem:[#allocation2 + $0x770] sm:$0xff] %v5481
    %5496 = vst [vmem:[#allocation2 + $0x778] sm:$0xff] %v5482
    %5497 = vst [vmem:[#allocation2 + $0x780] sm:$0xff] %v5483
    %5498 = vst [vmem:[#allocation2 + $0x788] sm:$0xff] %v5484
    %5499 = vst [vmem:[#allocation2 + $0x790] sm:$0xff] %v5485
    %5500 = vst [vmem:[#allocation2 + $0x798] sm:$0xff] %v5486
    %5501 = vst [vmem:[#allocation2 + $0x7a0] sm:$0xff] %v5487
    %v5502 = vld [vmem:[#allocation3 + $0x8] sm:$0xff]
    %v5503 = vld [vmem:[#allocation3 + $0x10] sm:$0xff]
    %v5504 = vld [vmem:[#allocation3 + $0x18] sm:$0xff]
    %v5505 = vld [vmem:[#allocation3 + $0x20] sm:$0xff]
    %v5506 = vld [vmem:[#allocation3 + $0x28] sm:$0xff]
    %v5507 = vld [vmem:[#allocation3 + $0x30] sm:$0xff]
    %v5508 = vld [vmem:[#allocation3 + $0x38] sm:$0xff]
    %v5509 = vld [vmem:[#allocation3 + $0x40] sm:$0xff]
    %5518 = vrot.lane.b32.xlu0 %v5502, 87
    %v5519 = vpop.permute.xlu0 %5518
    %5520 = vrot.lane.b32.xlu0 %v5503, 87
    %v5521 = vpop.permute.xlu0 %5520
    %5522 = vrot.lane.b32.xlu0 %v5504, 87
    %v5523 = vpop.permute.xlu0 %5522
    %5524 = vrot.lane.b32.xlu0 %v5505, 87
    %v5525 = vpop.permute.xlu0 %5524
    %5526 = vrot.lane.b32.xlu0 %v5506, 87
    %v5527 = vpop.permute.xlu0 %5526
    %5528 = vrot.lane.b32.xlu0 %v5507, 87
    %v5529 = vpop.permute.xlu0 %5528
    %5530 = vrot.lane.b32.xlu0 %v5508, 87
    %v5531 = vpop.permute.xlu0 %5530
    %5532 = vrot.lane.b32.xlu0 %v5509, 87
    %v5533 = vpop.permute.xlu0 %5532
    %v5534 = vsel %vm1954, %v5519, %v5521
    %v5535 = vsel %vm1954, %v5521, %v5523
    %v5536 = vsel %vm1954, %v5523, %v5525
    %v5537 = vsel %vm1954, %v5525, %v5527
    %v5538 = vsel %vm1954, %v5527, %v5529
    %v5539 = vsel %vm1954, %v5529, %v5531
    %v5540 = vsel %vm1954, %v5531, %v5533
    %5548 = vst [vmem:[#allocation2 + $0x7a8] sm:$0xff] %v5534
    %5549 = vst [vmem:[#allocation2 + $0x7b0] sm:$0xff] %v5535
    %5550 = vst [vmem:[#allocation2 + $0x7b8] sm:$0xff] %v5536
    %5551 = vst [vmem:[#allocation2 + $0x7c0] sm:$0xff] %v5537
    %5552 = vst [vmem:[#allocation2 + $0x7c8] sm:$0xff] %v5538
    %5553 = vst [vmem:[#allocation2 + $0x7d0] sm:$0xff] %v5539
    %5554 = vst [vmem:[#allocation2 + $0x7d8] sm:$0xff] %v5540
    %v5555 = vld [vmem:[#allocation3 + $0x8] sm:$0xff]
    %v5556 = vld [vmem:[#allocation3 + $0x10] sm:$0xff]
    %v5557 = vld [vmem:[#allocation3 + $0x18] sm:$0xff]
    %v5558 = vld [vmem:[#allocation3 + $0x20] sm:$0xff]
    %v5559 = vld [vmem:[#allocation3 + $0x28] sm:$0xff]
    %v5560 = vld [vmem:[#allocation3 + $0x30] sm:$0xff]
    %v5561 = vld [vmem:[#allocation3 + $0x38] sm:$0xff]
    %v5562 = vld [vmem:[#allocation3 + $0x40] sm:$0xff]
    %5571 = vrot.lane.b32.xlu0 %v5555, 86
    %v5572 = vpop.permute.xlu0 %5571
    %5573 = vrot.lane.b32.xlu0 %v5556, 86
    %v5574 = vpop.permute.xlu0 %5573
    %5575 = vrot.lane.b32.xlu0 %v5557, 86
    %v5576 = vpop.permute.xlu0 %5575
    %5577 = vrot.lane.b32.xlu0 %v5558, 86
    %v5578 = vpop.permute.xlu0 %5577
    %5579 = vrot.lane.b32.xlu0 %v5559, 86
    %v5580 = vpop.permute.xlu0 %5579
    %5581 = vrot.lane.b32.xlu0 %v5560, 86
    %v5582 = vpop.permute.xlu0 %5581
    %5583 = vrot.lane.b32.xlu0 %v5561, 86
    %v5584 = vpop.permute.xlu0 %5583
    %5585 = vrot.lane.b32.xlu0 %v5562, 86
    %v5586 = vpop.permute.xlu0 %5585
    %v5587 = vsel %vm2008, %v5572, %v5574
    %v5588 = vsel %vm2008, %v5574, %v5576
    %v5589 = vsel %vm2008, %v5576, %v5578
    %v5590 = vsel %vm2008, %v5578, %v5580
    %v5591 = vsel %vm2008, %v5580, %v5582
    %v5592 = vsel %vm2008, %v5582, %v5584
    %v5593 = vsel %vm2008, %v5584, %v5586
    %5601 = vst [vmem:[#allocation2 + $0x7e0] sm:$0xff] %v5587
    %5602 = vst [vmem:[#allocation2 + $0x7e8] sm:$0xff] %v5588
    %5603 = vst [vmem:[#allocation2 + $0x7f0] sm:$0xff] %v5589
    %5604 = vst [vmem:[#allocation2 + $0x7f8] sm:$0xff] %v5590
    %5605 = vst [vmem:[#allocation2 + $0x800] sm:$0xff] %v5591
    %5606 = vst [vmem:[#allocation2 + $0x808] sm:$0xff] %v5592
    %5607 = vst [vmem:[#allocation2 + $0x810] sm:$0xff] %v5593
    %v5608 = vld [vmem:[#allocation3 + $0x8] sm:$0xff]
    %v5609 = vld [vmem:[#allocation3 + $0x10] sm:$0xff]
    %v5610 = vld [vmem:[#allocation3 + $0x18] sm:$0xff]
    %v5611 = vld [vmem:[#allocation3 + $0x20] sm:$0xff]
    %v5612 = vld [vmem:[#allocation3 + $0x28] sm:$0xff]
    %v5613 = vld [vmem:[#allocation3 + $0x30] sm:$0xff]
    %v5614 = vld [vmem:[#allocation3 + $0x38] sm:$0xff]
    %v5615 = vld [vmem:[#allocation3 + $0x40] sm:$0xff]
    %5624 = vrot.lane.b32.xlu0 %v5608, 85
    %v5625 = vpop.permute.xlu0 %5624
    %5626 = vrot.lane.b32.xlu0 %v5609, 85
    %v5627 = vpop.permute.xlu0 %5626
    %5628 = vrot.lane.b32.xlu0 %v5610, 85
    %v5629 = vpop.permute.xlu0 %5628
    %5630 = vrot.lane.b32.xlu0 %v5611, 85
    %v5631 = vpop.permute.xlu0 %5630
    %5632 = vrot.lane.b32.xlu0 %v5612, 85
    %v5633 = vpop.permute.xlu0 %5632
    %5634 = vrot.lane.b32.xlu0 %v5613, 85
    %v5635 = vpop.permute.xlu0 %5634
    %5636 = vrot.lane.b32.xlu0 %v5614, 85
    %v5637 = vpop.permute.xlu0 %5636
    %5638 = vrot.lane.b32.xlu0 %v5615, 85
    %v5639 = vpop.permute.xlu0 %5638
    %v5640 = vsel %vm2062, %v5625, %v5627
    %v5641 = vsel %vm2062, %v5627, %v5629
    %v5642 = vsel %vm2062, %v5629, %v5631
    %v5643 = vsel %vm2062, %v5631, %v5633
    %v5644 = vsel %vm2062, %v5633, %v5635
    %v5645 = vsel %vm2062, %v5635, %v5637
    %v5646 = vsel %vm2062, %v5637, %v5639
    %5654 = vst [vmem:[#allocation2 + $0x818] sm:$0xff] %v5640
    %5655 = vst [vmem:[#allocation2 + $0x820] sm:$0xff] %v5641
    %5656 = vst [vmem:[#allocation2 + $0x828] sm:$0xff] %v5642
    %5657 = vst [vmem:[#allocation2 + $0x830] sm:$0xff] %v5643
    %5658 = vst [vmem:[#allocation2 + $0x838] sm:$0xff] %v5644
    %5659 = vst [vmem:[#allocation2 + $0x840] sm:$0xff] %v5645
    %5660 = vst [vmem:[#allocation2 + $0x848] sm:$0xff] %v5646
    %v5661 = vld [vmem:[#allocation3 + $0x8] sm:$0xff]
    %v5662 = vld [vmem:[#allocation3 + $0x10] sm:$0xff]
    %v5663 = vld [vmem:[#allocation3 + $0x18] sm:$0xff]
    %v5664 = vld [vmem:[#allocation3 + $0x20] sm:$0xff]
    %v5665 = vld [vmem:[#allocation3 + $0x28] sm:$0xff]
    %v5666 = vld [vmem:[#allocation3 + $0x30] sm:$0xff]
    %v5667 = vld [vmem:[#allocation3 + $0x38] sm:$0xff]
    %v5668 = vld [vmem:[#allocation3 + $0x40] sm:$0xff]
    %5677 = vrot.lane.b32.xlu0 %v5661, 84
    %v5678 = vpop.permute.xlu0 %5677
    %5679 = vrot.lane.b32.xlu0 %v5662, 84
    %v5680 = vpop.permute.xlu0 %5679
    %5681 = vrot.lane.b32.xlu0 %v5663, 84
    %v5682 = vpop.permute.xlu0 %5681
    %5683 = vrot.lane.b32.xlu0 %v5664, 84
    %v5684 = vpop.permute.xlu0 %5683
    %5685 = vrot.lane.b32.xlu0 %v5665, 84
    %v5686 = vpop.permute.xlu0 %5685
    %5687 = vrot.lane.b32.xlu0 %v5666, 84
    %v5688 = vpop.permute.xlu0 %5687
    %5689 = vrot.lane.b32.xlu0 %v5667, 84
    %v5690 = vpop.permute.xlu0 %5689
    %5691 = vrot.lane.b32.xlu0 %v5668, 84
    %v5692 = vpop.permute.xlu0 %5691
    %v5693 = vsel %vm2116, %v5678, %v5680
    %v5694 = vsel %vm2116, %v5680, %v5682
    %v5695 = vsel %vm2116, %v5682, %v5684
    %v5696 = vsel %vm2116, %v5684, %v5686
    %v5697 = vsel %vm2116, %v5686, %v5688
    %v5698 = vsel %vm2116, %v5688, %v5690
    %v5699 = vsel %vm2116, %v5690, %v5692
    %5707 = vst [vmem:[#allocation2 + $0x850] sm:$0xff] %v5693
    %5708 = vst [vmem:[#allocation2 + $0x858] sm:$0xff] %v5694
    %5709 = vst [vmem:[#allocation2 + $0x860] sm:$0xff] %v5695
    %5710 = vst [vmem:[#allocation2 + $0x868] sm:$0xff] %v5696
    %5711 = vst [vmem:[#allocation2 + $0x870] sm:$0xff] %v5697
    %5712 = vst [vmem:[#allocation2 + $0x878] sm:$0xff] %v5698
    %5713 = vst [vmem:[#allocation2 + $0x880] sm:$0xff] %v5699
    %v5714 = vld [vmem:[#allocation3 + $0x8] sm:$0xff]
    %v5715 = vld [vmem:[#allocation3 + $0x10] sm:$0xff]
    %v5716 = vld [vmem:[#allocation3 + $0x18] sm:$0xff]
    %v5717 = vld [vmem:[#allocation3 + $0x20] sm:$0xff]
    %v5718 = vld [vmem:[#allocation3 + $0x28] sm:$0xff]
    %v5719 = vld [vmem:[#allocation3 + $0x30] sm:$0xff]
    %v5720 = vld [vmem:[#allocation3 + $0x38] sm:$0xff]
    %v5721 = vld [vmem:[#allocation3 + $0x40] sm:$0xff]
    %5730 = vrot.lane.b32.xlu0 %v5714, 83
    %v5731 = vpop.permute.xlu0 %5730
    %5732 = vrot.lane.b32.xlu0 %v5715, 83
    %v5733 = vpop.permute.xlu0 %5732
    %5734 = vrot.lane.b32.xlu0 %v5716, 83
    %v5735 = vpop.permute.xlu0 %5734
    %5736 = vrot.lane.b32.xlu0 %v5717, 83
    %v5737 = vpop.permute.xlu0 %5736
    %5738 = vrot.lane.b32.xlu0 %v5718, 83
    %v5739 = vpop.permute.xlu0 %5738
    %5740 = vrot.lane.b32.xlu0 %v5719, 83
    %v5741 = vpop.permute.xlu0 %5740
    %5742 = vrot.lane.b32.xlu0 %v5720, 83
    %v5743 = vpop.permute.xlu0 %5742
    %5744 = vrot.lane.b32.xlu0 %v5721, 83
    %v5745 = vpop.permute.xlu0 %5744
    %v5746 = vsel %vm2170, %v5731, %v5733
    %v5747 = vsel %vm2170, %v5733, %v5735
    %v5748 = vsel %vm2170, %v5735, %v5737
    %v5749 = vsel %vm2170, %v5737, %v5739
    %v5750 = vsel %vm2170, %v5739, %v5741
    %v5751 = vsel %vm2170, %v5741, %v5743
    %v5752 = vsel %vm2170, %v5743, %v5745
    %5760 = vst [vmem:[#allocation2 + $0x888] sm:$0xff] %v5746
    %5761 = vst [vmem:[#allocation2 + $0x890] sm:$0xff] %v5747
    %5762 = vst [vmem:[#allocation2 + $0x898] sm:$0xff] %v5748
    %5763 = vst [vmem:[#allocation2 + $0x8a0] sm:$0xff] %v5749
    %5764 = vst [vmem:[#allocation2 + $0x8a8] sm:$0xff] %v5750
    %5765 = vst [vmem:[#allocation2 + $0x8b0] sm:$0xff] %v5751
    %5766 = vst [vmem:[#allocation2 + $0x8b8] sm:$0xff] %v5752
    %v5767 = vld [vmem:[#allocation3 + $0x8] sm:$0xff]
    %v5768 = vld [vmem:[#allocation3 + $0x10] sm:$0xff]
    %v5769 = vld [vmem:[#allocation3 + $0x18] sm:$0xff]
    %v5770 = vld [vmem:[#allocation3 + $0x20] sm:$0xff]
    %v5771 = vld [vmem:[#allocation3 + $0x28] sm:$0xff]
    %v5772 = vld [vmem:[#allocation3 + $0x30] sm:$0xff]
    %v5773 = vld [vmem:[#allocation3 + $0x38] sm:$0xff]
    %v5774 = vld [vmem:[#allocation3 + $0x40] sm:$0xff]
    %5783 = vrot.lane.b32.xlu0 %v5767, 82
    %v5784 = vpop.permute.xlu0 %5783
    %5785 = vrot.lane.b32.xlu0 %v5768, 82
    %v5786 = vpop.permute.xlu0 %5785
    %5787 = vrot.lane.b32.xlu0 %v5769, 82
    %v5788 = vpop.permute.xlu0 %5787
    %5789 = vrot.lane.b32.xlu0 %v5770, 82
    %v5790 = vpop.permute.xlu0 %5789
    %5791 = vrot.lane.b32.xlu0 %v5771, 82
    %v5792 = vpop.permute.xlu0 %5791
    %5793 = vrot.lane.b32.xlu0 %v5772, 82
    %v5794 = vpop.permute.xlu0 %5793
    %5795 = vrot.lane.b32.xlu0 %v5773, 82
    %v5796 = vpop.permute.xlu0 %5795
    %5797 = vrot.lane.b32.xlu0 %v5774, 82
    %v5798 = vpop.permute.xlu0 %5797
    %v5799 = vsel %vm2224, %v5784, %v5786
    %v5800 = vsel %vm2224, %v5786, %v5788
    %v5801 = vsel %vm2224, %v5788, %v5790
    %v5802 = vsel %vm2224, %v5790, %v5792
    %v5803 = vsel %vm2224, %v5792, %v5794
    %v5804 = vsel %vm2224, %v5794, %v5796
    %v5805 = vsel %vm2224, %v5796, %v5798
    %5813 = vst [vmem:[#allocation2 + $0x8c0] sm:$0xff] %v5799
    %5814 = vst [vmem:[#allocation2 + $0x8c8] sm:$0xff] %v5800
    %5815 = vst [vmem:[#allocation2 + $0x8d0] sm:$0xff] %v5801
    %5816 = vst [vmem:[#allocation2 + $0x8d8] sm:$0xff] %v5802
    %5817 = vst [vmem:[#allocation2 + $0x8e0] sm:$0xff] %v5803
    %5818 = vst [vmem:[#allocation2 + $0x8e8] sm:$0xff] %v5804
    %5819 = vst [vmem:[#allocation2 + $0x8f0] sm:$0xff] %v5805
    %v5820 = vld [vmem:[#allocation3 + $0x8] sm:$0xff]
    %v5821 = vld [vmem:[#allocation3 + $0x10] sm:$0xff]
    %v5822 = vld [vmem:[#allocation3 + $0x18] sm:$0xff]
    %v5823 = vld [vmem:[#allocation3 + $0x20] sm:$0xff]
    %v5824 = vld [vmem:[#allocation3 + $0x28] sm:$0xff]
    %v5825 = vld [vmem:[#allocation3 + $0x30] sm:$0xff]
    %v5826 = vld [vmem:[#allocation3 + $0x38] sm:$0xff]
    %v5827 = vld [vmem:[#allocation3 + $0x40] sm:$0xff]
    %5836 = vrot.lane.b32.xlu0 %v5820, 81
    %v5837 = vpop.permute.xlu0 %5836
    %5838 = vrot.lane.b32.xlu0 %v5821, 81
    %v5839 = vpop.permute.xlu0 %5838
    %5840 = vrot.lane.b32.xlu0 %v5822, 81
    %v5841 = vpop.permute.xlu0 %5840
    %5842 = vrot.lane.b32.xlu0 %v5823, 81
    %v5843 = vpop.permute.xlu0 %5842
    %5844 = vrot.lane.b32.xlu0 %v5824, 81
    %v5845 = vpop.permute.xlu0 %5844
    %5846 = vrot.lane.b32.xlu0 %v5825, 81
    %v5847 = vpop.permute.xlu0 %5846
    %5848 = vrot.lane.b32.xlu0 %v5826, 81
    %v5849 = vpop.permute.xlu0 %5848
    %5850 = vrot.lane.b32.xlu0 %v5827, 81
    %v5851 = vpop.permute.xlu0 %5850
    %v5852 = vsel %vm2278, %v5837, %v5839
    %v5853 = vsel %vm2278, %v5839, %v5841
    %v5854 = vsel %vm2278, %v5841, %v5843
    %v5855 = vsel %vm2278, %v5843, %v5845
    %v5856 = vsel %vm2278, %v5845, %v5847
    %v5857 = vsel %vm2278, %v5847, %v5849
    %v5858 = vsel %vm2278, %v5849, %v5851
    %5866 = vst [vmem:[#allocation2 + $0x8f8] sm:$0xff] %v5852
    %5867 = vst [vmem:[#allocation2 + $0x900] sm:$0xff] %v5853
    %5868 = vst [vmem:[#allocation2 + $0x908] sm:$0xff] %v5854
    %5869 = vst [vmem:[#allocation2 + $0x910] sm:$0xff] %v5855
    %5870 = vst [vmem:[#allocation2 + $0x918] sm:$0xff] %v5856
    %5871 = vst [vmem:[#allocation2 + $0x920] sm:$0xff] %v5857
    %5872 = vst [vmem:[#allocation2 + $0x928] sm:$0xff] %v5858
    %v5873 = vld [vmem:[#allocation3 + $0x8] sm:$0xff]
    %v5874 = vld [vmem:[#allocation3 + $0x10] sm:$0xff]
    %v5875 = vld [vmem:[#allocation3 + $0x18] sm:$0xff]
    %v5876 = vld [vmem:[#allocation3 + $0x20] sm:$0xff]
    %v5877 = vld [vmem:[#allocation3 + $0x28] sm:$0xff]
    %v5878 = vld [vmem:[#allocation3 + $0x30] sm:$0xff]
    %v5879 = vld [vmem:[#allocation3 + $0x38] sm:$0xff]
    %v5880 = vld [vmem:[#allocation3 + $0x40] sm:$0xff]
    %5889 = vrot.lane.b32.xlu0 %v5873, 65
    %v5890 = vpop.permute.xlu0 %5889
    %5891 = vrot.lane.b32.xlu0 %v5874, 65
    %v5892 = vpop.permute.xlu0 %5891
    %5893 = vrot.lane.b32.xlu0 %v5875, 65
    %v5894 = vpop.permute.xlu0 %5893
    %5895 = vrot.lane.b32.xlu0 %v5876, 65
    %v5896 = vpop.permute.xlu0 %5895
    %5897 = vrot.lane.b32.xlu0 %v5877, 65
    %v5898 = vpop.permute.xlu0 %5897
    %5899 = vrot.lane.b32.xlu0 %v5878, 65
    %v5900 = vpop.permute.xlu0 %5899
    %5901 = vrot.lane.b32.xlu0 %v5879, 65
    %v5902 = vpop.permute.xlu0 %5901
    %5903 = vrot.lane.b32.xlu0 %v5880, 65
    %v5904 = vpop.permute.xlu0 %5903
    %v5905 = vsel %vm320, %v5890, %v5892
    %v5906 = vsel %vm320, %v5892, %v5894
    %v5907 = vsel %vm320, %v5894, %v5896
    %v5908 = vsel %vm320, %v5896, %v5898
    %v5909 = vsel %vm320, %v5898, %v5900
    %v5910 = vsel %vm320, %v5900, %v5902
    %v5911 = vsel %vm320, %v5902, %v5904
    %5919 = vst [vmem:[#allocation2 + $0x930] sm:$0xff] %v5905
    %5920 = vst [vmem:[#allocation2 + $0x938] sm:$0xff] %v5906
    %5921 = vst [vmem:[#allocation2 + $0x940] sm:$0xff] %v5907
    %5922 = vst [vmem:[#allocation2 + $0x948] sm:$0xff] %v5908
    %5923 = vst [vmem:[#allocation2 + $0x950] sm:$0xff] %v5909
    %5924 = vst [vmem:[#allocation2 + $0x958] sm:$0xff] %v5910
    %5925 = vst [vmem:[#allocation2 + $0x960] sm:$0xff] %v5911
    %v5926 = vld [vmem:[#allocation3 + $0x8] sm:$0xff]
    %v5927 = vld [vmem:[#allocation3 + $0x10] sm:$0xff]
    %v5928 = vld [vmem:[#allocation3 + $0x18] sm:$0xff]
    %v5929 = vld [vmem:[#allocation3 + $0x20] sm:$0xff]
    %v5930 = vld [vmem:[#allocation3 + $0x28] sm:$0xff]
    %v5931 = vld [vmem:[#allocation3 + $0x30] sm:$0xff]
    %v5932 = vld [vmem:[#allocation3 + $0x38] sm:$0xff]
    %v5933 = vld [vmem:[#allocation3 + $0x40] sm:$0xff]
    %5942 = vrot.lane.b32.xlu0 %v5926, 64
    %v5943 = vpop.permute.xlu0 %5942
    %5944 = vrot.lane.b32.xlu0 %v5927, 64
    %v5945 = vpop.permute.xlu0 %5944
    %5946 = vrot.lane.b32.xlu0 %v5928, 64
    %v5947 = vpop.permute.xlu0 %5946
    %5948 = vrot.lane.b32.xlu0 %v5929, 64
    %v5949 = vpop.permute.xlu0 %5948
    %5950 = vrot.lane.b32.xlu0 %v5930, 64
    %v5951 = vpop.permute.xlu0 %5950
    %5952 = vrot.lane.b32.xlu0 %v5931, 64
    %v5953 = vpop.permute.xlu0 %5952
    %5954 = vrot.lane.b32.xlu0 %v5932, 64
    %v5955 = vpop.permute.xlu0 %5954
    %5956 = vrot.lane.b32.xlu0 %v5933, 64
    %v5957 = vpop.permute.xlu0 %5956
    %v5958 = vsel %vm374, %v5943, %v5945
    %v5959 = vsel %vm374, %v5945, %v5947
    %v5960 = vsel %vm374, %v5947, %v5949
    %v5961 = vsel %vm374, %v5949, %v5951
    %v5962 = vsel %vm374, %v5951, %v5953
    %v5963 = vsel %vm374, %v5953, %v5955
    %v5964 = vsel %vm374, %v5955, %v5957
    %5972 = vst [vmem:[#allocation2 + $0x968] sm:$0xff] %v5958
    %5973 = vst [vmem:[#allocation2 + $0x970] sm:$0xff] %v5959
    %5974 = vst [vmem:[#allocation2 + $0x978] sm:$0xff] %v5960
    %5975 = vst [vmem:[#allocation2 + $0x980] sm:$0xff] %v5961
    %5976 = vst [vmem:[#allocation2 + $0x988] sm:$0xff] %v5962
    %5977 = vst [vmem:[#allocation2 + $0x990] sm:$0xff] %v5963
    %5978 = vst [vmem:[#allocation2 + $0x998] sm:$0xff] %v5964
    %v5979 = vld [vmem:[#allocation3 + $0x8] sm:$0xff]
    %v5980 = vld [vmem:[#allocation3 + $0x10] sm:$0xff]
    %v5981 = vld [vmem:[#allocation3 + $0x18] sm:$0xff]
    %v5982 = vld [vmem:[#allocation3 + $0x20] sm:$0xff]
    %v5983 = vld [vmem:[#allocation3 + $0x28] sm:$0xff]
    %v5984 = vld [vmem:[#allocation3 + $0x30] sm:$0xff]
    %v5985 = vld [vmem:[#allocation3 + $0x38] sm:$0xff]
    %v5986 = vld [vmem:[#allocation3 + $0x40] sm:$0xff]
    %5995 = vrot.lane.b32.xlu0 %v5979, 63
    %v5996 = vpop.permute.xlu0 %5995
    %5997 = vrot.lane.b32.xlu0 %v5980, 63
    %v5998 = vpop.permute.xlu0 %5997
    %5999 = vrot.lane.b32.xlu0 %v5981, 63
    %v6000 = vpop.permute.xlu0 %5999
    %6001 = vrot.lane.b32.xlu0 %v5982, 63
    %v6002 = vpop.permute.xlu0 %6001
    %6003 = vrot.lane.b32.xlu0 %v5983, 63
    %v6004 = vpop.permute.xlu0 %6003
    %6005 = vrot.lane.b32.xlu0 %v5984, 63
    %v6006 = vpop.permute.xlu0 %6005
    %6007 = vrot.lane.b32.xlu0 %v5985, 63
    %v6008 = vpop.permute.xlu0 %6007
    %6009 = vrot.lane.b32.xlu0 %v5986, 63
    %v6010 = vpop.permute.xlu0 %6009
    %v6011 = vsel %vm428, %v5996, %v5998
    %v6012 = vsel %vm428, %v5998, %v6000
    %v6013 = vsel %vm428, %v6000, %v6002
    %v6014 = vsel %vm428, %v6002, %v6004
    %v6015 = vsel %vm428, %v6004, %v6006
    %v6016 = vsel %vm428, %v6006, %v6008
    %v6017 = vsel %vm428, %v6008, %v6010
    %6025 = vst [vmem:[#allocation2 + $0x9a0] sm:$0xff] %v6011
    %6026 = vst [vmem:[#allocation2 + $0x9a8] sm:$0xff] %v6012
    %6027 = vst [vmem:[#allocation2 + $0x9b0] sm:$0xff] %v6013
    %6028 = vst [vmem:[#allocation2 + $0x9b8] sm:$0xff] %v6014
    %6029 = vst [vmem:[#allocation2 + $0x9c0] sm:$0xff] %v6015
    %6030 = vst [vmem:[#allocation2 + $0x9c8] sm:$0xff] %v6016
    %6031 = vst [vmem:[#allocation2 + $0x9d0] sm:$0xff] %v6017
    %v6032 = vld [vmem:[#allocation3 + $0x8] sm:$0xff]
    %v6033 = vld [vmem:[#allocation3 + $0x10] sm:$0xff]
    %v6034 = vld [vmem:[#allocation3 + $0x18] sm:$0xff]
    %v6035 = vld [vmem:[#allocation3 + $0x20] sm:$0xff]
    %v6036 = vld [vmem:[#allocation3 + $0x28] sm:$0xff]
    %v6037 = vld [vmem:[#allocation3 + $0x30] sm:$0xff]
    %v6038 = vld [vmem:[#allocation3 + $0x38] sm:$0xff]
    %v6039 = vld [vmem:[#allocation3 + $0x40] sm:$0xff]
    %6048 = vrot.lane.b32.xlu0 %v6032, 62
    %v6049 = vpop.permute.xlu0 %6048
    %6050 = vrot.lane.b32.xlu0 %v6033, 62
    %v6051 = vpop.permute.xlu0 %6050
    %6052 = vrot.lane.b32.xlu0 %v6034, 62
    %v6053 = vpop.permute.xlu0 %6052
    %6054 = vrot.lane.b32.xlu0 %v6035, 62
    %v6055 = vpop.permute.xlu0 %6054
    %6056 = vrot.lane.b32.xlu0 %v6036, 62
    %v6057 = vpop.permute.xlu0 %6056
    %6058 = vrot.lane.b32.xlu0 %v6037, 62
    %v6059 = vpop.permute.xlu0 %6058
    %6060 = vrot.lane.b32.xlu0 %v6038, 62
    %v6061 = vpop.permute.xlu0 %6060
    %6062 = vrot.lane.b32.xlu0 %v6039, 62
    %v6063 = vpop.permute.xlu0 %6062
    %v6064 = vsel %vm2491, %v6049, %v6051
    %v6065 = vsel %vm2491, %v6051, %v6053
    %v6066 = vsel %vm2491, %v6053, %v6055
    %v6067 = vsel %vm2491, %v6055, %v6057
    %v6068 = vsel %vm2491, %v6057, %v6059
    %v6069 = vsel %vm2491, %v6059, %v6061
    %v6070 = vsel %vm2491, %v6061, %v6063
    %6078 = vst [vmem:[#allocation2 + $0x9d8] sm:$0xff] %v6064
    %6079 = vst [vmem:[#allocation2 + $0x9e0] sm:$0xff] %v6065
    %6080 = vst [vmem:[#allocation2 + $0x9e8] sm:$0xff] %v6066
    %6081 = vst [vmem:[#allocation2 + $0x9f0] sm:$0xff] %v6067
    %6082 = vst [vmem:[#allocation2 + $0x9f8] sm:$0xff] %v6068
    %6083 = vst [vmem:[#allocation2 + $0xa00] sm:$0xff] %v6069
    %6084 = vst [vmem:[#allocation2 + $0xa08] sm:$0xff] %v6070
    %v6085 = vld [vmem:[#allocation3 + $0x8] sm:$0xff]
    %v6086 = vld [vmem:[#allocation3 + $0x10] sm:$0xff]
    %v6087 = vld [vmem:[#allocation3 + $0x18] sm:$0xff]
    %v6088 = vld [vmem:[#allocation3 + $0x20] sm:$0xff]
    %v6089 = vld [vmem:[#allocation3 + $0x28] sm:$0xff]
    %v6090 = vld [vmem:[#allocation3 + $0x30] sm:$0xff]
    %v6091 = vld [vmem:[#allocation3 + $0x38] sm:$0xff]
    %v6092 = vld [vmem:[#allocation3 + $0x40] sm:$0xff]
    %6101 = vrot.lane.b32.xlu0 %v6085, 61
    %v6102 = vpop.permute.xlu0 %6101
    %6103 = vrot.lane.b32.xlu0 %v6086, 61
    %v6104 = vpop.permute.xlu0 %6103
    %6105 = vrot.lane.b32.xlu0 %v6087, 61
    %v6106 = vpop.permute.xlu0 %6105
    %6107 = vrot.lane.b32.xlu0 %v6088, 61
    %v6108 = vpop.permute.xlu0 %6107
    %6109 = vrot.lane.b32.xlu0 %v6089, 61
    %v6110 = vpop.permute.xlu0 %6109
    %6111 = vrot.lane.b32.xlu0 %v6090, 61
    %v6112 = vpop.permute.xlu0 %6111
    %6113 = vrot.lane.b32.xlu0 %v6091, 61
    %v6114 = vpop.permute.xlu0 %6113
    %6115 = vrot.lane.b32.xlu0 %v6092, 61
    %v6116 = vpop.permute.xlu0 %6115
    %v6117 = vsel %vm2545, %v6102, %v6104
    %v6118 = vsel %vm2545, %v6104, %v6106
    %v6119 = vsel %vm2545, %v6106, %v6108
    %v6120 = vsel %vm2545, %v6108, %v6110
    %v6121 = vsel %vm2545, %v6110, %v6112
    %v6122 = vsel %vm2545, %v6112, %v6114
    %v6123 = vsel %vm2545, %v6114, %v6116
    %6131 = vst [vmem:[#allocation2 + $0xa10] sm:$0xff] %v6117
    %6132 = vst [vmem:[#allocation2 + $0xa18] sm:$0xff] %v6118
    %6133 = vst [vmem:[#allocation2 + $0xa20] sm:$0xff] %v6119
    %6134 = vst [vmem:[#allocation2 + $0xa28] sm:$0xff] %v6120
    %6135 = vst [vmem:[#allocation2 + $0xa30] sm:$0xff] %v6121
    %6136 = vst [vmem:[#allocation2 + $0xa38] sm:$0xff] %v6122
    %6137 = vst [vmem:[#allocation2 + $0xa40] sm:$0xff] %v6123
    %v6138 = vld [vmem:[#allocation3 + $0x8] sm:$0xff]
    %v6139 = vld [vmem:[#allocation3 + $0x10] sm:$0xff]
    %v6140 = vld [vmem:[#allocation3 + $0x18] sm:$0xff]
    %v6141 = vld [vmem:[#allocation3 + $0x20] sm:$0xff]
    %v6142 = vld [vmem:[#allocation3 + $0x28] sm:$0xff]
    %v6143 = vld [vmem:[#allocation3 + $0x30] sm:$0xff]
    %v6144 = vld [vmem:[#allocation3 + $0x38] sm:$0xff]
    %v6145 = vld [vmem:[#allocation3 + $0x40] sm:$0xff]
    %6154 = vrot.lane.b32.xlu0 %v6138, 60
    %v6155 = vpop.permute.xlu0 %6154
    %6156 = vrot.lane.b32.xlu0 %v6139, 60
    %v6157 = vpop.permute.xlu0 %6156
    %6158 = vrot.lane.b32.xlu0 %v6140, 60
    %v6159 = vpop.permute.xlu0 %6158
    %6160 = vrot.lane.b32.xlu0 %v6141, 60
    %v6161 = vpop.permute.xlu0 %6160
    %6162 = vrot.lane.b32.xlu0 %v6142, 60
    %v6163 = vpop.permute.xlu0 %6162
    %6164 = vrot.lane.b32.xlu0 %v6143, 60
    %v6165 = vpop.permute.xlu0 %6164
    %6166 = vrot.lane.b32.xlu0 %v6144, 60
    %v6167 = vpop.permute.xlu0 %6166
    %6168 = vrot.lane.b32.xlu0 %v6145, 60
    %v6169 = vpop.permute.xlu0 %6168
    %v6170 = vsel %vm2599, %v6155, %v6157
    %v6171 = vsel %vm2599, %v6157, %v6159
    %v6172 = vsel %vm2599, %v6159, %v6161
    %v6173 = vsel %vm2599, %v6161, %v6163
    %v6174 = vsel %vm2599, %v6163, %v6165
    %v6175 = vsel %vm2599, %v6165, %v6167
    %v6176 = vsel %vm2599, %v6167, %v6169
    %6184 = vst [vmem:[#allocation2 + $0xa48] sm:$0xff] %v6170
    %6185 = vst [vmem:[#allocation2 + $0xa50] sm:$0xff] %v6171
    %6186 = vst [vmem:[#allocation2 + $0xa58] sm:$0xff] %v6172
    %6187 = vst [vmem:[#allocation2 + $0xa60] sm:$0xff] %v6173
    %6188 = vst [vmem:[#allocation2 + $0xa68] sm:$0xff] %v6174
    %6189 = vst [vmem:[#allocation2 + $0xa70] sm:$0xff] %v6175
    %6190 = vst [vmem:[#allocation2 + $0xa78] sm:$0xff] %v6176
    %v6191 = vld [vmem:[#allocation3 + $0x8] sm:$0xff]
    %v6192 = vld [vmem:[#allocation3 + $0x10] sm:$0xff]
    %v6193 = vld [vmem:[#allocation3 + $0x18] sm:$0xff]
    %v6194 = vld [vmem:[#allocation3 + $0x20] sm:$0xff]
    %v6195 = vld [vmem:[#allocation3 + $0x28] sm:$0xff]
    %v6196 = vld [vmem:[#allocation3 + $0x30] sm:$0xff]
    %v6197 = vld [vmem:[#allocation3 + $0x38] sm:$0xff]
    %v6198 = vld [vmem:[#allocation3 + $0x40] sm:$0xff]
    %6207 = vrot.lane.b32.xlu0 %v6191, 59
    %v6208 = vpop.permute.xlu0 %6207
    %6209 = vrot.lane.b32.xlu0 %v6192, 59
    %v6210 = vpop.permute.xlu0 %6209
    %6211 = vrot.lane.b32.xlu0 %v6193, 59
    %v6212 = vpop.permute.xlu0 %6211
    %6213 = vrot.lane.b32.xlu0 %v6194, 59
    %v6214 = vpop.permute.xlu0 %6213
    %6215 = vrot.lane.b32.xlu0 %v6195, 59
    %v6216 = vpop.permute.xlu0 %6215
    %6217 = vrot.lane.b32.xlu0 %v6196, 59
    %v6218 = vpop.permute.xlu0 %6217
    %6219 = vrot.lane.b32.xlu0 %v6197, 59
    %v6220 = vpop.permute.xlu0 %6219
    %6221 = vrot.lane.b32.xlu0 %v6198, 59
    %v6222 = vpop.permute.xlu0 %6221
    %v6223 = vsel %vm2653, %v6208, %v6210
    %v6224 = vsel %vm2653, %v6210, %v6212
    %v6225 = vsel %vm2653, %v6212, %v6214
    %v6226 = vsel %vm2653, %v6214, %v6216
    %v6227 = vsel %vm2653, %v6216, %v6218
    %v6228 = vsel %vm2653, %v6218, %v6220
    %v6229 = vsel %vm2653, %v6220, %v6222
    %6237 = vst [vmem:[#allocation2 + $0xa80] sm:$0xff] %v6223
    %6238 = vst [vmem:[#allocation2 + $0xa88] sm:$0xff] %v6224
    %6239 = vst [vmem:[#allocation2 + $0xa90] sm:$0xff] %v6225
    %6240 = vst [vmem:[#allocation2 + $0xa98] sm:$0xff] %v6226
    %6241 = vst [vmem:[#allocation2 + $0xaa0] sm:$0xff] %v6227
    %6242 = vst [vmem:[#allocation2 + $0xaa8] sm:$0xff] %v6228
    %6243 = vst [vmem:[#allocation2 + $0xab0] sm:$0xff] %v6229
    %v6244 = vld [vmem:[#allocation10] sm:$0xff]
    %v6245 = vld [vmem:[#allocation10 + $0x8] sm:$0xff]
    %v6246 = vld [vmem:[#allocation10 + $0x10] sm:$0xff]
    %v6247 = vld [vmem:[#allocation10 + $0x18] sm:$0xff]
    %v6248 = vld [vmem:[#allocation2] sm:$0xff]
    %v6249 = vld [vmem:[#allocation2 + $0x8] sm:$0xff]
    %v6250 = vld [vmem:[#allocation2 + $0x10] sm:$0xff]
    %v6251 = vld [vmem:[#allocation2 + $0x18] sm:$0xff]
    %v6252 = vld [vmem:[#allocation2 + $0x20] sm:$0xff]
    %v6253 = vld [vmem:[#allocation2 + $0x28] sm:$0xff]
    %v6254 = vld [vmem:[#allocation2 + $0x30] sm:$0xff]
    %v6255 = vld [vmem:[#allocation2 + $0x38] sm:$0xff]
    %v6256 = vld [vmem:[#allocation2 + $0x40] sm:$0xff]
    %v6257 = vld [vmem:[#allocation2 + $0x48] sm:$0xff]
    %v6258 = vld [vmem:[#allocation2 + $0x50] sm:$0xff]
    %v6259 = vld [vmem:[#allocation2 + $0x58] sm:$0xff]
    %v6260 = vld [vmem:[#allocation2 + $0x60] sm:$0xff]
    %v6261 = vld [vmem:[#allocation2 + $0x68] sm:$0xff]
    %v6262 = vld [vmem:[#allocation2 + $0x70] sm:$0xff]
    %v6263 = vld [vmem:[#allocation2 + $0x78] sm:$0xff]
    %v6264 = vld [vmem:[#allocation2 + $0x80] sm:$0xff]
    %v6265 = vld [vmem:[#allocation2 + $0x88] sm:$0xff]
    %v6266 = vld [vmem:[#allocation2 + $0x90] sm:$0xff]
    %v6267 = vld [vmem:[#allocation2 + $0x98] sm:$0xff]
    %v6268 = vld [vmem:[#allocation2 + $0xa0] sm:$0xff]
    %v6269 = vld [vmem:[#allocation2 + $0xa8] sm:$0xff]
    %v6270 = vld [vmem:[#allocation2 + $0xb0] sm:$0xff]
    %v6271 = vld [vmem:[#allocation2 + $0xb8] sm:$0xff]
    %v6272 = vld [vmem:[#allocation2 + $0xc0] sm:$0xff]
    %v6273 = vld [vmem:[#allocation2 + $0xc8] sm:$0xff]
    %v6274 = vld [vmem:[#allocation2 + $0xd0] sm:$0xff]
    %v6275 = vld [vmem:[#allocation2 + $0xd8] sm:$0xff]
    %v6276 = vld [vmem:[#allocation2 + $0xe0] sm:$0xff]
    %v6277 = vld [vmem:[#allocation2 + $0xe8] sm:$0xff]
    %v6278 = vld [vmem:[#allocation2 + $0xf0] sm:$0xff]
    %v6279 = vld [vmem:[#allocation2 + $0xf8] sm:$0xff]
    %v6280 = vld [vmem:[#allocation2 + $0x100] sm:$0xff]
    %v6281 = vld [vmem:[#allocation2 + $0x108] sm:$0xff]
    %v6282 = vld [vmem:[#allocation2 + $0x110] sm:$0xff]
    %v6283 = vld [vmem:[#allocation2 + $0x118] sm:$0xff]
    %v6284 = vld [vmem:[#allocation2 + $0x120] sm:$0xff]
    %v6285 = vld [vmem:[#allocation2 + $0x128] sm:$0xff]
    %v6286 = vld [vmem:[#allocation2 + $0x130] sm:$0xff]
    %v6287 = vld [vmem:[#allocation2 + $0x138] sm:$0xff]
    %v6288 = vld [vmem:[#allocation2 + $0x140] sm:$0xff]
    %v6289 = vld [vmem:[#allocation2 + $0x148] sm:$0xff]
    %v6290 = vld [vmem:[#allocation2 + $0x150] sm:$0xff]
    %v6291 = vld [vmem:[#allocation2 + $0x158] sm:$0xff]
    %v6292 = vld [vmem:[#allocation2 + $0x160] sm:$0xff]
    %v6293 = vld [vmem:[#allocation2 + $0x168] sm:$0xff]
    %v6294 = vld [vmem:[#allocation2 + $0x170] sm:$0xff]
    %v6295 = vld [vmem:[#allocation2 + $0x178] sm:$0xff]
    %v6296 = vld [vmem:[#allocation2 + $0x180] sm:$0xff]
    %v6297 = vld [vmem:[#allocation2 + $0x188] sm:$0xff]
    %v6298 = vld [vmem:[#allocation2 + $0x190] sm:$0xff]
    %v6299 = vld [vmem:[#allocation2 + $0x198] sm:$0xff]
    %v6300 = vld [vmem:[#allocation2 + $0x1a0] sm:$0xff]
    %v6301 = vld [vmem:[#allocation2 + $0x1a8] sm:$0xff]
    %v6302 = vld [vmem:[#allocation2 + $0x1b0] sm:$0xff]
    %v6303 = vld [vmem:[#allocation2 + $0x1b8] sm:$0xff]
    %v6304 = vld [vmem:[#allocation2 + $0x1c0] sm:$0xff]
    %v6305 = vld [vmem:[#allocation2 + $0x1c8] sm:$0xff]
    %v6306 = vld [vmem:[#allocation2 + $0x1d0] sm:$0xff]
    %v6307 = vld [vmem:[#allocation2 + $0x1d8] sm:$0xff]
    %v6308 = vld [vmem:[#allocation2 + $0x1e0] sm:$0xff]
    %v6309 = vld [vmem:[#allocation2 + $0x1e8] sm:$0xff]
    %v6310 = vld [vmem:[#allocation2 + $0x1f0] sm:$0xff]
    %v6311 = vld [vmem:[#allocation2 + $0x1f8] sm:$0xff]
    %v6312 = vld [vmem:[#allocation2 + $0x200] sm:$0xff]
    %v6313 = vld [vmem:[#allocation2 + $0x208] sm:$0xff]
    %v6314 = vld [vmem:[#allocation2 + $0x210] sm:$0xff]
    %v6315 = vld [vmem:[#allocation2 + $0x218] sm:$0xff]
    %v6316 = vld [vmem:[#allocation2 + $0x220] sm:$0xff]
    %v6317 = vld [vmem:[#allocation2 + $0x228] sm:$0xff]
    %v6318 = vld [vmem:[#allocation2 + $0x230] sm:$0xff]
    %v6319 = vld [vmem:[#allocation2 + $0x238] sm:$0xff]
    %v6320 = vld [vmem:[#allocation2 + $0x240] sm:$0xff]
    %v6321 = vld [vmem:[#allocation2 + $0x248] sm:$0xff]
    %v6322 = vld [vmem:[#allocation2 + $0x250] sm:$0xff]
    %v6323 = vld [vmem:[#allocation2 + $0x258] sm:$0xff]
    %v6324 = vld [vmem:[#allocation2 + $0x260] sm:$0xff]
    %v6325 = vld [vmem:[#allocation2 + $0x268] sm:$0xff]
    %v6326 = vld [vmem:[#allocation2 + $0x270] sm:$0xff]
    %v6327 = vld [vmem:[#allocation2 + $0x278] sm:$0xff]
    %v6328 = vld [vmem:[#allocation2 + $0x280] sm:$0xff]
    %v6329 = vld [vmem:[#allocation2 + $0x288] sm:$0xff]
    %v6330 = vld [vmem:[#allocation2 + $0x290] sm:$0xff]
    %v6331 = vld [vmem:[#allocation2 + $0x298] sm:$0xff]
    %v6332 = vld [vmem:[#allocation2 + $0x2a0] sm:$0xff]
    %v6333 = vld [vmem:[#allocation2 + $0x2a8] sm:$0xff]
    %v6334 = vld [vmem:[#allocation2 + $0x2b0] sm:$0xff]
    %v6335 = vld [vmem:[#allocation2 + $0x2b8] sm:$0xff]
    %v6336 = vld [vmem:[#allocation2 + $0x2c0] sm:$0xff]
    %v6337 = vld [vmem:[#allocation2 + $0x2c8] sm:$0xff]
    %v6338 = vld [vmem:[#allocation2 + $0x2d0] sm:$0xff]
    %v6339 = vld [vmem:[#allocation2 + $0x2d8] sm:$0xff]
    %v6340 = vld [vmem:[#allocation2 + $0x2e0] sm:$0xff]
    %v6341 = vld [vmem:[#allocation2 + $0x2e8] sm:$0xff]
    %v6342 = vld [vmem:[#allocation2 + $0x2f0] sm:$0xff]
    %v6343 = vld [vmem:[#allocation2 + $0x2f8] sm:$0xff]
    %v6344 = vld [vmem:[#allocation2 + $0x300] sm:$0xff]
    %v6345 = vld [vmem:[#allocation2 + $0x308] sm:$0xff]
    %v6346 = vld [vmem:[#allocation2 + $0x310] sm:$0xff]
    %v6347 = vld [vmem:[#allocation2 + $0x318] sm:$0xff]
    %v6348 = vld [vmem:[#allocation2 + $0x320] sm:$0xff]
    %v6349 = vld [vmem:[#allocation2 + $0x328] sm:$0xff]
    %v6350 = vld [vmem:[#allocation2 + $0x330] sm:$0xff]
    %v6351 = vld [vmem:[#allocation2 + $0x338] sm:$0xff]
    %v6352 = vld [vmem:[#allocation2 + $0x340] sm:$0xff]
    %v6353 = vld [vmem:[#allocation2 + $0x348] sm:$0xff]
    %v6354 = vld [vmem:[#allocation2 + $0x350] sm:$0xff]
    %v6355 = vld [vmem:[#allocation2 + $0x358] sm:$0xff]
    %v6356 = vld [vmem:[#allocation2 + $0x360] sm:$0xff]
    %v6357 = vld [vmem:[#allocation2 + $0x368] sm:$0xff]
    %v6358 = vld [vmem:[#allocation2 + $0x370] sm:$0xff]
    %v6359 = vld [vmem:[#allocation2 + $0x378] sm:$0xff]
    %v6360 = vld [vmem:[#allocation2 + $0x380] sm:$0xff]
    %v6361 = vld [vmem:[#allocation2 + $0x388] sm:$0xff]
    %v6362 = vld [vmem:[#allocation2 + $0x390] sm:$0xff]
    %v6363 = vld [vmem:[#allocation2 + $0x398] sm:$0xff]
    %v6364 = vld [vmem:[#allocation2 + $0x3a0] sm:$0xff]
    %v6365 = vld [vmem:[#allocation2 + $0x3a8] sm:$0xff]
    %v6366 = vld [vmem:[#allocation2 + $0x3b0] sm:$0xff]
    %v6367 = vld [vmem:[#allocation2 + $0x3b8] sm:$0xff]
    %v6368 = vld [vmem:[#allocation2 + $0x3c0] sm:$0xff]
    %v6369 = vld [vmem:[#allocation2 + $0x3c8] sm:$0xff]
    %v6370 = vld [vmem:[#allocation2 + $0x3d0] sm:$0xff]
    %v6371 = vld [vmem:[#allocation2 + $0x3d8] sm:$0xff]
    %v6372 = vld [vmem:[#allocation2 + $0x3e0] sm:$0xff]
    %v6373 = vld [vmem:[#allocation2 + $0x3e8] sm:$0xff]
    %v6374 = vld [vmem:[#allocation2 + $0x3f0] sm:$0xff]
    %v6375 = vld [vmem:[#allocation2 + $0x3f8] sm:$0xff]
    %v6376 = vld [vmem:[#allocation2 + $0x400] sm:$0xff]
    %v6377 = vld [vmem:[#allocation2 + $0x408] sm:$0xff]
    %v6378 = vld [vmem:[#allocation2 + $0x410] sm:$0xff]
    %v6379 = vld [vmem:[#allocation2 + $0x418] sm:$0xff]
    %v6380 = vld [vmem:[#allocation2 + $0x420] sm:$0xff]
    %v6381 = vld [vmem:[#allocation2 + $0x428] sm:$0xff]
    %v6382 = vld [vmem:[#allocation2 + $0x430] sm:$0xff]
    %v6383 = vld [vmem:[#allocation2 + $0x438] sm:$0xff]
    %v6384 = vld [vmem:[#allocation2 + $0x440] sm:$0xff]
    %v6385 = vld [vmem:[#allocation2 + $0x448] sm:$0xff]
    %v6386 = vld [vmem:[#allocation2 + $0x450] sm:$0xff]
    %v6387 = vld [vmem:[#allocation2 + $0x458] sm:$0xff]
    %v6388 = vld [vmem:[#allocation2 + $0x460] sm:$0xff]
    %v6389 = vld [vmem:[#allocation2 + $0x468] sm:$0xff]
    %v6390 = vld [vmem:[#allocation2 + $0x470] sm:$0xff]
    %v6391 = vld [vmem:[#allocation2 + $0x478] sm:$0xff]
    %v6392 = vld [vmem:[#allocation2 + $0x480] sm:$0xff]
    %v6393 = vld [vmem:[#allocation2 + $0x488] sm:$0xff]
    %v6394 = vld [vmem:[#allocation2 + $0x490] sm:$0xff]
    %v6395 = vld [vmem:[#allocation2 + $0x498] sm:$0xff]
    %v6396 = vld [vmem:[#allocation2 + $0x4a0] sm:$0xff]
    %v6397 = vld [vmem:[#allocation2 + $0x4a8] sm:$0xff]
    %v6398 = vld [vmem:[#allocation2 + $0x4b0] sm:$0xff]
    %v6399 = vld [vmem:[#allocation2 + $0x4b8] sm:$0xff]
    %v6400 = vld [vmem:[#allocation2 + $0x4c0] sm:$0xff]
    %v6401 = vld [vmem:[#allocation2 + $0x4c8] sm:$0xff]
    %v6402 = vld [vmem:[#allocation2 + $0x4d0] sm:$0xff]
    %v6403 = vld [vmem:[#allocation2 + $0x4d8] sm:$0xff]
    %v6404 = vld [vmem:[#allocation2 + $0x4e0] sm:$0xff]
    %v6405 = vld [vmem:[#allocation2 + $0x4e8] sm:$0xff]
    %v6406 = vld [vmem:[#allocation2 + $0x4f0] sm:$0xff]
    %v6407 = vld [vmem:[#allocation2 + $0x4f8] sm:$0xff]
    %v6408 = vld [vmem:[#allocation2 + $0x500] sm:$0xff]
    %v6409 = vld [vmem:[#allocation2 + $0x508] sm:$0xff]
    %v6410 = vld [vmem:[#allocation2 + $0x510] sm:$0xff]
    %v6411 = vld [vmem:[#allocation2 + $0x518] sm:$0xff]
    %v6412 = vld [vmem:[#allocation2 + $0x520] sm:$0xff]
    %v6413 = vld [vmem:[#allocation2 + $0x528] sm:$0xff]
    %v6414 = vld [vmem:[#allocation2 + $0x530] sm:$0xff]
    %v6415 = vld [vmem:[#allocation2 + $0x538] sm:$0xff]
    %v6416 = vld [vmem:[#allocation2 + $0x540] sm:$0xff]
    %v6417 = vld [vmem:[#allocation2 + $0x548] sm:$0xff]
    %v6418 = vld [vmem:[#allocation2 + $0x550] sm:$0xff]
    %v6419 = vld [vmem:[#allocation2 + $0x558] sm:$0xff]
    %v6420 = vld [vmem:[#allocation2 + $0x560] sm:$0xff]
    %v6421 = vld [vmem:[#allocation2 + $0x568] sm:$0xff]
    %v6422 = vld [vmem:[#allocation2 + $0x570] sm:$0xff]
    %v6423 = vld [vmem:[#allocation2 + $0x578] sm:$0xff]
    %v6424 = vld [vmem:[#allocation2 + $0x580] sm:$0xff]
    %v6425 = vld [vmem:[#allocation2 + $0x588] sm:$0xff]
    %v6426 = vld [vmem:[#allocation2 + $0x590] sm:$0xff]
    %v6427 = vld [vmem:[#allocation2 + $0x598] sm:$0xff]
    %v6428 = vld [vmem:[#allocation2 + $0x5a0] sm:$0xff]
    %v6429 = vld [vmem:[#allocation2 + $0x5a8] sm:$0xff]
    %v6430 = vld [vmem:[#allocation2 + $0x5b0] sm:$0xff]
    %v6431 = vld [vmem:[#allocation2 + $0x5b8] sm:$0xff]
    %v6432 = vld [vmem:[#allocation2 + $0x5c0] sm:$0xff]
    %v6433 = vld [vmem:[#allocation2 + $0x5c8] sm:$0xff]
    %v6434 = vld [vmem:[#allocation2 + $0x5d0] sm:$0xff]
    %v6435 = vld [vmem:[#allocation2 + $0x5d8] sm:$0xff]
    %v6436 = vld [vmem:[#allocation2 + $0x5e0] sm:$0xff]
    %v6437 = vld [vmem:[#allocation2 + $0x5e8] sm:$0xff]
    %v6438 = vld [vmem:[#allocation2 + $0x5f0] sm:$0xff]
    %v6439 = vld [vmem:[#allocation2 + $0x5f8] sm:$0xff]
    %v6440 = vld [vmem:[#allocation2 + $0x600] sm:$0xff]
    %v6441 = vld [vmem:[#allocation2 + $0x608] sm:$0xff]
    %v6442 = vld [vmem:[#allocation2 + $0x610] sm:$0xff]
    %v6443 = vld [vmem:[#allocation2 + $0x618] sm:$0xff]
    %v6444 = vld [vmem:[#allocation2 + $0x620] sm:$0xff]
    %v6445 = vld [vmem:[#allocation2 + $0x628] sm:$0xff]
    %v6446 = vld [vmem:[#allocation2 + $0x630] sm:$0xff]
    %v6447 = vld [vmem:[#allocation2 + $0x638] sm:$0xff]
    %v6448 = vld [vmem:[#allocation2 + $0x640] sm:$0xff]
    %v6449 = vld [vmem:[#allocation2 + $0x648] sm:$0xff]
    %v6450 = vld [vmem:[#allocation2 + $0x650] sm:$0xff]
    %v6451 = vld [vmem:[#allocation2 + $0x658] sm:$0xff]
    %v6452 = vld [vmem:[#allocation2 + $0x660] sm:$0xff]
    %v6453 = vld [vmem:[#allocation2 + $0x668] sm:$0xff]
    %v6454 = vld [vmem:[#allocation2 + $0x670] sm:$0xff]
    %v6455 = vld [vmem:[#allocation2 + $0x678] sm:$0xff]
    %v6456 = vld [vmem:[#allocation2 + $0x680] sm:$0xff]
    %v6457 = vld [vmem:[#allocation2 + $0x688] sm:$0xff]
    %v6458 = vld [vmem:[#allocation2 + $0x690] sm:$0xff]
    %v6459 = vld [vmem:[#allocation2 + $0x698] sm:$0xff]
    %v6460 = vld [vmem:[#allocation2 + $0x6a0] sm:$0xff]
    %v6461 = vld [vmem:[#allocation2 + $0x6a8] sm:$0xff]
    %v6462 = vld [vmem:[#allocation2 + $0x6b0] sm:$0xff]
    %v6463 = vld [vmem:[#allocation2 + $0x6b8] sm:$0xff]
    %v6464 = vld [vmem:[#allocation2 + $0x6c0] sm:$0xff]
    %v6465 = vld [vmem:[#allocation2 + $0x6c8] sm:$0xff]
    %v6466 = vld [vmem:[#allocation2 + $0x6d0] sm:$0xff]
    %v6467 = vld [vmem:[#allocation2 + $0x6d8] sm:$0xff]
    %v6468 = vld [vmem:[#allocation2 + $0x6e0] sm:$0xff]
    %v6469 = vld [vmem:[#allocation2 + $0x6e8] sm:$0xff]
    %v6470 = vld [vmem:[#allocation2 + $0x6f0] sm:$0xff]
    %v6471 = vld [vmem:[#allocation2 + $0x6f8] sm:$0xff]
    %v6472 = vld [vmem:[#allocation2 + $0x700] sm:$0xff]
    %v6473 = vld [vmem:[#allocation2 + $0x708] sm:$0xff]
    %v6474 = vld [vmem:[#allocation2 + $0x710] sm:$0xff]
    %v6475 = vld [vmem:[#allocation2 + $0x718] sm:$0xff]
    %v6476 = vld [vmem:[#allocation2 + $0x720] sm:$0xff]
    %v6477 = vld [vmem:[#allocation2 + $0x728] sm:$0xff]
    %v6478 = vld [vmem:[#allocation2 + $0x730] sm:$0xff]
    %v6479 = vld [vmem:[#allocation2 + $0x738] sm:$0xff]
    %v6480 = vld [vmem:[#allocation2 + $0x740] sm:$0xff]
    %v6481 = vld [vmem:[#allocation2 + $0x748] sm:$0xff]
    %v6482 = vld [vmem:[#allocation2 + $0x750] sm:$0xff]
    %v6483 = vld [vmem:[#allocation2 + $0x758] sm:$0xff]
    %v6484 = vld [vmem:[#allocation2 + $0x760] sm:$0xff]
    %v6485 = vld [vmem:[#allocation2 + $0x768] sm:$0xff]
    %v6486 = vld [vmem:[#allocation2 + $0x770] sm:$0xff]
    %v6487 = vld [vmem:[#allocation2 + $0x778] sm:$0xff]
    %v6488 = vld [vmem:[#allocation2 + $0x780] sm:$0xff]
    %v6489 = vld [vmem:[#allocation2 + $0x788] sm:$0xff]
    %v6490 = vld [vmem:[#allocation2 + $0x790] sm:$0xff]
    %v6491 = vld [vmem:[#allocation2 + $0x798] sm:$0xff]
    %v6492 = vld [vmem:[#allocation2 + $0x7a0] sm:$0xff]
    %v6493 = vld [vmem:[#allocation2 + $0x7a8] sm:$0xff]
    %v6494 = vld [vmem:[#allocation2 + $0x7b0] sm:$0xff]
    %v6495 = vld [vmem:[#allocation2 + $0x7b8] sm:$0xff]
    %v6496 = vld [vmem:[#allocation2 + $0x7c0] sm:$0xff]
    %v6497 = vld [vmem:[#allocation2 + $0x7c8] sm:$0xff]
    %v6498 = vld [vmem:[#allocation2 + $0x7d0] sm:$0xff]
    %v6499 = vld [vmem:[#allocation2 + $0x7d8] sm:$0xff]
    %v6500 = vld [vmem:[#allocation2 + $0x7e0] sm:$0xff]
    %v6501 = vld [vmem:[#allocation2 + $0x7e8] sm:$0xff]
    %v6502 = vld [vmem:[#allocation2 + $0x7f0] sm:$0xff]
    %v6503 = vld [vmem:[#allocation2 + $0x7f8] sm:$0xff]
    %v6504 = vld [vmem:[#allocation2 + $0x800] sm:$0xff]
    %v6505 = vld [vmem:[#allocation2 + $0x808] sm:$0xff]
    %v6506 = vld [vmem:[#allocation2 + $0x810] sm:$0xff]
    %v6507 = vld [vmem:[#allocation2 + $0x818] sm:$0xff]
    %v6508 = vld [vmem:[#allocation2 + $0x820] sm:$0xff]
    %v6509 = vld [vmem:[#allocation2 + $0x828] sm:$0xff]
    %v6510 = vld [vmem:[#allocation2 + $0x830] sm:$0xff]
    %v6511 = vld [vmem:[#allocation2 + $0x838] sm:$0xff]
    %v6512 = vld [vmem:[#allocation2 + $0x840] sm:$0xff]
    %v6513 = vld [vmem:[#allocation2 + $0x848] sm:$0xff]
    %v6514 = vld [vmem:[#allocation2 + $0x850] sm:$0xff]
    %v6515 = vld [vmem:[#allocation2 + $0x858] sm:$0xff]
    %v6516 = vld [vmem:[#allocation2 + $0x860] sm:$0xff]
    %v6517 = vld [vmem:[#allocation2 + $0x868] sm:$0xff]
    %v6518 = vld [vmem:[#allocation2 + $0x870] sm:$0xff]
    %v6519 = vld [vmem:[#allocation2 + $0x878] sm:$0xff]
    %v6520 = vld [vmem:[#allocation2 + $0x880] sm:$0xff]
    %v6521 = vld [vmem:[#allocation2 + $0x888] sm:$0xff]
    %v6522 = vld [vmem:[#allocation2 + $0x890] sm:$0xff]
    %v6523 = vld [vmem:[#allocation2 + $0x898] sm:$0xff]
    %v6524 = vld [vmem:[#allocation2 + $0x8a0] sm:$0xff]
    %v6525 = vld [vmem:[#allocation2 + $0x8a8] sm:$0xff]
    %v6526 = vld [vmem:[#allocation2 + $0x8b0] sm:$0xff]
    %v6527 = vld [vmem:[#allocation2 + $0x8b8] sm:$0xff]
    %v6528 = vld [vmem:[#allocation2 + $0x8c0] sm:$0xff]
    %v6529 = vld [vmem:[#allocation2 + $0x8c8] sm:$0xff]
    %v6530 = vld [vmem:[#allocation2 + $0x8d0] sm:$0xff]
    %v6531 = vld [vmem:[#allocation2 + $0x8d8] sm:$0xff]
    %v6532 = vld [vmem:[#allocation2 + $0x8e0] sm:$0xff]
    %v6533 = vld [vmem:[#allocation2 + $0x8e8] sm:$0xff]
    %v6534 = vld [vmem:[#allocation2 + $0x8f0] sm:$0xff]
    %v6535 = vld [vmem:[#allocation2 + $0x8f8] sm:$0xff]
    %v6536 = vld [vmem:[#allocation2 + $0x900] sm:$0xff]
    %v6537 = vld [vmem:[#allocation2 + $0x908] sm:$0xff]
    %v6538 = vld [vmem:[#allocation2 + $0x910] sm:$0xff]
    %v6539 = vld [vmem:[#allocation2 + $0x918] sm:$0xff]
    %v6540 = vld [vmem:[#allocation2 + $0x920] sm:$0xff]
    %v6541 = vld [vmem:[#allocation2 + $0x928] sm:$0xff]
    %v6542 = vld [vmem:[#allocation2 + $0x930] sm:$0xff]
    %v6543 = vld [vmem:[#allocation2 + $0x938] sm:$0xff]
    %v6544 = vld [vmem:[#allocation2 + $0x940] sm:$0xff]
    %v6545 = vld [vmem:[#allocation2 + $0x948] sm:$0xff]
    %v6546 = vld [vmem:[#allocation2 + $0x950] sm:$0xff]
    %v6547 = vld [vmem:[#allocation2 + $0x958] sm:$0xff]
    %v6548 = vld [vmem:[#allocation2 + $0x960] sm:$0xff]
    %v6549 = vld [vmem:[#allocation2 + $0x968] sm:$0xff]
    %v6550 = vld [vmem:[#allocation2 + $0x970] sm:$0xff]
    %v6551 = vld [vmem:[#allocation2 + $0x978] sm:$0xff]
    %v6552 = vld [vmem:[#allocation2 + $0x980] sm:$0xff]
    %v6553 = vld [vmem:[#allocation2 + $0x988] sm:$0xff]
    %v6554 = vld [vmem:[#allocation2 + $0x990] sm:$0xff]
    %v6555 = vld [vmem:[#allocation2 + $0x998] sm:$0xff]
    %v6556 = vld [vmem:[#allocation2 + $0x9a0] sm:$0xff]
    %v6557 = vld [vmem:[#allocation2 + $0x9a8] sm:$0xff]
    %v6558 = vld [vmem:[#allocation2 + $0x9b0] sm:$0xff]
    %v6559 = vld [vmem:[#allocation2 + $0x9b8] sm:$0xff]
    %v6560 = vld [vmem:[#allocation2 + $0x9c0] sm:$0xff]
    %v6561 = vld [vmem:[#allocation2 + $0x9c8] sm:$0xff]
    %v6562 = vld [vmem:[#allocation2 + $0x9d0] sm:$0xff]
    %v6563 = vld [vmem:[#allocation2 + $0x9d8] sm:$0xff]
    %v6564 = vld [vmem:[#allocation2 + $0x9e0] sm:$0xff]
    %v6565 = vld [vmem:[#allocation2 + $0x9e8] sm:$0xff]
    %v6566 = vld [vmem:[#allocation2 + $0x9f0] sm:$0xff]
    %v6567 = vld [vmem:[#allocation2 + $0x9f8] sm:$0xff]
    %v6568 = vld [vmem:[#allocation2 + $0xa00] sm:$0xff]
    %v6569 = vld [vmem:[#allocation2 + $0xa08] sm:$0xff]
    %v6570 = vld [vmem:[#allocation2 + $0xa10] sm:$0xff]
    %v6571 = vld [vmem:[#allocation2 + $0xa18] sm:$0xff]
    %v6572 = vld [vmem:[#allocation2 + $0xa20] sm:$0xff]
    %v6573 = vld [vmem:[#allocation2 + $0xa28] sm:$0xff]
    %v6574 = vld [vmem:[#allocation2 + $0xa30] sm:$0xff]
    %v6575 = vld [vmem:[#allocation2 + $0xa38] sm:$0xff]
    %v6576 = vld [vmem:[#allocation2 + $0xa40] sm:$0xff]
    %v6577 = vld [vmem:[#allocation2 + $0xa48] sm:$0xff]
    %v6578 = vld [vmem:[#allocation2 + $0xa50] sm:$0xff]
    %v6579 = vld [vmem:[#allocation2 + $0xa58] sm:$0xff]
    %v6580 = vld [vmem:[#allocation2 + $0xa60] sm:$0xff]
    %v6581 = vld [vmem:[#allocation2 + $0xa68] sm:$0xff]
    %v6582 = vld [vmem:[#allocation2 + $0xa70] sm:$0xff]
    %v6583 = vld [vmem:[#allocation2 + $0xa78] sm:$0xff]
    %v6584 = vld [vmem:[#allocation2 + $0xa80] sm:$0xff]
    %v6585 = vld [vmem:[#allocation2 + $0xa88] sm:$0xff]
    %v6586 = vld [vmem:[#allocation2 + $0xa90] sm:$0xff]
    %v6587 = vld [vmem:[#allocation2 + $0xa98] sm:$0xff]
    %v6588 = vld [vmem:[#allocation2 + $0xaa0] sm:$0xff]
    %v6589 = vld [vmem:[#allocation2 + $0xaa8] sm:$0xff]
    %v6590 = vld [vmem:[#allocation2 + $0xab0] sm:$0xff]
    %v6591 = vld [vmem:[%s5] sm:$0xff]
    %6593 = vset.pattern.permute.xlu0 3
    %6594 = vperm.xlu0 %6593, %v6591
    %v6595 = vpop.permute.xlu0 %6594
    %v6598 = vsel %vm3028, %v6247, 0
    %6600 = vmatprep.subr.mxu0 %v6249
    %6601 = vmatpush1.msra.mxu0 %v6248
    %6602 = vmatprep.subr.mxu0 %v6256
    %6603 = vmatpush1.msra.mxu0 %v6255
    %6604 = vmatprep.subr.mxu0 %v6263
    %6605 = vmatpush1.msra.mxu0 %v6262
    %6606 = vmatprep.subr.mxu0 %v6270
    %6607 = vmatpush1.msra.mxu0 %v6269
    %6608 = vmatprep.subr.mxu0 %v6277
    %6609 = vmatpush1.msra.mxu0 %v6276
    %6610 = vmatprep.subr.mxu0 %v6284
    %6611 = vmatpush1.msra.mxu0 %v6283
    %6612 = vmatprep.subr.mxu0 %v6291
    %6613 = vmatpush1.msra.mxu0 %v6290
    %6614 = vmatprep.subr.mxu0 %v6298
    %6615 = vmatpush1.msra.mxu0 %v6297
    %6616 = vmatprep.subr.mxu0 %v6305
    %6617 = vmatpush1.msra.mxu0 %v6304
    %6618 = vmatprep.subr.mxu0 %v6312
    %6619 = vmatpush1.msra.mxu0 %v6311
    %6620 = vmatprep.subr.mxu0 %v6319
    %6621 = vmatpush1.msra.mxu0 %v6318
    %6622 = vmatprep.subr.mxu0 %v6326
    %6623 = vmatpush1.msra.mxu0 %v6325
    %6624 = vmatprep.subr.mxu0 %v6333
    %6625 = vmatpush1.msra.mxu0 %v6332
    %6626 = vmatprep.subr.mxu0 %v6340
    %6627 = vmatpush1.msra.mxu0 %v6339
    %6628 = vmatprep.subr.mxu0 %v6347
    %6629 = vmatpush1.msra.mxu0 %v6346
    %6630 = vmatprep.subr.mxu0 %v6354
    %6631 = vmatpush1.msra.mxu0 %v6353
    %6632 = vmatprep.subr.mxu0 %v6361
    %6633 = vmatpush1.msra.mxu0 %v6360
    %6634 = vmatprep.subr.mxu0 %v6368
    %6635 = vmatpush1.msra.mxu0 %v6367
    %6636 = vmatprep.subr.mxu0 %v6375
    %6637 = vmatpush1.msra.mxu0 %v6374
    %6638 = vmatprep.subr.mxu0 %v6382
    %6639 = vmatpush1.msra.mxu0 %v6381
    %6640 = vmatprep.subr.mxu0 %v6389
    %6641 = vmatpush1.msra.mxu0 %v6388
    %6642 = vmatprep.subr.mxu0 %v6396
    %6643 = vmatpush1.msra.mxu0 %v6395
    %6644 = vmatprep.subr.mxu0 %v6403
    %6645 = vmatpush1.msra.mxu0 %v6402
    %6646 = vmatprep.subr.mxu0 %v6410
    %6647 = vmatpush1.msra.mxu0 %v6409
    %6648 = vmatprep.subr.mxu0 %v6417
    %6649 = vmatpush1.msra.mxu0 %v6416
    %6650 = vmatprep.subr.mxu0 %v6424
    %6651 = vmatpush1.msra.mxu0 %v6423
    %6652 = vmatprep.subr.mxu0 %v6431
    %6653 = vmatpush1.msra.mxu0 %v6430
    %6654 = vmatprep.subr.mxu0 %v6438
    %6655 = vmatpush1.msra.mxu0 %v6437
    %6656 = vmatprep.subr.mxu0 %v6445
    %6657 = vmatpush1.msra.mxu0 %v6444
    %6658 = vmatprep.subr.mxu0 %v6452
    %6659 = vmatpush1.msra.mxu0 %v6451
    %6660 = vmatprep.subr.mxu0 %v6459
    %6661 = vmatpush1.msra.mxu0 %v6458
    %6662 = vmatprep.subr.mxu0 %v6466
    %6663 = vmatpush1.msra.mxu0 %v6465
    %6664 = vmatprep.mubr.f32.mxu0 %v6245
    %6665 = vmatmul.mubr.f32.gmra.mrb[0].mxu0 %v6244
    %v6666 = vpop.f32.mrb[0].mxu0
    %v6667 = vadd.f32 %v6595, %v6666
    %v6668 = vpop.f32.mrb[0].mxu0
    %v6669 = vadd.f32 %v6595, %v6668
    %6670 = vdwg.mxu0
    %6671 = vmatprep.subr.mxu0 %v6473
    %6672 = vmatpush1.msra.mxu0 %v6472
    %6673 = vmatprep.subr.mxu0 %v6480
    %6674 = vmatpush1.msra.mxu0 %v6479
    %6675 = vmatprep.subr.mxu0 %v6487
    %6676 = vmatpush1.msra.mxu0 %v6486
    %6677 = vmatprep.subr.mxu0 %v6494
    %6678 = vmatpush1.msra.mxu0 %v6493
    %6679 = vmatprep.subr.mxu0 %v6501
    %6680 = vmatpush1.msra.mxu0 %v6500
    %6681 = vmatprep.subr.mxu0 %v6508
    %6682 = vmatpush1.msra.mxu0 %v6507
    %6683 = vmatprep.subr.mxu0 %v6515
    %6684 = vmatpush1.msra.mxu0 %v6514
    %6685 = vmatprep.subr.mxu0 %v6522
    %6686 = vmatpush1.msra.mxu0 %v6521
    %6687 = vmatprep.subr.mxu0 %v6529
    %6688 = vmatpush1.msra.mxu0 %v6528
    %6689 = vmatprep.subr.mxu0 %v6536
    %6690 = vmatpush1.msra.mxu0 %v6535
    %6691 = vmatprep.subr.mxu0 %v6543
    %6692 = vmatpush1.msra.mxu0 %v6542
    %6693 = vmatprep.subr.mxu0 %v6550
    %6694 = vmatpush1.msra.mxu0 %v6549
    %6695 = vmatprep.subr.mxu0 %v6557
    %6696 = vmatpush1.msra.mxu0 %v6556
    %6697 = vmatprep.subr.mxu0 %v6564
    %6698 = vmatpush1.msra.mxu0 %v6563
    %6699 = vmatprep.subr.mxu0 %v6571
    %6700 = vmatpush1.msra.mxu0 %v6570
    %6701 = vmatprep.subr.mxu0 %v6578
    %6702 = vmatpush1.msra.mxu0 %v6577
    %6703 = vmatprep.subr.mxu0 %v6585
    %6704 = vmatpush1.msra.mxu0 %v6584
    %6705 = vmatprep.subr.mxu0 0.0
    %6706 = vmatpush1.msra.mxu0 0.0
    %6707 = vmatprep.subr.mxu0 0.0
    %6708 = vmatpush1.msra.mxu0 0.0
    %6709 = vmatprep.subr.mxu0 0.0
    %6710 = vmatpush1.msra.mxu0 0.0
    %6711 = vmatprep.subr.mxu0 0.0
    %6712 = vmatpush1.msra.mxu0 0.0
    %6713 = vmatprep.subr.mxu0 0.0
    %6714 = vmatpush1.msra.mxu0 0.0
    %6715 = vmatprep.subr.mxu0 0.0
    %6716 = vmatpush1.msra.mxu0 0.0
    %6717 = vmatprep.subr.mxu0 0.0
    %6718 = vmatpush1.msra.mxu0 0.0
    %6719 = vmatprep.subr.mxu0 0.0
    %6720 = vmatpush1.msra.mxu0 0.0
    %6721 = vmatprep.subr.mxu0 0.0
    %6722 = vmatpush1.msra.mxu0 0.0
    %6723 = vmatprep.subr.mxu0 0.0
    %6724 = vmatpush1.msra.mxu0 0.0
    %6725 = vmatprep.subr.mxu0 0.0
    %6726 = vmatpush1.msra.mxu0 0.0
    %6727 = vmatprep.subr.mxu0 0.0
    %6728 = vmatpush1.msra.mxu0 0.0
    %6729 = vmatprep.subr.mxu0 0.0
    %6730 = vmatpush1.msra.mxu0 0.0
    %6731 = vmatprep.subr.mxu0 0.0
    %6732 = vmatpush1.msra.mxu0 0.0
    %6733 = vmatprep.subr.mxu0 0.0
    %6734 = vmatpush1.msra.mxu0 0.0
    %6735 = vmatprep.mubr.f32.mxu0 %v6598
    %6736 = vmatmul.mubr.f32.gmra.mrb[0].mxu0 %v6246
    %v6737 = vpop.f32.mrb[0].mxu0
    %v6738 = vadd.f32 %v6667, %v6737
    %v6739 = vpop.f32.mrb[0].mxu0
    %v6740 = vadd.f32 %v6669, %v6739
    %6741 = vdwg.mxu0
    %6742 = vmatprep.subr.mxu0 %v6251
    %6743 = vmatpush1.msra.mxu0 %v6250
    %6744 = vmatprep.subr.mxu0 %v6258
    %6745 = vmatpush1.msra.mxu0 %v6257
    %6746 = vmatprep.subr.mxu0 %v6265
    %6747 = vmatpush1.msra.mxu0 %v6264
    %6748 = vmatprep.subr.mxu0 %v6272
    %6749 = vmatpush1.msra.mxu0 %v6271
    %6750 = vmatprep.subr.mxu0 %v6279
    %6751 = vmatpush1.msra.mxu0 %v6278
    %6752 = vmatprep.subr.mxu0 %v6286
    %6753 = vmatpush1.msra.mxu0 %v6285
    %6754 = vmatprep.subr.mxu0 %v6293
    %6755 = vmatpush1.msra.mxu0 %v6292
    %6756 = vmatprep.subr.mxu0 %v6300
    %6757 = vmatpush1.msra.mxu0 %v6299
    %6758 = vmatprep.subr.mxu0 %v6307
    %6759 = vmatpush1.msra.mxu0 %v6306
    %6760 = vmatprep.subr.mxu0 %v6314
    %6761 = vmatpush1.msra.mxu0 %v6313
    %6762 = vmatprep.subr.mxu0 %v6321
    %6763 = vmatpush1.msra.mxu0 %v6320
    %6764 = vmatprep.subr.mxu0 %v6328
    %6765 = vmatpush1.msra.mxu0 %v6327
    %6766 = vmatprep.subr.mxu0 %v6335
    %6767 = vmatpush1.msra.mxu0 %v6334
    %6768 = vmatprep.subr.mxu0 %v6342
    %6769 = vmatpush1.msra.mxu0 %v6341
    %6770 = vmatprep.subr.mxu0 %v6349
    %6771 = vmatpush1.msra.mxu0 %v6348
    %6772 = vmatprep.subr.mxu0 %v6356
    %6773 = vmatpush1.msra.mxu0 %v6355
    %6774 = vmatprep.subr.mxu0 %v6363
    %6775 = vmatpush1.msra.mxu0 %v6362
    %6776 = vmatprep.subr.mxu0 %v6370
    %6777 = vmatpush1.msra.mxu0 %v6369
    %6778 = vmatprep.subr.mxu0 %v6377
    %6779 = vmatpush1.msra.mxu0 %v6376
    %6780 = vmatprep.subr.mxu0 %v6384
    %6781 = vmatpush1.msra.mxu0 %v6383
    %6782 = vmatprep.subr.mxu0 %v6391
    %6783 = vmatpush1.msra.mxu0 %v6390
    %6784 = vmatprep.subr.mxu0 %v6398
    %6785 = vmatpush1.msra.mxu0 %v6397
    %6786 = vmatprep.subr.mxu0 %v6405
    %6787 = vmatpush1.msra.mxu0 %v6404
    %6788 = vmatprep.subr.mxu0 %v6412
    %6789 = vmatpush1.msra.mxu0 %v6411
    %6790 = vmatprep.subr.mxu0 %v6419
    %6791 = vmatpush1.msra.mxu0 %v6418
    %6792 = vmatprep.subr.mxu0 %v6426
    %6793 = vmatpush1.msra.mxu0 %v6425
    %6794 = vmatprep.subr.mxu0 %v6433
    %6795 = vmatpush1.msra.mxu0 %v6432
    %6796 = vmatprep.subr.mxu0 %v6440
    %6797 = vmatpush1.msra.mxu0 %v6439
    %6798 = vmatprep.subr.mxu0 %v6447
    %6799 = vmatpush1.msra.mxu0 %v6446
    %6800 = vmatprep.subr.mxu0 %v6454
    %6801 = vmatpush1.msra.mxu0 %v6453
    %6802 = vmatprep.subr.mxu0 %v6461
    %6803 = vmatpush1.msra.mxu0 %v6460
    %6804 = vmatprep.subr.mxu0 %v6468
    %6805 = vmatpush1.msra.mxu0 %v6467
    %6806 = vmatprep.mubr.f32.mxu0 %v6245
    %6807 = vmatmul.mubr.f32.gmra.mrb[0].mxu0 %v6244
    %v6808 = vpop.f32.mrb[0].mxu0
    %v6809 = vadd.f32 %v6595, %v6808
    %v6810 = vpop.f32.mrb[0].mxu0
    %v6811 = vadd.f32 %v6595, %v6810
    %6812 = vdwg.mxu0
    %6813 = vmatprep.subr.mxu0 %v6475
    %6814 = vmatpush1.msra.mxu0 %v6474
    %6815 = vmatprep.subr.mxu0 %v6482
    %6816 = vmatpush1.msra.mxu0 %v6481
    %6817 = vmatprep.subr.mxu0 %v6489
    %6818 = vmatpush1.msra.mxu0 %v6488
    %6819 = vmatprep.subr.mxu0 %v6496
    %6820 = vmatpush1.msra.mxu0 %v6495
    %6821 = vmatprep.subr.mxu0 %v6503
    %6822 = vmatpush1.msra.mxu0 %v6502
    %6823 = vmatprep.subr.mxu0 %v6510
    %6824 = vmatpush1.msra.mxu0 %v6509
    %6825 = vmatprep.subr.mxu0 %v6517
    %6826 = vmatpush1.msra.mxu0 %v6516
    %6827 = vmatprep.subr.mxu0 %v6524
    %6828 = vmatpush1.msra.mxu0 %v6523
    %6829 = vmatprep.subr.mxu0 %v6531
    %6830 = vmatpush1.msra.mxu0 %v6530
    %6831 = vmatprep.subr.mxu0 %v6538
    %6832 = vmatpush1.msra.mxu0 %v6537
    %6833 = vmatprep.subr.mxu0 %v6545
    %6834 = vmatpush1.msra.mxu0 %v6544
    %6835 = vmatprep.subr.mxu0 %v6552
    %6836 = vmatpush1.msra.mxu0 %v6551
    %6837 = vmatprep.subr.mxu0 %v6559
    %6838 = vmatpush1.msra.mxu0 %v6558
    %6839 = vmatprep.subr.mxu0 %v6566
    %6840 = vmatpush1.msra.mxu0 %v6565
    %6841 = vmatprep.subr.mxu0 %v6573
    %6842 = vmatpush1.msra.mxu0 %v6572
    %6843 = vmatprep.subr.mxu0 %v6580
    %6844 = vmatpush1.msra.mxu0 %v6579
    %6845 = vmatprep.subr.mxu0 %v6587
    %6846 = vmatpush1.msra.mxu0 %v6586
    %6847 = vmatprep.subr.mxu0 0.0
    %6848 = vmatpush1.msra.mxu0 0.0
    %6849 = vmatprep.subr.mxu0 0.0
    %6850 = vmatpush1.msra.mxu0 0.0
    %6851 = vmatprep.subr.mxu0 0.0
    %6852 = vmatpush1.msra.mxu0 0.0
    %6853 = vmatprep.subr.mxu0 0.0
    %6854 = vmatpush1.msra.mxu0 0.0
    %6855 = vmatprep.subr.mxu0 0.0
    %6856 = vmatpush1.msra.mxu0 0.0
    %6857 = vmatprep.subr.mxu0 0.0
    %6858 = vmatpush1.msra.mxu0 0.0
    %6859 = vmatprep.subr.mxu0 0.0
    %6860 = vmatpush1.msra.mxu0 0.0
    %6861 = vmatprep.subr.mxu0 0.0
    %6862 = vmatpush1.msra.mxu0 0.0
    %6863 = vmatprep.subr.mxu0 0.0
    %6864 = vmatpush1.msra.mxu0 0.0
    %6865 = vmatprep.subr.mxu0 0.0
    %6866 = vmatpush1.msra.mxu0 0.0
    %6867 = vmatprep.subr.mxu0 0.0
    %6868 = vmatpush1.msra.mxu0 0.0
    %6869 = vmatprep.subr.mxu0 0.0
    %6870 = vmatpush1.msra.mxu0 0.0
    %6871 = vmatprep.subr.mxu0 0.0
    %6872 = vmatpush1.msra.mxu0 0.0
    %6873 = vmatprep.subr.mxu0 0.0
    %6874 = vmatpush1.msra.mxu0 0.0
    %6875 = vmatprep.subr.mxu0 0.0
    %6876 = vmatpush1.msra.mxu0 0.0
    %6877 = vmatprep.mubr.f32.mxu0 %v6598
    %6878 = vmatmul.mubr.f32.gmra.mrb[0].mxu0 %v6246
    %v6879 = vpop.f32.mrb[0].mxu0
    %v6880 = vadd.f32 %v6809, %v6879
    %v6881 = vpop.f32.mrb[0].mxu0
    %v6882 = vadd.f32 %v6811, %v6881
    %6883 = vdwg.mxu0
    %6884 = vmatprep.subr.mxu0 %v6253
    %6885 = vmatpush1.msra.mxu0 %v6252
    %6886 = vmatprep.subr.mxu0 %v6260
    %6887 = vmatpush1.msra.mxu0 %v6259
    %6888 = vmatprep.subr.mxu0 %v6267
    %6889 = vmatpush1.msra.mxu0 %v6266
    %6890 = vmatprep.subr.mxu0 %v6274
    %6891 = vmatpush1.msra.mxu0 %v6273
    %6892 = vmatprep.subr.mxu0 %v6281
    %6893 = vmatpush1.msra.mxu0 %v6280
    %6894 = vmatprep.subr.mxu0 %v6288
    %6895 = vmatpush1.msra.mxu0 %v6287
    %6896 = vmatprep.subr.mxu0 %v6295
    %6897 = vmatpush1.msra.mxu0 %v6294
    %6898 = vmatprep.subr.mxu0 %v6302
    %6899 = vmatpush1.msra.mxu0 %v6301
    %6900 = vmatprep.subr.mxu0 %v6309
    %6901 = vmatpush1.msra.mxu0 %v6308
    %6902 = vmatprep.subr.mxu0 %v6316
    %6903 = vmatpush1.msra.mxu0 %v6315
    %6904 = vmatprep.subr.mxu0 %v6323
    %6905 = vmatpush1.msra.mxu0 %v6322
    %6906 = vmatprep.subr.mxu0 %v6330
    %6907 = vmatpush1.msra.mxu0 %v6329
    %6908 = vmatprep.subr.mxu0 %v6337
    %6909 = vmatpush1.msra.mxu0 %v6336
    %6910 = vmatprep.subr.mxu0 %v6344
    %6911 = vmatpush1.msra.mxu0 %v6343
    %6912 = vmatprep.subr.mxu0 %v6351
    %6913 = vmatpush1.msra.mxu0 %v6350
    %6914 = vmatprep.subr.mxu0 %v6358
    %6915 = vmatpush1.msra.mxu0 %v6357
    %6916 = vmatprep.subr.mxu0 %v6365
    %6917 = vmatpush1.msra.mxu0 %v6364
    %6918 = vmatprep.subr.mxu0 %v6372
    %6919 = vmatpush1.msra.mxu0 %v6371
    %6920 = vmatprep.subr.mxu0 %v6379
    %6921 = vmatpush1.msra.mxu0 %v6378
    %6922 = vmatprep.subr.mxu0 %v6386
    %6923 = vmatpush1.msra.mxu0 %v6385
    %6924 = vmatprep.subr.mxu0 %v6393
    %6925 = vmatpush1.msra.mxu0 %v6392
    %6926 = vmatprep.subr.mxu0 %v6400
    %6927 = vmatpush1.msra.mxu0 %v6399
    %6928 = vmatprep.subr.mxu0 %v6407
    %6929 = vmatpush1.msra.mxu0 %v6406
    %6930 = vmatprep.subr.mxu0 %v6414
    %6931 = vmatpush1.msra.mxu0 %v6413
    %6932 = vmatprep.subr.mxu0 %v6421
    %6933 = vmatpush1.msra.mxu0 %v6420
    %6934 = vmatprep.subr.mxu0 %v6428
    %6935 = vmatpush1.msra.mxu0 %v6427
    %6936 = vmatprep.subr.mxu0 %v6435
    %6937 = vmatpush1.msra.mxu0 %v6434
    %6938 = vmatprep.subr.mxu0 %v6442
    %6939 = vmatpush1.msra.mxu0 %v6441
    %6940 = vmatprep.subr.mxu0 %v6449
    %6941 = vmatpush1.msra.mxu0 %v6448
    %6942 = vmatprep.subr.mxu0 %v6456
    %6943 = vmatpush1.msra.mxu0 %v6455
    %6944 = vmatprep.subr.mxu0 %v6463
    %6945 = vmatpush1.msra.mxu0 %v6462
    %6946 = vmatprep.subr.mxu0 %v6470
    %6947 = vmatpush1.msra.mxu0 %v6469
    %6948 = vmatprep.mubr.f32.mxu0 %v6245
    %6949 = vmatmul.mubr.f32.gmra.mrb[0].mxu0 %v6244
    %v6950 = vpop.f32.mrb[0].mxu0
    %v6951 = vadd.f32 %v6595, %v6950
    %v6952 = vpop.f32.mrb[0].mxu0
    %v6953 = vadd.f32 %v6595, %v6952
    %6954 = vdwg.mxu0
    %6955 = vmatprep.subr.mxu0 %v6477
    %6956 = vmatpush1.msra.mxu0 %v6476
    %6957 = vmatprep.subr.mxu0 %v6484
    %6958 = vmatpush1.msra.mxu0 %v6483
    %6959 = vmatprep.subr.mxu0 %v6491
    %6960 = vmatpush1.msra.mxu0 %v6490
    %6961 = vmatprep.subr.mxu0 %v6498
    %6962 = vmatpush1.msra.mxu0 %v6497
    %6963 = vmatprep.subr.mxu0 %v6505
    %6964 = vmatpush1.msra.mxu0 %v6504
    %6965 = vmatprep.subr.mxu0 %v6512
    %6966 = vmatpush1.msra.mxu0 %v6511
    %6967 = vmatprep.subr.mxu0 %v6519
    %6968 = vmatpush1.msra.mxu0 %v6518
    %6969 = vmatprep.subr.mxu0 %v6526
    %6970 = vmatpush1.msra.mxu0 %v6525
    %6971 = vmatprep.subr.mxu0 %v6533
    %6972 = vmatpush1.msra.mxu0 %v6532
    %6973 = vmatprep.subr.mxu0 %v6540
    %6974 = vmatpush1.msra.mxu0 %v6539
    %6975 = vmatprep.subr.mxu0 %v6547
    %6976 = vmatpush1.msra.mxu0 %v6546
    %6977 = vmatprep.subr.mxu0 %v6554
    %6978 = vmatpush1.msra.mxu0 %v6553
    %6979 = vmatprep.subr.mxu0 %v6561
    %6980 = vmatpush1.msra.mxu0 %v6560
    %6981 = vmatprep.subr.mxu0 %v6568
    %6982 = vmatpush1.msra.mxu0 %v6567
    %6983 = vmatprep.subr.mxu0 %v6575
    %6984 = vmatpush1.msra.mxu0 %v6574
    %6985 = vmatprep.subr.mxu0 %v6582
    %6986 = vmatpush1.msra.mxu0 %v6581
    %6987 = vmatprep.subr.mxu0 %v6589
    %6988 = vmatpush1.msra.mxu0 %v6588
    %6989 = vmatprep.subr.mxu0 0.0
    %6990 = vmatpush1.msra.mxu0 0.0
    %6991 = vmatprep.subr.mxu0 0.0
    %6992 = vmatpush1.msra.mxu0 0.0
    %6993 = vmatprep.subr.mxu0 0.0
    %6994 = vmatpush1.msra.mxu0 0.0
    %6995 = vmatprep.subr.mxu0 0.0
    %6996 = vmatpush1.msra.mxu0 0.0
    %6997 = vmatprep.subr.mxu0 0.0
    %6998 = vmatpush1.msra.mxu0 0.0
    %6999 = vmatprep.subr.mxu0 0.0
    %7000 = vmatpush1.msra.mxu0 0.0
    %7001 = vmatprep.subr.mxu0 0.0
    %7002 = vmatpush1.msra.mxu0 0.0
    %7003 = vmatprep.subr.mxu0 0.0
    %7004 = vmatpush1.msra.mxu0 0.0
    %7005 = vmatprep.subr.mxu0 0.0
    %7006 = vmatpush1.msra.mxu0 0.0
    %7007 = vmatprep.subr.mxu0 0.0
    %7008 = vmatpush1.msra.mxu0 0.0
    %7009 = vmatprep.subr.mxu0 0.0
    %7010 = vmatpush1.msra.mxu0 0.0
    %7011 = vmatprep.subr.mxu0 0.0
    %7012 = vmatpush1.msra.mxu0 0.0
    %7013 = vmatprep.subr.mxu0 0.0
    %7014 = vmatpush1.msra.mxu0 0.0
    %7015 = vmatprep.subr.mxu0 0.0
    %7016 = vmatpush1.msra.mxu0 0.0
    %7017 = vmatprep.subr.mxu0 0.0
    %7018 = vmatpush1.msra.mxu0 0.0
    %7019 = vmatprep.mubr.f32.mxu0 %v6598
    %7020 = vmatmul.mubr.f32.gmra.mrb[0].mxu0 %v6246
    %v7021 = vpop.f32.mrb[0].mxu0
    %v7022 = vadd.f32 %v6951, %v7021
    %v7023 = vpop.f32.mrb[0].mxu0
    %v7024 = vadd.f32 %v6953, %v7023
    %7025 = vdwg.mxu0
    %7026 = vmatprep.subr.mxu0 0.0
    %7027 = vmatpush1.msra.mxu0 %v6254
    %7028 = vmatprep.subr.mxu0 0.0
    %7029 = vmatpush1.msra.mxu0 %v6261
    %7030 = vmatprep.subr.mxu0 0.0
    %7031 = vmatpush1.msra.mxu0 %v6268
    %7032 = vmatprep.subr.mxu0 0.0
    %7033 = vmatpush1.msra.mxu0 %v6275
    %7034 = vmatprep.subr.mxu0 0.0
    %7035 = vmatpush1.msra.mxu0 %v6282
    %7036 = vmatprep.subr.mxu0 0.0
    %7037 = vmatpush1.msra.mxu0 %v6289
    %7038 = vmatprep.subr.mxu0 0.0
    %7039 = vmatpush1.msra.mxu0 %v6296
    %7040 = vmatprep.subr.mxu0 0.0
    %7041 = vmatpush1.msra.mxu0 %v6303
    %7042 = vmatprep.subr.mxu0 0.0
    %7043 = vmatpush1.msra.mxu0 %v6310
    %7044 = vmatprep.subr.mxu0 0.0
    %7045 = vmatpush1.msra.mxu0 %v6317
    %7046 = vmatprep.subr.mxu0 0.0
    %7047 = vmatpush1.msra.mxu0 %v6324
    %7048 = vmatprep.subr.mxu0 0.0
    %7049 = vmatpush1.msra.mxu0 %v6331
    %7050 = vmatprep.subr.mxu0 0.0
    %7051 = vmatpush1.msra.mxu0 %v6338
    %7052 = vmatprep.subr.mxu0 0.0
    %7053 = vmatpush1.msra.mxu0 %v6345
    %7054 = vmatprep.subr.mxu0 0.0
    %7055 = vmatpush1.msra.mxu0 %v6352
    %7056 = vmatprep.subr.mxu0 0.0
    %7057 = vmatpush1.msra.mxu0 %v6359
    %7058 = vmatprep.subr.mxu0 0.0
    %7059 = vmatpush1.msra.mxu0 %v6366
    %7060 = vmatprep.subr.mxu0 0.0
    %7061 = vmatpush1.msra.mxu0 %v6373
    %7062 = vmatprep.subr.mxu0 0.0
    %7063 = vmatpush1.msra.mxu0 %v6380
    %7064 = vmatprep.subr.mxu0 0.0
    %7065 = vmatpush1.msra.mxu0 %v6387
    %7066 = vmatprep.subr.mxu0 0.0
    %7067 = vmatpush1.msra.mxu0 %v6394
    %7068 = vmatprep.subr.mxu0 0.0
    %7069 = vmatpush1.msra.mxu0 %v6401
    %7070 = vmatprep.subr.mxu0 0.0
    %7071 = vmatpush1.msra.mxu0 %v6408
    %7072 = vmatprep.subr.mxu0 0.0
    %7073 = vmatpush1.msra.mxu0 %v6415
    %7074 = vmatprep.subr.mxu0 0.0
    %7075 = vmatpush1.msra.mxu0 %v6422
    %7076 = vmatprep.subr.mxu0 0.0
    %7077 = vmatpush1.msra.mxu0 %v6429
    %7078 = vmatprep.subr.mxu0 0.0
    %7079 = vmatpush1.msra.mxu0 %v6436
    %7080 = vmatprep.subr.mxu0 0.0
    %7081 = vmatpush1.msra.mxu0 %v6443
    %7082 = vmatprep.subr.mxu0 0.0
    %7083 = vmatpush1.msra.mxu0 %v6450
    %7084 = vmatprep.subr.mxu0 0.0
    %7085 = vmatpush1.msra.mxu0 %v6457
    %7086 = vmatprep.subr.mxu0 0.0
    %7087 = vmatpush1.msra.mxu0 %v6464
    %7088 = vmatprep.subr.mxu0 0.0
    %7089 = vmatpush1.msra.mxu0 %v6471
    %7090 = vmatprep.mubr.f32.mxu0 %v6245
    %7091 = vmatmul.mubr.f32.gmra.mrb[0].mxu0 %v6244
    %v7092 = vpop.f32.mrb[0].mxu0
    %v7093 = vadd.f32 %v6595, %v7092
    %v7094 = vpop.f32.mrb[0].mxu0
    %7095 = vdwg.mxu0
    %7096 = vmatprep.subr.mxu0 0.0
    %7097 = vmatpush1.msra.mxu0 %v6478
    %7098 = vmatprep.subr.mxu0 0.0
    %7099 = vmatpush1.msra.mxu0 %v6485
    %7100 = vmatprep.subr.mxu0 0.0
    %7101 = vmatpush1.msra.mxu0 %v6492
    %7102 = vmatprep.subr.mxu0 0.0
    %7103 = vmatpush1.msra.mxu0 %v6499
    %7104 = vmatprep.subr.mxu0 0.0
    %7105 = vmatpush1.msra.mxu0 %v6506
    %7106 = vmatprep.subr.mxu0 0.0
    %7107 = vmatpush1.msra.mxu0 %v6513
    %7108 = vmatprep.subr.mxu0 0.0
    %7109 = vmatpush1.msra.mxu0 %v6520
    %7110 = vmatprep.subr.mxu0 0.0
    %7111 = vmatpush1.msra.mxu0 %v6527
    %7112 = vmatprep.subr.mxu0 0.0
    %7113 = vmatpush1.msra.mxu0 %v6534
    %7114 = vmatprep.subr.mxu0 0.0
    %7115 = vmatpush1.msra.mxu0 %v6541
    %7116 = vmatprep.subr.mxu0 0.0
    %7117 = vmatpush1.msra.mxu0 %v6548
    %7118 = vmatprep.subr.mxu0 0.0
    %7119 = vmatpush1.msra.mxu0 %v6555
    %7120 = vmatprep.subr.mxu0 0.0
    %7121 = vmatpush1.msra.mxu0 %v6562
    %7122 = vmatprep.subr.mxu0 0.0
    %7123 = vmatpush1.msra.mxu0 %v6569
    %7124 = vmatprep.subr.mxu0 0.0
    %7125 = vmatpush1.msra.mxu0 %v6576
    %7126 = vmatprep.subr.mxu0 0.0
    %7127 = vmatpush1.msra.mxu0 %v6583
    %7128 = vmatprep.subr.mxu0 0.0
    %7129 = vmatpush1.msra.mxu0 %v6590
    %7130 = vmatprep.subr.mxu0 0.0
    %7131 = vmatpush1.msra.mxu0 0.0
    %7132 = vmatprep.subr.mxu0 0.0
    %7133 = vmatpush1.msra.mxu0 0.0
    %7134 = vmatprep.subr.mxu0 0.0
    %7135 = vmatpush1.msra.mxu0 0.0
    %7136 = vmatprep.subr.mxu0 0.0
    %7137 = vmatpush1.msra.mxu0 0.0
    %7138 = vmatprep.subr.mxu0 0.0
    %7139 = vmatpush1.msra.mxu0 0.0
    %7140 = vmatprep.subr.mxu0 0.0
    %7141 = vmatpush1.msra.mxu0 0.0
    %7142 = vmatprep.subr.mxu0 0.0
    %7143 = vmatpush1.msra.mxu0 0.0
    %7144 = vmatprep.subr.mxu0 0.0
    %7145 = vmatpush1.msra.mxu0 0.0
    %7146 = vmatprep.subr.mxu0 0.0
    %7147 = vmatpush1.msra.mxu0 0.0
    %7148 = vmatprep.subr.mxu0 0.0
    %7149 = vmatpush1.msra.mxu0 0.0
    %7150 = vmatprep.subr.mxu0 0.0
    %7151 = vmatpush1.msra.mxu0 0.0
    %7152 = vmatprep.subr.mxu0 0.0
    %7153 = vmatpush1.msra.mxu0 0.0
    %7154 = vmatprep.subr.mxu0 0.0
    %7155 = vmatpush1.msra.mxu0 0.0
    %7156 = vmatprep.subr.mxu0 0.0
    %7157 = vmatpush1.msra.mxu0 0.0
    %7158 = vmatprep.subr.mxu0 0.0
    %7159 = vmatpush1.msra.mxu0 0.0
    %7160 = vmatprep.mubr.f32.mxu0 %v6598
    %7161 = vmatmul.mubr.f32.gmra.mrb[0].mxu0 %v6246
    %v7162 = vpop.f32.mrb[0].mxu0
    %v7163 = vadd.f32 %v7093, %v7162
    %v7164 = vpop.f32.mrb[0].mxu0
    %7165 = vdwg.mxu0
    %v7166 = vmax.f32 %v6738, 0.0
    %v7167 = vmax.f32 %v6740, 0.0
    %v7168 = vmax.f32 %v6880, 0.0
    %v7169 = vmax.f32 %v6882, 0.0
    %v7170 = vmax.f32 %v7022, 0.0
    %v7171 = vmax.f32 %v7024, 0.0
    %v7172 = vmax.f32 %v7163, 0.0
    %7173 = vset.pattern.permute.xlu0 4
    %7174 = vperm.xlu0 %7173, %v6591
    %v7175 = vpop.permute.xlu0 %7174
    %v7177 = vmul.f32 %v7166, %v7175
    %v7178 = vmul.f32 %v7167, %v7175
    %v7179 = vmul.f32 %v7168, %v7175
    %v7180 = vmul.f32 %v7169, %v7175
    %v7181 = vmul.f32 %v7170, %v7175
    %v7182 = vmul.f32 %v7171, %v7175
    %v7183 = vmul.f32 %v7172, %v7175
    %7184 = vset.pattern.permute.xlu0 5
    %7185 = vperm.xlu0 %7184, %v6591
    %v7186 = vpop.permute.xlu0 %7185
    %v7188 = vadd.f32 %v7177, %v7186
    %v7189 = vadd.f32 %v7178, %v7186
    %v7190 = vadd.f32 %v7179, %v7186
    %v7191 = vadd.f32 %v7180, %v7186
    %v7192 = vadd.f32 %v7181, %v7186
    %v7193 = vadd.f32 %v7182, %v7186
    %v7194 = vadd.f32 %v7183, %v7186
    %v7195 = vld [vmem:[%s4] sm:$0xff]
    %v7196 = vld [vmem:[#allocation4 + $0x8] sm:$0xff]
    %v7197 = vld [vmem:[#allocation4 + $0x10] sm:$0xff]
    %v7198 = vld [vmem:[#allocation4 + $0x18] sm:$0xff]
    %v7199 = vld [vmem:[#allocation4 + $0x20] sm:$0xff]
    %v7200 = vld [vmem:[#allocation4 + $0x28] sm:$0xff]
    %v7201 = vld [vmem:[#allocation4 + $0x30] sm:$0xff]
    %v7202 = vld [vmem:[#allocation4 + $0x38] sm:$0xff]
    %7203 = vset.pattern.permute.xlu0 6
    %7204 = vperm.xlu0 %7203, %v6591
    %v7205 = vpop.permute.xlu0 %7204
    %v7208 = vsel %vm3028, %v7195, 0
    %7210 = vmatprep.subr.mxu0 %v7197
    %7211 = vmatpush1.msra.mxu0 %v7196
    %7212 = vmatprep.subr.mxu0 0.0
    %7213 = vmatpush1.msra.mxu0 0.0
    %7214 = vmatprep.subr.mxu0 0.0
    %7215 = vmatpush1.msra.mxu0 0.0
    %7216 = vmatprep.subr.mxu0 0.0
    %7217 = vmatpush1.msra.mxu0 0.0
    %7218 = vmatprep.subr.mxu0 0.0
    %7219 = vmatpush1.msra.mxu0 0.0
    %7220 = vmatprep.subr.mxu0 0.0
    %7221 = vmatpush1.msra.mxu0 0.0
    %7222 = vmatprep.subr.mxu0 0.0
    %7223 = vmatpush1.msra.mxu0 0.0
    %7224 = vmatprep.subr.mxu0 0.0
    %7225 = vmatpush1.msra.mxu0 0.0
    %7226 = vmatprep.subr.mxu0 0.0
    %7227 = vmatpush1.msra.mxu0 0.0
    %7228 = vmatprep.subr.mxu0 0.0
    %7229 = vmatpush1.msra.mxu0 0.0
    %7230 = vmatprep.subr.mxu0 0.0
    %7231 = vmatpush1.msra.mxu0 0.0
    %7232 = vmatprep.subr.mxu0 0.0
    %7233 = vmatpush1.msra.mxu0 0.0
    %7234 = vmatprep.subr.mxu0 0.0
    %7235 = vmatpush1.msra.mxu0 0.0
    %7236 = vmatprep.subr.mxu0 0.0
    %7237 = vmatpush1.msra.mxu0 0.0
    %7238 = vmatprep.subr.mxu0 0.0
    %7239 = vmatpush1.msra.mxu0 0.0
    %7240 = vmatprep.subr.mxu0 0.0
    %7241 = vmatpush1.msra.mxu0 0.0
    %7242 = vmatprep.subr.mxu0 0.0
    %7243 = vmatpush1.msra.mxu0 0.0
    %7244 = vmatprep.subr.mxu0 0.0
    %7245 = vmatpush1.msra.mxu0 0.0
    %7246 = vmatprep.subr.mxu0 0.0
    %7247 = vmatpush1.msra.mxu0 0.0
    %7248 = vmatprep.subr.mxu0 0.0
    %7249 = vmatpush1.msra.mxu0 0.0
    %7250 = vmatprep.subr.mxu0 0.0
    %7251 = vmatpush1.msra.mxu0 0.0
    %7252 = vmatprep.subr.mxu0 0.0
    %7253 = vmatpush1.msra.mxu0 0.0
    %7254 = vmatprep.subr.mxu0 0.0
    %7255 = vmatpush1.msra.mxu0 0.0
    %7256 = vmatprep.subr.mxu0 0.0
    %7257 = vmatpush1.msra.mxu0 0.0
    %7258 = vmatprep.subr.mxu0 0.0
    %7259 = vmatpush1.msra.mxu0 0.0
    %7260 = vmatprep.subr.mxu0 0.0
    %7261 = vmatpush1.msra.mxu0 0.0
    %7262 = vmatprep.subr.mxu0 0.0
    %7263 = vmatpush1.msra.mxu0 0.0
    %7264 = vmatprep.subr.mxu0 0.0
    %7265 = vmatpush1.msra.mxu0 0.0
    %7266 = vmatprep.subr.mxu0 0.0
    %7267 = vmatpush1.msra.mxu0 0.0
    %7268 = vmatprep.subr.mxu0 0.0
    %7269 = vmatpush1.msra.mxu0 0.0
    %7270 = vmatprep.subr.mxu0 0.0
    %7271 = vmatpush1.msra.mxu0 0.0
    %7272 = vmatprep.subr.mxu0 0.0
    %7273 = vmatpush1.msra.mxu0 0.0
    %7274 = vmatprep.mubr.f32.mxu0 0.0
    %7275 = vmatmul.mubr.f32.gmra.mrb[0].mxu0 %v7208
    %v7276 = vpop.f32.mrb[0].mxu0
    %v7277 = vadd.f32 %v7205, %v7276
    %v7278 = vpop.f32.mrb[0].mxu0
    %v7279 = vadd.f32 %v7205, %v7278
    %7280 = vdwg.mxu0
    %7281 = vmatprep.subr.mxu0 %v7199
    %7282 = vmatpush1.msra.mxu0 %v7198
    %7283 = vmatprep.subr.mxu0 0.0
    %7284 = vmatpush1.msra.mxu0 0.0
    %7285 = vmatprep.subr.mxu0 0.0
    %7286 = vmatpush1.msra.mxu0 0.0
    %7287 = vmatprep.subr.mxu0 0.0
    %7288 = vmatpush1.msra.mxu0 0.0
    %7289 = vmatprep.subr.mxu0 0.0
    %7290 = vmatpush1.msra.mxu0 0.0
    %7291 = vmatprep.subr.mxu0 0.0
    %7292 = vmatpush1.msra.mxu0 0.0
    %7293 = vmatprep.subr.mxu0 0.0
    %7294 = vmatpush1.msra.mxu0 0.0
    %7295 = vmatprep.subr.mxu0 0.0
    %7296 = vmatpush1.msra.mxu0 0.0
    %7297 = vmatprep.subr.mxu0 0.0
    %7298 = vmatpush1.msra.mxu0 0.0
    %7299 = vmatprep.subr.mxu0 0.0
    %7300 = vmatpush1.msra.mxu0 0.0
    %7301 = vmatprep.subr.mxu0 0.0
    %7302 = vmatpush1.msra.mxu0 0.0
    %7303 = vmatprep.subr.mxu0 0.0
    %7304 = vmatpush1.msra.mxu0 0.0
    %7305 = vmatprep.subr.mxu0 0.0
    %7306 = vmatpush1.msra.mxu0 0.0
    %7307 = vmatprep.subr.mxu0 0.0
    %7308 = vmatpush1.msra.mxu0 0.0
    %7309 = vmatprep.subr.mxu0 0.0
    %7310 = vmatpush1.msra.mxu0 0.0
    %7311 = vmatprep.subr.mxu0 0.0
    %7312 = vmatpush1.msra.mxu0 0.0
    %7313 = vmatprep.subr.mxu0 0.0
    %7314 = vmatpush1.msra.mxu0 0.0
    %7315 = vmatprep.subr.mxu0 0.0
    %7316 = vmatpush1.msra.mxu0 0.0
    %7317 = vmatprep.subr.mxu0 0.0
    %7318 = vmatpush1.msra.mxu0 0.0
    %7319 = vmatprep.subr.mxu0 0.0
    %7320 = vmatpush1.msra.mxu0 0.0
    %7321 = vmatprep.subr.mxu0 0.0
    %7322 = vmatpush1.msra.mxu0 0.0
    %7323 = vmatprep.subr.mxu0 0.0
    %7324 = vmatpush1.msra.mxu0 0.0
    %7325 = vmatprep.subr.mxu0 0.0
    %7326 = vmatpush1.msra.mxu0 0.0
    %7327 = vmatprep.subr.mxu0 0.0
    %7328 = vmatpush1.msra.mxu0 0.0
    %7329 = vmatprep.subr.mxu0 0.0
    %7330 = vmatpush1.msra.mxu0 0.0
    %7331 = vmatprep.subr.mxu0 0.0
    %7332 = vmatpush1.msra.mxu0 0.0
    %7333 = vmatprep.subr.mxu0 0.0
    %7334 = vmatpush1.msra.mxu0 0.0
    %7335 = vmatprep.subr.mxu0 0.0
    %7336 = vmatpush1.msra.mxu0 0.0
    %7337 = vmatprep.subr.mxu0 0.0
    %7338 = vmatpush1.msra.mxu0 0.0
    %7339 = vmatprep.subr.mxu0 0.0
    %7340 = vmatpush1.msra.mxu0 0.0
    %7341 = vmatprep.subr.mxu0 0.0
    %7342 = vmatpush1.msra.mxu0 0.0
    %7343 = vmatprep.subr.mxu0 0.0
    %7344 = vmatpush1.msra.mxu0 0.0
    %7345 = vmatprep.mubr.f32.mxu0 0.0
    %7346 = vmatmul.mubr.f32.gmra.mrb[0].mxu0 %v7208
    %v7347 = vpop.f32.mrb[0].mxu0
    %v7348 = vadd.f32 %v7205, %v7347
    %v7349 = vpop.f32.mrb[0].mxu0
    %v7350 = vadd.f32 %v7205, %v7349
    %7351 = vdwg.mxu0
    %7352 = vmatprep.subr.mxu0 %v7201
    %7353 = vmatpush1.msra.mxu0 %v7200
    %7354 = vmatprep.subr.mxu0 0.0
    %7355 = vmatpush1.msra.mxu0 0.0
    %7356 = vmatprep.subr.mxu0 0.0
    %7357 = vmatpush1.msra.mxu0 0.0
    %7358 = vmatprep.subr.mxu0 0.0
    %7359 = vmatpush1.msra.mxu0 0.0
    %7360 = vmatprep.subr.mxu0 0.0
    %7361 = vmatpush1.msra.mxu0 0.0
    %7362 = vmatprep.subr.mxu0 0.0
    %7363 = vmatpush1.msra.mxu0 0.0
    %7364 = vmatprep.subr.mxu0 0.0
    %7365 = vmatpush1.msra.mxu0 0.0
    %7366 = vmatprep.subr.mxu0 0.0
    %7367 = vmatpush1.msra.mxu0 0.0
    %7368 = vmatprep.subr.mxu0 0.0
    %7369 = vmatpush1.msra.mxu0 0.0
    %7370 = vmatprep.subr.mxu0 0.0
    %7371 = vmatpush1.msra.mxu0 0.0
    %7372 = vmatprep.subr.mxu0 0.0
    %7373 = vmatpush1.msra.mxu0 0.0
    %7374 = vmatprep.subr.mxu0 0.0
    %7375 = vmatpush1.msra.mxu0 0.0
    %7376 = vmatprep.subr.mxu0 0.0
    %7377 = vmatpush1.msra.mxu0 0.0
    %7378 = vmatprep.subr.mxu0 0.0
    %7379 = vmatpush1.msra.mxu0 0.0
    %7380 = vmatprep.subr.mxu0 0.0
    %7381 = vmatpush1.msra.mxu0 0.0
    %7382 = vmatprep.subr.mxu0 0.0
    %7383 = vmatpush1.msra.mxu0 0.0
    %7384 = vmatprep.subr.mxu0 0.0
    %7385 = vmatpush1.msra.mxu0 0.0
    %7386 = vmatprep.subr.mxu0 0.0
    %7387 = vmatpush1.msra.mxu0 0.0
    %7388 = vmatprep.subr.mxu0 0.0
    %7389 = vmatpush1.msra.mxu0 0.0
    %7390 = vmatprep.subr.mxu0 0.0
    %7391 = vmatpush1.msra.mxu0 0.0
    %7392 = vmatprep.subr.mxu0 0.0
    %7393 = vmatpush1.msra.mxu0 0.0
    %7394 = vmatprep.subr.mxu0 0.0
    %7395 = vmatpush1.msra.mxu0 0.0
    %7396 = vmatprep.subr.mxu0 0.0
    %7397 = vmatpush1.msra.mxu0 0.0
    %7398 = vmatprep.subr.mxu0 0.0
    %7399 = vmatpush1.msra.mxu0 0.0
    %7400 = vmatprep.subr.mxu0 0.0
    %7401 = vmatpush1.msra.mxu0 0.0
    %7402 = vmatprep.subr.mxu0 0.0
    %7403 = vmatpush1.msra.mxu0 0.0
    %7404 = vmatprep.subr.mxu0 0.0
    %7405 = vmatpush1.msra.mxu0 0.0
    %7406 = vmatprep.subr.mxu0 0.0
    %7407 = vmatpush1.msra.mxu0 0.0
    %7408 = vmatprep.subr.mxu0 0.0
    %7409 = vmatpush1.msra.mxu0 0.0
    %7410 = vmatprep.subr.mxu0 0.0
    %7411 = vmatpush1.msra.mxu0 0.0
    %7412 = vmatprep.subr.mxu0 0.0
    %7413 = vmatpush1.msra.mxu0 0.0
    %7414 = vmatprep.subr.mxu0 0.0
    %7415 = vmatpush1.msra.mxu0 0.0
    %7416 = vmatprep.mubr.f32.mxu0 0.0
    %7417 = vmatmul.mubr.f32.gmra.mrb[0].mxu0 %v7208
    %v7418 = vpop.f32.mrb[0].mxu0
    %v7419 = vadd.f32 %v7205, %v7418
    %v7420 = vpop.f32.mrb[0].mxu0
    %v7421 = vadd.f32 %v7205, %v7420
    %7422 = vdwg.mxu0
    %7423 = vmatprep.subr.mxu0 0.0
    %7424 = vmatpush1.msra.mxu0 %v7202
    %7425 = vmatprep.subr.mxu0 0.0
    %7426 = vmatpush1.msra.mxu0 0.0
    %7427 = vmatprep.subr.mxu0 0.0
    %7428 = vmatpush1.msra.mxu0 0.0
    %7429 = vmatprep.subr.mxu0 0.0
    %7430 = vmatpush1.msra.mxu0 0.0
    %7431 = vmatprep.subr.mxu0 0.0
    %7432 = vmatpush1.msra.mxu0 0.0
    %7433 = vmatprep.subr.mxu0 0.0
    %7434 = vmatpush1.msra.mxu0 0.0
    %7435 = vmatprep.subr.mxu0 0.0
    %7436 = vmatpush1.msra.mxu0 0.0
    %7437 = vmatprep.subr.mxu0 0.0
    %7438 = vmatpush1.msra.mxu0 0.0
    %7439 = vmatprep.subr.mxu0 0.0
    %7440 = vmatpush1.msra.mxu0 0.0
    %7441 = vmatprep.subr.mxu0 0.0
    %7442 = vmatpush1.msra.mxu0 0.0
    %7443 = vmatprep.subr.mxu0 0.0
    %7444 = vmatpush1.msra.mxu0 0.0
    %7445 = vmatprep.subr.mxu0 0.0
    %7446 = vmatpush1.msra.mxu0 0.0
    %7447 = vmatprep.subr.mxu0 0.0
    %7448 = vmatpush1.msra.mxu0 0.0
    %7449 = vmatprep.subr.mxu0 0.0
    %7450 = vmatpush1.msra.mxu0 0.0
    %7451 = vmatprep.subr.mxu0 0.0
    %7452 = vmatpush1.msra.mxu0 0.0
    %7453 = vmatprep.subr.mxu0 0.0
    %7454 = vmatpush1.msra.mxu0 0.0
    %7455 = vmatprep.subr.mxu0 0.0
    %7456 = vmatpush1.msra.mxu0 0.0
    %7457 = vmatprep.subr.mxu0 0.0
    %7458 = vmatpush1.msra.mxu0 0.0
    %7459 = vmatprep.subr.mxu0 0.0
    %7460 = vmatpush1.msra.mxu0 0.0
    %7461 = vmatprep.subr.mxu0 0.0
    %7462 = vmatpush1.msra.mxu0 0.0
    %7463 = vmatprep.subr.mxu0 0.0
    %7464 = vmatpush1.msra.mxu0 0.0
    %7465 = vmatprep.subr.mxu0 0.0
    %7466 = vmatpush1.msra.mxu0 0.0
    %7467 = vmatprep.subr.mxu0 0.0
    %7468 = vmatpush1.msra.mxu0 0.0
    %7469 = vmatprep.subr.mxu0 0.0
    %7470 = vmatpush1.msra.mxu0 0.0
    %7471 = vmatprep.subr.mxu0 0.0
    %7472 = vmatpush1.msra.mxu0 0.0
    %7473 = vmatprep.subr.mxu0 0.0
    %7474 = vmatpush1.msra.mxu0 0.0
    %7475 = vmatprep.subr.mxu0 0.0
    %7476 = vmatpush1.msra.mxu0 0.0
    %7477 = vmatprep.subr.mxu0 0.0
    %7478 = vmatpush1.msra.mxu0 0.0
    %7479 = vmatprep.subr.mxu0 0.0
    %7480 = vmatpush1.msra.mxu0 0.0
    %7481 = vmatprep.subr.mxu0 0.0
    %7482 = vmatpush1.msra.mxu0 0.0
    %7483 = vmatprep.subr.mxu0 0.0
    %7484 = vmatpush1.msra.mxu0 0.0
    %7485 = vmatprep.subr.mxu0 0.0
    %7486 = vmatpush1.msra.mxu0 0.0
    %7487 = vmatprep.mubr.f32.mxu0 0.0
    %7488 = vmatmul.mubr.f32.gmra.mrb[0].mxu0 %v7208
    %v7489 = vpop.f32.mrb[0].mxu0
    %v7490 = vadd.f32 %v7205, %v7489
    %v7491 = vpop.f32.mrb[0].mxu0
    %7492 = vdwg.mxu0
    %v7493 = vadd.f32 %v7188, %v7277
    %v7494 = vadd.f32 %v7189, %v7279
    %v7495 = vadd.f32 %v7190, %v7348
    %v7496 = vadd.f32 %v7191, %v7350
    %v7497 = vadd.f32 %v7192, %v7419
    %v7498 = vadd.f32 %v7193, %v7421
    %v7499 = vadd.f32 %v7194, %v7490
    %7500 = vst [vmem:[#allocation12] sm:$0xff] %v7493
    %7501 = vst [vmem:[#allocation12 + $0x8] sm:$0xff] %v7494
    %7502 = vst [vmem:[#allocation12 + $0x10] sm:$0xff] %v7495
    %7503 = vst [vmem:[#allocation12 + $0x18] sm:$0xff] %v7496
    %7504 = vst [vmem:[#allocation12 + $0x20] sm:$0xff] %v7497
    %7505 = vst [vmem:[#allocation12 + $0x28] sm:$0xff] %v7498
    %7506 = vst [vmem:[#allocation12 + $0x30] sm:$0xff] %v7499
    // Predicated region
    $region42: #{tpu_custom_call.1} parent=1 // pred_check
      _
    $region43: #{tpu_custom_call.1} parent=1 // pred_check_branch
      %7508 = sbr.rel (0) target = $region45
    $region44: #{tpu_custom_call.1} parent=1 // pred_region
      %s7510 = ssub.s32 896, 896
      %7511 = vsyncadd [#allocation6], %s7510
      %s7513 = sshll.u32 [#allocation12], 4
      %s7514 = int_to_ptr.vmem [resolvable:$true] %s7513
      %7516 = dma.vmem_to_hbm [thread:$0]  %s7514, 896, %s6, [#allocation6]
    $region45: #{tpu_custom_call.1} parent=1 // pred_fallthru
      _
    // Predicated region
    $region46: #{tpu_custom_call.1} parent=1 // pred_check
      _
    $region47: #{tpu_custom_call.1} parent=1 // pred_check_branch
      %7518 = sbr.rel (0) target = $region49
    $region48: #{tpu_custom_call.1} parent=1 // pred_region
      %7519 = dma.done [#allocation6], 896
    $region49: #{tpu_custom_call.1} parent=1 // pred_fallthru
      _
    %7520 = vsyncpa [#allocation5], 1
    %7521 = vsyncpa [#allocation8], 1
    %7522 = vsyncpa [#allocation11], 1
    %7523 = vsyncpa [#allocation6], 1

</llo_original>
